<compile_context>
chip_gen: v7x
topology: tpu7x:2x2x1
jax: 0.10.0
libtpu: 0.0.40
codegen_flags: <defaults>
</compile_context>

<pallas_src>
import math
import functools

import jax
import jax.numpy as jnp
from jax.experimental import pallas as pl
from jax.experimental.pallas import tpu as pltpu


# ----------------------------------------------------------------------------
# In-kernel helpers (operate on loaded values, not refs)
# ----------------------------------------------------------------------------
def _layer_norm(x, g, b, eps=1e-5):
    mu = jnp.mean(x, axis=-1, keepdims=True)
    var = jnp.mean(jnp.square(x - mu), axis=-1, keepdims=True)
    return (x - mu) * jax.lax.rsqrt(var + eps) * g + b


def _split_heads(x, num_heads, dh):
    # (N, H*Dh) -> (H*N, Dh): fold heads onto the sublane axis (head-major).
    # Static lane slices + one sublane concat; avoids >2-D transposes.
    return jnp.concatenate(
        [x[:, h * dh:(h + 1) * dh] for h in range(num_heads)], axis=0)


def _merge_heads(xh, num_heads, n):
    # (H*N, Dh) -> (N, H*Dh)
    return jnp.concatenate(
        [xh[h * n:(h + 1) * n, :] for h in range(num_heads)], axis=-1)


def _mha(q, k, v, mask, *, num_heads, dh):
    """Block-diagonal all-head attention.

    q: (Nq, D), k/v: (Nk, D); mask: (H*Nq, H*Nk) additive float with -1e9
    across batch/head boundaries (plus causal positions for self-attention).
    One score matmul + one softmax + one PV matmul for every batch and head.
    The 1/sqrt(Dh) scale is pre-folded into the Q projection weights.
    """
    nq = q.shape[0]
    qh = _split_heads(q, num_heads, dh)                      # (H*Nq, Dh)
    kh = _split_heads(k, num_heads, dh)                      # (H*Nk, Dh)
    vh = _split_heads(v, num_heads, dh)                      # (H*Nk, Dh)
    s = jnp.dot(qh, kh.T, preferred_element_type=jnp.float32)  # (H*Nq, H*Nk)
    s = s + mask
    s = s - jnp.max(s, axis=-1, keepdims=True)
    p = jnp.exp(s)
    p = p * pl.reciprocal(jnp.sum(p, axis=-1, keepdims=True), approx=True)
    oh = jnp.dot(p, vh, preferred_element_type=jnp.float32)    # (H*Nq, Dh)
    return _merge_heads(oh, num_heads, nq)


def _ffn(x, w1, b1, w2, b2):
    # Hidden dim is zero-padded to 128 lanes outside the kernel (lane-dense).
    h = jnp.maximum(jnp.dot(x, w1, preferred_element_type=jnp.float32) + b1, 0.0)
    return jnp.dot(h, w2, preferred_element_type=jnp.float32) + b2


# ----------------------------------------------------------------------------
# Single fused Pallas kernel: encoder stack + decoder stack + vocab projection
# ----------------------------------------------------------------------------
def _transformer_kernel(
        x_ref, y_ref, enc_mask_ref, self_mask_ref, cross_mask_ref,
        # encoder weights (stacked over layers)
        e_wqkv_ref, e_bqkv_ref, e_wo_ref, e_bo_ref,
        e_ln1g_ref, e_ln1b_ref,
        e_w1_ref, e_b1_ref, e_w2_ref, e_b2_ref,
        e_ln2g_ref, e_ln2b_ref,
        # decoder weights (stacked over layers)
        d_swqkv_ref, d_sbqkv_ref, d_swo_ref, d_sbo_ref,
        d_ln1g_ref, d_ln1b_ref,
        d_cwq_ref, d_cbq_ref, d_cwkv_ref, d_cbkv_ref, d_cwo_ref, d_cbo_ref,
        d_ln2g_ref, d_ln2b_ref,
        d_w1_ref, d_b1_ref, d_w2_ref, d_b2_ref,
        d_ln3g_ref, d_ln3b_ref,
        # output projection (vocab padded to a lane-dense width)
        wout_ref, bout_ref,
        o_ref, *, num_heads, n_enc, n_dec, d_model):
    d = d_model
    dh = d // num_heads

    # ---------------- Encoder stack (memory never leaves VMEM) ----------------
    x = x_ref[...]
    enc_mask = enc_mask_ref[...]
    for l in range(n_enc):
        qkv = (jnp.dot(x, e_wqkv_ref[l], preferred_element_type=jnp.float32)
               + e_bqkv_ref[l])
        a = _mha(qkv[:, :d], qkv[:, d:2 * d], qkv[:, 2 * d:], enc_mask,
                 num_heads=num_heads, dh=dh)
        a = jnp.dot(a, e_wo_ref[l], preferred_element_type=jnp.float32) + e_bo_ref[l]
        x = _layer_norm(x + a, e_ln1g_ref[l], e_ln1b_ref[l])          # fused residual
        f = _ffn(x, e_w1_ref[l], e_b1_ref[l], e_w2_ref[l], e_b2_ref[l])
        x = _layer_norm(x + f, e_ln2g_ref[l], e_ln2b_ref[l])          # fused residual
    mem = x

    # ---------------- Decoder stack ----------------
    y = y_ref[...]
    self_mask = self_mask_ref[...]
    cross_mask = cross_mask_ref[...]
    for l in range(n_dec):
        # masked self-attention
        qkv = (jnp.dot(y, d_swqkv_ref[l], preferred_element_type=jnp.float32)
               + d_sbqkv_ref[l])
        a = _mha(qkv[:, :d], qkv[:, d:2 * d], qkv[:, 2 * d:], self_mask,
                 num_heads=num_heads, dh=dh)
        a = jnp.dot(a, d_swo_ref[l], preferred_element_type=jnp.float32) + d_sbo_ref[l]
        y = _layer_norm(y + a, d_ln1g_ref[l], d_ln1b_ref[l])
        # cross-attention over encoder memory (in VMEM)
        q = jnp.dot(y, d_cwq_ref[l], preferred_element_type=jnp.float32) + d_cbq_ref[l]
        kv = (jnp.dot(mem, d_cwkv_ref[l], preferred_element_type=jnp.float32)
              + d_cbkv_ref[l])
        c = _mha(q, kv[:, :d], kv[:, d:], cross_mask,
                 num_heads=num_heads, dh=dh)
        c = jnp.dot(c, d_cwo_ref[l], preferred_element_type=jnp.float32) + d_cbo_ref[l]
        y = _layer_norm(y + c, d_ln2g_ref[l], d_ln2b_ref[l])
        # feed-forward (hidden activation stays in VMEM, lane-dense width 128)
        f = _ffn(y, d_w1_ref[l], d_b1_ref[l], d_w2_ref[l], d_b2_ref[l])
        y = _layer_norm(y + f, d_ln3g_ref[l], d_ln3b_ref[l])

    # ---------------- Vocab projection -- lane-dense padded output ----------------
    o_ref[...] = (jnp.dot(y, wout_ref[...], preferred_element_type=jnp.float32)
                  + bout_ref[...]).astype(o_ref.dtype)


# ----------------------------------------------------------------------------
# pallas_call wrapper (gridless, everything resident in VMEM)
# ----------------------------------------------------------------------------
def fused_transformer(x, y, enc_mask, self_mask, cross_mask, params,
                      *, num_heads):
    enc, dec = params["enc"], params["dec"]
    out_w, out_b = params["out_w"], params["out_b"]
    d_model = x.shape[1]
    n_enc = enc["wqkv"].shape[0]
    n_dec = dec["swqkv"].shape[0]
    v_pad = out_w.shape[1]

    kern = functools.partial(_transformer_kernel, num_heads=num_heads,
                             n_enc=n_enc, n_dec=n_dec, d_model=d_model)
    args = (x, y, enc_mask, self_mask, cross_mask,
            enc["wqkv"], enc["bqkv"], enc["wo"], enc["bo"],
            enc["ln1_g"], enc["ln1_b"],
            enc["w1"], enc["b1"], enc["w2"], enc["b2"],
            enc["ln2_g"], enc["ln2_b"],
            dec["swqkv"], dec["sbqkv"], dec["swo"], dec["sbo"],
            dec["ln1_g"], dec["ln1_b"],
            dec["cwq"], dec["cbq"], dec["cwkv"], dec["cbkv"],
            dec["cwo"], dec["cbo"],
            dec["ln2_g"], dec["ln2_b"],
            dec["w1"], dec["b1"], dec["w2"], dec["b2"],
            dec["ln3_g"], dec["ln3_b"],
            out_w, out_b)

    vmem = pl.BlockSpec(memory_space=pltpu.MemorySpace.VMEM)
    return pl.pallas_call(
        kern,
        out_shape=jax.ShapeDtypeStruct((y.shape[0], v_pad), jnp.float32),
        in_specs=[vmem] * len(args),
        out_specs=vmem,
    )(*args)


# ----------------------------------------------------------------------------
# Model glue (embedding lookup / PE / mask expansion in plain JAX)
# ----------------------------------------------------------------------------
def sinusoidal_pe(max_len, d_model):
    pos = jnp.arange(max_len, dtype=jnp.float32)[:, None]
    div = jnp.exp(
        jnp.arange(0, d_model, 2, dtype=jnp.float32) * (-math.log(10000.0) / d_model))
    pe = jnp.zeros((max_len, d_model), jnp.float32)
    pe = pe.at[:, 0::2].set(jnp.sin(pos * div))
    pe = pe.at[:, 1::2].set(jnp.cos(pos * div))
    return pe


def build_block_mask(base_mask, batch, num_heads):
    """Expand an (Sq, Sk) additive mask to a (H*B*Sq, H*B*Sk) block-diagonal
    additive mask matching the head-major sublane fold used inside the kernel
    (-1e9 off the per-(head,batch) diagonal blocks)."""
    sq, sk = base_mask.shape
    g = num_heads * batch
    same = jnp.eye(g, dtype=jnp.bool_)[:, None, :, None]            # (g,1,g,1)
    m = jnp.where(same, base_mask[None, :, None, :].astype(jnp.float32),
                  jnp.float32(-1e9))
    return m.reshape(g * sq, g * sk)


def transformer_forward(params, src, tgt, enc_mask, self_mask, cross_mask,
                        *, num_heads, vocab_size):
    d_model = params["enc_emb"].shape[1]
    pe = params["pos_enc"]
    b, s_src = src.shape
    _, s_tgt = tgt.shape

    x = (jnp.take(params["enc_emb"], src, axis=0) * math.sqrt(d_model)
         + pe[:s_src][None]).reshape(b * s_src, d_model)
    y = (jnp.take(params["dec_emb"], tgt, axis=0) * math.sqrt(d_model)
         + pe[:s_tgt][None]).reshape(b * s_tgt, d_model)

    logits_padded = fused_transformer(x, y, enc_mask, self_mask, cross_mask,
                                      params, num_heads=num_heads)
    return logits_padded[:, :vocab_size].reshape(b, s_tgt, vocab_size)


# ----------------------------------------------------------------------------
# Deterministic parameter initialization (weights pre-stacked / pre-fused / padded)
# ----------------------------------------------------------------------------
def init_params(key, vocab_size, d_model, num_heads, n_enc, n_dec,
                feature_dim, max_len, vocab_pad, ffn_pad):
    keys = iter(jax.random.split(key, 1024))

    def dense(shape):
        return jax.random.normal(next(keys), shape, jnp.float32) * 0.02

    def ones(shape):
        return jnp.ones(shape, jnp.float32)

    def zeros(shape):
        return jnp.zeros(shape, jnp.float32)

    dh = d_model // num_heads
    q_scale = 1.0 / math.sqrt(dh)   # folded into Q projection weights

    def qkv_weights(n):
        wq = dense((n, d_model, d_model)) * q_scale
        wk = dense((n, d_model, d_model))
        wv = dense((n, d_model, d_model))
        return (jnp.concatenate([wq, wk, wv], axis=-1),
                zeros((n, 1, 3 * d_model)))

    def ffn_weights(n):
        # Zero-pad the hidden dim to a lane-dense width; math is identical
        # (ReLU(0)=0 and padded w2 rows are zero).  d_model is NOT padded
        # (LayerNorm statistics would change).
        w1 = dense((n, d_model, feature_dim))
        w2 = dense((n, feature_dim, d_model))
        if ffn_pad > feature_dim:
            w1 = jnp.concatenate(
                [w1, jnp.zeros((n, d_model, ffn_pad - feature_dim), jnp.float32)],
                axis=-1)
            w2 = jnp.concatenate(
                [w2, jnp.zeros((n, ffn_pad - feature_dim, d_model), jnp.float32)],
                axis=1)
        return w1, zeros((n, 1, ffn_pad)), w2, zeros((n, 1, d_model))

    enc_wqkv, enc_bqkv = qkv_weights(n_enc)
    e_w1, e_b1, e_w2, e_b2 = ffn_weights(n_enc)
    enc = dict(
        wqkv=enc_wqkv, bqkv=enc_bqkv,
        wo=dense((n_enc, d_model, d_model)), bo=zeros((n_enc, 1, d_model)),
        ln1_g=ones((n_enc, 1, d_model)), ln1_b=zeros((n_enc, 1, d_model)),
        w1=e_w1, b1=e_b1, w2=e_w2, b2=e_b2,
        ln2_g=ones((n_enc, 1, d_model)), ln2_b=zeros((n_enc, 1, d_model)),
    )

    dec_swqkv, dec_sbqkv = qkv_weights(n_dec)
    d_w1, d_b1, d_w2, d_b2 = ffn_weights(n_dec)
    dec = dict(
        swqkv=dec_swqkv, sbqkv=dec_sbqkv,
        swo=dense((n_dec, d_model, d_model)), sbo=zeros((n_dec, 1, d_model)),
        ln1_g=ones((n_dec, 1, d_model)), ln1_b=zeros((n_dec, 1, d_model)),
        cwq=dense((n_dec, d_model, d_model)) * q_scale,
        cbq=zeros((n_dec, 1, d_model)),
        cwkv=jnp.concatenate([dense((n_dec, d_model, d_model)),
                              dense((n_dec, d_model, d_model))], axis=-1),
        cbkv=zeros((n_dec, 1, 2 * d_model)),
        cwo=dense((n_dec, d_model, d_model)), cbo=zeros((n_dec, 1, d_model)),
        ln2_g=ones((n_dec, 1, d_model)), ln2_b=zeros((n_dec, 1, d_model)),
        w1=d_w1, b1=d_b1, w2=d_w2, b2=d_b2,
        ln3_g=ones((n_dec, 1, d_model)), ln3_b=zeros((n_dec, 1, d_model)),
    )

    # vocab projection, zero-padded to a lane-dense width (multiple of 128)
    out_w = dense((d_model, vocab_size))
    out_w = jnp.concatenate(
        [out_w, jnp.zeros((d_model, vocab_pad - vocab_size), jnp.float32)], axis=-1)
    out_b = jnp.zeros((1, vocab_pad), jnp.float32)

    return dict(
        enc_emb=dense((vocab_size, d_model)),
        dec_emb=dense((vocab_size, d_model)),
        pos_enc=sinusoidal_pe(max_len, d_model),
        enc=enc, dec=dec,
        out_w=out_w, out_b=out_b,
    )


# ----------------------------------------------------------------------------
# Main
# ----------------------------------------------------------------------------
if __name__ == "__main__":
    vocab_size = 16
    d_model = 32          # input_dim
    num_heads = 4
    num_encoder_layers = 2
    num_decoder_layers = 2
    feature_dim = 64
    max_len = 16
    B, S_src, S_tgt = 2, 8, 8
    VOCAB_PAD = 128       # lane-dense logits width inside the kernel
    FFN_PAD = 128         # lane-dense FFN hidden width inside the kernel

    root = jax.random.PRNGKey(0)
    k_param, k_src, k_tgt = jax.random.split(root, 3)

    params = init_params(k_param, vocab_size, d_model, num_heads,
                         num_encoder_layers, num_decoder_layers,
                         feature_dim, max_len, VOCAB_PAD, FFN_PAD)

    src = jax.random.randint(k_src, (B, S_src), 0, vocab_size, dtype=jnp.int32)
    tgt = jax.random.randint(k_tgt, (B, S_tgt), 0, vocab_size, dtype=jnp.int32)

    # Base additive masks: src unmasked, decoder self-attention is causal.
    src_base = jnp.zeros((S_src, S_src), jnp.float32)
    causal = jnp.tril(jnp.ones((S_tgt, S_tgt), jnp.bool_))
    tgt_base = jnp.where(causal, 0.0, -1e9).astype(jnp.float32)
    cross_base = jnp.zeros((S_tgt, S_src), jnp.float32)

    # Block-diagonal expansions matching the kernel's head-major sublane fold.
    enc_mask = build_block_mask(src_base, B, num_heads)
    self_mask = build_block_mask(tgt_base, B, num_heads)
    cross_mask = build_block_mask(cross_base, B, num_heads)

    fwd = jax.jit(functools.partial(transformer_forward,
                                    num_heads=num_heads, vocab_size=vocab_size))
    logits = fwd(params, src, tgt, enc_mask, self_mask, cross_mask)
    logits = jax.block_until_ready(logits)

    assert logits.shape == (B, S_tgt, vocab_size)
    assert bool(jnp.all(jnp.isfinite(logits)))
    print("KERNEL_OK")
</pallas_src>

<mosaic_0001>
module attributes {stable_mosaic.version = 11 : i64} {
  func.func @_transformer_kernel(%arg0: memref<16x32xf32, #tpu.memory_space<vmem>>, %arg1: memref<16x32xf32, #tpu.memory_space<vmem>>, %arg2: memref<64x64xf32, #tpu.memory_space<vmem>>, %arg3: memref<64x64xf32, #tpu.memory_space<vmem>>, %arg4: memref<64x64xf32, #tpu.memory_space<vmem>>, %arg5: memref<2x32x96xf32, #tpu.memory_space<vmem>>, %arg6: memref<2x1x96xf32, #tpu.memory_space<vmem>>, %arg7: memref<2x32x32xf32, #tpu.memory_space<vmem>>, %arg8: memref<2x1x32xf32, #tpu.memory_space<vmem>>, %arg9: memref<2x1x32xf32, #tpu.memory_space<vmem>>, %arg10: memref<2x1x32xf32, #tpu.memory_space<vmem>>, %arg11: memref<2x32x128xf32, #tpu.memory_space<vmem>>, %arg12: memref<2x1x128xf32, #tpu.memory_space<vmem>>, %arg13: memref<2x128x32xf32, #tpu.memory_space<vmem>>, %arg14: memref<2x1x32xf32, #tpu.memory_space<vmem>>, %arg15: memref<2x1x32xf32, #tpu.memory_space<vmem>>, %arg16: memref<2x1x32xf32, #tpu.memory_space<vmem>>, %arg17: memref<2x32x96xf32, #tpu.memory_space<vmem>>, %arg18: memref<2x1x96xf32, #tpu.memory_space<vmem>>, %arg19: memref<2x32x32xf32, #tpu.memory_space<vmem>>, %arg20: memref<2x1x32xf32, #tpu.memory_space<vmem>>, %arg21: memref<2x1x32xf32, #tpu.memory_space<vmem>>, %arg22: memref<2x1x32xf32, #tpu.memory_space<vmem>>, %arg23: memref<2x32x32xf32, #tpu.memory_space<vmem>>, %arg24: memref<2x1x32xf32, #tpu.memory_space<vmem>>, %arg25: memref<2x32x64xf32, #tpu.memory_space<vmem>>, %arg26: memref<2x1x64xf32, #tpu.memory_space<vmem>>, %arg27: memref<2x32x32xf32, #tpu.memory_space<vmem>>, %arg28: memref<2x1x32xf32, #tpu.memory_space<vmem>>, %arg29: memref<2x1x32xf32, #tpu.memory_space<vmem>>, %arg30: memref<2x1x32xf32, #tpu.memory_space<vmem>>, %arg31: memref<2x32x128xf32, #tpu.memory_space<vmem>>, %arg32: memref<2x1x128xf32, #tpu.memory_space<vmem>>, %arg33: memref<2x128x32xf32, #tpu.memory_space<vmem>>, %arg34: memref<2x1x32xf32, #tpu.memory_space<vmem>>, %arg35: memref<2x1x32xf32, #tpu.memory_space<vmem>>, %arg36: memref<2x1x32xf32, #tpu.memory_space<vmem>>, %arg37: memref<32x128xf32, #tpu.memory_space<vmem>>, %arg38: memref<1x128xf32, #tpu.memory_space<vmem>>, %arg39: memref<16x128xf32, #tpu.memory_space<vmem>>) attributes {dimension_semantics = [], scalar_prefetch = 0 : i64, scratch_operands = 0 : i64, tpu.core_type = #tpu.core_type<tc>} {
    %c0 = arith.constant 0 : index
    %c0_0 = arith.constant 0 : index
    %0 = vector.load %arg0[%c0, %c0_0] : memref<16x32xf32, #tpu.memory_space<vmem>>, vector<16x32xf32>
    %c0_1 = arith.constant 0 : index
    %c0_2 = arith.constant 0 : index
    %1 = vector.load %arg2[%c0_1, %c0_2] : memref<64x64xf32, #tpu.memory_space<vmem>>, vector<64x64xf32>
    %c0_3 = arith.constant 0 : index
    %c0_4 = arith.constant 0 : index
    %c0_5 = arith.constant 0 : index
    %2 = vector.load %arg5[%c0_3, %c0_4, %c0_5] : memref<2x32x96xf32, #tpu.memory_space<vmem>>, vector<1x32x96xf32>
    %3 = vector.shape_cast %2 : vector<1x32x96xf32> to vector<32x96xf32>
    %cst = arith.constant dense<0.000000e+00> : vector<16x96xf32>
    %4 = tpu.matmul %0, %3, %cst {dimension_numbers = #tpu.dot_dimension_numbers<[1], [0], [0], [1], [0, 0, 1, 1], [], []>} : vector<16x32xf32>, vector<32x96xf32>, vector<16x96xf32> -> vector<16x96xf32>
    %c0_6 = arith.constant 0 : index
    %c0_7 = arith.constant 0 : index
    %c0_8 = arith.constant 0 : index
    %5 = vector.load %arg6[%c0_6, %c0_7, %c0_8] : memref<2x1x96xf32, #tpu.memory_space<vmem>>, vector<1x1x96xf32>
    %6 = vector.shape_cast %5 : vector<1x1x96xf32> to vector<1x96xf32>
    %7 = vector.broadcast %6 : vector<1x96xf32> to vector<16x96xf32>
    %8 = arith.addf %4, %7 : vector<16x96xf32>
    %9 = vector.extract_strided_slice %8 {offsets = [0, 0], sizes = [16, 32], strides = [1, 1]} : vector<16x96xf32> to vector<16x32xf32>
    %10 = vector.extract_strided_slice %8 {offsets = [0, 32], sizes = [16, 32], strides = [1, 1]} : vector<16x96xf32> to vector<16x32xf32>
    %11 = vector.extract_strided_slice %8 {offsets = [0, 64], sizes = [16, 32], strides = [1, 1]} : vector<16x96xf32> to vector<16x32xf32>
    %12 = vector.extract_strided_slice %9 {offsets = [0, 0], sizes = [16, 8], strides = [1, 1]} : vector<16x32xf32> to vector<16x8xf32>
    %13 = vector.extract_strided_slice %9 {offsets = [0, 8], sizes = [16, 8], strides = [1, 1]} : vector<16x32xf32> to vector<16x8xf32>
    %14 = vector.extract_strided_slice %9 {offsets = [0, 16], sizes = [16, 8], strides = [1, 1]} : vector<16x32xf32> to vector<16x8xf32>
    %15 = vector.extract_strided_slice %9 {offsets = [0, 24], sizes = [16, 8], strides = [1, 1]} : vector<16x32xf32> to vector<16x8xf32>
    %16 = tpu.concatenate %12, %13, %14, %15 in 0 : vector<16x8xf32>, vector<16x8xf32>, vector<16x8xf32>, vector<16x8xf32> -> vector<64x8xf32>
    %17 = vector.extract_strided_slice %10 {offsets = [0, 0], sizes = [16, 8], strides = [1, 1]} : vector<16x32xf32> to vector<16x8xf32>
    %18 = vector.extract_strided_slice %10 {offsets = [0, 8], sizes = [16, 8], strides = [1, 1]} : vector<16x32xf32> to vector<16x8xf32>
    %19 = vector.extract_strided_slice %10 {offsets = [0, 16], sizes = [16, 8], strides = [1, 1]} : vector<16x32xf32> to vector<16x8xf32>
    %20 = vector.extract_strided_slice %10 {offsets = [0, 24], sizes = [16, 8], strides = [1, 1]} : vector<16x32xf32> to vector<16x8xf32>
    %21 = tpu.concatenate %17, %18, %19, %20 in 0 : vector<16x8xf32>, vector<16x8xf32>, vector<16x8xf32>, vector<16x8xf32> -> vector<64x8xf32>
    %22 = vector.extract_strided_slice %11 {offsets = [0, 0], sizes = [16, 8], strides = [1, 1]} : vector<16x32xf32> to vector<16x8xf32>
    %23 = vector.extract_strided_slice %11 {offsets = [0, 8], sizes = [16, 8], strides = [1, 1]} : vector<16x32xf32> to vector<16x8xf32>
    %24 = vector.extract_strided_slice %11 {offsets = [0, 16], sizes = [16, 8], strides = [1, 1]} : vector<16x32xf32> to vector<16x8xf32>
    %25 = vector.extract_strided_slice %11 {offsets = [0, 24], sizes = [16, 8], strides = [1, 1]} : vector<16x32xf32> to vector<16x8xf32>
    %26 = tpu.concatenate %22, %23, %24, %25 in 0 : vector<16x8xf32>, vector<16x8xf32>, vector<16x8xf32>, vector<16x8xf32> -> vector<64x8xf32>
    %27 = tpu.transpose %21, [1, 0] : vector<64x8xf32> -> vector<8x64xf32>
    %cst_9 = arith.constant dense<0.000000e+00> : vector<64x64xf32>
    %28 = tpu.matmul %16, %27, %cst_9 {dimension_numbers = #tpu.dot_dimension_numbers<[1], [0], [0], [1], [0, 0, 1, 1], [], []>} : vector<64x8xf32>, vector<8x64xf32>, vector<64x64xf32> -> vector<64x64xf32>
    %29 = arith.addf %28, %1 : vector<64x64xf32>
    %cst_10 = arith.constant dense<0xFF800000> : vector<64xf32>
    %30 = vector.multi_reduction <maximumf>, %29, %cst_10 [1] : vector<64x64xf32> to vector<64xf32>
    %31 = vector.shape_cast %30 : vector<64xf32> to vector<64x1xf32>
    %32 = vector.broadcast %31 : vector<64x1xf32> to vector<64x64xf32>
    %33 = arith.subf %29, %32 : vector<64x64xf32>
    %34 = math.exp %33 : vector<64x64xf32>
    %cst_11 = arith.constant dense<0.000000e+00> : vector<64xf32>
    %35 = vector.multi_reduction <add>, %34, %cst_11 [1] : vector<64x64xf32> to vector<64xf32>
    %36 = vector.shape_cast %35 : vector<64xf32> to vector<64x1xf32>
    %37 = tpu.reciprocal %36 {approx = true} : vector<64x1xf32> -> vector<64x1xf32>
    %38 = vector.broadcast %37 : vector<64x1xf32> to vector<64x64xf32>
    %39 = arith.mulf %34, %38 : vector<64x64xf32>
    %cst_12 = arith.constant dense<0.000000e+00> : vector<64x8xf32>
    %40 = tpu.matmul %39, %26, %cst_12 {dimension_numbers = #tpu.dot_dimension_numbers<[1], [0], [0], [1], [0, 0, 1, 1], [], []>} : vector<64x64xf32>, vector<64x8xf32>, vector<64x8xf32> -> vector<64x8xf32>
    %41 = vector.extract_strided_slice %40 {offsets = [0, 0], sizes = [16, 8], strides = [1, 1]} : vector<64x8xf32> to vector<16x8xf32>
    %42 = vector.extract_strided_slice %40 {offsets = [16, 0], sizes = [16, 8], strides = [1, 1]} : vector<64x8xf32> to vector<16x8xf32>
    %43 = vector.extract_strided_slice %40 {offsets = [32, 0], sizes = [16, 8], strides = [1, 1]} : vector<64x8xf32> to vector<16x8xf32>
    %44 = vector.extract_strided_slice %40 {offsets = [48, 0], sizes = [16, 8], strides = [1, 1]} : vector<64x8xf32> to vector<16x8xf32>
    %45 = tpu.concatenate %41, %42, %43, %44 in 1 : vector<16x8xf32>, vector<16x8xf32>, vector<16x8xf32>, vector<16x8xf32> -> vector<16x32xf32>
    %c0_13 = arith.constant 0 : index
    %c0_14 = arith.constant 0 : index
    %c0_15 = arith.constant 0 : index
    %46 = vector.load %arg7[%c0_13, %c0_14, %c0_15] : memref<2x32x32xf32, #tpu.memory_space<vmem>>, vector<1x32x32xf32>
    %47 = vector.shape_cast %46 : vector<1x32x32xf32> to vector<32x32xf32>
    %cst_16 = arith.constant dense<0.000000e+00> : vector<16x32xf32>
    %48 = tpu.matmul %45, %47, %cst_16 {dimension_numbers = #tpu.dot_dimension_numbers<[1], [0], [0], [1], [0, 0, 1, 1], [], []>} : vector<16x32xf32>, vector<32x32xf32>, vector<16x32xf32> -> vector<16x32xf32>
    %c0_17 = arith.constant 0 : index
    %c0_18 = arith.constant 0 : index
    %c0_19 = arith.constant 0 : index
    %49 = vector.load %arg8[%c0_17, %c0_18, %c0_19] : memref<2x1x32xf32, #tpu.memory_space<vmem>>, vector<1x1x32xf32>
    %50 = vector.shape_cast %49 : vector<1x1x32xf32> to vector<1x32xf32>
    %51 = vector.broadcast %50 : vector<1x32xf32> to vector<16x32xf32>
    %52 = arith.addf %48, %51 : vector<16x32xf32>
    %53 = arith.addf %0, %52 : vector<16x32xf32>
    %c0_20 = arith.constant 0 : index
    %c0_21 = arith.constant 0 : index
    %c0_22 = arith.constant 0 : index
    %54 = vector.load %arg9[%c0_20, %c0_21, %c0_22] : memref<2x1x32xf32, #tpu.memory_space<vmem>>, vector<1x1x32xf32>
    %55 = vector.shape_cast %54 : vector<1x1x32xf32> to vector<1x32xf32>
    %c0_23 = arith.constant 0 : index
    %c0_24 = arith.constant 0 : index
    %c0_25 = arith.constant 0 : index
    %56 = vector.load %arg10[%c0_23, %c0_24, %c0_25] : memref<2x1x32xf32, #tpu.memory_space<vmem>>, vector<1x1x32xf32>
    %57 = vector.shape_cast %56 : vector<1x1x32xf32> to vector<1x32xf32>
    %cst_26 = arith.constant dense<0.000000e+00> : vector<16xf32>
    %58 = vector.multi_reduction <add>, %53, %cst_26 [1] : vector<16x32xf32> to vector<16xf32>
    %59 = vector.shape_cast %58 : vector<16xf32> to vector<16x1xf32>
    %cst_27 = arith.constant 3.200000e+01 : f32
    %60 = vector.broadcast %cst_27 : f32 to vector<16x1xf32>
    %61 = arith.divf %59, %60 : vector<16x1xf32>
    %62 = vector.broadcast %61 : vector<16x1xf32> to vector<16x32xf32>
    %63 = arith.subf %53, %62 : vector<16x32xf32>
    %64 = arith.mulf %63, %63 : vector<16x32xf32>
    %cst_28 = arith.constant dense<0.000000e+00> : vector<16xf32>
    %65 = vector.multi_reduction <add>, %64, %cst_28 [1] : vector<16x32xf32> to vector<16xf32>
    %66 = vector.shape_cast %65 : vector<16xf32> to vector<16x1xf32>
    %cst_29 = arith.constant 3.200000e+01 : f32
    %67 = vector.broadcast %cst_29 : f32 to vector<16x1xf32>
    %68 = arith.divf %66, %67 : vector<16x1xf32>
    %69 = vector.broadcast %61 : vector<16x1xf32> to vector<16x32xf32>
    %70 = arith.subf %53, %69 : vector<16x32xf32>
    %cst_30 = arith.constant 9.99999974E-6 : f32
    %71 = vector.broadcast %cst_30 : f32 to vector<16x1xf32>
    %72 = arith.addf %68, %71 : vector<16x1xf32>
    %73 = math.rsqrt %72 : vector<16x1xf32>
    %74 = vector.broadcast %73 : vector<16x1xf32> to vector<16x32xf32>
    %75 = arith.mulf %70, %74 : vector<16x32xf32>
    %76 = vector.broadcast %55 : vector<1x32xf32> to vector<16x32xf32>
    %77 = arith.mulf %75, %76 : vector<16x32xf32>
    %78 = vector.broadcast %57 : vector<1x32xf32> to vector<16x32xf32>
    %79 = arith.addf %77, %78 : vector<16x32xf32>
    %c0_31 = arith.constant 0 : index
    %c0_32 = arith.constant 0 : index
    %c0_33 = arith.constant 0 : index
    %80 = vector.load %arg11[%c0_31, %c0_32, %c0_33] : memref<2x32x128xf32, #tpu.memory_space<vmem>>, vector<1x32x128xf32>
    %81 = vector.shape_cast %80 : vector<1x32x128xf32> to vector<32x128xf32>
    %c0_34 = arith.constant 0 : index
    %c0_35 = arith.constant 0 : index
    %c0_36 = arith.constant 0 : index
    %82 = vector.load %arg12[%c0_34, %c0_35, %c0_36] : memref<2x1x128xf32, #tpu.memory_space<vmem>>, vector<1x1x128xf32>
    %83 = vector.shape_cast %82 : vector<1x1x128xf32> to vector<1x128xf32>
    %c0_37 = arith.constant 0 : index
    %c0_38 = arith.constant 0 : index
    %c0_39 = arith.constant 0 : index
    %84 = vector.load %arg13[%c0_37, %c0_38, %c0_39] : memref<2x128x32xf32, #tpu.memory_space<vmem>>, vector<1x128x32xf32>
    %85 = vector.shape_cast %84 : vector<1x128x32xf32> to vector<128x32xf32>
    %c0_40 = arith.constant 0 : index
    %c0_41 = arith.constant 0 : index
    %c0_42 = arith.constant 0 : index
    %86 = vector.load %arg14[%c0_40, %c0_41, %c0_42] : memref<2x1x32xf32, #tpu.memory_space<vmem>>, vector<1x1x32xf32>
    %87 = vector.shape_cast %86 : vector<1x1x32xf32> to vector<1x32xf32>
    %cst_43 = arith.constant dense<0.000000e+00> : vector<16x128xf32>
    %88 = tpu.matmul %79, %81, %cst_43 {dimension_numbers = #tpu.dot_dimension_numbers<[1], [0], [0], [1], [0, 0, 1, 1], [], []>} : vector<16x32xf32>, vector<32x128xf32>, vector<16x128xf32> -> vector<16x128xf32>
    %89 = vector.broadcast %83 : vector<1x128xf32> to vector<16x128xf32>
    %90 = arith.addf %88, %89 : vector<16x128xf32>
    %cst_44 = arith.constant 0.000000e+00 : f32
    %91 = vector.broadcast %cst_44 : f32 to vector<16x128xf32>
    %92 = arith.maximumf %90, %91 : vector<16x128xf32>
    %cst_45 = arith.constant dense<0.000000e+00> : vector<16x32xf32>
    %93 = tpu.matmul %92, %85, %cst_45 {dimension_numbers = #tpu.dot_dimension_numbers<[1], [0], [0], [1], [0, 0, 1, 1], [], []>} : vector<16x128xf32>, vector<128x32xf32>, vector<16x32xf32> -> vector<16x32xf32>
    %94 = vector.broadcast %87 : vector<1x32xf32> to vector<16x32xf32>
    %95 = arith.addf %93, %94 : vector<16x32xf32>
    %96 = arith.addf %79, %95 : vector<16x32xf32>
    %c0_46 = arith.constant 0 : index
    %c0_47 = arith.constant 0 : index
    %c0_48 = arith.constant 0 : index
    %97 = vector.load %arg15[%c0_46, %c0_47, %c0_48] : memref<2x1x32xf32, #tpu.memory_space<vmem>>, vector<1x1x32xf32>
    %98 = vector.shape_cast %97 : vector<1x1x32xf32> to vector<1x32xf32>
    %c0_49 = arith.constant 0 : index
    %c0_50 = arith.constant 0 : index
    %c0_51 = arith.constant 0 : index
    %99 = vector.load %arg16[%c0_49, %c0_50, %c0_51] : memref<2x1x32xf32, #tpu.memory_space<vmem>>, vector<1x1x32xf32>
    %100 = vector.shape_cast %99 : vector<1x1x32xf32> to vector<1x32xf32>
    %cst_52 = arith.constant dense<0.000000e+00> : vector<16xf32>
    %101 = vector.multi_reduction <add>, %96, %cst_52 [1] : vector<16x32xf32> to vector<16xf32>
    %102 = vector.shape_cast %101 : vector<16xf32> to vector<16x1xf32>
    %cst_53 = arith.constant 3.200000e+01 : f32
    %103 = vector.broadcast %cst_53 : f32 to vector<16x1xf32>
    %104 = arith.divf %102, %103 : vector<16x1xf32>
    %105 = vector.broadcast %104 : vector<16x1xf32> to vector<16x32xf32>
    %106 = arith.subf %96, %105 : vector<16x32xf32>
    %107 = arith.mulf %106, %106 : vector<16x32xf32>
    %cst_54 = arith.constant dense<0.000000e+00> : vector<16xf32>
    %108 = vector.multi_reduction <add>, %107, %cst_54 [1] : vector<16x32xf32> to vector<16xf32>
    %109 = vector.shape_cast %108 : vector<16xf32> to vector<16x1xf32>
    %cst_55 = arith.constant 3.200000e+01 : f32
    %110 = vector.broadcast %cst_55 : f32 to vector<16x1xf32>
    %111 = arith.divf %109, %110 : vector<16x1xf32>
    %112 = vector.broadcast %104 : vector<16x1xf32> to vector<16x32xf32>
    %113 = arith.subf %96, %112 : vector<16x32xf32>
    %cst_56 = arith.constant 9.99999974E-6 : f32
    %114 = vector.broadcast %cst_56 : f32 to vector<16x1xf32>
    %115 = arith.addf %111, %114 : vector<16x1xf32>
    %116 = math.rsqrt %115 : vector<16x1xf32>
    %117 = vector.broadcast %116 : vector<16x1xf32> to vector<16x32xf32>
    %118 = arith.mulf %113, %117 : vector<16x32xf32>
    %119 = vector.broadcast %98 : vector<1x32xf32> to vector<16x32xf32>
    %120 = arith.mulf %118, %119 : vector<16x32xf32>
    %121 = vector.broadcast %100 : vector<1x32xf32> to vector<16x32xf32>
    %122 = arith.addf %120, %121 : vector<16x32xf32>
    %c1 = arith.constant 1 : index
    %c0_57 = arith.constant 0 : index
    %c0_58 = arith.constant 0 : index
    %123 = vector.load %arg5[%c1, %c0_57, %c0_58] : memref<2x32x96xf32, #tpu.memory_space<vmem>>, vector<1x32x96xf32>
    %124 = vector.shape_cast %123 : vector<1x32x96xf32> to vector<32x96xf32>
    %cst_59 = arith.constant dense<0.000000e+00> : vector<16x96xf32>
    %125 = tpu.matmul %122, %124, %cst_59 {dimension_numbers = #tpu.dot_dimension_numbers<[1], [0], [0], [1], [0, 0, 1, 1], [], []>} : vector<16x32xf32>, vector<32x96xf32>, vector<16x96xf32> -> vector<16x96xf32>
    %c1_60 = arith.constant 1 : index
    %c0_61 = arith.constant 0 : index
    %c0_62 = arith.constant 0 : index
    %126 = vector.load %arg6[%c1_60, %c0_61, %c0_62] : memref<2x1x96xf32, #tpu.memory_space<vmem>>, vector<1x1x96xf32>
    %127 = vector.shape_cast %126 : vector<1x1x96xf32> to vector<1x96xf32>
    %128 = vector.broadcast %127 : vector<1x96xf32> to vector<16x96xf32>
    %129 = arith.addf %125, %128 : vector<16x96xf32>
    %130 = vector.extract_strided_slice %129 {offsets = [0, 0], sizes = [16, 32], strides = [1, 1]} : vector<16x96xf32> to vector<16x32xf32>
    %131 = vector.extract_strided_slice %129 {offsets = [0, 32], sizes = [16, 32], strides = [1, 1]} : vector<16x96xf32> to vector<16x32xf32>
    %132 = vector.extract_strided_slice %129 {offsets = [0, 64], sizes = [16, 32], strides = [1, 1]} : vector<16x96xf32> to vector<16x32xf32>
    %133 = vector.extract_strided_slice %130 {offsets = [0, 0], sizes = [16, 8], strides = [1, 1]} : vector<16x32xf32> to vector<16x8xf32>
    %134 = vector.extract_strided_slice %130 {offsets = [0, 8], sizes = [16, 8], strides = [1, 1]} : vector<16x32xf32> to vector<16x8xf32>
    %135 = vector.extract_strided_slice %130 {offsets = [0, 16], sizes = [16, 8], strides = [1, 1]} : vector<16x32xf32> to vector<16x8xf32>
    %136 = vector.extract_strided_slice %130 {offsets = [0, 24], sizes = [16, 8], strides = [1, 1]} : vector<16x32xf32> to vector<16x8xf32>
    %137 = tpu.concatenate %133, %134, %135, %136 in 0 : vector<16x8xf32>, vector<16x8xf32>, vector<16x8xf32>, vector<16x8xf32> -> vector<64x8xf32>
    %138 = vector.extract_strided_slice %131 {offsets = [0, 0], sizes = [16, 8], strides = [1, 1]} : vector<16x32xf32> to vector<16x8xf32>
    %139 = vector.extract_strided_slice %131 {offsets = [0, 8], sizes = [16, 8], strides = [1, 1]} : vector<16x32xf32> to vector<16x8xf32>
    %140 = vector.extract_strided_slice %131 {offsets = [0, 16], sizes = [16, 8], strides = [1, 1]} : vector<16x32xf32> to vector<16x8xf32>
    %141 = vector.extract_strided_slice %131 {offsets = [0, 24], sizes = [16, 8], strides = [1, 1]} : vector<16x32xf32> to vector<16x8xf32>
    %142 = tpu.concatenate %138, %139, %140, %141 in 0 : vector<16x8xf32>, vector<16x8xf32>, vector<16x8xf32>, vector<16x8xf32> -> vector<64x8xf32>
    %143 = vector.extract_strided_slice %132 {offsets = [0, 0], sizes = [16, 8], strides = [1, 1]} : vector<16x32xf32> to vector<16x8xf32>
    %144 = vector.extract_strided_slice %132 {offsets = [0, 8], sizes = [16, 8], strides = [1, 1]} : vector<16x32xf32> to vector<16x8xf32>
    %145 = vector.extract_strided_slice %132 {offsets = [0, 16], sizes = [16, 8], strides = [1, 1]} : vector<16x32xf32> to vector<16x8xf32>
    %146 = vector.extract_strided_slice %132 {offsets = [0, 24], sizes = [16, 8], strides = [1, 1]} : vector<16x32xf32> to vector<16x8xf32>
    %147 = tpu.concatenate %143, %144, %145, %146 in 0 : vector<16x8xf32>, vector<16x8xf32>, vector<16x8xf32>, vector<16x8xf32> -> vector<64x8xf32>
    %148 = tpu.transpose %142, [1, 0] : vector<64x8xf32> -> vector<8x64xf32>
    %cst_63 = arith.constant dense<0.000000e+00> : vector<64x64xf32>
    %149 = tpu.matmul %137, %148, %cst_63 {dimension_numbers = #tpu.dot_dimension_numbers<[1], [0], [0], [1], [0, 0, 1, 1], [], []>} : vector<64x8xf32>, vector<8x64xf32>, vector<64x64xf32> -> vector<64x64xf32>
    %150 = arith.addf %149, %1 : vector<64x64xf32>
    %cst_64 = arith.constant dense<0xFF800000> : vector<64xf32>
    %151 = vector.multi_reduction <maximumf>, %150, %cst_64 [1] : vector<64x64xf32> to vector<64xf32>
    %152 = vector.shape_cast %151 : vector<64xf32> to vector<64x1xf32>
    %153 = vector.broadcast %152 : vector<64x1xf32> to vector<64x64xf32>
    %154 = arith.subf %150, %153 : vector<64x64xf32>
    %155 = math.exp %154 : vector<64x64xf32>
    %cst_65 = arith.constant dense<0.000000e+00> : vector<64xf32>
    %156 = vector.multi_reduction <add>, %155, %cst_65 [1] : vector<64x64xf32> to vector<64xf32>
    %157 = vector.shape_cast %156 : vector<64xf32> to vector<64x1xf32>
    %158 = tpu.reciprocal %157 {approx = true} : vector<64x1xf32> -> vector<64x1xf32>
    %159 = vector.broadcast %158 : vector<64x1xf32> to vector<64x64xf32>
    %160 = arith.mulf %155, %159 : vector<64x64xf32>
    %cst_66 = arith.constant dense<0.000000e+00> : vector<64x8xf32>
    %161 = tpu.matmul %160, %147, %cst_66 {dimension_numbers = #tpu.dot_dimension_numbers<[1], [0], [0], [1], [0, 0, 1, 1], [], []>} : vector<64x64xf32>, vector<64x8xf32>, vector<64x8xf32> -> vector<64x8xf32>
    %162 = vector.extract_strided_slice %161 {offsets = [0, 0], sizes = [16, 8], strides = [1, 1]} : vector<64x8xf32> to vector<16x8xf32>
    %163 = vector.extract_strided_slice %161 {offsets = [16, 0], sizes = [16, 8], strides = [1, 1]} : vector<64x8xf32> to vector<16x8xf32>
    %164 = vector.extract_strided_slice %161 {offsets = [32, 0], sizes = [16, 8], strides = [1, 1]} : vector<64x8xf32> to vector<16x8xf32>
    %165 = vector.extract_strided_slice %161 {offsets = [48, 0], sizes = [16, 8], strides = [1, 1]} : vector<64x8xf32> to vector<16x8xf32>
    %166 = tpu.concatenate %162, %163, %164, %165 in 1 : vector<16x8xf32>, vector<16x8xf32>, vector<16x8xf32>, vector<16x8xf32> -> vector<16x32xf32>
    %c1_67 = arith.constant 1 : index
    %c0_68 = arith.constant 0 : index
    %c0_69 = arith.constant 0 : index
    %167 = vector.load %arg7[%c1_67, %c0_68, %c0_69] : memref<2x32x32xf32, #tpu.memory_space<vmem>>, vector<1x32x32xf32>
    %168 = vector.shape_cast %167 : vector<1x32x32xf32> to vector<32x32xf32>
    %cst_70 = arith.constant dense<0.000000e+00> : vector<16x32xf32>
    %169 = tpu.matmul %166, %168, %cst_70 {dimension_numbers = #tpu.dot_dimension_numbers<[1], [0], [0], [1], [0, 0, 1, 1], [], []>} : vector<16x32xf32>, vector<32x32xf32>, vector<16x32xf32> -> vector<16x32xf32>
    %c1_71 = arith.constant 1 : index
    %c0_72 = arith.constant 0 : index
    %c0_73 = arith.constant 0 : index
    %170 = vector.load %arg8[%c1_71, %c0_72, %c0_73] : memref<2x1x32xf32, #tpu.memory_space<vmem>>, vector<1x1x32xf32>
    %171 = vector.shape_cast %170 : vector<1x1x32xf32> to vector<1x32xf32>
    %172 = vector.broadcast %171 : vector<1x32xf32> to vector<16x32xf32>
    %173 = arith.addf %169, %172 : vector<16x32xf32>
    %174 = arith.addf %122, %173 : vector<16x32xf32>
    %c1_74 = arith.constant 1 : index
    %c0_75 = arith.constant 0 : index
    %c0_76 = arith.constant 0 : index
    %175 = vector.load %arg9[%c1_74, %c0_75, %c0_76] : memref<2x1x32xf32, #tpu.memory_space<vmem>>, vector<1x1x32xf32>
    %176 = vector.shape_cast %175 : vector<1x1x32xf32> to vector<1x32xf32>
    %c1_77 = arith.constant 1 : index
    %c0_78 = arith.constant 0 : index
    %c0_79 = arith.constant 0 : index
    %177 = vector.load %arg10[%c1_77, %c0_78, %c0_79] : memref<2x1x32xf32, #tpu.memory_space<vmem>>, vector<1x1x32xf32>
    %178 = vector.shape_cast %177 : vector<1x1x32xf32> to vector<1x32xf32>
    %cst_80 = arith.constant dense<0.000000e+00> : vector<16xf32>
    %179 = vector.multi_reduction <add>, %174, %cst_80 [1] : vector<16x32xf32> to vector<16xf32>
    %180 = vector.shape_cast %179 : vector<16xf32> to vector<16x1xf32>
    %cst_81 = arith.constant 3.200000e+01 : f32
    %181 = vector.broadcast %cst_81 : f32 to vector<16x1xf32>
    %182 = arith.divf %180, %181 : vector<16x1xf32>
    %183 = vector.broadcast %182 : vector<16x1xf32> to vector<16x32xf32>
    %184 = arith.subf %174, %183 : vector<16x32xf32>
    %185 = arith.mulf %184, %184 : vector<16x32xf32>
    %cst_82 = arith.constant dense<0.000000e+00> : vector<16xf32>
    %186 = vector.multi_reduction <add>, %185, %cst_82 [1] : vector<16x32xf32> to vector<16xf32>
    %187 = vector.shape_cast %186 : vector<16xf32> to vector<16x1xf32>
    %cst_83 = arith.constant 3.200000e+01 : f32
    %188 = vector.broadcast %cst_83 : f32 to vector<16x1xf32>
    %189 = arith.divf %187, %188 : vector<16x1xf32>
    %190 = vector.broadcast %182 : vector<16x1xf32> to vector<16x32xf32>
    %191 = arith.subf %174, %190 : vector<16x32xf32>
    %cst_84 = arith.constant 9.99999974E-6 : f32
    %192 = vector.broadcast %cst_84 : f32 to vector<16x1xf32>
    %193 = arith.addf %189, %192 : vector<16x1xf32>
    %194 = math.rsqrt %193 : vector<16x1xf32>
    %195 = vector.broadcast %194 : vector<16x1xf32> to vector<16x32xf32>
    %196 = arith.mulf %191, %195 : vector<16x32xf32>
    %197 = vector.broadcast %176 : vector<1x32xf32> to vector<16x32xf32>
    %198 = arith.mulf %196, %197 : vector<16x32xf32>
    %199 = vector.broadcast %178 : vector<1x32xf32> to vector<16x32xf32>
    %200 = arith.addf %198, %199 : vector<16x32xf32>
    %c1_85 = arith.constant 1 : index
    %c0_86 = arith.constant 0 : index
    %c0_87 = arith.constant 0 : index
    %201 = vector.load %arg11[%c1_85, %c0_86, %c0_87] : memref<2x32x128xf32, #tpu.memory_space<vmem>>, vector<1x32x128xf32>
    %202 = vector.shape_cast %201 : vector<1x32x128xf32> to vector<32x128xf32>
    %c1_88 = arith.constant 1 : index
    %c0_89 = arith.constant 0 : index
    %c0_90 = arith.constant 0 : index
    %203 = vector.load %arg12[%c1_88, %c0_89, %c0_90] : memref<2x1x128xf32, #tpu.memory_space<vmem>>, vector<1x1x128xf32>
    %204 = vector.shape_cast %203 : vector<1x1x128xf32> to vector<1x128xf32>
    %c1_91 = arith.constant 1 : index
    %c0_92 = arith.constant 0 : index
    %c0_93 = arith.constant 0 : index
    %205 = vector.load %arg13[%c1_91, %c0_92, %c0_93] : memref<2x128x32xf32, #tpu.memory_space<vmem>>, vector<1x128x32xf32>
    %206 = vector.shape_cast %205 : vector<1x128x32xf32> to vector<128x32xf32>
    %c1_94 = arith.constant 1 : index
    %c0_95 = arith.constant 0 : index
    %c0_96 = arith.constant 0 : index
    %207 = vector.load %arg14[%c1_94, %c0_95, %c0_96] : memref<2x1x32xf32, #tpu.memory_space<vmem>>, vector<1x1x32xf32>
    %208 = vector.shape_cast %207 : vector<1x1x32xf32> to vector<1x32xf32>
    %cst_97 = arith.constant dense<0.000000e+00> : vector<16x128xf32>
    %209 = tpu.matmul %200, %202, %cst_97 {dimension_numbers = #tpu.dot_dimension_numbers<[1], [0], [0], [1], [0, 0, 1, 1], [], []>} : vector<16x32xf32>, vector<32x128xf32>, vector<16x128xf32> -> vector<16x128xf32>
    %210 = vector.broadcast %204 : vector<1x128xf32> to vector<16x128xf32>
    %211 = arith.addf %209, %210 : vector<16x128xf32>
    %cst_98 = arith.constant 0.000000e+00 : f32
    %212 = vector.broadcast %cst_98 : f32 to vector<16x128xf32>
    %213 = arith.maximumf %211, %212 : vector<16x128xf32>
    %cst_99 = arith.constant dense<0.000000e+00> : vector<16x32xf32>
    %214 = tpu.matmul %213, %206, %cst_99 {dimension_numbers = #tpu.dot_dimension_numbers<[1], [0], [0], [1], [0, 0, 1, 1], [], []>} : vector<16x128xf32>, vector<128x32xf32>, vector<16x32xf32> -> vector<16x32xf32>
    %215 = vector.broadcast %208 : vector<1x32xf32> to vector<16x32xf32>
    %216 = arith.addf %214, %215 : vector<16x32xf32>
    %217 = arith.addf %200, %216 : vector<16x32xf32>
    %c1_100 = arith.constant 1 : index
    %c0_101 = arith.constant 0 : index
    %c0_102 = arith.constant 0 : index
    %218 = vector.load %arg15[%c1_100, %c0_101, %c0_102] : memref<2x1x32xf32, #tpu.memory_space<vmem>>, vector<1x1x32xf32>
    %219 = vector.shape_cast %218 : vector<1x1x32xf32> to vector<1x32xf32>
    %c1_103 = arith.constant 1 : index
    %c0_104 = arith.constant 0 : index
    %c0_105 = arith.constant 0 : index
    %220 = vector.load %arg16[%c1_103, %c0_104, %c0_105] : memref<2x1x32xf32, #tpu.memory_space<vmem>>, vector<1x1x32xf32>
    %221 = vector.shape_cast %220 : vector<1x1x32xf32> to vector<1x32xf32>
    %cst_106 = arith.constant dense<0.000000e+00> : vector<16xf32>
    %222 = vector.multi_reduction <add>, %217, %cst_106 [1] : vector<16x32xf32> to vector<16xf32>
    %223 = vector.shape_cast %222 : vector<16xf32> to vector<16x1xf32>
    %cst_107 = arith.constant 3.200000e+01 : f32
    %224 = vector.broadcast %cst_107 : f32 to vector<16x1xf32>
    %225 = arith.divf %223, %224 : vector<16x1xf32>
    %226 = vector.broadcast %225 : vector<16x1xf32> to vector<16x32xf32>
    %227 = arith.subf %217, %226 : vector<16x32xf32>
    %228 = arith.mulf %227, %227 : vector<16x32xf32>
    %cst_108 = arith.constant dense<0.000000e+00> : vector<16xf32>
    %229 = vector.multi_reduction <add>, %228, %cst_108 [1] : vector<16x32xf32> to vector<16xf32>
    %230 = vector.shape_cast %229 : vector<16xf32> to vector<16x1xf32>
    %cst_109 = arith.constant 3.200000e+01 : f32
    %231 = vector.broadcast %cst_109 : f32 to vector<16x1xf32>
    %232 = arith.divf %230, %231 : vector<16x1xf32>
    %233 = vector.broadcast %225 : vector<16x1xf32> to vector<16x32xf32>
    %234 = arith.subf %217, %233 : vector<16x32xf32>
    %cst_110 = arith.constant 9.99999974E-6 : f32
    %235 = vector.broadcast %cst_110 : f32 to vector<16x1xf32>
    %236 = arith.addf %232, %235 : vector<16x1xf32>
    %237 = math.rsqrt %236 : vector<16x1xf32>
    %238 = vector.broadcast %237 : vector<16x1xf32> to vector<16x32xf32>
    %239 = arith.mulf %234, %238 : vector<16x32xf32>
    %240 = vector.broadcast %219 : vector<1x32xf32> to vector<16x32xf32>
    %241 = arith.mulf %239, %240 : vector<16x32xf32>
    %242 = vector.broadcast %221 : vector<1x32xf32> to vector<16x32xf32>
    %243 = arith.addf %241, %242 : vector<16x32xf32>
    %c0_111 = arith.constant 0 : index
    %c0_112 = arith.constant 0 : index
    %244 = vector.load %arg1[%c0_111, %c0_112] : memref<16x32xf32, #tpu.memory_space<vmem>>, vector<16x32xf32>
    %c0_113 = arith.constant 0 : index
    %c0_114 = arith.constant 0 : index
    %245 = vector.load %arg3[%c0_113, %c0_114] : memref<64x64xf32, #tpu.memory_space<vmem>>, vector<64x64xf32>
    %c0_115 = arith.constant 0 : index
    %c0_116 = arith.constant 0 : index
    %246 = vector.load %arg4[%c0_115, %c0_116] : memref<64x64xf32, #tpu.memory_space<vmem>>, vector<64x64xf32>
    %c0_117 = arith.constant 0 : index
    %c0_118 = arith.constant 0 : index
    %c0_119 = arith.constant 0 : index
    %247 = vector.load %arg17[%c0_117, %c0_118, %c0_119] : memref<2x32x96xf32, #tpu.memory_space<vmem>>, vector<1x32x96xf32>
    %248 = vector.shape_cast %247 : vector<1x32x96xf32> to vector<32x96xf32>
    %cst_120 = arith.constant dense<0.000000e+00> : vector<16x96xf32>
    %249 = tpu.matmul %244, %248, %cst_120 {dimension_numbers = #tpu.dot_dimension_numbers<[1], [0], [0], [1], [0, 0, 1, 1], [], []>} : vector<16x32xf32>, vector<32x96xf32>, vector<16x96xf32> -> vector<16x96xf32>
    %c0_121 = arith.constant 0 : index
    %c0_122 = arith.constant 0 : index
    %c0_123 = arith.constant 0 : index
    %250 = vector.load %arg18[%c0_121, %c0_122, %c0_123] : memref<2x1x96xf32, #tpu.memory_space<vmem>>, vector<1x1x96xf32>
    %251 = vector.shape_cast %250 : vector<1x1x96xf32> to vector<1x96xf32>
    %252 = vector.broadcast %251 : vector<1x96xf32> to vector<16x96xf32>
    %253 = arith.addf %249, %252 : vector<16x96xf32>
    %254 = vector.extract_strided_slice %253 {offsets = [0, 0], sizes = [16, 32], strides = [1, 1]} : vector<16x96xf32> to vector<16x32xf32>
    %255 = vector.extract_strided_slice %253 {offsets = [0, 32], sizes = [16, 32], strides = [1, 1]} : vector<16x96xf32> to vector<16x32xf32>
    %256 = vector.extract_strided_slice %253 {offsets = [0, 64], sizes = [16, 32], strides = [1, 1]} : vector<16x96xf32> to vector<16x32xf32>
    %257 = vector.extract_strided_slice %254 {offsets = [0, 0], sizes = [16, 8], strides = [1, 1]} : vector<16x32xf32> to vector<16x8xf32>
    %258 = vector.extract_strided_slice %254 {offsets = [0, 8], sizes = [16, 8], strides = [1, 1]} : vector<16x32xf32> to vector<16x8xf32>
    %259 = vector.extract_strided_slice %254 {offsets = [0, 16], sizes = [16, 8], strides = [1, 1]} : vector<16x32xf32> to vector<16x8xf32>
    %260 = vector.extract_strided_slice %254 {offsets = [0, 24], sizes = [16, 8], strides = [1, 1]} : vector<16x32xf32> to vector<16x8xf32>
    %261 = tpu.concatenate %257, %258, %259, %260 in 0 : vector<16x8xf32>, vector<16x8xf32>, vector<16x8xf32>, vector<16x8xf32> -> vector<64x8xf32>
    %262 = vector.extract_strided_slice %255 {offsets = [0, 0], sizes = [16, 8], strides = [1, 1]} : vector<16x32xf32> to vector<16x8xf32>
    %263 = vector.extract_strided_slice %255 {offsets = [0, 8], sizes = [16, 8], strides = [1, 1]} : vector<16x32xf32> to vector<16x8xf32>
    %264 = vector.extract_strided_slice %255 {offsets = [0, 16], sizes = [16, 8], strides = [1, 1]} : vector<16x32xf32> to vector<16x8xf32>
    %265 = vector.extract_strided_slice %255 {offsets = [0, 24], sizes = [16, 8], strides = [1, 1]} : vector<16x32xf32> to vector<16x8xf32>
    %266 = tpu.concatenate %262, %263, %264, %265 in 0 : vector<16x8xf32>, vector<16x8xf32>, vector<16x8xf32>, vector<16x8xf32> -> vector<64x8xf32>
    %267 = vector.extract_strided_slice %256 {offsets = [0, 0], sizes = [16, 8], strides = [1, 1]} : vector<16x32xf32> to vector<16x8xf32>
    %268 = vector.extract_strided_slice %256 {offsets = [0, 8], sizes = [16, 8], strides = [1, 1]} : vector<16x32xf32> to vector<16x8xf32>
    %269 = vector.extract_strided_slice %256 {offsets = [0, 16], sizes = [16, 8], strides = [1, 1]} : vector<16x32xf32> to vector<16x8xf32>
    %270 = vector.extract_strided_slice %256 {offsets = [0, 24], sizes = [16, 8], strides = [1, 1]} : vector<16x32xf32> to vector<16x8xf32>
    %271 = tpu.concatenate %267, %268, %269, %270 in 0 : vector<16x8xf32>, vector<16x8xf32>, vector<16x8xf32>, vector<16x8xf32> -> vector<64x8xf32>
    %272 = tpu.transpose %266, [1, 0] : vector<64x8xf32> -> vector<8x64xf32>
    %cst_124 = arith.constant dense<0.000000e+00> : vector<64x64xf32>
    %273 = tpu.matmul %261, %272, %cst_124 {dimension_numbers = #tpu.dot_dimension_numbers<[1], [0], [0], [1], [0, 0, 1, 1], [], []>} : vector<64x8xf32>, vector<8x64xf32>, vector<64x64xf32> -> vector<64x64xf32>
    %274 = arith.addf %273, %245 : vector<64x64xf32>
    %cst_125 = arith.constant dense<0xFF800000> : vector<64xf32>
    %275 = vector.multi_reduction <maximumf>, %274, %cst_125 [1] : vector<64x64xf32> to vector<64xf32>
    %276 = vector.shape_cast %275 : vector<64xf32> to vector<64x1xf32>
    %277 = vector.broadcast %276 : vector<64x1xf32> to vector<64x64xf32>
    %278 = arith.subf %274, %277 : vector<64x64xf32>
    %279 = math.exp %278 : vector<64x64xf32>
    %cst_126 = arith.constant dense<0.000000e+00> : vector<64xf32>
    %280 = vector.multi_reduction <add>, %279, %cst_126 [1] : vector<64x64xf32> to vector<64xf32>
    %281 = vector.shape_cast %280 : vector<64xf32> to vector<64x1xf32>
    %282 = tpu.reciprocal %281 {approx = true} : vector<64x1xf32> -> vector<64x1xf32>
    %283 = vector.broadcast %282 : vector<64x1xf32> to vector<64x64xf32>
    %284 = arith.mulf %279, %283 : vector<64x64xf32>
    %cst_127 = arith.constant dense<0.000000e+00> : vector<64x8xf32>
    %285 = tpu.matmul %284, %271, %cst_127 {dimension_numbers = #tpu.dot_dimension_numbers<[1], [0], [0], [1], [0, 0, 1, 1], [], []>} : vector<64x64xf32>, vector<64x8xf32>, vector<64x8xf32> -> vector<64x8xf32>
    %286 = vector.extract_strided_slice %285 {offsets = [0, 0], sizes = [16, 8], strides = [1, 1]} : vector<64x8xf32> to vector<16x8xf32>
    %287 = vector.extract_strided_slice %285 {offsets = [16, 0], sizes = [16, 8], strides = [1, 1]} : vector<64x8xf32> to vector<16x8xf32>
    %288 = vector.extract_strided_slice %285 {offsets = [32, 0], sizes = [16, 8], strides = [1, 1]} : vector<64x8xf32> to vector<16x8xf32>
    %289 = vector.extract_strided_slice %285 {offsets = [48, 0], sizes = [16, 8], strides = [1, 1]} : vector<64x8xf32> to vector<16x8xf32>
    %290 = tpu.concatenate %286, %287, %288, %289 in 1 : vector<16x8xf32>, vector<16x8xf32>, vector<16x8xf32>, vector<16x8xf32> -> vector<16x32xf32>
    %c0_128 = arith.constant 0 : index
    %c0_129 = arith.constant 0 : index
    %c0_130 = arith.constant 0 : index
    %291 = vector.load %arg19[%c0_128, %c0_129, %c0_130] : memref<2x32x32xf32, #tpu.memory_space<vmem>>, vector<1x32x32xf32>
    %292 = vector.shape_cast %291 : vector<1x32x32xf32> to vector<32x32xf32>
    %cst_131 = arith.constant dense<0.000000e+00> : vector<16x32xf32>
    %293 = tpu.matmul %290, %292, %cst_131 {dimension_numbers = #tpu.dot_dimension_numbers<[1], [0], [0], [1], [0, 0, 1, 1], [], []>} : vector<16x32xf32>, vector<32x32xf32>, vector<16x32xf32> -> vector<16x32xf32>
    %c0_132 = arith.constant 0 : index
    %c0_133 = arith.constant 0 : index
    %c0_134 = arith.constant 0 : index
    %294 = vector.load %arg20[%c0_132, %c0_133, %c0_134] : memref<2x1x32xf32, #tpu.memory_space<vmem>>, vector<1x1x32xf32>
    %295 = vector.shape_cast %294 : vector<1x1x32xf32> to vector<1x32xf32>
    %296 = vector.broadcast %295 : vector<1x32xf32> to vector<16x32xf32>
    %297 = arith.addf %293, %296 : vector<16x32xf32>
    %298 = arith.addf %244, %297 : vector<16x32xf32>
    %c0_135 = arith.constant 0 : index
    %c0_136 = arith.constant 0 : index
    %c0_137 = arith.constant 0 : index
    %299 = vector.load %arg21[%c0_135, %c0_136, %c0_137] : memref<2x1x32xf32, #tpu.memory_space<vmem>>, vector<1x1x32xf32>
    %300 = vector.shape_cast %299 : vector<1x1x32xf32> to vector<1x32xf32>
    %c0_138 = arith.constant 0 : index
    %c0_139 = arith.constant 0 : index
    %c0_140 = arith.constant 0 : index
    %301 = vector.load %arg22[%c0_138, %c0_139, %c0_140] : memref<2x1x32xf32, #tpu.memory_space<vmem>>, vector<1x1x32xf32>
    %302 = vector.shape_cast %301 : vector<1x1x32xf32> to vector<1x32xf32>
    %cst_141 = arith.constant dense<0.000000e+00> : vector<16xf32>
    %303 = vector.multi_reduction <add>, %298, %cst_141 [1] : vector<16x32xf32> to vector<16xf32>
    %304 = vector.shape_cast %303 : vector<16xf32> to vector<16x1xf32>
    %cst_142 = arith.constant 3.200000e+01 : f32
    %305 = vector.broadcast %cst_142 : f32 to vector<16x1xf32>
    %306 = arith.divf %304, %305 : vector<16x1xf32>
    %307 = vector.broadcast %306 : vector<16x1xf32> to vector<16x32xf32>
    %308 = arith.subf %298, %307 : vector<16x32xf32>
    %309 = arith.mulf %308, %308 : vector<16x32xf32>
    %cst_143 = arith.constant dense<0.000000e+00> : vector<16xf32>
    %310 = vector.multi_reduction <add>, %309, %cst_143 [1] : vector<16x32xf32> to vector<16xf32>
    %311 = vector.shape_cast %310 : vector<16xf32> to vector<16x1xf32>
    %cst_144 = arith.constant 3.200000e+01 : f32
    %312 = vector.broadcast %cst_144 : f32 to vector<16x1xf32>
    %313 = arith.divf %311, %312 : vector<16x1xf32>
    %314 = vector.broadcast %306 : vector<16x1xf32> to vector<16x32xf32>
    %315 = arith.subf %298, %314 : vector<16x32xf32>
    %cst_145 = arith.constant 9.99999974E-6 : f32
    %316 = vector.broadcast %cst_145 : f32 to vector<16x1xf32>
    %317 = arith.addf %313, %316 : vector<16x1xf32>
    %318 = math.rsqrt %317 : vector<16x1xf32>
    %319 = vector.broadcast %318 : vector<16x1xf32> to vector<16x32xf32>
    %320 = arith.mulf %315, %319 : vector<16x32xf32>
    %321 = vector.broadcast %300 : vector<1x32xf32> to vector<16x32xf32>
    %322 = arith.mulf %320, %321 : vector<16x32xf32>
    %323 = vector.broadcast %302 : vector<1x32xf32> to vector<16x32xf32>
    %324 = arith.addf %322, %323 : vector<16x32xf32>
    %c0_146 = arith.constant 0 : index
    %c0_147 = arith.constant 0 : index
    %c0_148 = arith.constant 0 : index
    %325 = vector.load %arg23[%c0_146, %c0_147, %c0_148] : memref<2x32x32xf32, #tpu.memory_space<vmem>>, vector<1x32x32xf32>
    %326 = vector.shape_cast %325 : vector<1x32x32xf32> to vector<32x32xf32>
    %cst_149 = arith.constant dense<0.000000e+00> : vector<16x32xf32>
    %327 = tpu.matmul %324, %326, %cst_149 {dimension_numbers = #tpu.dot_dimension_numbers<[1], [0], [0], [1], [0, 0, 1, 1], [], []>} : vector<16x32xf32>, vector<32x32xf32>, vector<16x32xf32> -> vector<16x32xf32>
    %c0_150 = arith.constant 0 : index
    %c0_151 = arith.constant 0 : index
    %c0_152 = arith.constant 0 : index
    %328 = vector.load %arg24[%c0_150, %c0_151, %c0_152] : memref<2x1x32xf32, #tpu.memory_space<vmem>>, vector<1x1x32xf32>
    %329 = vector.shape_cast %328 : vector<1x1x32xf32> to vector<1x32xf32>
    %330 = vector.broadcast %329 : vector<1x32xf32> to vector<16x32xf32>
    %331 = arith.addf %327, %330 : vector<16x32xf32>
    %c0_153 = arith.constant 0 : index
    %c0_154 = arith.constant 0 : index
    %c0_155 = arith.constant 0 : index
    %332 = vector.load %arg25[%c0_153, %c0_154, %c0_155] : memref<2x32x64xf32, #tpu.memory_space<vmem>>, vector<1x32x64xf32>
    %333 = vector.shape_cast %332 : vector<1x32x64xf32> to vector<32x64xf32>
    %cst_156 = arith.constant dense<0.000000e+00> : vector<16x64xf32>
    %334 = tpu.matmul %243, %333, %cst_156 {dimension_numbers = #tpu.dot_dimension_numbers<[1], [0], [0], [1], [0, 0, 1, 1], [], []>} : vector<16x32xf32>, vector<32x64xf32>, vector<16x64xf32> -> vector<16x64xf32>
    %c0_157 = arith.constant 0 : index
    %c0_158 = arith.constant 0 : index
    %c0_159 = arith.constant 0 : index
    %335 = vector.load %arg26[%c0_157, %c0_158, %c0_159] : memref<2x1x64xf32, #tpu.memory_space<vmem>>, vector<1x1x64xf32>
    %336 = vector.shape_cast %335 : vector<1x1x64xf32> to vector<1x64xf32>
    %337 = vector.broadcast %336 : vector<1x64xf32> to vector<16x64xf32>
    %338 = arith.addf %334, %337 : vector<16x64xf32>
    %339 = vector.extract_strided_slice %338 {offsets = [0, 0], sizes = [16, 32], strides = [1, 1]} : vector<16x64xf32> to vector<16x32xf32>
    %340 = vector.extract_strided_slice %338 {offsets = [0, 32], sizes = [16, 32], strides = [1, 1]} : vector<16x64xf32> to vector<16x32xf32>
    %341 = vector.extract_strided_slice %331 {offsets = [0, 0], sizes = [16, 8], strides = [1, 1]} : vector<16x32xf32> to vector<16x8xf32>
    %342 = vector.extract_strided_slice %331 {offsets = [0, 8], sizes = [16, 8], strides = [1, 1]} : vector<16x32xf32> to vector<16x8xf32>
    %343 = vector.extract_strided_slice %331 {offsets = [0, 16], sizes = [16, 8], strides = [1, 1]} : vector<16x32xf32> to vector<16x8xf32>
    %344 = vector.extract_strided_slice %331 {offsets = [0, 24], sizes = [16, 8], strides = [1, 1]} : vector<16x32xf32> to vector<16x8xf32>
    %345 = tpu.concatenate %341, %342, %343, %344 in 0 : vector<16x8xf32>, vector<16x8xf32>, vector<16x8xf32>, vector<16x8xf32> -> vector<64x8xf32>
    %346 = vector.extract_strided_slice %339 {offsets = [0, 0], sizes = [16, 8], strides = [1, 1]} : vector<16x32xf32> to vector<16x8xf32>
    %347 = vector.extract_strided_slice %339 {offsets = [0, 8], sizes = [16, 8], strides = [1, 1]} : vector<16x32xf32> to vector<16x8xf32>
    %348 = vector.extract_strided_slice %339 {offsets = [0, 16], sizes = [16, 8], strides = [1, 1]} : vector<16x32xf32> to vector<16x8xf32>
    %349 = vector.extract_strided_slice %339 {offsets = [0, 24], sizes = [16, 8], strides = [1, 1]} : vector<16x32xf32> to vector<16x8xf32>
    %350 = tpu.concatenate %346, %347, %348, %349 in 0 : vector<16x8xf32>, vector<16x8xf32>, vector<16x8xf32>, vector<16x8xf32> -> vector<64x8xf32>
    %351 = vector.extract_strided_slice %340 {offsets = [0, 0], sizes = [16, 8], strides = [1, 1]} : vector<16x32xf32> to vector<16x8xf32>
    %352 = vector.extract_strided_slice %340 {offsets = [0, 8], sizes = [16, 8], strides = [1, 1]} : vector<16x32xf32> to vector<16x8xf32>
    %353 = vector.extract_strided_slice %340 {offsets = [0, 16], sizes = [16, 8], strides = [1, 1]} : vector<16x32xf32> to vector<16x8xf32>
    %354 = vector.extract_strided_slice %340 {offsets = [0, 24], sizes = [16, 8], strides = [1, 1]} : vector<16x32xf32> to vector<16x8xf32>
    %355 = tpu.concatenate %351, %352, %353, %354 in 0 : vector<16x8xf32>, vector<16x8xf32>, vector<16x8xf32>, vector<16x8xf32> -> vector<64x8xf32>
    %356 = tpu.transpose %350, [1, 0] : vector<64x8xf32> -> vector<8x64xf32>
    %cst_160 = arith.constant dense<0.000000e+00> : vector<64x64xf32>
    %357 = tpu.matmul %345, %356, %cst_160 {dimension_numbers = #tpu.dot_dimension_numbers<[1], [0], [0], [1], [0, 0, 1, 1], [], []>} : vector<64x8xf32>, vector<8x64xf32>, vector<64x64xf32> -> vector<64x64xf32>
    %358 = arith.addf %357, %246 : vector<64x64xf32>
    %cst_161 = arith.constant dense<0xFF800000> : vector<64xf32>
    %359 = vector.multi_reduction <maximumf>, %358, %cst_161 [1] : vector<64x64xf32> to vector<64xf32>
    %360 = vector.shape_cast %359 : vector<64xf32> to vector<64x1xf32>
    %361 = vector.broadcast %360 : vector<64x1xf32> to vector<64x64xf32>
    %362 = arith.subf %358, %361 : vector<64x64xf32>
    %363 = math.exp %362 : vector<64x64xf32>
    %cst_162 = arith.constant dense<0.000000e+00> : vector<64xf32>
    %364 = vector.multi_reduction <add>, %363, %cst_162 [1] : vector<64x64xf32> to vector<64xf32>
    %365 = vector.shape_cast %364 : vector<64xf32> to vector<64x1xf32>
    %366 = tpu.reciprocal %365 {approx = true} : vector<64x1xf32> -> vector<64x1xf32>
    %367 = vector.broadcast %366 : vector<64x1xf32> to vector<64x64xf32>
    %368 = arith.mulf %363, %367 : vector<64x64xf32>
    %cst_163 = arith.constant dense<0.000000e+00> : vector<64x8xf32>
    %369 = tpu.matmul %368, %355, %cst_163 {dimension_numbers = #tpu.dot_dimension_numbers<[1], [0], [0], [1], [0, 0, 1, 1], [], []>} : vector<64x64xf32>, vector<64x8xf32>, vector<64x8xf32> -> vector<64x8xf32>
    %370 = vector.extract_strided_slice %369 {offsets = [0, 0], sizes = [16, 8], strides = [1, 1]} : vector<64x8xf32> to vector<16x8xf32>
    %371 = vector.extract_strided_slice %369 {offsets = [16, 0], sizes = [16, 8], strides = [1, 1]} : vector<64x8xf32> to vector<16x8xf32>
    %372 = vector.extract_strided_slice %369 {offsets = [32, 0], sizes = [16, 8], strides = [1, 1]} : vector<64x8xf32> to vector<16x8xf32>
    %373 = vector.extract_strided_slice %369 {offsets = [48, 0], sizes = [16, 8], strides = [1, 1]} : vector<64x8xf32> to vector<16x8xf32>
    %374 = tpu.concatenate %370, %371, %372, %373 in 1 : vector<16x8xf32>, vector<16x8xf32>, vector<16x8xf32>, vector<16x8xf32> -> vector<16x32xf32>
    %c0_164 = arith.constant 0 : index
    %c0_165 = arith.constant 0 : index
    %c0_166 = arith.constant 0 : index
    %375 = vector.load %arg27[%c0_164, %c0_165, %c0_166] : memref<2x32x32xf32, #tpu.memory_space<vmem>>, vector<1x32x32xf32>
    %376 = vector.shape_cast %375 : vector<1x32x32xf32> to vector<32x32xf32>
    %cst_167 = arith.constant dense<0.000000e+00> : vector<16x32xf32>
    %377 = tpu.matmul %374, %376, %cst_167 {dimension_numbers = #tpu.dot_dimension_numbers<[1], [0], [0], [1], [0, 0, 1, 1], [], []>} : vector<16x32xf32>, vector<32x32xf32>, vector<16x32xf32> -> vector<16x32xf32>
    %c0_168 = arith.constant 0 : index
    %c0_169 = arith.constant 0 : index
    %c0_170 = arith.constant 0 : index
    %378 = vector.load %arg28[%c0_168, %c0_169, %c0_170] : memref<2x1x32xf32, #tpu.memory_space<vmem>>, vector<1x1x32xf32>
    %379 = vector.shape_cast %378 : vector<1x1x32xf32> to vector<1x32xf32>
    %380 = vector.broadcast %379 : vector<1x32xf32> to vector<16x32xf32>
    %381 = arith.addf %377, %380 : vector<16x32xf32>
    %382 = arith.addf %324, %381 : vector<16x32xf32>
    %c0_171 = arith.constant 0 : index
    %c0_172 = arith.constant 0 : index
    %c0_173 = arith.constant 0 : index
    %383 = vector.load %arg29[%c0_171, %c0_172, %c0_173] : memref<2x1x32xf32, #tpu.memory_space<vmem>>, vector<1x1x32xf32>
    %384 = vector.shape_cast %383 : vector<1x1x32xf32> to vector<1x32xf32>
    %c0_174 = arith.constant 0 : index
    %c0_175 = arith.constant 0 : index
    %c0_176 = arith.constant 0 : index
    %385 = vector.load %arg30[%c0_174, %c0_175, %c0_176] : memref<2x1x32xf32, #tpu.memory_space<vmem>>, vector<1x1x32xf32>
    %386 = vector.shape_cast %385 : vector<1x1x32xf32> to vector<1x32xf32>
    %cst_177 = arith.constant dense<0.000000e+00> : vector<16xf32>
    %387 = vector.multi_reduction <add>, %382, %cst_177 [1] : vector<16x32xf32> to vector<16xf32>
    %388 = vector.shape_cast %387 : vector<16xf32> to vector<16x1xf32>
    %cst_178 = arith.constant 3.200000e+01 : f32
    %389 = vector.broadcast %cst_178 : f32 to vector<16x1xf32>
    %390 = arith.divf %388, %389 : vector<16x1xf32>
    %391 = vector.broadcast %390 : vector<16x1xf32> to vector<16x32xf32>
    %392 = arith.subf %382, %391 : vector<16x32xf32>
    %393 = arith.mulf %392, %392 : vector<16x32xf32>
    %cst_179 = arith.constant dense<0.000000e+00> : vector<16xf32>
    %394 = vector.multi_reduction <add>, %393, %cst_179 [1] : vector<16x32xf32> to vector<16xf32>
    %395 = vector.shape_cast %394 : vector<16xf32> to vector<16x1xf32>
    %cst_180 = arith.constant 3.200000e+01 : f32
    %396 = vector.broadcast %cst_180 : f32 to vector<16x1xf32>
    %397 = arith.divf %395, %396 : vector<16x1xf32>
    %398 = vector.broadcast %390 : vector<16x1xf32> to vector<16x32xf32>
    %399 = arith.subf %382, %398 : vector<16x32xf32>
    %cst_181 = arith.constant 9.99999974E-6 : f32
    %400 = vector.broadcast %cst_181 : f32 to vector<16x1xf32>
    %401 = arith.addf %397, %400 : vector<16x1xf32>
    %402 = math.rsqrt %401 : vector<16x1xf32>
    %403 = vector.broadcast %402 : vector<16x1xf32> to vector<16x32xf32>
    %404 = arith.mulf %399, %403 : vector<16x32xf32>
    %405 = vector.broadcast %384 : vector<1x32xf32> to vector<16x32xf32>
    %406 = arith.mulf %404, %405 : vector<16x32xf32>
    %407 = vector.broadcast %386 : vector<1x32xf32> to vector<16x32xf32>
    %408 = arith.addf %406, %407 : vector<16x32xf32>
    %c0_182 = arith.constant 0 : index
    %c0_183 = arith.constant 0 : index
    %c0_184 = arith.constant 0 : index
    %409 = vector.load %arg31[%c0_182, %c0_183, %c0_184] : memref<2x32x128xf32, #tpu.memory_space<vmem>>, vector<1x32x128xf32>
    %410 = vector.shape_cast %409 : vector<1x32x128xf32> to vector<32x128xf32>
    %c0_185 = arith.constant 0 : index
    %c0_186 = arith.constant 0 : index
    %c0_187 = arith.constant 0 : index
    %411 = vector.load %arg32[%c0_185, %c0_186, %c0_187] : memref<2x1x128xf32, #tpu.memory_space<vmem>>, vector<1x1x128xf32>
    %412 = vector.shape_cast %411 : vector<1x1x128xf32> to vector<1x128xf32>
    %c0_188 = arith.constant 0 : index
    %c0_189 = arith.constant 0 : index
    %c0_190 = arith.constant 0 : index
    %413 = vector.load %arg33[%c0_188, %c0_189, %c0_190] : memref<2x128x32xf32, #tpu.memory_space<vmem>>, vector<1x128x32xf32>
    %414 = vector.shape_cast %413 : vector<1x128x32xf32> to vector<128x32xf32>
    %c0_191 = arith.constant 0 : index
    %c0_192 = arith.constant 0 : index
    %c0_193 = arith.constant 0 : index
    %415 = vector.load %arg34[%c0_191, %c0_192, %c0_193] : memref<2x1x32xf32, #tpu.memory_space<vmem>>, vector<1x1x32xf32>
    %416 = vector.shape_cast %415 : vector<1x1x32xf32> to vector<1x32xf32>
    %cst_194 = arith.constant dense<0.000000e+00> : vector<16x128xf32>
    %417 = tpu.matmul %408, %410, %cst_194 {dimension_numbers = #tpu.dot_dimension_numbers<[1], [0], [0], [1], [0, 0, 1, 1], [], []>} : vector<16x32xf32>, vector<32x128xf32>, vector<16x128xf32> -> vector<16x128xf32>
    %418 = vector.broadcast %412 : vector<1x128xf32> to vector<16x128xf32>
    %419 = arith.addf %417, %418 : vector<16x128xf32>
    %cst_195 = arith.constant 0.000000e+00 : f32
    %420 = vector.broadcast %cst_195 : f32 to vector<16x128xf32>
    %421 = arith.maximumf %419, %420 : vector<16x128xf32>
    %cst_196 = arith.constant dense<0.000000e+00> : vector<16x32xf32>
    %422 = tpu.matmul %421, %414, %cst_196 {dimension_numbers = #tpu.dot_dimension_numbers<[1], [0], [0], [1], [0, 0, 1, 1], [], []>} : vector<16x128xf32>, vector<128x32xf32>, vector<16x32xf32> -> vector<16x32xf32>
    %423 = vector.broadcast %416 : vector<1x32xf32> to vector<16x32xf32>
    %424 = arith.addf %422, %423 : vector<16x32xf32>
    %425 = arith.addf %408, %424 : vector<16x32xf32>
    %c0_197 = arith.constant 0 : index
    %c0_198 = arith.constant 0 : index
    %c0_199 = arith.constant 0 : index
    %426 = vector.load %arg35[%c0_197, %c0_198, %c0_199] : memref<2x1x32xf32, #tpu.memory_space<vmem>>, vector<1x1x32xf32>
    %427 = vector.shape_cast %426 : vector<1x1x32xf32> to vector<1x32xf32>
    %c0_200 = arith.constant 0 : index
    %c0_201 = arith.constant 0 : index
    %c0_202 = arith.constant 0 : index
    %428 = vector.load %arg36[%c0_200, %c0_201, %c0_202] : memref<2x1x32xf32, #tpu.memory_space<vmem>>, vector<1x1x32xf32>
    %429 = vector.shape_cast %428 : vector<1x1x32xf32> to vector<1x32xf32>
    %cst_203 = arith.constant dense<0.000000e+00> : vector<16xf32>
    %430 = vector.multi_reduction <add>, %425, %cst_203 [1] : vector<16x32xf32> to vector<16xf32>
    %431 = vector.shape_cast %430 : vector<16xf32> to vector<16x1xf32>
    %cst_204 = arith.constant 3.200000e+01 : f32
    %432 = vector.broadcast %cst_204 : f32 to vector<16x1xf32>
    %433 = arith.divf %431, %432 : vector<16x1xf32>
    %434 = vector.broadcast %433 : vector<16x1xf32> to vector<16x32xf32>
    %435 = arith.subf %425, %434 : vector<16x32xf32>
    %436 = arith.mulf %435, %435 : vector<16x32xf32>
    %cst_205 = arith.constant dense<0.000000e+00> : vector<16xf32>
    %437 = vector.multi_reduction <add>, %436, %cst_205 [1] : vector<16x32xf32> to vector<16xf32>
    %438 = vector.shape_cast %437 : vector<16xf32> to vector<16x1xf32>
    %cst_206 = arith.constant 3.200000e+01 : f32
    %439 = vector.broadcast %cst_206 : f32 to vector<16x1xf32>
    %440 = arith.divf %438, %439 : vector<16x1xf32>
    %441 = vector.broadcast %433 : vector<16x1xf32> to vector<16x32xf32>
    %442 = arith.subf %425, %441 : vector<16x32xf32>
    %cst_207 = arith.constant 9.99999974E-6 : f32
    %443 = vector.broadcast %cst_207 : f32 to vector<16x1xf32>
    %444 = arith.addf %440, %443 : vector<16x1xf32>
    %445 = math.rsqrt %444 : vector<16x1xf32>
    %446 = vector.broadcast %445 : vector<16x1xf32> to vector<16x32xf32>
    %447 = arith.mulf %442, %446 : vector<16x32xf32>
    %448 = vector.broadcast %427 : vector<1x32xf32> to vector<16x32xf32>
    %449 = arith.mulf %447, %448 : vector<16x32xf32>
    %450 = vector.broadcast %429 : vector<1x32xf32> to vector<16x32xf32>
    %451 = arith.addf %449, %450 : vector<16x32xf32>
    %c1_208 = arith.constant 1 : index
    %c0_209 = arith.constant 0 : index
    %c0_210 = arith.constant 0 : index
    %452 = vector.load %arg17[%c1_208, %c0_209, %c0_210] : memref<2x32x96xf32, #tpu.memory_space<vmem>>, vector<1x32x96xf32>
    %453 = vector.shape_cast %452 : vector<1x32x96xf32> to vector<32x96xf32>
    %cst_211 = arith.constant dense<0.000000e+00> : vector<16x96xf32>
    %454 = tpu.matmul %451, %453, %cst_211 {dimension_numbers = #tpu.dot_dimension_numbers<[1], [0], [0], [1], [0, 0, 1, 1], [], []>} : vector<16x32xf32>, vector<32x96xf32>, vector<16x96xf32> -> vector<16x96xf32>
    %c1_212 = arith.constant 1 : index
    %c0_213 = arith.constant 0 : index
    %c0_214 = arith.constant 0 : index
    %455 = vector.load %arg18[%c1_212, %c0_213, %c0_214] : memref<2x1x96xf32, #tpu.memory_space<vmem>>, vector<1x1x96xf32>
    %456 = vector.shape_cast %455 : vector<1x1x96xf32> to vector<1x96xf32>
    %457 = vector.broadcast %456 : vector<1x96xf32> to vector<16x96xf32>
    %458 = arith.addf %454, %457 : vector<16x96xf32>
    %459 = vector.extract_strided_slice %458 {offsets = [0, 0], sizes = [16, 32], strides = [1, 1]} : vector<16x96xf32> to vector<16x32xf32>
    %460 = vector.extract_strided_slice %458 {offsets = [0, 32], sizes = [16, 32], strides = [1, 1]} : vector<16x96xf32> to vector<16x32xf32>
    %461 = vector.extract_strided_slice %458 {offsets = [0, 64], sizes = [16, 32], strides = [1, 1]} : vector<16x96xf32> to vector<16x32xf32>
    %462 = vector.extract_strided_slice %459 {offsets = [0, 0], sizes = [16, 8], strides = [1, 1]} : vector<16x32xf32> to vector<16x8xf32>
    %463 = vector.extract_strided_slice %459 {offsets = [0, 8], sizes = [16, 8], strides = [1, 1]} : vector<16x32xf32> to vector<16x8xf32>
    %464 = vector.extract_strided_slice %459 {offsets = [0, 16], sizes = [16, 8], strides = [1, 1]} : vector<16x32xf32> to vector<16x8xf32>
    %465 = vector.extract_strided_slice %459 {offsets = [0, 24], sizes = [16, 8], strides = [1, 1]} : vector<16x32xf32> to vector<16x8xf32>
    %466 = tpu.concatenate %462, %463, %464, %465 in 0 : vector<16x8xf32>, vector<16x8xf32>, vector<16x8xf32>, vector<16x8xf32> -> vector<64x8xf32>
    %467 = vector.extract_strided_slice %460 {offsets = [0, 0], sizes = [16, 8], strides = [1, 1]} : vector<16x32xf32> to vector<16x8xf32>
    %468 = vector.extract_strided_slice %460 {offsets = [0, 8], sizes = [16, 8], strides = [1, 1]} : vector<16x32xf32> to vector<16x8xf32>
    %469 = vector.extract_strided_slice %460 {offsets = [0, 16], sizes = [16, 8], strides = [1, 1]} : vector<16x32xf32> to vector<16x8xf32>
    %470 = vector.extract_strided_slice %460 {offsets = [0, 24], sizes = [16, 8], strides = [1, 1]} : vector<16x32xf32> to vector<16x8xf32>
    %471 = tpu.concatenate %467, %468, %469, %470 in 0 : vector<16x8xf32>, vector<16x8xf32>, vector<16x8xf32>, vector<16x8xf32> -> vector<64x8xf32>
    %472 = vector.extract_strided_slice %461 {offsets = [0, 0], sizes = [16, 8], strides = [1, 1]} : vector<16x32xf32> to vector<16x8xf32>
    %473 = vector.extract_strided_slice %461 {offsets = [0, 8], sizes = [16, 8], strides = [1, 1]} : vector<16x32xf32> to vector<16x8xf32>
    %474 = vector.extract_strided_slice %461 {offsets = [0, 16], sizes = [16, 8], strides = [1, 1]} : vector<16x32xf32> to vector<16x8xf32>
    %475 = vector.extract_strided_slice %461 {offsets = [0, 24], sizes = [16, 8], strides = [1, 1]} : vector<16x32xf32> to vector<16x8xf32>
    %476 = tpu.concatenate %472, %473, %474, %475 in 0 : vector<16x8xf32>, vector<16x8xf32>, vector<16x8xf32>, vector<16x8xf32> -> vector<64x8xf32>
    %477 = tpu.transpose %471, [1, 0] : vector<64x8xf32> -> vector<8x64xf32>
    %cst_215 = arith.constant dense<0.000000e+00> : vector<64x64xf32>
    %478 = tpu.matmul %466, %477, %cst_215 {dimension_numbers = #tpu.dot_dimension_numbers<[1], [0], [0], [1], [0, 0, 1, 1], [], []>} : vector<64x8xf32>, vector<8x64xf32>, vector<64x64xf32> -> vector<64x64xf32>
    %479 = arith.addf %478, %245 : vector<64x64xf32>
    %cst_216 = arith.constant dense<0xFF800000> : vector<64xf32>
    %480 = vector.multi_reduction <maximumf>, %479, %cst_216 [1] : vector<64x64xf32> to vector<64xf32>
    %481 = vector.shape_cast %480 : vector<64xf32> to vector<64x1xf32>
    %482 = vector.broadcast %481 : vector<64x1xf32> to vector<64x64xf32>
    %483 = arith.subf %479, %482 : vector<64x64xf32>
    %484 = math.exp %483 : vector<64x64xf32>
    %cst_217 = arith.constant dense<0.000000e+00> : vector<64xf32>
    %485 = vector.multi_reduction <add>, %484, %cst_217 [1] : vector<64x64xf32> to vector<64xf32>
    %486 = vector.shape_cast %485 : vector<64xf32> to vector<64x1xf32>
    %487 = tpu.reciprocal %486 {approx = true} : vector<64x1xf32> -> vector<64x1xf32>
    %488 = vector.broadcast %487 : vector<64x1xf32> to vector<64x64xf32>
    %489 = arith.mulf %484, %488 : vector<64x64xf32>
    %cst_218 = arith.constant dense<0.000000e+00> : vector<64x8xf32>
    %490 = tpu.matmul %489, %476, %cst_218 {dimension_numbers = #tpu.dot_dimension_numbers<[1], [0], [0], [1], [0, 0, 1, 1], [], []>} : vector<64x64xf32>, vector<64x8xf32>, vector<64x8xf32> -> vector<64x8xf32>
    %491 = vector.extract_strided_slice %490 {offsets = [0, 0], sizes = [16, 8], strides = [1, 1]} : vector<64x8xf32> to vector<16x8xf32>
    %492 = vector.extract_strided_slice %490 {offsets = [16, 0], sizes = [16, 8], strides = [1, 1]} : vector<64x8xf32> to vector<16x8xf32>
    %493 = vector.extract_strided_slice %490 {offsets = [32, 0], sizes = [16, 8], strides = [1, 1]} : vector<64x8xf32> to vector<16x8xf32>
    %494 = vector.extract_strided_slice %490 {offsets = [48, 0], sizes = [16, 8], strides = [1, 1]} : vector<64x8xf32> to vector<16x8xf32>
    %495 = tpu.concatenate %491, %492, %493, %494 in 1 : vector<16x8xf32>, vector<16x8xf32>, vector<16x8xf32>, vector<16x8xf32> -> vector<16x32xf32>
    %c1_219 = arith.constant 1 : index
    %c0_220 = arith.constant 0 : index
    %c0_221 = arith.constant 0 : index
    %496 = vector.load %arg19[%c1_219, %c0_220, %c0_221] : memref<2x32x32xf32, #tpu.memory_space<vmem>>, vector<1x32x32xf32>
    %497 = vector.shape_cast %496 : vector<1x32x32xf32> to vector<32x32xf32>
    %cst_222 = arith.constant dense<0.000000e+00> : vector<16x32xf32>
    %498 = tpu.matmul %495, %497, %cst_222 {dimension_numbers = #tpu.dot_dimension_numbers<[1], [0], [0], [1], [0, 0, 1, 1], [], []>} : vector<16x32xf32>, vector<32x32xf32>, vector<16x32xf32> -> vector<16x32xf32>
    %c1_223 = arith.constant 1 : index
    %c0_224 = arith.constant 0 : index
    %c0_225 = arith.constant 0 : index
    %499 = vector.load %arg20[%c1_223, %c0_224, %c0_225] : memref<2x1x32xf32, #tpu.memory_space<vmem>>, vector<1x1x32xf32>
    %500 = vector.shape_cast %499 : vector<1x1x32xf32> to vector<1x32xf32>
    %501 = vector.broadcast %500 : vector<1x32xf32> to vector<16x32xf32>
    %502 = arith.addf %498, %501 : vector<16x32xf32>
    %503 = arith.addf %451, %502 : vector<16x32xf32>
    %c1_226 = arith.constant 1 : index
    %c0_227 = arith.constant 0 : index
    %c0_228 = arith.constant 0 : index
    %504 = vector.load %arg21[%c1_226, %c0_227, %c0_228] : memref<2x1x32xf32, #tpu.memory_space<vmem>>, vector<1x1x32xf32>
    %505 = vector.shape_cast %504 : vector<1x1x32xf32> to vector<1x32xf32>
    %c1_229 = arith.constant 1 : index
    %c0_230 = arith.constant 0 : index
    %c0_231 = arith.constant 0 : index
    %506 = vector.load %arg22[%c1_229, %c0_230, %c0_231] : memref<2x1x32xf32, #tpu.memory_space<vmem>>, vector<1x1x32xf32>
    %507 = vector.shape_cast %506 : vector<1x1x32xf32> to vector<1x32xf32>
    %cst_232 = arith.constant dense<0.000000e+00> : vector<16xf32>
    %508 = vector.multi_reduction <add>, %503, %cst_232 [1] : vector<16x32xf32> to vector<16xf32>
    %509 = vector.shape_cast %508 : vector<16xf32> to vector<16x1xf32>
    %cst_233 = arith.constant 3.200000e+01 : f32
    %510 = vector.broadcast %cst_233 : f32 to vector<16x1xf32>
    %511 = arith.divf %509, %510 : vector<16x1xf32>
    %512 = vector.broadcast %511 : vector<16x1xf32> to vector<16x32xf32>
    %513 = arith.subf %503, %512 : vector<16x32xf32>
    %514 = arith.mulf %513, %513 : vector<16x32xf32>
    %cst_234 = arith.constant dense<0.000000e+00> : vector<16xf32>
    %515 = vector.multi_reduction <add>, %514, %cst_234 [1] : vector<16x32xf32> to vector<16xf32>
    %516 = vector.shape_cast %515 : vector<16xf32> to vector<16x1xf32>
    %cst_235 = arith.constant 3.200000e+01 : f32
    %517 = vector.broadcast %cst_235 : f32 to vector<16x1xf32>
    %518 = arith.divf %516, %517 : vector<16x1xf32>
    %519 = vector.broadcast %511 : vector<16x1xf32> to vector<16x32xf32>
    %520 = arith.subf %503, %519 : vector<16x32xf32>
    %cst_236 = arith.constant 9.99999974E-6 : f32
    %521 = vector.broadcast %cst_236 : f32 to vector<16x1xf32>
    %522 = arith.addf %518, %521 : vector<16x1xf32>
    %523 = math.rsqrt %522 : vector<16x1xf32>
    %524 = vector.broadcast %523 : vector<16x1xf32> to vector<16x32xf32>
    %525 = arith.mulf %520, %524 : vector<16x32xf32>
    %526 = vector.broadcast %505 : vector<1x32xf32> to vector<16x32xf32>
    %527 = arith.mulf %525, %526 : vector<16x32xf32>
    %528 = vector.broadcast %507 : vector<1x32xf32> to vector<16x32xf32>
    %529 = arith.addf %527, %528 : vector<16x32xf32>
    %c1_237 = arith.constant 1 : index
    %c0_238 = arith.constant 0 : index
    %c0_239 = arith.constant 0 : index
    %530 = vector.load %arg23[%c1_237, %c0_238, %c0_239] : memref<2x32x32xf32, #tpu.memory_space<vmem>>, vector<1x32x32xf32>
    %531 = vector.shape_cast %530 : vector<1x32x32xf32> to vector<32x32xf32>
    %cst_240 = arith.constant dense<0.000000e+00> : vector<16x32xf32>
    %532 = tpu.matmul %529, %531, %cst_240 {dimension_numbers = #tpu.dot_dimension_numbers<[1], [0], [0], [1], [0, 0, 1, 1], [], []>} : vector<16x32xf32>, vector<32x32xf32>, vector<16x32xf32> -> vector<16x32xf32>
    %c1_241 = arith.constant 1 : index
    %c0_242 = arith.constant 0 : index
    %c0_243 = arith.constant 0 : index
    %533 = vector.load %arg24[%c1_241, %c0_242, %c0_243] : memref<2x1x32xf32, #tpu.memory_space<vmem>>, vector<1x1x32xf32>
    %534 = vector.shape_cast %533 : vector<1x1x32xf32> to vector<1x32xf32>
    %535 = vector.broadcast %534 : vector<1x32xf32> to vector<16x32xf32>
    %536 = arith.addf %532, %535 : vector<16x32xf32>
    %c1_244 = arith.constant 1 : index
    %c0_245 = arith.constant 0 : index
    %c0_246 = arith.constant 0 : index
    %537 = vector.load %arg25[%c1_244, %c0_245, %c0_246] : memref<2x32x64xf32, #tpu.memory_space<vmem>>, vector<1x32x64xf32>
    %538 = vector.shape_cast %537 : vector<1x32x64xf32> to vector<32x64xf32>
    %cst_247 = arith.constant dense<0.000000e+00> : vector<16x64xf32>
    %539 = tpu.matmul %243, %538, %cst_247 {dimension_numbers = #tpu.dot_dimension_numbers<[1], [0], [0], [1], [0, 0, 1, 1], [], []>} : vector<16x32xf32>, vector<32x64xf32>, vector<16x64xf32> -> vector<16x64xf32>
    %c1_248 = arith.constant 1 : index
    %c0_249 = arith.constant 0 : index
    %c0_250 = arith.constant 0 : index
    %540 = vector.load %arg26[%c1_248, %c0_249, %c0_250] : memref<2x1x64xf32, #tpu.memory_space<vmem>>, vector<1x1x64xf32>
    %541 = vector.shape_cast %540 : vector<1x1x64xf32> to vector<1x64xf32>
    %542 = vector.broadcast %541 : vector<1x64xf32> to vector<16x64xf32>
    %543 = arith.addf %539, %542 : vector<16x64xf32>
    %544 = vector.extract_strided_slice %543 {offsets = [0, 0], sizes = [16, 32], strides = [1, 1]} : vector<16x64xf32> to vector<16x32xf32>
    %545 = vector.extract_strided_slice %543 {offsets = [0, 32], sizes = [16, 32], strides = [1, 1]} : vector<16x64xf32> to vector<16x32xf32>
    %546 = vector.extract_strided_slice %536 {offsets = [0, 0], sizes = [16, 8], strides = [1, 1]} : vector<16x32xf32> to vector<16x8xf32>
    %547 = vector.extract_strided_slice %536 {offsets = [0, 8], sizes = [16, 8], strides = [1, 1]} : vector<16x32xf32> to vector<16x8xf32>
    %548 = vector.extract_strided_slice %536 {offsets = [0, 16], sizes = [16, 8], strides = [1, 1]} : vector<16x32xf32> to vector<16x8xf32>
    %549 = vector.extract_strided_slice %536 {offsets = [0, 24], sizes = [16, 8], strides = [1, 1]} : vector<16x32xf32> to vector<16x8xf32>
    %550 = tpu.concatenate %546, %547, %548, %549 in 0 : vector<16x8xf32>, vector<16x8xf32>, vector<16x8xf32>, vector<16x8xf32> -> vector<64x8xf32>
    %551 = vector.extract_strided_slice %544 {offsets = [0, 0], sizes = [16, 8], strides = [1, 1]} : vector<16x32xf32> to vector<16x8xf32>
    %552 = vector.extract_strided_slice %544 {offsets = [0, 8], sizes = [16, 8], strides = [1, 1]} : vector<16x32xf32> to vector<16x8xf32>
    %553 = vector.extract_strided_slice %544 {offsets = [0, 16], sizes = [16, 8], strides = [1, 1]} : vector<16x32xf32> to vector<16x8xf32>
    %554 = vector.extract_strided_slice %544 {offsets = [0, 24], sizes = [16, 8], strides = [1, 1]} : vector<16x32xf32> to vector<16x8xf32>
    %555 = tpu.concatenate %551, %552, %553, %554 in 0 : vector<16x8xf32>, vector<16x8xf32>, vector<16x8xf32>, vector<16x8xf32> -> vector<64x8xf32>
    %556 = vector.extract_strided_slice %545 {offsets = [0, 0], sizes = [16, 8], strides = [1, 1]} : vector<16x32xf32> to vector<16x8xf32>
    %557 = vector.extract_strided_slice %545 {offsets = [0, 8], sizes = [16, 8], strides = [1, 1]} : vector<16x32xf32> to vector<16x8xf32>
    %558 = vector.extract_strided_slice %545 {offsets = [0, 16], sizes = [16, 8], strides = [1, 1]} : vector<16x32xf32> to vector<16x8xf32>
    %559 = vector.extract_strided_slice %545 {offsets = [0, 24], sizes = [16, 8], strides = [1, 1]} : vector<16x32xf32> to vector<16x8xf32>
    %560 = tpu.concatenate %556, %557, %558, %559 in 0 : vector<16x8xf32>, vector<16x8xf32>, vector<16x8xf32>, vector<16x8xf32> -> vector<64x8xf32>
    %561 = tpu.transpose %555, [1, 0] : vector<64x8xf32> -> vector<8x64xf32>
    %cst_251 = arith.constant dense<0.000000e+00> : vector<64x64xf32>
    %562 = tpu.matmul %550, %561, %cst_251 {dimension_numbers = #tpu.dot_dimension_numbers<[1], [0], [0], [1], [0, 0, 1, 1], [], []>} : vector<64x8xf32>, vector<8x64xf32>, vector<64x64xf32> -> vector<64x64xf32>
    %563 = arith.addf %562, %246 : vector<64x64xf32>
    %cst_252 = arith.constant dense<0xFF800000> : vector<64xf32>
    %564 = vector.multi_reduction <maximumf>, %563, %cst_252 [1] : vector<64x64xf32> to vector<64xf32>
    %565 = vector.shape_cast %564 : vector<64xf32> to vector<64x1xf32>
    %566 = vector.broadcast %565 : vector<64x1xf32> to vector<64x64xf32>
    %567 = arith.subf %563, %566 : vector<64x64xf32>
    %568 = math.exp %567 : vector<64x64xf32>
    %cst_253 = arith.constant dense<0.000000e+00> : vector<64xf32>
    %569 = vector.multi_reduction <add>, %568, %cst_253 [1] : vector<64x64xf32> to vector<64xf32>
    %570 = vector.shape_cast %569 : vector<64xf32> to vector<64x1xf32>
    %571 = tpu.reciprocal %570 {approx = true} : vector<64x1xf32> -> vector<64x1xf32>
    %572 = vector.broadcast %571 : vector<64x1xf32> to vector<64x64xf32>
    %573 = arith.mulf %568, %572 : vector<64x64xf32>
    %cst_254 = arith.constant dense<0.000000e+00> : vector<64x8xf32>
    %574 = tpu.matmul %573, %560, %cst_254 {dimension_numbers = #tpu.dot_dimension_numbers<[1], [0], [0], [1], [0, 0, 1, 1], [], []>} : vector<64x64xf32>, vector<64x8xf32>, vector<64x8xf32> -> vector<64x8xf32>
    %575 = vector.extract_strided_slice %574 {offsets = [0, 0], sizes = [16, 8], strides = [1, 1]} : vector<64x8xf32> to vector<16x8xf32>
    %576 = vector.extract_strided_slice %574 {offsets = [16, 0], sizes = [16, 8], strides = [1, 1]} : vector<64x8xf32> to vector<16x8xf32>
    %577 = vector.extract_strided_slice %574 {offsets = [32, 0], sizes = [16, 8], strides = [1, 1]} : vector<64x8xf32> to vector<16x8xf32>
    %578 = vector.extract_strided_slice %574 {offsets = [48, 0], sizes = [16, 8], strides = [1, 1]} : vector<64x8xf32> to vector<16x8xf32>
    %579 = tpu.concatenate %575, %576, %577, %578 in 1 : vector<16x8xf32>, vector<16x8xf32>, vector<16x8xf32>, vector<16x8xf32> -> vector<16x32xf32>
    %c1_255 = arith.constant 1 : index
    %c0_256 = arith.constant 0 : index
    %c0_257 = arith.constant 0 : index
    %580 = vector.load %arg27[%c1_255, %c0_256, %c0_257] : memref<2x32x32xf32, #tpu.memory_space<vmem>>, vector<1x32x32xf32>
    %581 = vector.shape_cast %580 : vector<1x32x32xf32> to vector<32x32xf32>
    %cst_258 = arith.constant dense<0.000000e+00> : vector<16x32xf32>
    %582 = tpu.matmul %579, %581, %cst_258 {dimension_numbers = #tpu.dot_dimension_numbers<[1], [0], [0], [1], [0, 0, 1, 1], [], []>} : vector<16x32xf32>, vector<32x32xf32>, vector<16x32xf32> -> vector<16x32xf32>
    %c1_259 = arith.constant 1 : index
    %c0_260 = arith.constant 0 : index
    %c0_261 = arith.constant 0 : index
    %583 = vector.load %arg28[%c1_259, %c0_260, %c0_261] : memref<2x1x32xf32, #tpu.memory_space<vmem>>, vector<1x1x32xf32>
    %584 = vector.shape_cast %583 : vector<1x1x32xf32> to vector<1x32xf32>
    %585 = vector.broadcast %584 : vector<1x32xf32> to vector<16x32xf32>
    %586 = arith.addf %582, %585 : vector<16x32xf32>
    %587 = arith.addf %529, %586 : vector<16x32xf32>
    %c1_262 = arith.constant 1 : index
    %c0_263 = arith.constant 0 : index
    %c0_264 = arith.constant 0 : index
    %588 = vector.load %arg29[%c1_262, %c0_263, %c0_264] : memref<2x1x32xf32, #tpu.memory_space<vmem>>, vector<1x1x32xf32>
    %589 = vector.shape_cast %588 : vector<1x1x32xf32> to vector<1x32xf32>
    %c1_265 = arith.constant 1 : index
    %c0_266 = arith.constant 0 : index
    %c0_267 = arith.constant 0 : index
    %590 = vector.load %arg30[%c1_265, %c0_266, %c0_267] : memref<2x1x32xf32, #tpu.memory_space<vmem>>, vector<1x1x32xf32>
    %591 = vector.shape_cast %590 : vector<1x1x32xf32> to vector<1x32xf32>
    %cst_268 = arith.constant dense<0.000000e+00> : vector<16xf32>
    %592 = vector.multi_reduction <add>, %587, %cst_268 [1] : vector<16x32xf32> to vector<16xf32>
    %593 = vector.shape_cast %592 : vector<16xf32> to vector<16x1xf32>
    %cst_269 = arith.constant 3.200000e+01 : f32
    %594 = vector.broadcast %cst_269 : f32 to vector<16x1xf32>
    %595 = arith.divf %593, %594 : vector<16x1xf32>
    %596 = vector.broadcast %595 : vector<16x1xf32> to vector<16x32xf32>
    %597 = arith.subf %587, %596 : vector<16x32xf32>
    %598 = arith.mulf %597, %597 : vector<16x32xf32>
    %cst_270 = arith.constant dense<0.000000e+00> : vector<16xf32>
    %599 = vector.multi_reduction <add>, %598, %cst_270 [1] : vector<16x32xf32> to vector<16xf32>
    %600 = vector.shape_cast %599 : vector<16xf32> to vector<16x1xf32>
    %cst_271 = arith.constant 3.200000e+01 : f32
    %601 = vector.broadcast %cst_271 : f32 to vector<16x1xf32>
    %602 = arith.divf %600, %601 : vector<16x1xf32>
    %603 = vector.broadcast %595 : vector<16x1xf32> to vector<16x32xf32>
    %604 = arith.subf %587, %603 : vector<16x32xf32>
    %cst_272 = arith.constant 9.99999974E-6 : f32
    %605 = vector.broadcast %cst_272 : f32 to vector<16x1xf32>
    %606 = arith.addf %602, %605 : vector<16x1xf32>
    %607 = math.rsqrt %606 : vector<16x1xf32>
    %608 = vector.broadcast %607 : vector<16x1xf32> to vector<16x32xf32>
    %609 = arith.mulf %604, %608 : vector<16x32xf32>
    %610 = vector.broadcast %589 : vector<1x32xf32> to vector<16x32xf32>
    %611 = arith.mulf %609, %610 : vector<16x32xf32>
    %612 = vector.broadcast %591 : vector<1x32xf32> to vector<16x32xf32>
    %613 = arith.addf %611, %612 : vector<16x32xf32>
    %c1_273 = arith.constant 1 : index
    %c0_274 = arith.constant 0 : index
    %c0_275 = arith.constant 0 : index
    %614 = vector.load %arg31[%c1_273, %c0_274, %c0_275] : memref<2x32x128xf32, #tpu.memory_space<vmem>>, vector<1x32x128xf32>
    %615 = vector.shape_cast %614 : vector<1x32x128xf32> to vector<32x128xf32>
    %c1_276 = arith.constant 1 : index
    %c0_277 = arith.constant 0 : index
    %c0_278 = arith.constant 0 : index
    %616 = vector.load %arg32[%c1_276, %c0_277, %c0_278] : memref<2x1x128xf32, #tpu.memory_space<vmem>>, vector<1x1x128xf32>
    %617 = vector.shape_cast %616 : vector<1x1x128xf32> to vector<1x128xf32>
    %c1_279 = arith.constant 1 : index
    %c0_280 = arith.constant 0 : index
    %c0_281 = arith.constant 0 : index
    %618 = vector.load %arg33[%c1_279, %c0_280, %c0_281] : memref<2x128x32xf32, #tpu.memory_space<vmem>>, vector<1x128x32xf32>
    %619 = vector.shape_cast %618 : vector<1x128x32xf32> to vector<128x32xf32>
    %c1_282 = arith.constant 1 : index
    %c0_283 = arith.constant 0 : index
    %c0_284 = arith.constant 0 : index
    %620 = vector.load %arg34[%c1_282, %c0_283, %c0_284] : memref<2x1x32xf32, #tpu.memory_space<vmem>>, vector<1x1x32xf32>
    %621 = vector.shape_cast %620 : vector<1x1x32xf32> to vector<1x32xf32>
    %cst_285 = arith.constant dense<0.000000e+00> : vector<16x128xf32>
    %622 = tpu.matmul %613, %615, %cst_285 {dimension_numbers = #tpu.dot_dimension_numbers<[1], [0], [0], [1], [0, 0, 1, 1], [], []>} : vector<16x32xf32>, vector<32x128xf32>, vector<16x128xf32> -> vector<16x128xf32>
    %623 = vector.broadcast %617 : vector<1x128xf32> to vector<16x128xf32>
    %624 = arith.addf %622, %623 : vector<16x128xf32>
    %cst_286 = arith.constant 0.000000e+00 : f32
    %625 = vector.broadcast %cst_286 : f32 to vector<16x128xf32>
    %626 = arith.maximumf %624, %625 : vector<16x128xf32>
    %cst_287 = arith.constant dense<0.000000e+00> : vector<16x32xf32>
    %627 = tpu.matmul %626, %619, %cst_287 {dimension_numbers = #tpu.dot_dimension_numbers<[1], [0], [0], [1], [0, 0, 1, 1], [], []>} : vector<16x128xf32>, vector<128x32xf32>, vector<16x32xf32> -> vector<16x32xf32>
    %628 = vector.broadcast %621 : vector<1x32xf32> to vector<16x32xf32>
    %629 = arith.addf %627, %628 : vector<16x32xf32>
    %630 = arith.addf %613, %629 : vector<16x32xf32>
    %c1_288 = arith.constant 1 : index
    %c0_289 = arith.constant 0 : index
    %c0_290 = arith.constant 0 : index
    %631 = vector.load %arg35[%c1_288, %c0_289, %c0_290] : memref<2x1x32xf32, #tpu.memory_space<vmem>>, vector<1x1x32xf32>
    %632 = vector.shape_cast %631 : vector<1x1x32xf32> to vector<1x32xf32>
    %c1_291 = arith.constant 1 : index
    %c0_292 = arith.constant 0 : index
    %c0_293 = arith.constant 0 : index
    %633 = vector.load %arg36[%c1_291, %c0_292, %c0_293] : memref<2x1x32xf32, #tpu.memory_space<vmem>>, vector<1x1x32xf32>
    %634 = vector.shape_cast %633 : vector<1x1x32xf32> to vector<1x32xf32>
    %cst_294 = arith.constant dense<0.000000e+00> : vector<16xf32>
    %635 = vector.multi_reduction <add>, %630, %cst_294 [1] : vector<16x32xf32> to vector<16xf32>
    %636 = vector.shape_cast %635 : vector<16xf32> to vector<16x1xf32>
    %cst_295 = arith.constant 3.200000e+01 : f32
    %637 = vector.broadcast %cst_295 : f32 to vector<16x1xf32>
    %638 = arith.divf %636, %637 : vector<16x1xf32>
    %639 = vector.broadcast %638 : vector<16x1xf32> to vector<16x32xf32>
    %640 = arith.subf %630, %639 : vector<16x32xf32>
    %641 = arith.mulf %640, %640 : vector<16x32xf32>
    %cst_296 = arith.constant dense<0.000000e+00> : vector<16xf32>
    %642 = vector.multi_reduction <add>, %641, %cst_296 [1] : vector<16x32xf32> to vector<16xf32>
    %643 = vector.shape_cast %642 : vector<16xf32> to vector<16x1xf32>
    %cst_297 = arith.constant 3.200000e+01 : f32
    %644 = vector.broadcast %cst_297 : f32 to vector<16x1xf32>
    %645 = arith.divf %643, %644 : vector<16x1xf32>
    %646 = vector.broadcast %638 : vector<16x1xf32> to vector<16x32xf32>
    %647 = arith.subf %630, %646 : vector<16x32xf32>
    %cst_298 = arith.constant 9.99999974E-6 : f32
    %648 = vector.broadcast %cst_298 : f32 to vector<16x1xf32>
    %649 = arith.addf %645, %648 : vector<16x1xf32>
    %650 = math.rsqrt %649 : vector<16x1xf32>
    %651 = vector.broadcast %650 : vector<16x1xf32> to vector<16x32xf32>
    %652 = arith.mulf %647, %651 : vector<16x32xf32>
    %653 = vector.broadcast %632 : vector<1x32xf32> to vector<16x32xf32>
    %654 = arith.mulf %652, %653 : vector<16x32xf32>
    %655 = vector.broadcast %634 : vector<1x32xf32> to vector<16x32xf32>
    %656 = arith.addf %654, %655 : vector<16x32xf32>
    %c0_299 = arith.constant 0 : index
    %c0_300 = arith.constant 0 : index
    %657 = vector.load %arg37[%c0_299, %c0_300] : memref<32x128xf32, #tpu.memory_space<vmem>>, vector<32x128xf32>
    %cst_301 = arith.constant dense<0.000000e+00> : vector<16x128xf32>
    %658 = tpu.matmul %656, %657, %cst_301 {dimension_numbers = #tpu.dot_dimension_numbers<[1], [0], [0], [1], [0, 0, 1, 1], [], []>} : vector<16x32xf32>, vector<32x128xf32>, vector<16x128xf32> -> vector<16x128xf32>
    %c0_302 = arith.constant 0 : index
    %c0_303 = arith.constant 0 : index
    %659 = vector.load %arg38[%c0_302, %c0_303] : memref<1x128xf32, #tpu.memory_space<vmem>>, vector<1x128xf32>
    %660 = vector.broadcast %659 : vector<1x128xf32> to vector<16x128xf32>
    %661 = arith.addf %658, %660 : vector<16x128xf32>
    %c0_304 = arith.constant 0 : index
    %c0_305 = arith.constant 0 : index
    %662 = vector.load %arg39[%c0_304, %c0_305] : memref<16x128xf32, #tpu.memory_space<vmem>>, vector<16x128xf32>
    tpu.vector_store %arg39[%c0_304, %c0_305], %661 {strides = array<i32>} : memref<16x128xf32, #tpu.memory_space<vmem>>, vector<16x128xf32>,
    return
  }
}

</mosaic_0001>

<llo_original>
// kernel: transformer_forward.1
$region0: #{transformer_forward.1}
  #allocation0 [shape = 'u32[]', space=smem, size = 0x4, offset = 0x4, fixed_abs, tag = 'smem constant byte address 0x4 - core index']
  #allocation1 [shape = 'u32[144,128]{1,0:T(1,128)}', space=vmem, size = 0x12000, scoped, tag = 'internal scratch']
  %s0 = inlined_call_operand.smem [shape: u32[40], index: -1, kind: input, shape index: {}]
  %s1 = sld [smem:[%s0]]
  %s2 = scalar_lea.smem %s0, 1
  %s3 = sld [smem:[%s2]]
  %s4 = scalar_lea.smem %s0, 2
  %s5 = sld [smem:[%s4]]
  %s6 = scalar_lea.smem %s0, 3
  %s7 = sld [smem:[%s6]]
  %s8 = scalar_lea.smem %s0, 4
  %s9 = sld [smem:[%s8]]
  %s10 = scalar_lea.smem %s0, 5
  %s11 = sld [smem:[%s10]]
  %s12 = scalar_lea.smem %s0, 6
  %s13 = sld [smem:[%s12]]
  %s14 = scalar_lea.smem %s0, 7
  %s15 = sld [smem:[%s14]]
  %s16 = scalar_lea.smem %s0, 8
  %s17 = sld [smem:[%s16]]
  %s18 = scalar_lea.smem %s0, 9
  %s19 = sld [smem:[%s18]]
  %s20 = scalar_lea.smem %s0, 10
  %s21 = sld [smem:[%s20]]
  %s22 = scalar_lea.smem %s0, 11
  %s23 = sld [smem:[%s22]]
  %s24 = scalar_lea.smem %s0, 12
  %s25 = sld [smem:[%s24]]
  %s26 = scalar_lea.smem %s0, 13
  %s27 = sld [smem:[%s26]]
  %s28 = scalar_lea.smem %s0, 14
  %s29 = sld [smem:[%s28]]
  %s30 = scalar_lea.smem %s0, 15
  %s31 = sld [smem:[%s30]]
  %s32 = scalar_lea.smem %s0, 16
  %s33 = sld [smem:[%s32]]
  %s34 = scalar_lea.smem %s0, 17
  %s35 = sld [smem:[%s34]]
  %s36 = scalar_lea.smem %s0, 18
  %s37 = sld [smem:[%s36]]
  %s38 = scalar_lea.smem %s0, 19
  %s39 = sld [smem:[%s38]]
  %s40 = scalar_lea.smem %s0, 20
  %s41 = sld [smem:[%s40]]
  %s42 = scalar_lea.smem %s0, 21
  %s43 = sld [smem:[%s42]]
  %s44 = scalar_lea.smem %s0, 22
  %s45 = sld [smem:[%s44]]
  %s46 = scalar_lea.smem %s0, 23
  %s47 = sld [smem:[%s46]]
  %s48 = scalar_lea.smem %s0, 24
  %s49 = sld [smem:[%s48]]
  %s50 = scalar_lea.smem %s0, 25
  %s51 = sld [smem:[%s50]]
  %s52 = scalar_lea.smem %s0, 26
  %s53 = sld [smem:[%s52]]
  %s54 = scalar_lea.smem %s0, 27
  %s55 = sld [smem:[%s54]]
  %s56 = scalar_lea.smem %s0, 28
  %s57 = sld [smem:[%s56]]
  %s58 = scalar_lea.smem %s0, 29
  %s59 = sld [smem:[%s58]]
  %s60 = scalar_lea.smem %s0, 30
  %s61 = sld [smem:[%s60]]
  %s62 = scalar_lea.smem %s0, 31
  %s63 = sld [smem:[%s62]]
  %s64 = scalar_lea.smem %s0, 32
  %s65 = sld [smem:[%s64]]
  %s66 = scalar_lea.smem %s0, 33
  %s67 = sld [smem:[%s66]]
  %s68 = scalar_lea.smem %s0, 34
  %s69 = sld [smem:[%s68]]
  %s70 = scalar_lea.smem %s0, 35
  %s71 = sld [smem:[%s70]]
  %s72 = scalar_lea.smem %s0, 36
  %s73 = sld [smem:[%s72]]
  %s74 = scalar_lea.smem %s0, 37
  %s75 = sld [smem:[%s74]]
  %s76 = scalar_lea.smem %s0, 38
  %s77 = sld [smem:[%s76]]
  %s78 = scalar_lea.smem %s0, 39
  %s79 = sld [smem:[%s78]]
  %s80 = sld [smem:[#allocation0]]
  $region166: #{transformer_forward.1} parent=0
    _
  %s82 = ssub.s32 1, %s80
  %s83 = scalar_select 0, %s82, %s80
  // Predicated region
  $region2: #{transformer_forward.1} parent=0 // pred_check
    _
  $region3: #{transformer_forward.1} parent=0 // pred_check_branch
    %85 = sbr.rel (0) target = $region5
  $region4: #{transformer_forward.1} parent=0 // pred_region
    _
  $region5: #{transformer_forward.1} parent=0 // pred_fallthru
    _
  // Predicated region
  $region6: #{transformer_forward.1} parent=0 // pred_check
    _
  $region7: #{transformer_forward.1} parent=0 // pred_check_branch
    %87 = sbr.rel (0) target = $region9
  $region8: #{transformer_forward.1} parent=0 // pred_region
    _
  $region9: #{transformer_forward.1} parent=0 // pred_fallthru
    _
  // Predicated region
  $region10: #{transformer_forward.1} parent=0 // pred_check
    _
  $region11: #{transformer_forward.1} parent=0 // pred_check_branch
    %89 = sbr.rel (0) target = $region13
  $region12: #{transformer_forward.1} parent=0 // pred_region
    _
  $region13: #{transformer_forward.1} parent=0 // pred_fallthru
    _
  // Predicated region
  $region14: #{transformer_forward.1} parent=0 // pred_check
    _
  $region15: #{transformer_forward.1} parent=0 // pred_check_branch
    %91 = sbr.rel (0) target = $region17
  $region16: #{transformer_forward.1} parent=0 // pred_region
    _
  $region17: #{transformer_forward.1} parent=0 // pred_fallthru
    _
  // Predicated region
  $region18: #{transformer_forward.1} parent=0 // pred_check
    _
  $region19: #{transformer_forward.1} parent=0 // pred_check_branch
    %93 = sbr.rel (0) target = $region21
  $region20: #{transformer_forward.1} parent=0 // pred_region
    _
  $region21: #{transformer_forward.1} parent=0 // pred_fallthru
    _
  // Predicated region
  $region22: #{transformer_forward.1} parent=0 // pred_check
    _
  $region23: #{transformer_forward.1} parent=0 // pred_check_branch
    %95 = sbr.rel (0) target = $region25
  $region24: #{transformer_forward.1} parent=0 // pred_region
    _
  $region25: #{transformer_forward.1} parent=0 // pred_fallthru
    _
  // Predicated region
  $region26: #{transformer_forward.1} parent=0 // pred_check
    _
  $region27: #{transformer_forward.1} parent=0 // pred_check_branch
    %97 = sbr.rel (0) target = $region29
  $region28: #{transformer_forward.1} parent=0 // pred_region
    _
  $region29: #{transformer_forward.1} parent=0 // pred_fallthru
    _
  // Predicated region
  $region30: #{transformer_forward.1} parent=0 // pred_check
    _
  $region31: #{transformer_forward.1} parent=0 // pred_check_branch
    %99 = sbr.rel (0) target = $region33
  $region32: #{transformer_forward.1} parent=0 // pred_region
    _
  $region33: #{transformer_forward.1} parent=0 // pred_fallthru
    _
  // Predicated region
  $region34: #{transformer_forward.1} parent=0 // pred_check
    _
  $region35: #{transformer_forward.1} parent=0 // pred_check_branch
    %101 = sbr.rel (0) target = $region37
  $region36: #{transformer_forward.1} parent=0 // pred_region
    _
  $region37: #{transformer_forward.1} parent=0 // pred_fallthru
    _
  // Predicated region
  $region38: #{transformer_forward.1} parent=0 // pred_check
    _
  $region39: #{transformer_forward.1} parent=0 // pred_check_branch
    %103 = sbr.rel (0) target = $region41
  $region40: #{transformer_forward.1} parent=0 // pred_region
    _
  $region41: #{transformer_forward.1} parent=0 // pred_fallthru
    _
  // Predicated region
  $region42: #{transformer_forward.1} parent=0 // pred_check
    _
  $region43: #{transformer_forward.1} parent=0 // pred_check_branch
    %105 = sbr.rel (0) target = $region45
  $region44: #{transformer_forward.1} parent=0 // pred_region
    _
  $region45: #{transformer_forward.1} parent=0 // pred_fallthru
    _
  // Predicated region
  $region46: #{transformer_forward.1} parent=0 // pred_check
    _
  $region47: #{transformer_forward.1} parent=0 // pred_check_branch
    %107 = sbr.rel (0) target = $region49
  $region48: #{transformer_forward.1} parent=0 // pred_region
    _
  $region49: #{transformer_forward.1} parent=0 // pred_fallthru
    _
  // Predicated region
  $region50: #{transformer_forward.1} parent=0 // pred_check
    _
  $region51: #{transformer_forward.1} parent=0 // pred_check_branch
    %109 = sbr.rel (0) target = $region53
  $region52: #{transformer_forward.1} parent=0 // pred_region
    _
  $region53: #{transformer_forward.1} parent=0 // pred_fallthru
    _
  // Predicated region
  $region54: #{transformer_forward.1} parent=0 // pred_check
    _
  $region55: #{transformer_forward.1} parent=0 // pred_check_branch
    %111 = sbr.rel (0) target = $region57
  $region56: #{transformer_forward.1} parent=0 // pred_region
    _
  $region57: #{transformer_forward.1} parent=0 // pred_fallthru
    _
  // Predicated region
  $region58: #{transformer_forward.1} parent=0 // pred_check
    _
  $region59: #{transformer_forward.1} parent=0 // pred_check_branch
    %113 = sbr.rel (0) target = $region61
  $region60: #{transformer_forward.1} parent=0 // pred_region
    _
  $region61: #{transformer_forward.1} parent=0 // pred_fallthru
    _
  // Predicated region
  $region62: #{transformer_forward.1} parent=0 // pred_check
    _
  $region63: #{transformer_forward.1} parent=0 // pred_check_branch
    %115 = sbr.rel (0) target = $region65
  $region64: #{transformer_forward.1} parent=0 // pred_region
    _
  $region65: #{transformer_forward.1} parent=0 // pred_fallthru
    _
  // Predicated region
  $region66: #{transformer_forward.1} parent=0 // pred_check
    _
  $region67: #{transformer_forward.1} parent=0 // pred_check_branch
    %117 = sbr.rel (0) target = $region69
  $region68: #{transformer_forward.1} parent=0 // pred_region
    _
  $region69: #{transformer_forward.1} parent=0 // pred_fallthru
    _
  // Predicated region
  $region70: #{transformer_forward.1} parent=0 // pred_check
    _
  $region71: #{transformer_forward.1} parent=0 // pred_check_branch
    %119 = sbr.rel (0) target = $region73
  $region72: #{transformer_forward.1} parent=0 // pred_region
    _
  $region73: #{transformer_forward.1} parent=0 // pred_fallthru
    _
  // Predicated region
  $region74: #{transformer_forward.1} parent=0 // pred_check
    _
  $region75: #{transformer_forward.1} parent=0 // pred_check_branch
    %121 = sbr.rel (0) target = $region77
  $region76: #{transformer_forward.1} parent=0 // pred_region
    _
  $region77: #{transformer_forward.1} parent=0 // pred_fallthru
    _
  // Predicated region
  $region78: #{transformer_forward.1} parent=0 // pred_check
    _
  $region79: #{transformer_forward.1} parent=0 // pred_check_branch
    %123 = sbr.rel (0) target = $region81
  $region80: #{transformer_forward.1} parent=0 // pred_region
    _
  $region81: #{transformer_forward.1} parent=0 // pred_fallthru
    _
  // Predicated region
  $region82: #{transformer_forward.1} parent=0 // pred_check
    _
  $region83: #{transformer_forward.1} parent=0 // pred_check_branch
    %125 = sbr.rel (0) target = $region85
  $region84: #{transformer_forward.1} parent=0 // pred_region
    _
  $region85: #{transformer_forward.1} parent=0 // pred_fallthru
    _
  // Predicated region
  $region86: #{transformer_forward.1} parent=0 // pred_check
    _
  $region87: #{transformer_forward.1} parent=0 // pred_check_branch
    %127 = sbr.rel (0) target = $region89
  $region88: #{transformer_forward.1} parent=0 // pred_region
    _
  $region89: #{transformer_forward.1} parent=0 // pred_fallthru
    _
  // Predicated region
  $region90: #{transformer_forward.1} parent=0 // pred_check
    _
  $region91: #{transformer_forward.1} parent=0 // pred_check_branch
    %129 = sbr.rel (0) target = $region93
  $region92: #{transformer_forward.1} parent=0 // pred_region
    _
  $region93: #{transformer_forward.1} parent=0 // pred_fallthru
    _
  // Predicated region
  $region94: #{transformer_forward.1} parent=0 // pred_check
    _
  $region95: #{transformer_forward.1} parent=0 // pred_check_branch
    %131 = sbr.rel (0) target = $region97
  $region96: #{transformer_forward.1} parent=0 // pred_region
    _
  $region97: #{transformer_forward.1} parent=0 // pred_fallthru
    _
  // Predicated region
  $region98: #{transformer_forward.1} parent=0 // pred_check
    _
  $region99: #{transformer_forward.1} parent=0 // pred_check_branch
    %133 = sbr.rel (0) target = $region101
  $region100: #{transformer_forward.1} parent=0 // pred_region
    _
  $region101: #{transformer_forward.1} parent=0 // pred_fallthru
    _
  // Predicated region
  $region102: #{transformer_forward.1} parent=0 // pred_check
    _
  $region103: #{transformer_forward.1} parent=0 // pred_check_branch
    %135 = sbr.rel (0) target = $region105
  $region104: #{transformer_forward.1} parent=0 // pred_region
    _
  $region105: #{transformer_forward.1} parent=0 // pred_fallthru
    _
  // Predicated region
  $region106: #{transformer_forward.1} parent=0 // pred_check
    _
  $region107: #{transformer_forward.1} parent=0 // pred_check_branch
    %137 = sbr.rel (0) target = $region109
  $region108: #{transformer_forward.1} parent=0 // pred_region
    _
  $region109: #{transformer_forward.1} parent=0 // pred_fallthru
    _
  // Predicated region
  $region110: #{transformer_forward.1} parent=0 // pred_check
    _
  $region111: #{transformer_forward.1} parent=0 // pred_check_branch
    %139 = sbr.rel (0) target = $region113
  $region112: #{transformer_forward.1} parent=0 // pred_region
    _
  $region113: #{transformer_forward.1} parent=0 // pred_fallthru
    _
  // Predicated region
  $region114: #{transformer_forward.1} parent=0 // pred_check
    _
  $region115: #{transformer_forward.1} parent=0 // pred_check_branch
    %141 = sbr.rel (0) target = $region117
  $region116: #{transformer_forward.1} parent=0 // pred_region
    _
  $region117: #{transformer_forward.1} parent=0 // pred_fallthru
    _
  // Predicated region
  $region118: #{transformer_forward.1} parent=0 // pred_check
    _
  $region119: #{transformer_forward.1} parent=0 // pred_check_branch
    %143 = sbr.rel (0) target = $region121
  $region120: #{transformer_forward.1} parent=0 // pred_region
    _
  $region121: #{transformer_forward.1} parent=0 // pred_fallthru
    _
  // Predicated region
  $region122: #{transformer_forward.1} parent=0 // pred_check
    _
  $region123: #{transformer_forward.1} parent=0 // pred_check_branch
    %145 = sbr.rel (0) target = $region125
  $region124: #{transformer_forward.1} parent=0 // pred_region
    _
  $region125: #{transformer_forward.1} parent=0 // pred_fallthru
    _
  // Predicated region
  $region126: #{transformer_forward.1} parent=0 // pred_check
    _
  $region127: #{transformer_forward.1} parent=0 // pred_check_branch
    %147 = sbr.rel (0) target = $region129
  $region128: #{transformer_forward.1} parent=0 // pred_region
    _
  $region129: #{transformer_forward.1} parent=0 // pred_fallthru
    _
  // Predicated region
  $region130: #{transformer_forward.1} parent=0 // pred_check
    _
  $region131: #{transformer_forward.1} parent=0 // pred_check_branch
    %149 = sbr.rel (0) target = $region133
  $region132: #{transformer_forward.1} parent=0 // pred_region
    _
  $region133: #{transformer_forward.1} parent=0 // pred_fallthru
    _
  // Predicated region
  $region134: #{transformer_forward.1} parent=0 // pred_check
    _
  $region135: #{transformer_forward.1} parent=0 // pred_check_branch
    %151 = sbr.rel (0) target = $region137
  $region136: #{transformer_forward.1} parent=0 // pred_region
    _
  $region137: #{transformer_forward.1} parent=0 // pred_fallthru
    _
  // Predicated region
  $region138: #{transformer_forward.1} parent=0 // pred_check
    _
  $region139: #{transformer_forward.1} parent=0 // pred_check_branch
    %153 = sbr.rel (0) target = $region141
  $region140: #{transformer_forward.1} parent=0 // pred_region
    _
  $region141: #{transformer_forward.1} parent=0 // pred_fallthru
    _
  // Predicated region
  $region142: #{transformer_forward.1} parent=0 // pred_check
    _
  $region143: #{transformer_forward.1} parent=0 // pred_check_branch
    %155 = sbr.rel (0) target = $region145
  $region144: #{transformer_forward.1} parent=0 // pred_region
    _
  $region145: #{transformer_forward.1} parent=0 // pred_fallthru
    _
  // Predicated region
  $region146: #{transformer_forward.1} parent=0 // pred_check
    _
  $region147: #{transformer_forward.1} parent=0 // pred_check_branch
    %157 = sbr.rel (0) target = $region149
  $region148: #{transformer_forward.1} parent=0 // pred_region
    _
  $region149: #{transformer_forward.1} parent=0 // pred_fallthru
    _
  // Predicated region
  $region150: #{transformer_forward.1} parent=0 // pred_check
    _
  $region151: #{transformer_forward.1} parent=0 // pred_check_branch
    %159 = sbr.rel (0) target = $region153
  $region152: #{transformer_forward.1} parent=0 // pred_region
    _
  $region153: #{transformer_forward.1} parent=0 // pred_fallthru
    _
  // Predicated region
  $region154: #{transformer_forward.1} parent=0 // pred_check
    _
  $region155: #{transformer_forward.1} parent=0 // pred_check_branch
    %161 = sbr.rel (0) target = $region157
  $region156: #{transformer_forward.1} parent=0 // pred_region
    _
  $region157: #{transformer_forward.1} parent=0 // pred_fallthru
    _
  %v162 = vld [vmem:[%s1] sm:$0xff]
  %v163 = vld [vmem:[%s1 + $0x8] sm:$0xff]
  %v164 = vld [vmem:[%s5] sm:$0xff]
  %v165 = vld [vmem:[%s5 + $0x8] sm:$0xff]
  %v166 = vld [vmem:[%s5 + $0x10] sm:$0xff]
  %v167 = vld [vmem:[%s5 + $0x18] sm:$0xff]
  %v168 = vld [vmem:[%s5 + $0x20] sm:$0xff]
  %v169 = vld [vmem:[%s5 + $0x28] sm:$0xff]
  %v170 = vld [vmem:[%s5 + $0x30] sm:$0xff]
  %v171 = vld [vmem:[%s5 + $0x38] sm:$0xff]
  %v172 = vld [vmem:[%s11] sm:$0xff]
  %v173 = vld [vmem:[%s11 + $0x8] sm:$0xff]
  %v174 = vld [vmem:[%s11 + $0x10] sm:$0xff]
  %v175 = vld [vmem:[%s11 + $0x18] sm:$0xff]
  %v176 = vld [vmem:[%s13] sm:$0x1]
  %v178 = vlaneseq
  %v179 = vshrl.u32 %v178, 7
  %v180 = vsub.s32 0, %v179
  %v181 = vrot.slane %v176, %v180
  %vm183 = vcmask 261120
  %v185 = vsel %vm183, %v162, 0
  %v188 = vsel %vm183, %v163, 0
  %190 = vmatprep.subr.mxu0 0.0
  %191 = vmatpush1.msra.mxu0 %v172
  %192 = vmatprep.subr.mxu0 0.0
  %193 = vmatpush1.msra.mxu0 %v173
  %194 = vmatprep.subr.mxu0 0.0
  %195 = vmatpush1.msra.mxu0 %v174
  %196 = vmatprep.subr.mxu0 0.0
  %197 = vmatpush1.msra.mxu0 %v175
  %198 = vmatprep.subr.mxu0 0.0
  %199 = vmatpush1.msra.mxu0 0.0
  %200 = vmatprep.subr.mxu0 0.0
  %201 = vmatpush1.msra.mxu0 0.0
  %202 = vmatprep.subr.mxu0 0.0
  %203 = vmatpush1.msra.mxu0 0.0
  %204 = vmatprep.subr.mxu0 0.0
  %205 = vmatpush1.msra.mxu0 0.0
  %206 = vmatprep.subr.mxu0 0.0
  %207 = vmatpush1.msra.mxu0 0.0
  %208 = vmatprep.subr.mxu0 0.0
  %209 = vmatpush1.msra.mxu0 0.0
  %210 = vmatprep.subr.mxu0 0.0
  %211 = vmatpush1.msra.mxu0 0.0
  %212 = vmatprep.subr.mxu0 0.0
  %213 = vmatpush1.msra.mxu0 0.0
  %214 = vmatprep.subr.mxu0 0.0
  %215 = vmatpush1.msra.mxu0 0.0
  %216 = vmatprep.subr.mxu0 0.0
  %217 = vmatpush1.msra.mxu0 0.0
  %218 = vmatprep.subr.mxu0 0.0
  %219 = vmatpush1.msra.mxu0 0.0
  %220 = vmatprep.subr.mxu0 0.0
  %221 = vmatpush1.msra.mxu0 0.0
  %222 = vmatprep.subr.mxu0 0.0
  %223 = vmatpush1.msra.mxu0 0.0
  %224 = vmatprep.subr.mxu0 0.0
  %225 = vmatpush1.msra.mxu0 0.0
  %226 = vmatprep.subr.mxu0 0.0
  %227 = vmatpush1.msra.mxu0 0.0
  %228 = vmatprep.subr.mxu0 0.0
  %229 = vmatpush1.msra.mxu0 0.0
  %230 = vmatprep.subr.mxu0 0.0
  %231 = vmatpush1.msra.mxu0 0.0
  %232 = vmatprep.subr.mxu0 0.0
  %233 = vmatpush1.msra.mxu0 0.0
  %234 = vmatprep.subr.mxu0 0.0
  %235 = vmatpush1.msra.mxu0 0.0
  %236 = vmatprep.subr.mxu0 0.0
  %237 = vmatpush1.msra.mxu0 0.0
  %238 = vmatprep.subr.mxu0 0.0
  %239 = vmatpush1.msra.mxu0 0.0
  %240 = vmatprep.subr.mxu0 0.0
  %241 = vmatpush1.msra.mxu0 0.0
  %242 = vmatprep.subr.mxu0 0.0
  %243 = vmatpush1.msra.mxu0 0.0
  %244 = vmatprep.subr.mxu0 0.0
  %245 = vmatpush1.msra.mxu0 0.0
  %246 = vmatprep.subr.mxu0 0.0
  %247 = vmatpush1.msra.mxu0 0.0
  %248 = vmatprep.subr.mxu0 0.0
  %249 = vmatpush1.msra.mxu0 0.0
  %250 = vmatprep.subr.mxu0 0.0
  %251 = vmatpush1.msra.mxu0 0.0
  %252 = vmatprep.subr.mxu0 0.0
  %253 = vmatpush1.msra.mxu0 0.0
  %254 = vmatprep.mubr.f32.mxu0 0.0
  %255 = vmatmul.mubr.f32.gmra.mrb[0].mxu0 %v185
  %v256 = vpop.f32.mrb[0].mxu0
  %v257 = vadd.f32 %v181, %v256
  %v258 = vpop.f32.mrb[0].mxu0
  %259 = vmatprep.mubr.f32.mxu0 0.0
  %260 = vmatmul.mubr.f32.gmra.mrb[0].mxu0 %v188
  %v261 = vpop.f32.mrb[0].mxu0
  %v262 = vadd.f32 %v181, %v261
  %v263 = vpop.f32.mrb[0].mxu0
  %264 = vdwg.mxu0
  %267 = vrot.lane.b32.xlu0 %v257, 120
  %v268 = vpop.permute.xlu0 %267
  %269 = vrot.lane.b32.xlu0 %v262, 120
  %v270 = vpop.permute.xlu0 %269
  %271 = vrot.lane.b32.xlu0 %v257, 112
  %v272 = vpop.permute.xlu0 %271
  %273 = vrot.lane.b32.xlu0 %v262, 112
  %v274 = vpop.permute.xlu0 %273
  %275 = vrot.lane.b32.xlu0 %v257, 104
  %v276 = vpop.permute.xlu0 %275
  %277 = vrot.lane.b32.xlu0 %v262, 104
  %v278 = vpop.permute.xlu0 %277
  %279 = vrot.lane.b32.xlu0 %v257, 96
  %v280 = vpop.permute.xlu0 %279
  %281 = vrot.lane.b32.xlu0 %v262, 96
  %v282 = vpop.permute.xlu0 %281
  %283 = vrot.lane.b32.xlu0 %v268, 96
  %v284 = vpop.permute.xlu0 %283
  %285 = vrot.lane.b32.xlu0 %v270, 96
  %v286 = vpop.permute.xlu0 %285
  %287 = vrot.lane.b32.xlu0 %v272, 96
  %v288 = vpop.permute.xlu0 %287
  %289 = vrot.lane.b32.xlu0 %v274, 96
  %v290 = vpop.permute.xlu0 %289
  %291 = vrot.lane.b32.xlu0 %v276, 96
  %v292 = vpop.permute.xlu0 %291
  %293 = vrot.lane.b32.xlu0 %v278, 96
  %v294 = vpop.permute.xlu0 %293
  %vm295 = vcmask 64512
  %v296 = vsel %vm295, %v257, 0
  %v298 = vsel %vm295, %v262, 0
  %v300 = vsel %vm295, %v268, 0
  %v302 = vsel %vm295, %v270, 0
  %v304 = vsel %vm295, %v272, 0
  %v306 = vsel %vm295, %v274, 0
  %v308 = vsel %vm295, %v276, 0
  %v310 = vsel %vm295, %v278, 0
  %v312 = vsel %vm295, %v280, 0
  %v314 = vsel %vm295, %v282, 0
  %v316 = vsel %vm295, %v284, 0
  %v318 = vsel %vm295, %v286, 0
  %v320 = vsel %vm295, %v288, 0
  %v322 = vsel %vm295, %v290, 0
  %v324 = vsel %vm295, %v292, 0
  %v326 = vsel %vm295, %v294, 0
  %328 = vmatprep.subr.mxu0 0.0
  %329 = vmatpush1.xpose.msra.mxu0 %v312
  %330 = vmatprep.subr.mxu0 0.0
  %331 = vmatpush1.xpose.msra.mxu0 %v314
  %332 = vmatprep.subr.mxu0 0.0
  %333 = vmatpush1.xpose.msra.mxu0 %v316
  %334 = vmatprep.subr.mxu0 0.0
  %335 = vmatpush1.xpose.msra.mxu0 %v318
  %336 = vmatprep.subr.mxu0 0.0
  %337 = vmatpush1.xpose.msra.mxu0 %v320
  %338 = vmatprep.subr.mxu0 0.0
  %339 = vmatpush1.xpose.msra.mxu0 %v322
  %340 = vmatprep.subr.mxu0 0.0
  %341 = vmatpush1.xpose.msra.mxu0 %v324
  %342 = vmatprep.subr.mxu0 0.0
  %343 = vmatpush1.xpose.msra.mxu0 %v326
  %344 = vmatprep.subr.mxu0 0.0
  %345 = vmatpush1.xpose.msra.mxu0 0.0
  %346 = vmatprep.subr.mxu0 0.0
  %347 = vmatpush1.xpose.msra.mxu0 0.0
  %348 = vmatprep.subr.mxu0 0.0
  %349 = vmatpush1.xpose.msra.mxu0 0.0
  %350 = vmatprep.subr.mxu0 0.0
  %351 = vmatpush1.xpose.msra.mxu0 0.0
  %352 = vmatprep.subr.mxu0 0.0
  %353 = vmatpush1.xpose.msra.mxu0 0.0
  %354 = vmatprep.subr.mxu0 0.0
  %355 = vmatpush1.xpose.msra.mxu0 0.0
  %356 = vmatprep.subr.mxu0 0.0
  %357 = vmatpush1.xpose.msra.mxu0 0.0
  %358 = vmatprep.subr.mxu0 0.0
  %359 = vmatpush1.xpose.msra.mxu0 0.0
  %360 = vmatprep.subr.mxu0 0.0
  %361 = vmatpush1.xpose.msra.mxu0 0.0
  %362 = vmatprep.subr.mxu0 0.0
  %363 = vmatpush1.xpose.msra.mxu0 0.0
  %364 = vmatprep.subr.mxu0 0.0
  %365 = vmatpush1.xpose.msra.mxu0 0.0
  %366 = vmatprep.subr.mxu0 0.0
  %367 = vmatpush1.xpose.msra.mxu0 0.0
  %368 = vmatprep.subr.mxu0 0.0
  %369 = vmatpush1.xpose.msra.mxu0 0.0
  %370 = vmatprep.subr.mxu0 0.0
  %371 = vmatpush1.xpose.msra.mxu0 0.0
  %372 = vmatprep.subr.mxu0 0.0
  %373 = vmatpush1.xpose.msra.mxu0 0.0
  %374 = vmatprep.subr.mxu0 0.0
  %375 = vmatpush1.xpose.msra.mxu0 0.0
  %376 = vmatprep.subr.mxu0 0.0
  %377 = vmatpush1.xpose.msra.mxu0 0.0
  %378 = vmatprep.subr.mxu0 0.0
  %379 = vmatpush1.xpose.msra.mxu0 0.0
  %380 = vmatprep.subr.mxu0 0.0
  %381 = vmatpush1.xpose.msra.mxu0 0.0
  %382 = vmatprep.subr.mxu0 0.0
  %383 = vmatpush1.xpose.msra.mxu0 0.0
  %384 = vmatprep.subr.mxu0 0.0
  %385 = vmatpush1.xpose.msra.mxu0 0.0
  %386 = vmatprep.subr.mxu0 0.0
  %387 = vmatpush1.xpose.msra.mxu0 0.0
  %388 = vmatprep.subr.mxu0 0.0
  %389 = vmatpush1.xpose.msra.mxu0 0.0
  %390 = vmatprep.subr.mxu0 0.0
  %391 = vmatpush1.xpose.msra.mxu0 0.0
  %392 = vmatprep.mubr.f32.mxu0 0.0
  %393 = vmatmul.mubr.f32.gmra.mrb[0].mxu0 %v296
  %v394 = vpop.f32.mrb[0].mxu0
  %v395 = vadd.f32 %v164, %v394
  %v396 = vpop.f32.mrb[0].mxu0
  %397 = vmatprep.mubr.f32.mxu0 0.0
  %398 = vmatmul.mubr.f32.gmra.mrb[0].mxu0 %v298
  %v399 = vpop.f32.mrb[0].mxu0
  %v400 = vadd.f32 %v165, %v399
  %v401 = vpop.f32.mrb[0].mxu0
  %402 = vmatprep.mubr.f32.mxu0 0.0
  %403 = vmatmul.mubr.f32.gmra.mrb[0].mxu0 %v300
  %v404 = vpop.f32.mrb[0].mxu0
  %v405 = vadd.f32 %v166, %v404
  %v406 = vpop.f32.mrb[0].mxu0
  %407 = vmatprep.mubr.f32.mxu0 0.0
  %408 = vmatmul.mubr.f32.gmra.mrb[0].mxu0 %v302
  %v409 = vpop.f32.mrb[0].mxu0
  %v410 = vadd.f32 %v167, %v409
  %v411 = vpop.f32.mrb[0].mxu0
  %412 = vmatprep.mubr.f32.mxu0 0.0
  %413 = vmatmul.mubr.f32.gmra.mrb[0].mxu0 %v304
  %v414 = vpop.f32.mrb[0].mxu0
  %v415 = vadd.f32 %v168, %v414
  %v416 = vpop.f32.mrb[0].mxu0
  %417 = vmatprep.mubr.f32.mxu0 0.0
  %418 = vmatmul.mubr.f32.gmra.mrb[0].mxu0 %v306
  %v419 = vpop.f32.mrb[0].mxu0
  %v420 = vadd.f32 %v169, %v419
  %v421 = vpop.f32.mrb[0].mxu0
  %422 = vmatprep.mubr.f32.mxu0 0.0
  %423 = vmatmul.mubr.f32.gmra.mrb[0].mxu0 %v308
  %v424 = vpop.f32.mrb[0].mxu0
  %v425 = vadd.f32 %v170, %v424
  %v426 = vpop.f32.mrb[0].mxu0
  %427 = vmatprep.mubr.f32.mxu0 0.0
  %428 = vmatmul.mubr.f32.gmra.mrb[0].mxu0 %v310
  %v429 = vpop.f32.mrb[0].mxu0
  %v430 = vadd.f32 %v171, %v429
  %v431 = vpop.f32.mrb[0].mxu0
  %432 = vdwg.mxu0
  %vm433 = vcmask 523264
  %v434 = vsel %vm433, %v395, -inf
  %435 = vmax.xlane.f32.xlu0 %v434
  %v436 = vpop.xlane.xlu0 %435
  %v437 = vsel %vm433, %v400, -inf
  %438 = vmax.xlane.f32.xlu0 %v437
  %v439 = vpop.xlane.xlu0 %438
  %v440 = vsel %vm433, %v405, -inf
  %441 = vmax.xlane.f32.xlu0 %v440
  %v442 = vpop.xlane.xlu0 %441
  %v443 = vsel %vm433, %v410, -inf
  %444 = vmax.xlane.f32.xlu0 %v443
  %v445 = vpop.xlane.xlu0 %444
  %v446 = vsel %vm433, %v415, -inf
  %447 = vmax.xlane.f32.xlu0 %v446
  %v448 = vpop.xlane.xlu0 %447
  %v449 = vsel %vm433, %v420, -inf
  %450 = vmax.xlane.f32.xlu0 %v449
  %v451 = vpop.xlane.xlu0 %450
  %v452 = vsel %vm433, %v425, -inf
  %453 = vmax.xlane.f32.xlu0 %v452
  %v454 = vpop.xlane.xlu0 %453
  %v455 = vsel %vm433, %v430, -inf
  %456 = vmax.xlane.f32.xlu0 %v455
  %v457 = vpop.xlane.xlu0 %456
  %v458 = vsub.f32 %v395, %v436
  %v459 = vsub.f32 %v400, %v439
  %v460 = vsub.f32 %v405, %v442
  %v461 = vsub.f32 %v410, %v445
  %v462 = vsub.f32 %v415, %v448
  %v463 = vsub.f32 %v420, %v451
  %v464 = vsub.f32 %v425, %v454
  %v465 = vsub.f32 %v430, %v457
  %v466 = vmul.f32 %v458, 1.442695
  %v467 = vpow.pop %v466
  %v468 = vmul.f32 %v459, 1.442695
  %v469 = vpow.pop %v468
  %v470 = vmul.f32 %v460, 1.442695
  %v471 = vpow.pop %v470
  %v472 = vmul.f32 %v461, 1.442695
  %v473 = vpow.pop %v472
  %v474 = vmul.f32 %v462, 1.442695
  %v475 = vpow.pop %v474
  %v476 = vmul.f32 %v463, 1.442695
  %v477 = vpow.pop %v476
  %v478 = vmul.f32 %v464, 1.442695
  %v479 = vpow.pop %v478
  %v480 = vmul.f32 %v465, 1.442695
  %v481 = vpow.pop %v480
  %v482 = vsel %vm433, %v467, 0.0
  %483 = vadd.xlane.f32.xlu0 %v482
  %v484 = vpop.xlane.xlu0 %483
  %v485 = vsel %vm433, %v469, 0.0
  %486 = vadd.xlane.f32.xlu0 %v485
  %v487 = vpop.xlane.xlu0 %486
  %v488 = vsel %vm433, %v471, 0.0
  %489 = vadd.xlane.f32.xlu0 %v488
  %v490 = vpop.xlane.xlu0 %489
  %v491 = vsel %vm433, %v473, 0.0
  %492 = vadd.xlane.f32.xlu0 %v491
  %v493 = vpop.xlane.xlu0 %492
  %v494 = vsel %vm433, %v475, 0.0
  %495 = vadd.xlane.f32.xlu0 %v494
  %v496 = vpop.xlane.xlu0 %495
  %v497 = vsel %vm433, %v477, 0.0
  %498 = vadd.xlane.f32.xlu0 %v497
  %v499 = vpop.xlane.xlu0 %498
  %v500 = vsel %vm433, %v479, 0.0
  %501 = vadd.xlane.f32.xlu0 %v500
  %v502 = vpop.xlane.xlu0 %501
  %v503 = vsel %vm433, %v481, 0.0
  %504 = vadd.xlane.f32.xlu0 %v503
  %v505 = vpop.xlane.xlu0 %504
  %v506 = vrcp.pop %v484
  %v507 = vrcp.pop %v487
  %v508 = vrcp.pop %v490
  %v509 = vrcp.pop %v493
  %v510 = vrcp.pop %v496
  %v511 = vrcp.pop %v499
  %v512 = vrcp.pop %v502
  %v513 = vrcp.pop %v505
  %v514 = vmul.f32 %v467, %v506
  %v515 = vmul.f32 %v469, %v507
  %v516 = vmul.f32 %v471, %v508
  %v517 = vmul.f32 %v473, %v509
  %v518 = vmul.f32 %v475, %v510
  %v519 = vmul.f32 %v477, %v511
  %v520 = vmul.f32 %v479, %v512
  %v521 = vmul.f32 %v481, %v513
  %522 = vrot.lane.b32.xlu0 %v257, 64
  %v523 = vpop.permute.xlu0 %522
  %524 = vrot.lane.b32.xlu0 %v262, 64
  %v525 = vpop.permute.xlu0 %524
  %526 = vrot.lane.b32.xlu0 %v268, 64
  %v527 = vpop.permute.xlu0 %526
  %528 = vrot.lane.b32.xlu0 %v270, 64
  %v529 = vpop.permute.xlu0 %528
  %530 = vrot.lane.b32.xlu0 %v272, 64
  %v531 = vpop.permute.xlu0 %530
  %532 = vrot.lane.b32.xlu0 %v274, 64
  %v533 = vpop.permute.xlu0 %532
  %534 = vrot.lane.b32.xlu0 %v276, 64
  %v535 = vpop.permute.xlu0 %534
  %536 = vrot.lane.b32.xlu0 %v278, 64
  %v537 = vpop.permute.xlu0 %536
  %v547 = vsel %vm433, %v514, 0
  %v550 = vsel %vm433, %v515, 0
  %v553 = vsel %vm433, %v516, 0
  %v556 = vsel %vm433, %v517, 0
  %v559 = vsel %vm433, %v518, 0
  %v562 = vsel %vm433, %v519, 0
  %v565 = vsel %vm433, %v520, 0
  %v568 = vsel %vm433, %v521, 0
  %570 = vmatprep.subr.mxu0 0.0
  %571 = vmatpush1.msra.mxu0 %v523
  %572 = vmatprep.subr.mxu0 0.0
  %573 = vmatpush1.msra.mxu0 %v525
  %574 = vmatprep.subr.mxu0 0.0
  %575 = vmatpush1.msra.mxu0 %v527
  %576 = vmatprep.subr.mxu0 0.0
  %577 = vmatpush1.msra.mxu0 %v529
  %578 = vmatprep.subr.mxu0 0.0
  %579 = vmatpush1.msra.mxu0 %v531
  %580 = vmatprep.subr.mxu0 0.0
  %581 = vmatpush1.msra.mxu0 %v533
  %582 = vmatprep.subr.mxu0 0.0
  %583 = vmatpush1.msra.mxu0 %v535
  %584 = vmatprep.subr.mxu0 0.0
  %585 = vmatpush1.msra.mxu0 %v537
  %586 = vmatprep.subr.mxu0 0.0
  %587 = vmatpush1.msra.mxu0 0.0
  %588 = vmatprep.subr.mxu0 0.0
  %589 = vmatpush1.msra.mxu0 0.0
  %590 = vmatprep.subr.mxu0 0.0
  %591 = vmatpush1.msra.mxu0 0.0
  %592 = vmatprep.subr.mxu0 0.0
  %593 = vmatpush1.msra.mxu0 0.0
  %594 = vmatprep.subr.mxu0 0.0
  %595 = vmatpush1.msra.mxu0 0.0
  %596 = vmatprep.subr.mxu0 0.0
  %597 = vmatpush1.msra.mxu0 0.0
  %598 = vmatprep.subr.mxu0 0.0
  %599 = vmatpush1.msra.mxu0 0.0
  %600 = vmatprep.subr.mxu0 0.0
  %601 = vmatpush1.msra.mxu0 0.0
  %602 = vmatprep.subr.mxu0 0.0
  %603 = vmatpush1.msra.mxu0 0.0
  %604 = vmatprep.subr.mxu0 0.0
  %605 = vmatpush1.msra.mxu0 0.0
  %606 = vmatprep.subr.mxu0 0.0
  %607 = vmatpush1.msra.mxu0 0.0
  %608 = vmatprep.subr.mxu0 0.0
  %609 = vmatpush1.msra.mxu0 0.0
  %610 = vmatprep.subr.mxu0 0.0
  %611 = vmatpush1.msra.mxu0 0.0
  %612 = vmatprep.subr.mxu0 0.0
  %613 = vmatpush1.msra.mxu0 0.0
  %614 = vmatprep.subr.mxu0 0.0
  %615 = vmatpush1.msra.mxu0 0.0
  %616 = vmatprep.subr.mxu0 0.0
  %617 = vmatpush1.msra.mxu0 0.0
  %618 = vmatprep.subr.mxu0 0.0
  %619 = vmatpush1.msra.mxu0 0.0
  %620 = vmatprep.subr.mxu0 0.0
  %621 = vmatpush1.msra.mxu0 0.0
  %622 = vmatprep.subr.mxu0 0.0
  %623 = vmatpush1.msra.mxu0 0.0
  %624 = vmatprep.subr.mxu0 0.0
  %625 = vmatpush1.msra.mxu0 0.0
  %626 = vmatprep.subr.mxu0 0.0
  %627 = vmatpush1.msra.mxu0 0.0
  %628 = vmatprep.subr.mxu0 0.0
  %629 = vmatpush1.msra.mxu0 0.0
  %630 = vmatprep.subr.mxu0 0.0
  %631 = vmatpush1.msra.mxu0 0.0
  %632 = vmatprep.subr.mxu0 0.0
  %633 = vmatpush1.msra.mxu0 0.0
  %634 = vmatprep.mubr.f32.mxu0 0.0
  %635 = vmatmul.mubr.f32.gmra.mrb[0].mxu0 %v547
  %v636 = vpop.f32.mrb[0].mxu0
  %v637 = vadd.f32 0.0, %v636
  %v638 = vpop.f32.mrb[0].mxu0
  %639 = vmatprep.mubr.f32.mxu0 0.0
  %640 = vmatmul.mubr.f32.gmra.mrb[0].mxu0 %v550
  %v641 = vpop.f32.mrb[0].mxu0
  %v642 = vadd.f32 0.0, %v641
  %v643 = vpop.f32.mrb[0].mxu0
  %644 = vmatprep.mubr.f32.mxu0 0.0
  %645 = vmatmul.mubr.f32.gmra.mrb[0].mxu0 %v553
  %v646 = vpop.f32.mrb[0].mxu0
  %v647 = vadd.f32 0.0, %v646
  %v648 = vpop.f32.mrb[0].mxu0
  %649 = vmatprep.mubr.f32.mxu0 0.0
  %650 = vmatmul.mubr.f32.gmra.mrb[0].mxu0 %v556
  %v651 = vpop.f32.mrb[0].mxu0
  %v652 = vadd.f32 0.0, %v651
  %v653 = vpop.f32.mrb[0].mxu0
  %654 = vmatprep.mubr.f32.mxu0 0.0
  %655 = vmatmul.mubr.f32.gmra.mrb[0].mxu0 %v559
  %v656 = vpop.f32.mrb[0].mxu0
  %v657 = vadd.f32 0.0, %v656
  %v658 = vpop.f32.mrb[0].mxu0
  %659 = vmatprep.mubr.f32.mxu0 0.0
  %660 = vmatmul.mubr.f32.gmra.mrb[0].mxu0 %v562
  %v661 = vpop.f32.mrb[0].mxu0
  %v662 = vadd.f32 0.0, %v661
  %v663 = vpop.f32.mrb[0].mxu0
  %664 = vmatprep.mubr.f32.mxu0 0.0
  %665 = vmatmul.mubr.f32.gmra.mrb[0].mxu0 %v565
  %v666 = vpop.f32.mrb[0].mxu0
  %v667 = vadd.f32 0.0, %v666
  %v668 = vpop.f32.mrb[0].mxu0
  %669 = vmatprep.mubr.f32.mxu0 0.0
  %670 = vmatmul.mubr.f32.gmra.mrb[0].mxu0 %v568
  %v671 = vpop.f32.mrb[0].mxu0
  %v672 = vadd.f32 0.0, %v671
  %v673 = vpop.f32.mrb[0].mxu0
  %674 = vdwg.mxu0
  %677 = vrot.lane.b32.xlu0 %v647, 8
  %v678 = vpop.permute.xlu0 %677
  %679 = vrot.lane.b32.xlu0 %v652, 8
  %v680 = vpop.permute.xlu0 %679
  %685 = vrot.lane.b32.xlu0 %v657, 16
  %v686 = vpop.permute.xlu0 %685
  %687 = vrot.lane.b32.xlu0 %v662, 16
  %v688 = vpop.permute.xlu0 %687
  %693 = vrot.lane.b32.xlu0 %v667, 24
  %v694 = vpop.permute.xlu0 %693
  %695 = vrot.lane.b32.xlu0 %v672, 24
  %v696 = vpop.permute.xlu0 %695
  %v699 = vsel %vm295, %v637, %v678
  %v700 = vsel %vm295, %v642, %v680
  %vm701 = vcmask 130048
  %v702 = vsel %vm701, %v699, %v686
  %v703 = vsel %vm701, %v700, %v688
  %vm704 = vcmask 195584
  %v705 = vsel %vm704, %v702, %v694
  %v706 = vsel %vm704, %v703, %v696
  %v707 = vld [vmem:[%s15] sm:$0xff]
  %v708 = vld [vmem:[%s15 + $0x8] sm:$0xff]
  %v709 = vld [vmem:[%s15 + $0x10] sm:$0xff]
  %v710 = vld [vmem:[%s15 + $0x18] sm:$0xff]
  %v711 = vld [vmem:[%s17] sm:$0x1]
  %v713 = vlaneseq
  %v714 = vshrl.u32 %v713, 7
  %v715 = vsub.s32 0, %v714
  %v716 = vrot.slane %v711, %v715
  %v719 = vsel %vm183, %v705, 0
  %v722 = vsel %vm183, %v706, 0
  %724 = vmatprep.subr.mxu0 0.0
  %725 = vmatpush1.msra.mxu0 %v707
  %726 = vmatprep.subr.mxu0 0.0
  %727 = vmatpush1.msra.mxu0 %v708
  %728 = vmatprep.subr.mxu0 0.0
  %729 = vmatpush1.msra.mxu0 %v709
  %730 = vmatprep.subr.mxu0 0.0
  %731 = vmatpush1.msra.mxu0 %v710
  %732 = vmatprep.subr.mxu0 0.0
  %733 = vmatpush1.msra.mxu0 0.0
  %734 = vmatprep.subr.mxu0 0.0
  %735 = vmatpush1.msra.mxu0 0.0
  %736 = vmatprep.subr.mxu0 0.0
  %737 = vmatpush1.msra.mxu0 0.0
  %738 = vmatprep.subr.mxu0 0.0
  %739 = vmatpush1.msra.mxu0 0.0
  %740 = vmatprep.subr.mxu0 0.0
  %741 = vmatpush1.msra.mxu0 0.0
  %742 = vmatprep.subr.mxu0 0.0
  %743 = vmatpush1.msra.mxu0 0.0
  %744 = vmatprep.subr.mxu0 0.0
  %745 = vmatpush1.msra.mxu0 0.0
  %746 = vmatprep.subr.mxu0 0.0
  %747 = vmatpush1.msra.mxu0 0.0
  %748 = vmatprep.subr.mxu0 0.0
  %749 = vmatpush1.msra.mxu0 0.0
  %750 = vmatprep.subr.mxu0 0.0
  %751 = vmatpush1.msra.mxu0 0.0
  %752 = vmatprep.subr.mxu0 0.0
  %753 = vmatpush1.msra.mxu0 0.0
  %754 = vmatprep.subr.mxu0 0.0
  %755 = vmatpush1.msra.mxu0 0.0
  %756 = vmatprep.subr.mxu0 0.0
  %757 = vmatpush1.msra.mxu0 0.0
  %758 = vmatprep.subr.mxu0 0.0
  %759 = vmatpush1.msra.mxu0 0.0
  %760 = vmatprep.subr.mxu0 0.0
  %761 = vmatpush1.msra.mxu0 0.0
  %762 = vmatprep.subr.mxu0 0.0
  %763 = vmatpush1.msra.mxu0 0.0
  %764 = vmatprep.subr.mxu0 0.0
  %765 = vmatpush1.msra.mxu0 0.0
  %766 = vmatprep.subr.mxu0 0.0
  %767 = vmatpush1.msra.mxu0 0.0
  %768 = vmatprep.subr.mxu0 0.0
  %769 = vmatpush1.msra.mxu0 0.0
  %770 = vmatprep.subr.mxu0 0.0
  %771 = vmatpush1.msra.mxu0 0.0
  %772 = vmatprep.subr.mxu0 0.0
  %773 = vmatpush1.msra.mxu0 0.0
  %774 = vmatprep.subr.mxu0 0.0
  %775 = vmatpush1.msra.mxu0 0.0
  %776 = vmatprep.subr.mxu0 0.0
  %777 = vmatpush1.msra.mxu0 0.0
  %778 = vmatprep.subr.mxu0 0.0
  %779 = vmatpush1.msra.mxu0 0.0
  %780 = vmatprep.subr.mxu0 0.0
  %781 = vmatpush1.msra.mxu0 0.0
  %782 = vmatprep.subr.mxu0 0.0
  %783 = vmatpush1.msra.mxu0 0.0
  %784 = vmatprep.subr.mxu0 0.0
  %785 = vmatpush1.msra.mxu0 0.0
  %786 = vmatprep.subr.mxu0 0.0
  %787 = vmatpush1.msra.mxu0 0.0
  %788 = vmatprep.mubr.f32.mxu0 0.0
  %789 = vmatmul.mubr.f32.gmra.mrb[0].mxu0 %v719
  %v790 = vpop.f32.mrb[0].mxu0
  %v791 = vadd.f32 %v716, %v790
  %v792 = vpop.f32.mrb[0].mxu0
  %793 = vmatprep.mubr.f32.mxu0 0.0
  %794 = vmatmul.mubr.f32.gmra.mrb[0].mxu0 %v722
  %v795 = vpop.f32.mrb[0].mxu0
  %v796 = vadd.f32 %v716, %v795
  %v797 = vpop.f32.mrb[0].mxu0
  %798 = vdwg.mxu0
  %v799 = vadd.f32 %v162, %v791
  %v800 = vadd.f32 %v163, %v796
  %v801 = vld [vmem:[%s19] sm:$0x1]
  %v802 = vld [vmem:[%s21] sm:$0x1]
  %v803 = vsel %vm183, %v799, 0.0
  %804 = vadd.xlane.f32.xlu0 %v803
  %v805 = vpop.xlane.xlu0 %804
  %v806 = vsel %vm183, %v800, 0.0
  %807 = vadd.xlane.f32.xlu0 %v806
  %v808 = vpop.xlane.xlu0 %807
  %v809 = vrcp.pop 32.0
  %v810 = vmul.f32 %v805, %v809
  %v811 = vmul.f32 %v808, %v809
  %v812 = vsub.f32 %v799, %v810
  %v813 = vsub.f32 %v800, %v811
  %v814 = vmul.f32 %v812, %v812
  %v815 = vmul.f32 %v813, %v813
  %v816 = vsel %vm183, %v814, 0.0
  %817 = vadd.xlane.f32.xlu0 %v816
  %v818 = vpop.xlane.xlu0 %817
  %v819 = vsel %vm183, %v815, 0.0
  %820 = vadd.xlane.f32.xlu0 %v819
  %v821 = vpop.xlane.xlu0 %820
  %v822 = vmul.f32 %v818, %v809
  %v823 = vmul.f32 %v821, %v809
  %v824 = vadd.f32 %v822, 1e-05
  %v825 = vadd.f32 %v823, 1e-05
  %v826 = vrsqrt.pop %v824
  %v827 = vrsqrt.pop %v825
  %v828 = vmul.f32 %v812, %v826
  %v829 = vmul.f32 %v813, %v827
  %v831 = vlaneseq
  %v832 = vshrl.u32 %v831, 7
  %v833 = vsub.s32 0, %v832
  %v834 = vrot.slane %v801, %v833
  %v836 = vmul.f32 %v828, %v834
  %v837 = vmul.f32 %v829, %v834
  %v839 = vlaneseq
  %v840 = vshrl.u32 %v839, 7
  %v841 = vsub.s32 0, %v840
  %v842 = vrot.slane %v802, %v841
  %v844 = vadd.f32 %v836, %v842
  %v845 = vadd.f32 %v837, %v842
  %v846 = vld [vmem:[%s23] sm:$0xff]
  %v847 = vld [vmem:[%s23 + $0x8] sm:$0xff]
  %v848 = vld [vmem:[%s23 + $0x10] sm:$0xff]
  %v849 = vld [vmem:[%s23 + $0x18] sm:$0xff]
  %v850 = vld [vmem:[%s25] sm:$0x1]
  %v851 = vld [vmem:[%s27] sm:$0xff]
  %v852 = vld [vmem:[%s27 + $0x8] sm:$0xff]
  %v853 = vld [vmem:[%s27 + $0x10] sm:$0xff]
  %v854 = vld [vmem:[%s27 + $0x18] sm:$0xff]
  %v855 = vld [vmem:[%s27 + $0x20] sm:$0xff]
  %v856 = vld [vmem:[%s27 + $0x28] sm:$0xff]
  %v857 = vld [vmem:[%s27 + $0x30] sm:$0xff]
  %v858 = vld [vmem:[%s27 + $0x38] sm:$0xff]
  %v859 = vld [vmem:[%s27 + $0x40] sm:$0xff]
  %v860 = vld [vmem:[%s27 + $0x48] sm:$0xff]
  %v861 = vld [vmem:[%s27 + $0x50] sm:$0xff]
  %v862 = vld [vmem:[%s27 + $0x58] sm:$0xff]
  %v863 = vld [vmem:[%s27 + $0x60] sm:$0xff]
  %v864 = vld [vmem:[%s27 + $0x68] sm:$0xff]
  %v865 = vld [vmem:[%s27 + $0x70] sm:$0xff]
  %v866 = vld [vmem:[%s27 + $0x78] sm:$0xff]
  %v867 = vld [vmem:[%s29] sm:$0x1]
  %v869 = vlaneseq
  %v870 = vshrl.u32 %v869, 7
  %v871 = vsub.s32 0, %v870
  %v872 = vrot.slane %v850, %v871
  %v875 = vsel %vm183, %v844, 0
  %v878 = vsel %vm183, %v845, 0
  %880 = vmatprep.subr.mxu0 0.0
  %881 = vmatpush1.msra.mxu0 %v846
  %882 = vmatprep.subr.mxu0 0.0
  %883 = vmatpush1.msra.mxu0 %v847
  %884 = vmatprep.subr.mxu0 0.0
  %885 = vmatpush1.msra.mxu0 %v848
  %886 = vmatprep.subr.mxu0 0.0
  %887 = vmatpush1.msra.mxu0 %v849
  %888 = vmatprep.subr.mxu0 0.0
  %889 = vmatpush1.msra.mxu0 0.0
  %890 = vmatprep.subr.mxu0 0.0
  %891 = vmatpush1.msra.mxu0 0.0
  %892 = vmatprep.subr.mxu0 0.0
  %893 = vmatpush1.msra.mxu0 0.0
  %894 = vmatprep.subr.mxu0 0.0
  %895 = vmatpush1.msra.mxu0 0.0
  %896 = vmatprep.subr.mxu0 0.0
  %897 = vmatpush1.msra.mxu0 0.0
  %898 = vmatprep.subr.mxu0 0.0
  %899 = vmatpush1.msra.mxu0 0.0
  %900 = vmatprep.subr.mxu0 0.0
  %901 = vmatpush1.msra.mxu0 0.0
  %902 = vmatprep.subr.mxu0 0.0
  %903 = vmatpush1.msra.mxu0 0.0
  %904 = vmatprep.subr.mxu0 0.0
  %905 = vmatpush1.msra.mxu0 0.0
  %906 = vmatprep.subr.mxu0 0.0
  %907 = vmatpush1.msra.mxu0 0.0
  %908 = vmatprep.subr.mxu0 0.0
  %909 = vmatpush1.msra.mxu0 0.0
  %910 = vmatprep.subr.mxu0 0.0
  %911 = vmatpush1.msra.mxu0 0.0
  %912 = vmatprep.subr.mxu0 0.0
  %913 = vmatpush1.msra.mxu0 0.0
  %914 = vmatprep.subr.mxu0 0.0
  %915 = vmatpush1.msra.mxu0 0.0
  %916 = vmatprep.subr.mxu0 0.0
  %917 = vmatpush1.msra.mxu0 0.0
  %918 = vmatprep.subr.mxu0 0.0
  %919 = vmatpush1.msra.mxu0 0.0
  %920 = vmatprep.subr.mxu0 0.0
  %921 = vmatpush1.msra.mxu0 0.0
  %922 = vmatprep.subr.mxu0 0.0
  %923 = vmatpush1.msra.mxu0 0.0
  %924 = vmatprep.subr.mxu0 0.0
  %925 = vmatpush1.msra.mxu0 0.0
  %926 = vmatprep.subr.mxu0 0.0
  %927 = vmatpush1.msra.mxu0 0.0
  %928 = vmatprep.subr.mxu0 0.0
  %929 = vmatpush1.msra.mxu0 0.0
  %930 = vmatprep.subr.mxu0 0.0
  %931 = vmatpush1.msra.mxu0 0.0
  %932 = vmatprep.subr.mxu0 0.0
  %933 = vmatpush1.msra.mxu0 0.0
  %934 = vmatprep.subr.mxu0 0.0
  %935 = vmatpush1.msra.mxu0 0.0
  %936 = vmatprep.subr.mxu0 0.0
  %937 = vmatpush1.msra.mxu0 0.0
  %938 = vmatprep.subr.mxu0 0.0
  %939 = vmatpush1.msra.mxu0 0.0
  %940 = vmatprep.subr.mxu0 0.0
  %941 = vmatpush1.msra.mxu0 0.0
  %942 = vmatprep.subr.mxu0 0.0
  %943 = vmatpush1.msra.mxu0 0.0
  %944 = vmatprep.mubr.f32.mxu0 0.0
  %945 = vmatmul.mubr.f32.gmra.mrb[0].mxu0 %v875
  %v946 = vpop.f32.mrb[0].mxu0
  %v947 = vadd.f32 %v872, %v946
  %v948 = vpop.f32.mrb[0].mxu0
  %949 = vmatprep.mubr.f32.mxu0 0.0
  %950 = vmatmul.mubr.f32.gmra.mrb[0].mxu0 %v878
  %v951 = vpop.f32.mrb[0].mxu0
  %v952 = vadd.f32 %v872, %v951
  %v953 = vpop.f32.mrb[0].mxu0
  %954 = vdwg.mxu0
  %v955 = vmax.f32 %v947, 0.0
  %v956 = vmax.f32 %v952, 0.0
  %v958 = vlaneseq
  %v959 = vshrl.u32 %v958, 7
  %v960 = vsub.s32 0, %v959
  %v961 = vrot.slane %v867, %v960
  %963 = vmatprep.subr.mxu0 0.0
  %964 = vmatpush1.msra.mxu0 %v851
  %965 = vmatprep.subr.mxu0 0.0
  %966 = vmatpush1.msra.mxu0 %v852
  %967 = vmatprep.subr.mxu0 0.0
  %968 = vmatpush1.msra.mxu0 %v853
  %969 = vmatprep.subr.mxu0 0.0
  %970 = vmatpush1.msra.mxu0 %v854
  %971 = vmatprep.subr.mxu0 0.0
  %972 = vmatpush1.msra.mxu0 %v855
  %973 = vmatprep.subr.mxu0 0.0
  %974 = vmatpush1.msra.mxu0 %v856
  %975 = vmatprep.subr.mxu0 0.0
  %976 = vmatpush1.msra.mxu0 %v857
  %977 = vmatprep.subr.mxu0 0.0
  %978 = vmatpush1.msra.mxu0 %v858
  %979 = vmatprep.subr.mxu0 0.0
  %980 = vmatpush1.msra.mxu0 %v859
  %981 = vmatprep.subr.mxu0 0.0
  %982 = vmatpush1.msra.mxu0 %v860
  %983 = vmatprep.subr.mxu0 0.0
  %984 = vmatpush1.msra.mxu0 %v861
  %985 = vmatprep.subr.mxu0 0.0
  %986 = vmatpush1.msra.mxu0 %v862
  %987 = vmatprep.subr.mxu0 0.0
  %988 = vmatpush1.msra.mxu0 %v863
  %989 = vmatprep.subr.mxu0 0.0
  %990 = vmatpush1.msra.mxu0 %v864
  %991 = vmatprep.subr.mxu0 0.0
  %992 = vmatpush1.msra.mxu0 %v865
  %993 = vmatprep.subr.mxu0 0.0
  %994 = vmatpush1.msra.mxu0 %v866
  %995 = vmatprep.subr.mxu0 0.0
  %996 = vmatpush1.msra.mxu0 0.0
  %997 = vmatprep.subr.mxu0 0.0
  %998 = vmatpush1.msra.mxu0 0.0
  %999 = vmatprep.subr.mxu0 0.0
  %1000 = vmatpush1.msra.mxu0 0.0
  %1001 = vmatprep.subr.mxu0 0.0
  %1002 = vmatpush1.msra.mxu0 0.0
  %1003 = vmatprep.subr.mxu0 0.0
  %1004 = vmatpush1.msra.mxu0 0.0
  %1005 = vmatprep.subr.mxu0 0.0
  %1006 = vmatpush1.msra.mxu0 0.0
  %1007 = vmatprep.subr.mxu0 0.0
  %1008 = vmatpush1.msra.mxu0 0.0
  %1009 = vmatprep.subr.mxu0 0.0
  %1010 = vmatpush1.msra.mxu0 0.0
  %1011 = vmatprep.subr.mxu0 0.0
  %1012 = vmatpush1.msra.mxu0 0.0
  %1013 = vmatprep.subr.mxu0 0.0
  %1014 = vmatpush1.msra.mxu0 0.0
  %1015 = vmatprep.subr.mxu0 0.0
  %1016 = vmatpush1.msra.mxu0 0.0
  %1017 = vmatprep.subr.mxu0 0.0
  %1018 = vmatpush1.msra.mxu0 0.0
  %1019 = vmatprep.subr.mxu0 0.0
  %1020 = vmatpush1.msra.mxu0 0.0
  %1021 = vmatprep.subr.mxu0 0.0
  %1022 = vmatpush1.msra.mxu0 0.0
  %1023 = vmatprep.subr.mxu0 0.0
  %1024 = vmatpush1.msra.mxu0 0.0
  %1025 = vmatprep.subr.mxu0 0.0
  %1026 = vmatpush1.msra.mxu0 0.0
  %1027 = vmatprep.mubr.f32.mxu0 0.0
  %1028 = vmatmul.mubr.f32.gmra.mrb[0].mxu0 %v955
  %v1029 = vpop.f32.mrb[0].mxu0
  %v1030 = vadd.f32 %v961, %v1029
  %v1031 = vpop.f32.mrb[0].mxu0
  %1032 = vmatprep.mubr.f32.mxu0 0.0
  %1033 = vmatmul.mubr.f32.gmra.mrb[0].mxu0 %v956
  %v1034 = vpop.f32.mrb[0].mxu0
  %v1035 = vadd.f32 %v961, %v1034
  %v1036 = vpop.f32.mrb[0].mxu0
  %1037 = vdwg.mxu0
  %v1038 = vadd.f32 %v844, %v1030
  %v1039 = vadd.f32 %v845, %v1035
  %v1040 = vld [vmem:[%s31] sm:$0x1]
  %v1041 = vld [vmem:[%s33] sm:$0x1]
  %v1042 = vsel %vm183, %v1038, 0.0
  %1043 = vadd.xlane.f32.xlu0 %v1042
  %v1044 = vpop.xlane.xlu0 %1043
  %v1045 = vsel %vm183, %v1039, 0.0
  %1046 = vadd.xlane.f32.xlu0 %v1045
  %v1047 = vpop.xlane.xlu0 %1046
  %v1048 = vmul.f32 %v1044, %v809
  %v1049 = vmul.f32 %v1047, %v809
  %v1050 = vsub.f32 %v1038, %v1048
  %v1051 = vsub.f32 %v1039, %v1049
  %v1052 = vmul.f32 %v1050, %v1050
  %v1053 = vmul.f32 %v1051, %v1051
  %v1054 = vsel %vm183, %v1052, 0.0
  %1055 = vadd.xlane.f32.xlu0 %v1054
  %v1056 = vpop.xlane.xlu0 %1055
  %v1057 = vsel %vm183, %v1053, 0.0
  %1058 = vadd.xlane.f32.xlu0 %v1057
  %v1059 = vpop.xlane.xlu0 %1058
  %v1060 = vmul.f32 %v1056, %v809
  %v1061 = vmul.f32 %v1059, %v809
  %v1062 = vadd.f32 %v1060, 1e-05
  %v1063 = vadd.f32 %v1061, 1e-05
  %v1064 = vrsqrt.pop %v1062
  %v1065 = vrsqrt.pop %v1063
  %v1066 = vmul.f32 %v1050, %v1064
  %v1067 = vmul.f32 %v1051, %v1065
  %v1069 = vlaneseq
  %v1070 = vshrl.u32 %v1069, 7
  %v1071 = vsub.s32 0, %v1070
  %v1072 = vrot.slane %v1040, %v1071
  %v1074 = vmul.f32 %v1066, %v1072
  %v1075 = vmul.f32 %v1067, %v1072
  %v1077 = vlaneseq
  %v1078 = vshrl.u32 %v1077, 7
  %v1079 = vsub.s32 0, %v1078
  %v1080 = vrot.slane %v1041, %v1079
  %v1082 = vadd.f32 %v1074, %v1080
  %v1083 = vadd.f32 %v1075, %v1080
  %s1084 = scalar_lea.vmem %s11, 32
  %v1085 = vld [vmem:[%s1084] sm:$0xff]
  %v1086 = vld [vmem:[%s1084 + $0x8] sm:$0xff]
  %v1087 = vld [vmem:[%s1084 + $0x10] sm:$0xff]
  %v1088 = vld [vmem:[%s1084 + $0x18] sm:$0xff]
  %s1089 = scalar_lea.vmem %s13, 1
  %v1090 = vld [vmem:[%s1089] sm:$0x1]
  %v1092 = vlaneseq
  %v1093 = vshrl.u32 %v1092, 7
  %v1094 = vsub.s32 0, %v1093
  %v1095 = vrot.slane %v1090, %v1094
  %v1098 = vsel %vm183, %v1082, 0
  %v1101 = vsel %vm183, %v1083, 0
  %1103 = vmatprep.subr.mxu0 0.0
  %1104 = vmatpush1.msra.mxu0 %v1085
  %1105 = vmatprep.subr.mxu0 0.0
  %1106 = vmatpush1.msra.mxu0 %v1086
  %1107 = vmatprep.subr.mxu0 0.0
  %1108 = vmatpush1.msra.mxu0 %v1087
  %1109 = vmatprep.subr.mxu0 0.0
  %1110 = vmatpush1.msra.mxu0 %v1088
  %1111 = vmatprep.subr.mxu0 0.0
  %1112 = vmatpush1.msra.mxu0 0.0
  %1113 = vmatprep.subr.mxu0 0.0
  %1114 = vmatpush1.msra.mxu0 0.0
  %1115 = vmatprep.subr.mxu0 0.0
  %1116 = vmatpush1.msra.mxu0 0.0
  %1117 = vmatprep.subr.mxu0 0.0
  %1118 = vmatpush1.msra.mxu0 0.0
  %1119 = vmatprep.subr.mxu0 0.0
  %1120 = vmatpush1.msra.mxu0 0.0
  %1121 = vmatprep.subr.mxu0 0.0
  %1122 = vmatpush1.msra.mxu0 0.0
  %1123 = vmatprep.subr.mxu0 0.0
  %1124 = vmatpush1.msra.mxu0 0.0
  %1125 = vmatprep.subr.mxu0 0.0
  %1126 = vmatpush1.msra.mxu0 0.0
  %1127 = vmatprep.subr.mxu0 0.0
  %1128 = vmatpush1.msra.mxu0 0.0
  %1129 = vmatprep.subr.mxu0 0.0
  %1130 = vmatpush1.msra.mxu0 0.0
  %1131 = vmatprep.subr.mxu0 0.0
  %1132 = vmatpush1.msra.mxu0 0.0
  %1133 = vmatprep.subr.mxu0 0.0
  %1134 = vmatpush1.msra.mxu0 0.0
  %1135 = vmatprep.subr.mxu0 0.0
  %1136 = vmatpush1.msra.mxu0 0.0
  %1137 = vmatprep.subr.mxu0 0.0
  %1138 = vmatpush1.msra.mxu0 0.0
  %1139 = vmatprep.subr.mxu0 0.0
  %1140 = vmatpush1.msra.mxu0 0.0
  %1141 = vmatprep.subr.mxu0 0.0
  %1142 = vmatpush1.msra.mxu0 0.0
  %1143 = vmatprep.subr.mxu0 0.0
  %1144 = vmatpush1.msra.mxu0 0.0
  %1145 = vmatprep.subr.mxu0 0.0
  %1146 = vmatpush1.msra.mxu0 0.0
  %1147 = vmatprep.subr.mxu0 0.0
  %1148 = vmatpush1.msra.mxu0 0.0
  %1149 = vmatprep.subr.mxu0 0.0
  %1150 = vmatpush1.msra.mxu0 0.0
  %1151 = vmatprep.subr.mxu0 0.0
  %1152 = vmatpush1.msra.mxu0 0.0
  %1153 = vmatprep.subr.mxu0 0.0
  %1154 = vmatpush1.msra.mxu0 0.0
  %1155 = vmatprep.subr.mxu0 0.0
  %1156 = vmatpush1.msra.mxu0 0.0
  %1157 = vmatprep.subr.mxu0 0.0
  %1158 = vmatpush1.msra.mxu0 0.0
  %1159 = vmatprep.subr.mxu0 0.0
  %1160 = vmatpush1.msra.mxu0 0.0
  %1161 = vmatprep.subr.mxu0 0.0
  %1162 = vmatpush1.msra.mxu0 0.0
  %1163 = vmatprep.subr.mxu0 0.0
  %1164 = vmatpush1.msra.mxu0 0.0
  %1165 = vmatprep.subr.mxu0 0.0
  %1166 = vmatpush1.msra.mxu0 0.0
  %1167 = vmatprep.mubr.f32.mxu0 0.0
  %1168 = vmatmul.mubr.f32.gmra.mrb[0].mxu0 %v1098
  %v1169 = vpop.f32.mrb[0].mxu0
  %v1170 = vadd.f32 %v1095, %v1169
  %v1171 = vpop.f32.mrb[0].mxu0
  %1172 = vmatprep.mubr.f32.mxu0 0.0
  %1173 = vmatmul.mubr.f32.gmra.mrb[0].mxu0 %v1101
  %v1174 = vpop.f32.mrb[0].mxu0
  %v1175 = vadd.f32 %v1095, %v1174
  %v1176 = vpop.f32.mrb[0].mxu0
  %1177 = vdwg.mxu0
  %1180 = vrot.lane.b32.xlu0 %v1170, 120
  %v1181 = vpop.permute.xlu0 %1180
  %1182 = vrot.lane.b32.xlu0 %v1175, 120
  %v1183 = vpop.permute.xlu0 %1182
  %1184 = vrot.lane.b32.xlu0 %v1170, 112
  %v1185 = vpop.permute.xlu0 %1184
  %1186 = vrot.lane.b32.xlu0 %v1175, 112
  %v1187 = vpop.permute.xlu0 %1186
  %1188 = vrot.lane.b32.xlu0 %v1170, 104
  %v1189 = vpop.permute.xlu0 %1188
  %1190 = vrot.lane.b32.xlu0 %v1175, 104
  %v1191 = vpop.permute.xlu0 %1190
  %1192 = vrot.lane.b32.xlu0 %v1170, 96
  %v1193 = vpop.permute.xlu0 %1192
  %1194 = vrot.lane.b32.xlu0 %v1175, 96
  %v1195 = vpop.permute.xlu0 %1194
  %1196 = vrot.lane.b32.xlu0 %v1181, 96
  %v1197 = vpop.permute.xlu0 %1196
  %1198 = vrot.lane.b32.xlu0 %v1183, 96
  %v1199 = vpop.permute.xlu0 %1198
  %1200 = vrot.lane.b32.xlu0 %v1185, 96
  %v1201 = vpop.permute.xlu0 %1200
  %1202 = vrot.lane.b32.xlu0 %v1187, 96
  %v1203 = vpop.permute.xlu0 %1202
  %1204 = vrot.lane.b32.xlu0 %v1189, 96
  %v1205 = vpop.permute.xlu0 %1204
  %1206 = vrot.lane.b32.xlu0 %v1191, 96
  %v1207 = vpop.permute.xlu0 %1206
  %v1208 = vsel %vm295, %v1170, 0
  %v1210 = vsel %vm295, %v1175, 0
  %v1212 = vsel %vm295, %v1181, 0
  %v1214 = vsel %vm295, %v1183, 0
  %v1216 = vsel %vm295, %v1185, 0
  %v1218 = vsel %vm295, %v1187, 0
  %v1220 = vsel %vm295, %v1189, 0
  %v1222 = vsel %vm295, %v1191, 0
  %v1224 = vsel %vm295, %v1193, 0
  %v1226 = vsel %vm295, %v1195, 0
  %v1228 = vsel %vm295, %v1197, 0
  %v1230 = vsel %vm295, %v1199, 0
  %v1232 = vsel %vm295, %v1201, 0
  %v1234 = vsel %vm295, %v1203, 0
  %v1236 = vsel %vm295, %v1205, 0
  %v1238 = vsel %vm295, %v1207, 0
  %1240 = vmatprep.subr.mxu0 0.0
  %1241 = vmatpush1.xpose.msra.mxu0 %v1224
  %1242 = vmatprep.subr.mxu0 0.0
  %1243 = vmatpush1.xpose.msra.mxu0 %v1226
  %1244 = vmatprep.subr.mxu0 0.0
  %1245 = vmatpush1.xpose.msra.mxu0 %v1228
  %1246 = vmatprep.subr.mxu0 0.0
  %1247 = vmatpush1.xpose.msra.mxu0 %v1230
  %1248 = vmatprep.subr.mxu0 0.0
  %1249 = vmatpush1.xpose.msra.mxu0 %v1232
  %1250 = vmatprep.subr.mxu0 0.0
  %1251 = vmatpush1.xpose.msra.mxu0 %v1234
  %1252 = vmatprep.subr.mxu0 0.0
  %1253 = vmatpush1.xpose.msra.mxu0 %v1236
  %1254 = vmatprep.subr.mxu0 0.0
  %1255 = vmatpush1.xpose.msra.mxu0 %v1238
  %1256 = vmatprep.subr.mxu0 0.0
  %1257 = vmatpush1.xpose.msra.mxu0 0.0
  %1258 = vmatprep.subr.mxu0 0.0
  %1259 = vmatpush1.xpose.msra.mxu0 0.0
  %1260 = vmatprep.subr.mxu0 0.0
  %1261 = vmatpush1.xpose.msra.mxu0 0.0
  %1262 = vmatprep.subr.mxu0 0.0
  %1263 = vmatpush1.xpose.msra.mxu0 0.0
  %1264 = vmatprep.subr.mxu0 0.0
  %1265 = vmatpush1.xpose.msra.mxu0 0.0
  %1266 = vmatprep.subr.mxu0 0.0
  %1267 = vmatpush1.xpose.msra.mxu0 0.0
  %1268 = vmatprep.subr.mxu0 0.0
  %1269 = vmatpush1.xpose.msra.mxu0 0.0
  %1270 = vmatprep.subr.mxu0 0.0
  %1271 = vmatpush1.xpose.msra.mxu0 0.0
  %1272 = vmatprep.subr.mxu0 0.0
  %1273 = vmatpush1.xpose.msra.mxu0 0.0
  %1274 = vmatprep.subr.mxu0 0.0
  %1275 = vmatpush1.xpose.msra.mxu0 0.0
  %1276 = vmatprep.subr.mxu0 0.0
  %1277 = vmatpush1.xpose.msra.mxu0 0.0
  %1278 = vmatprep.subr.mxu0 0.0
  %1279 = vmatpush1.xpose.msra.mxu0 0.0
  %1280 = vmatprep.subr.mxu0 0.0
  %1281 = vmatpush1.xpose.msra.mxu0 0.0
  %1282 = vmatprep.subr.mxu0 0.0
  %1283 = vmatpush1.xpose.msra.mxu0 0.0
  %1284 = vmatprep.subr.mxu0 0.0
  %1285 = vmatpush1.xpose.msra.mxu0 0.0
  %1286 = vmatprep.subr.mxu0 0.0
  %1287 = vmatpush1.xpose.msra.mxu0 0.0
  %1288 = vmatprep.subr.mxu0 0.0
  %1289 = vmatpush1.xpose.msra.mxu0 0.0
  %1290 = vmatprep.subr.mxu0 0.0
  %1291 = vmatpush1.xpose.msra.mxu0 0.0
  %1292 = vmatprep.subr.mxu0 0.0
  %1293 = vmatpush1.xpose.msra.mxu0 0.0
  %1294 = vmatprep.subr.mxu0 0.0
  %1295 = vmatpush1.xpose.msra.mxu0 0.0
  %1296 = vmatprep.subr.mxu0 0.0
  %1297 = vmatpush1.xpose.msra.mxu0 0.0
  %1298 = vmatprep.subr.mxu0 0.0
  %1299 = vmatpush1.xpose.msra.mxu0 0.0
  %1300 = vmatprep.subr.mxu0 0.0
  %1301 = vmatpush1.xpose.msra.mxu0 0.0
  %1302 = vmatprep.subr.mxu0 0.0
  %1303 = vmatpush1.xpose.msra.mxu0 0.0
  %1304 = vmatprep.mubr.f32.mxu0 0.0
  %1305 = vmatmul.mubr.f32.gmra.mrb[0].mxu0 %v1208
  %v1306 = vpop.f32.mrb[0].mxu0
  %v1307 = vadd.f32 %v164, %v1306
  %v1308 = vpop.f32.mrb[0].mxu0
  %1309 = vmatprep.mubr.f32.mxu0 0.0
  %1310 = vmatmul.mubr.f32.gmra.mrb[0].mxu0 %v1210
  %v1311 = vpop.f32.mrb[0].mxu0
  %v1312 = vadd.f32 %v165, %v1311
  %v1313 = vpop.f32.mrb[0].mxu0
  %1314 = vmatprep.mubr.f32.mxu0 0.0
  %1315 = vmatmul.mubr.f32.gmra.mrb[0].mxu0 %v1212
  %v1316 = vpop.f32.mrb[0].mxu0
  %v1317 = vadd.f32 %v166, %v1316
  %v1318 = vpop.f32.mrb[0].mxu0
  %1319 = vmatprep.mubr.f32.mxu0 0.0
  %1320 = vmatmul.mubr.f32.gmra.mrb[0].mxu0 %v1214
  %v1321 = vpop.f32.mrb[0].mxu0
  %v1322 = vadd.f32 %v167, %v1321
  %v1323 = vpop.f32.mrb[0].mxu0
  %1324 = vmatprep.mubr.f32.mxu0 0.0
  %1325 = vmatmul.mubr.f32.gmra.mrb[0].mxu0 %v1216
  %v1326 = vpop.f32.mrb[0].mxu0
  %v1327 = vadd.f32 %v168, %v1326
  %v1328 = vpop.f32.mrb[0].mxu0
  %1329 = vmatprep.mubr.f32.mxu0 0.0
  %1330 = vmatmul.mubr.f32.gmra.mrb[0].mxu0 %v1218
  %v1331 = vpop.f32.mrb[0].mxu0
  %v1332 = vadd.f32 %v169, %v1331
  %v1333 = vpop.f32.mrb[0].mxu0
  %1334 = vmatprep.mubr.f32.mxu0 0.0
  %1335 = vmatmul.mubr.f32.gmra.mrb[0].mxu0 %v1220
  %v1336 = vpop.f32.mrb[0].mxu0
  %v1337 = vadd.f32 %v170, %v1336
  %v1338 = vpop.f32.mrb[0].mxu0
  %1339 = vmatprep.mubr.f32.mxu0 0.0
  %1340 = vmatmul.mubr.f32.gmra.mrb[0].mxu0 %v1222
  %v1341 = vpop.f32.mrb[0].mxu0
  %v1342 = vadd.f32 %v171, %v1341
  %v1343 = vpop.f32.mrb[0].mxu0
  %1344 = vdwg.mxu0
  %v1345 = vsel %vm433, %v1307, -inf
  %1346 = vmax.xlane.f32.xlu0 %v1345
  %v1347 = vpop.xlane.xlu0 %1346
  %v1348 = vsel %vm433, %v1312, -inf
  %1349 = vmax.xlane.f32.xlu0 %v1348
  %v1350 = vpop.xlane.xlu0 %1349
  %v1351 = vsel %vm433, %v1317, -inf
  %1352 = vmax.xlane.f32.xlu0 %v1351
  %v1353 = vpop.xlane.xlu0 %1352
  %v1354 = vsel %vm433, %v1322, -inf
  %1355 = vmax.xlane.f32.xlu0 %v1354
  %v1356 = vpop.xlane.xlu0 %1355
  %v1357 = vsel %vm433, %v1327, -inf
  %1358 = vmax.xlane.f32.xlu0 %v1357
  %v1359 = vpop.xlane.xlu0 %1358
  %v1360 = vsel %vm433, %v1332, -inf
  %1361 = vmax.xlane.f32.xlu0 %v1360
  %v1362 = vpop.xlane.xlu0 %1361
  %v1363 = vsel %vm433, %v1337, -inf
  %1364 = vmax.xlane.f32.xlu0 %v1363
  %v1365 = vpop.xlane.xlu0 %1364
  %v1366 = vsel %vm433, %v1342, -inf
  %1367 = vmax.xlane.f32.xlu0 %v1366
  %v1368 = vpop.xlane.xlu0 %1367
  %v1369 = vsub.f32 %v1307, %v1347
  %v1370 = vsub.f32 %v1312, %v1350
  %v1371 = vsub.f32 %v1317, %v1353
  %v1372 = vsub.f32 %v1322, %v1356
  %v1373 = vsub.f32 %v1327, %v1359
  %v1374 = vsub.f32 %v1332, %v1362
  %v1375 = vsub.f32 %v1337, %v1365
  %v1376 = vsub.f32 %v1342, %v1368
  %v1377 = vmul.f32 %v1369, 1.442695
  %v1378 = vpow.pop %v1377
  %v1379 = vmul.f32 %v1370, 1.442695
  %v1380 = vpow.pop %v1379
  %v1381 = vmul.f32 %v1371, 1.442695
  %v1382 = vpow.pop %v1381
  %v1383 = vmul.f32 %v1372, 1.442695
  %v1384 = vpow.pop %v1383
  %v1385 = vmul.f32 %v1373, 1.442695
  %v1386 = vpow.pop %v1385
  %v1387 = vmul.f32 %v1374, 1.442695
  %v1388 = vpow.pop %v1387
  %v1389 = vmul.f32 %v1375, 1.442695
  %v1390 = vpow.pop %v1389
  %v1391 = vmul.f32 %v1376, 1.442695
  %v1392 = vpow.pop %v1391
  %v1393 = vsel %vm433, %v1378, 0.0
  %1394 = vadd.xlane.f32.xlu0 %v1393
  %v1395 = vpop.xlane.xlu0 %1394
  %v1396 = vsel %vm433, %v1380, 0.0
  %1397 = vadd.xlane.f32.xlu0 %v1396
  %v1398 = vpop.xlane.xlu0 %1397
  %v1399 = vsel %vm433, %v1382, 0.0
  %1400 = vadd.xlane.f32.xlu0 %v1399
  %v1401 = vpop.xlane.xlu0 %1400
  %v1402 = vsel %vm433, %v1384, 0.0
  %1403 = vadd.xlane.f32.xlu0 %v1402
  %v1404 = vpop.xlane.xlu0 %1403
  %v1405 = vsel %vm433, %v1386, 0.0
  %1406 = vadd.xlane.f32.xlu0 %v1405
  %v1407 = vpop.xlane.xlu0 %1406
  %v1408 = vsel %vm433, %v1388, 0.0
  %1409 = vadd.xlane.f32.xlu0 %v1408
  %v1410 = vpop.xlane.xlu0 %1409
  %v1411 = vsel %vm433, %v1390, 0.0
  %1412 = vadd.xlane.f32.xlu0 %v1411
  %v1413 = vpop.xlane.xlu0 %1412
  %v1414 = vsel %vm433, %v1392, 0.0
  %1415 = vadd.xlane.f32.xlu0 %v1414
  %v1416 = vpop.xlane.xlu0 %1415
  %v1417 = vrcp.pop %v1395
  %v1418 = vrcp.pop %v1398
  %v1419 = vrcp.pop %v1401
  %v1420 = vrcp.pop %v1404
  %v1421 = vrcp.pop %v1407
  %v1422 = vrcp.pop %v1410
  %v1423 = vrcp.pop %v1413
  %v1424 = vrcp.pop %v1416
  %v1425 = vmul.f32 %v1378, %v1417
  %v1426 = vmul.f32 %v1380, %v1418
  %v1427 = vmul.f32 %v1382, %v1419
  %v1428 = vmul.f32 %v1384, %v1420
  %v1429 = vmul.f32 %v1386, %v1421
  %v1430 = vmul.f32 %v1388, %v1422
  %v1431 = vmul.f32 %v1390, %v1423
  %v1432 = vmul.f32 %v1392, %v1424
  %1433 = vrot.lane.b32.xlu0 %v1170, 64
  %v1434 = vpop.permute.xlu0 %1433
  %1435 = vrot.lane.b32.xlu0 %v1175, 64
  %v1436 = vpop.permute.xlu0 %1435
  %1437 = vrot.lane.b32.xlu0 %v1181, 64
  %v1438 = vpop.permute.xlu0 %1437
  %1439 = vrot.lane.b32.xlu0 %v1183, 64
  %v1440 = vpop.permute.xlu0 %1439
  %1441 = vrot.lane.b32.xlu0 %v1185, 64
  %v1442 = vpop.permute.xlu0 %1441
  %1443 = vrot.lane.b32.xlu0 %v1187, 64
  %v1444 = vpop.permute.xlu0 %1443
  %1445 = vrot.lane.b32.xlu0 %v1189, 64
  %v1446 = vpop.permute.xlu0 %1445
  %1447 = vrot.lane.b32.xlu0 %v1191, 64
  %v1448 = vpop.permute.xlu0 %1447
  %v1458 = vsel %vm433, %v1425, 0
  %v1461 = vsel %vm433, %v1426, 0
  %v1464 = vsel %vm433, %v1427, 0
  %v1467 = vsel %vm433, %v1428, 0
  %v1470 = vsel %vm433, %v1429, 0
  %v1473 = vsel %vm433, %v1430, 0
  %v1476 = vsel %vm433, %v1431, 0
  %v1479 = vsel %vm433, %v1432, 0
  %1481 = vmatprep.subr.mxu0 0.0
  %1482 = vmatpush1.msra.mxu0 %v1434
  %1483 = vmatprep.subr.mxu0 0.0
  %1484 = vmatpush1.msra.mxu0 %v1436
  %1485 = vmatprep.subr.mxu0 0.0
  %1486 = vmatpush1.msra.mxu0 %v1438
  %1487 = vmatprep.subr.mxu0 0.0
  %1488 = vmatpush1.msra.mxu0 %v1440
  %1489 = vmatprep.subr.mxu0 0.0
  %1490 = vmatpush1.msra.mxu0 %v1442
  %1491 = vmatprep.subr.mxu0 0.0
  %1492 = vmatpush1.msra.mxu0 %v1444
  %1493 = vmatprep.subr.mxu0 0.0
  %1494 = vmatpush1.msra.mxu0 %v1446
  %1495 = vmatprep.subr.mxu0 0.0
  %1496 = vmatpush1.msra.mxu0 %v1448
  %1497 = vmatprep.subr.mxu0 0.0
  %1498 = vmatpush1.msra.mxu0 0.0
  %1499 = vmatprep.subr.mxu0 0.0
  %1500 = vmatpush1.msra.mxu0 0.0
  %1501 = vmatprep.subr.mxu0 0.0
  %1502 = vmatpush1.msra.mxu0 0.0
  %1503 = vmatprep.subr.mxu0 0.0
  %1504 = vmatpush1.msra.mxu0 0.0
  %1505 = vmatprep.subr.mxu0 0.0
  %1506 = vmatpush1.msra.mxu0 0.0
  %1507 = vmatprep.subr.mxu0 0.0
  %1508 = vmatpush1.msra.mxu0 0.0
  %1509 = vmatprep.subr.mxu0 0.0
  %1510 = vmatpush1.msra.mxu0 0.0
  %1511 = vmatprep.subr.mxu0 0.0
  %1512 = vmatpush1.msra.mxu0 0.0
  %1513 = vmatprep.subr.mxu0 0.0
  %1514 = vmatpush1.msra.mxu0 0.0
  %1515 = vmatprep.subr.mxu0 0.0
  %1516 = vmatpush1.msra.mxu0 0.0
  %1517 = vmatprep.subr.mxu0 0.0
  %1518 = vmatpush1.msra.mxu0 0.0
  %1519 = vmatprep.subr.mxu0 0.0
  %1520 = vmatpush1.msra.mxu0 0.0
  %1521 = vmatprep.subr.mxu0 0.0
  %1522 = vmatpush1.msra.mxu0 0.0
  %1523 = vmatprep.subr.mxu0 0.0
  %1524 = vmatpush1.msra.mxu0 0.0
  %1525 = vmatprep.subr.mxu0 0.0
  %1526 = vmatpush1.msra.mxu0 0.0
  %1527 = vmatprep.subr.mxu0 0.0
  %1528 = vmatpush1.msra.mxu0 0.0
  %1529 = vmatprep.subr.mxu0 0.0
  %1530 = vmatpush1.msra.mxu0 0.0
  %1531 = vmatprep.subr.mxu0 0.0
  %1532 = vmatpush1.msra.mxu0 0.0
  %1533 = vmatprep.subr.mxu0 0.0
  %1534 = vmatpush1.msra.mxu0 0.0
  %1535 = vmatprep.subr.mxu0 0.0
  %1536 = vmatpush1.msra.mxu0 0.0
  %1537 = vmatprep.subr.mxu0 0.0
  %1538 = vmatpush1.msra.mxu0 0.0
  %1539 = vmatprep.subr.mxu0 0.0
  %1540 = vmatpush1.msra.mxu0 0.0
  %1541 = vmatprep.subr.mxu0 0.0
  %1542 = vmatpush1.msra.mxu0 0.0
  %1543 = vmatprep.subr.mxu0 0.0
  %1544 = vmatpush1.msra.mxu0 0.0
  %1545 = vmatprep.mubr.f32.mxu0 0.0
  %1546 = vmatmul.mubr.f32.gmra.mrb[0].mxu0 %v1458
  %v1547 = vpop.f32.mrb[0].mxu0
  %v1548 = vadd.f32 0.0, %v1547
  %v1549 = vpop.f32.mrb[0].mxu0
  %1550 = vmatprep.mubr.f32.mxu0 0.0
  %1551 = vmatmul.mubr.f32.gmra.mrb[0].mxu0 %v1461
  %v1552 = vpop.f32.mrb[0].mxu0
  %v1553 = vadd.f32 0.0, %v1552
  %v1554 = vpop.f32.mrb[0].mxu0
  %1555 = vmatprep.mubr.f32.mxu0 0.0
  %1556 = vmatmul.mubr.f32.gmra.mrb[0].mxu0 %v1464
  %v1557 = vpop.f32.mrb[0].mxu0
  %v1558 = vadd.f32 0.0, %v1557
  %v1559 = vpop.f32.mrb[0].mxu0
  %1560 = vmatprep.mubr.f32.mxu0 0.0
  %1561 = vmatmul.mubr.f32.gmra.mrb[0].mxu0 %v1467
  %v1562 = vpop.f32.mrb[0].mxu0
  %v1563 = vadd.f32 0.0, %v1562
  %v1564 = vpop.f32.mrb[0].mxu0
  %1565 = vmatprep.mubr.f32.mxu0 0.0
  %1566 = vmatmul.mubr.f32.gmra.mrb[0].mxu0 %v1470
  %v1567 = vpop.f32.mrb[0].mxu0
  %v1568 = vadd.f32 0.0, %v1567
  %v1569 = vpop.f32.mrb[0].mxu0
  %1570 = vmatprep.mubr.f32.mxu0 0.0
  %1571 = vmatmul.mubr.f32.gmra.mrb[0].mxu0 %v1473
  %v1572 = vpop.f32.mrb[0].mxu0
  %v1573 = vadd.f32 0.0, %v1572
  %v1574 = vpop.f32.mrb[0].mxu0
  %1575 = vmatprep.mubr.f32.mxu0 0.0
  %1576 = vmatmul.mubr.f32.gmra.mrb[0].mxu0 %v1476
  %v1577 = vpop.f32.mrb[0].mxu0
  %v1578 = vadd.f32 0.0, %v1577
  %v1579 = vpop.f32.mrb[0].mxu0
  %1580 = vmatprep.mubr.f32.mxu0 0.0
  %1581 = vmatmul.mubr.f32.gmra.mrb[0].mxu0 %v1479
  %v1582 = vpop.f32.mrb[0].mxu0
  %v1583 = vadd.f32 0.0, %v1582
  %v1584 = vpop.f32.mrb[0].mxu0
  %1585 = vdwg.mxu0
  %1588 = vrot.lane.b32.xlu0 %v1558, 8
  %v1589 = vpop.permute.xlu0 %1588
  %1590 = vrot.lane.b32.xlu0 %v1563, 8
  %v1591 = vpop.permute.xlu0 %1590
  %1596 = vrot.lane.b32.xlu0 %v1568, 16
  %v1597 = vpop.permute.xlu0 %1596
  %1598 = vrot.lane.b32.xlu0 %v1573, 16
  %v1599 = vpop.permute.xlu0 %1598
  %1604 = vrot.lane.b32.xlu0 %v1578, 24
  %v1605 = vpop.permute.xlu0 %1604
  %1606 = vrot.lane.b32.xlu0 %v1583, 24
  %v1607 = vpop.permute.xlu0 %1606
  %v1610 = vsel %vm295, %v1548, %v1589
  %v1611 = vsel %vm295, %v1553, %v1591
  %v1612 = vsel %vm701, %v1610, %v1597
  %v1613 = vsel %vm701, %v1611, %v1599
  %v1614 = vsel %vm704, %v1612, %v1605
  %v1615 = vsel %vm704, %v1613, %v1607
  %s1616 = scalar_lea.vmem %s15, 32
  %v1617 = vld [vmem:[%s1616] sm:$0xff]
  %v1618 = vld [vmem:[%s1616 + $0x8] sm:$0xff]
  %v1619 = vld [vmem:[%s1616 + $0x10] sm:$0xff]
  %v1620 = vld [vmem:[%s1616 + $0x18] sm:$0xff]
  %s1621 = scalar_lea.vmem %s17, 1
  %v1622 = vld [vmem:[%s1621] sm:$0x1]
  %v1624 = vlaneseq
  %v1625 = vshrl.u32 %v1624, 7
  %v1626 = vsub.s32 0, %v1625
  %v1627 = vrot.slane %v1622, %v1626
  %v1630 = vsel %vm183, %v1614, 0
  %v1633 = vsel %vm183, %v1615, 0
  %1635 = vmatprep.subr.mxu0 0.0
  %1636 = vmatpush1.msra.mxu0 %v1617
  %1637 = vmatprep.subr.mxu0 0.0
  %1638 = vmatpush1.msra.mxu0 %v1618
  %1639 = vmatprep.subr.mxu0 0.0
  %1640 = vmatpush1.msra.mxu0 %v1619
  %1641 = vmatprep.subr.mxu0 0.0
  %1642 = vmatpush1.msra.mxu0 %v1620
  %1643 = vmatprep.subr.mxu0 0.0
  %1644 = vmatpush1.msra.mxu0 0.0
  %1645 = vmatprep.subr.mxu0 0.0
  %1646 = vmatpush1.msra.mxu0 0.0
  %1647 = vmatprep.subr.mxu0 0.0
  %1648 = vmatpush1.msra.mxu0 0.0
  %1649 = vmatprep.subr.mxu0 0.0
  %1650 = vmatpush1.msra.mxu0 0.0
  %1651 = vmatprep.subr.mxu0 0.0
  %1652 = vmatpush1.msra.mxu0 0.0
  %1653 = vmatprep.subr.mxu0 0.0
  %1654 = vmatpush1.msra.mxu0 0.0
  %1655 = vmatprep.subr.mxu0 0.0
  %1656 = vmatpush1.msra.mxu0 0.0
  %1657 = vmatprep.subr.mxu0 0.0
  %1658 = vmatpush1.msra.mxu0 0.0
  %1659 = vmatprep.subr.mxu0 0.0
  %1660 = vmatpush1.msra.mxu0 0.0
  %1661 = vmatprep.subr.mxu0 0.0
  %1662 = vmatpush1.msra.mxu0 0.0
  %1663 = vmatprep.subr.mxu0 0.0
  %1664 = vmatpush1.msra.mxu0 0.0
  %1665 = vmatprep.subr.mxu0 0.0
  %1666 = vmatpush1.msra.mxu0 0.0
  %1667 = vmatprep.subr.mxu0 0.0
  %1668 = vmatpush1.msra.mxu0 0.0
  %1669 = vmatprep.subr.mxu0 0.0
  %1670 = vmatpush1.msra.mxu0 0.0
  %1671 = vmatprep.subr.mxu0 0.0
  %1672 = vmatpush1.msra.mxu0 0.0
  %1673 = vmatprep.subr.mxu0 0.0
  %1674 = vmatpush1.msra.mxu0 0.0
  %1675 = vmatprep.subr.mxu0 0.0
  %1676 = vmatpush1.msra.mxu0 0.0
  %1677 = vmatprep.subr.mxu0 0.0
  %1678 = vmatpush1.msra.mxu0 0.0
  %1679 = vmatprep.subr.mxu0 0.0
  %1680 = vmatpush1.msra.mxu0 0.0
  %1681 = vmatprep.subr.mxu0 0.0
  %1682 = vmatpush1.msra.mxu0 0.0
  %1683 = vmatprep.subr.mxu0 0.0
  %1684 = vmatpush1.msra.mxu0 0.0
  %1685 = vmatprep.subr.mxu0 0.0
  %1686 = vmatpush1.msra.mxu0 0.0
  %1687 = vmatprep.subr.mxu0 0.0
  %1688 = vmatpush1.msra.mxu0 0.0
  %1689 = vmatprep.subr.mxu0 0.0
  %1690 = vmatpush1.msra.mxu0 0.0
  %1691 = vmatprep.subr.mxu0 0.0
  %1692 = vmatpush1.msra.mxu0 0.0
  %1693 = vmatprep.subr.mxu0 0.0
  %1694 = vmatpush1.msra.mxu0 0.0
  %1695 = vmatprep.subr.mxu0 0.0
  %1696 = vmatpush1.msra.mxu0 0.0
  %1697 = vmatprep.subr.mxu0 0.0
  %1698 = vmatpush1.msra.mxu0 0.0
  %1699 = vmatprep.mubr.f32.mxu0 0.0
  %1700 = vmatmul.mubr.f32.gmra.mrb[0].mxu0 %v1630
  %v1701 = vpop.f32.mrb[0].mxu0
  %v1702 = vadd.f32 %v1627, %v1701
  %v1703 = vpop.f32.mrb[0].mxu0
  %1704 = vmatprep.mubr.f32.mxu0 0.0
  %1705 = vmatmul.mubr.f32.gmra.mrb[0].mxu0 %v1633
  %v1706 = vpop.f32.mrb[0].mxu0
  %v1707 = vadd.f32 %v1627, %v1706
  %v1708 = vpop.f32.mrb[0].mxu0
  %1709 = vdwg.mxu0
  %v1710 = vadd.f32 %v1082, %v1702
  %v1711 = vadd.f32 %v1083, %v1707
  %s1712 = scalar_lea.vmem %s19, 1
  %v1713 = vld [vmem:[%s1712] sm:$0x1]
  %s1714 = scalar_lea.vmem %s21, 1
  %v1715 = vld [vmem:[%s1714] sm:$0x1]
  %v1716 = vsel %vm183, %v1710, 0.0
  %1717 = vadd.xlane.f32.xlu0 %v1716
  %v1718 = vpop.xlane.xlu0 %1717
  %v1719 = vsel %vm183, %v1711, 0.0
  %1720 = vadd.xlane.f32.xlu0 %v1719
  %v1721 = vpop.xlane.xlu0 %1720
  %v1722 = vmul.f32 %v1718, %v809
  %v1723 = vmul.f32 %v1721, %v809
  %v1724 = vsub.f32 %v1710, %v1722
  %v1725 = vsub.f32 %v1711, %v1723
  %v1726 = vmul.f32 %v1724, %v1724
  %v1727 = vmul.f32 %v1725, %v1725
  %v1728 = vsel %vm183, %v1726, 0.0
  %1729 = vadd.xlane.f32.xlu0 %v1728
  %v1730 = vpop.xlane.xlu0 %1729
  %v1731 = vsel %vm183, %v1727, 0.0
  %1732 = vadd.xlane.f32.xlu0 %v1731
  %v1733 = vpop.xlane.xlu0 %1732
  %v1734 = vmul.f32 %v1730, %v809
  %v1735 = vmul.f32 %v1733, %v809
  %v1736 = vadd.f32 %v1734, 1e-05
  %v1737 = vadd.f32 %v1735, 1e-05
  %v1738 = vrsqrt.pop %v1736
  %v1739 = vrsqrt.pop %v1737
  %v1740 = vmul.f32 %v1724, %v1738
  %v1741 = vmul.f32 %v1725, %v1739
  %v1743 = vlaneseq
  %v1744 = vshrl.u32 %v1743, 7
  %v1745 = vsub.s32 0, %v1744
  %v1746 = vrot.slane %v1713, %v1745
  %v1748 = vmul.f32 %v1740, %v1746
  %v1749 = vmul.f32 %v1741, %v1746
  %v1751 = vlaneseq
  %v1752 = vshrl.u32 %v1751, 7
  %v1753 = vsub.s32 0, %v1752
  %v1754 = vrot.slane %v1715, %v1753
  %v1756 = vadd.f32 %v1748, %v1754
  %v1757 = vadd.f32 %v1749, %v1754
  %s1758 = scalar_lea.vmem %s23, 32
  %v1759 = vld [vmem:[%s1758] sm:$0xff]
  %v1760 = vld [vmem:[%s1758 + $0x8] sm:$0xff]
  %v1761 = vld [vmem:[%s1758 + $0x10] sm:$0xff]
  %v1762 = vld [vmem:[%s1758 + $0x18] sm:$0xff]
  %s1763 = scalar_lea.vmem %s25, 1
  %v1764 = vld [vmem:[%s1763] sm:$0x1]
  %s1765 = scalar_lea.vmem %s27, 128
  %v1766 = vld [vmem:[%s1765] sm:$0xff]
  %v1767 = vld [vmem:[%s1765 + $0x8] sm:$0xff]
  %v1768 = vld [vmem:[%s1765 + $0x10] sm:$0xff]
  %v1769 = vld [vmem:[%s1765 + $0x18] sm:$0xff]
  %v1770 = vld [vmem:[%s1765 + $0x20] sm:$0xff]
  %v1771 = vld [vmem:[%s1765 + $0x28] sm:$0xff]
  %v1772 = vld [vmem:[%s1765 + $0x30] sm:$0xff]
  %v1773 = vld [vmem:[%s1765 + $0x38] sm:$0xff]
  %v1774 = vld [vmem:[%s1765 + $0x40] sm:$0xff]
  %v1775 = vld [vmem:[%s1765 + $0x48] sm:$0xff]
  %v1776 = vld [vmem:[%s1765 + $0x50] sm:$0xff]
  %v1777 = vld [vmem:[%s1765 + $0x58] sm:$0xff]
  %v1778 = vld [vmem:[%s1765 + $0x60] sm:$0xff]
  %v1779 = vld [vmem:[%s1765 + $0x68] sm:$0xff]
  %v1780 = vld [vmem:[%s1765 + $0x70] sm:$0xff]
  %v1781 = vld [vmem:[%s1765 + $0x78] sm:$0xff]
  %s1782 = scalar_lea.vmem %s29, 1
  %v1783 = vld [vmem:[%s1782] sm:$0x1]
  %v1785 = vlaneseq
  %v1786 = vshrl.u32 %v1785, 7
  %v1787 = vsub.s32 0, %v1786
  %v1788 = vrot.slane %v1764, %v1787
  %v1791 = vsel %vm183, %v1756, 0
  %v1794 = vsel %vm183, %v1757, 0
  %1796 = vmatprep.subr.mxu0 0.0
  %1797 = vmatpush1.msra.mxu0 %v1759
  %1798 = vmatprep.subr.mxu0 0.0
  %1799 = vmatpush1.msra.mxu0 %v1760
  %1800 = vmatprep.subr.mxu0 0.0
  %1801 = vmatpush1.msra.mxu0 %v1761
  %1802 = vmatprep.subr.mxu0 0.0
  %1803 = vmatpush1.msra.mxu0 %v1762
  %1804 = vmatprep.subr.mxu0 0.0
  %1805 = vmatpush1.msra.mxu0 0.0
  %1806 = vmatprep.subr.mxu0 0.0
  %1807 = vmatpush1.msra.mxu0 0.0
  %1808 = vmatprep.subr.mxu0 0.0
  %1809 = vmatpush1.msra.mxu0 0.0
  %1810 = vmatprep.subr.mxu0 0.0
  %1811 = vmatpush1.msra.mxu0 0.0
  %1812 = vmatprep.subr.mxu0 0.0
  %1813 = vmatpush1.msra.mxu0 0.0
  %1814 = vmatprep.subr.mxu0 0.0
  %1815 = vmatpush1.msra.mxu0 0.0
  %1816 = vmatprep.subr.mxu0 0.0
  %1817 = vmatpush1.msra.mxu0 0.0
  %1818 = vmatprep.subr.mxu0 0.0
  %1819 = vmatpush1.msra.mxu0 0.0
  %1820 = vmatprep.subr.mxu0 0.0
  %1821 = vmatpush1.msra.mxu0 0.0
  %1822 = vmatprep.subr.mxu0 0.0
  %1823 = vmatpush1.msra.mxu0 0.0
  %1824 = vmatprep.subr.mxu0 0.0
  %1825 = vmatpush1.msra.mxu0 0.0
  %1826 = vmatprep.subr.mxu0 0.0
  %1827 = vmatpush1.msra.mxu0 0.0
  %1828 = vmatprep.subr.mxu0 0.0
  %1829 = vmatpush1.msra.mxu0 0.0
  %1830 = vmatprep.subr.mxu0 0.0
  %1831 = vmatpush1.msra.mxu0 0.0
  %1832 = vmatprep.subr.mxu0 0.0
  %1833 = vmatpush1.msra.mxu0 0.0
  %1834 = vmatprep.subr.mxu0 0.0
  %1835 = vmatpush1.msra.mxu0 0.0
  %1836 = vmatprep.subr.mxu0 0.0
  %1837 = vmatpush1.msra.mxu0 0.0
  %1838 = vmatprep.subr.mxu0 0.0
  %1839 = vmatpush1.msra.mxu0 0.0
  %1840 = vmatprep.subr.mxu0 0.0
  %1841 = vmatpush1.msra.mxu0 0.0
  %1842 = vmatprep.subr.mxu0 0.0
  %1843 = vmatpush1.msra.mxu0 0.0
  %1844 = vmatprep.subr.mxu0 0.0
  %1845 = vmatpush1.msra.mxu0 0.0
  %1846 = vmatprep.subr.mxu0 0.0
  %1847 = vmatpush1.msra.mxu0 0.0
  %1848 = vmatprep.subr.mxu0 0.0
  %1849 = vmatpush1.msra.mxu0 0.0
  %1850 = vmatprep.subr.mxu0 0.0
  %1851 = vmatpush1.msra.mxu0 0.0
  %1852 = vmatprep.subr.mxu0 0.0
  %1853 = vmatpush1.msra.mxu0 0.0
  %1854 = vmatprep.subr.mxu0 0.0
  %1855 = vmatpush1.msra.mxu0 0.0
  %1856 = vmatprep.subr.mxu0 0.0
  %1857 = vmatpush1.msra.mxu0 0.0
  %1858 = vmatprep.subr.mxu0 0.0
  %1859 = vmatpush1.msra.mxu0 0.0
  %1860 = vmatprep.mubr.f32.mxu0 0.0
  %1861 = vmatmul.mubr.f32.gmra.mrb[0].mxu0 %v1791
  %v1862 = vpop.f32.mrb[0].mxu0
  %v1863 = vadd.f32 %v1788, %v1862
  %v1864 = vpop.f32.mrb[0].mxu0
  %1865 = vmatprep.mubr.f32.mxu0 0.0
  %1866 = vmatmul.mubr.f32.gmra.mrb[0].mxu0 %v1794
  %v1867 = vpop.f32.mrb[0].mxu0
  %v1868 = vadd.f32 %v1788, %v1867
  %v1869 = vpop.f32.mrb[0].mxu0
  %1870 = vdwg.mxu0
  %v1871 = vmax.f32 %v1863, 0.0
  %v1872 = vmax.f32 %v1868, 0.0
  %v1874 = vlaneseq
  %v1875 = vshrl.u32 %v1874, 7
  %v1876 = vsub.s32 0, %v1875
  %v1877 = vrot.slane %v1783, %v1876
  %1879 = vmatprep.subr.mxu0 0.0
  %1880 = vmatpush1.msra.mxu0 %v1766
  %1881 = vmatprep.subr.mxu0 0.0
  %1882 = vmatpush1.msra.mxu0 %v1767
  %1883 = vmatprep.subr.mxu0 0.0
  %1884 = vmatpush1.msra.mxu0 %v1768
  %1885 = vmatprep.subr.mxu0 0.0
  %1886 = vmatpush1.msra.mxu0 %v1769
  %1887 = vmatprep.subr.mxu0 0.0
  %1888 = vmatpush1.msra.mxu0 %v1770
  %1889 = vmatprep.subr.mxu0 0.0
  %1890 = vmatpush1.msra.mxu0 %v1771
  %1891 = vmatprep.subr.mxu0 0.0
  %1892 = vmatpush1.msra.mxu0 %v1772
  %1893 = vmatprep.subr.mxu0 0.0
  %1894 = vmatpush1.msra.mxu0 %v1773
  %1895 = vmatprep.subr.mxu0 0.0
  %1896 = vmatpush1.msra.mxu0 %v1774
  %1897 = vmatprep.subr.mxu0 0.0
  %1898 = vmatpush1.msra.mxu0 %v1775
  %1899 = vmatprep.subr.mxu0 0.0
  %1900 = vmatpush1.msra.mxu0 %v1776
  %1901 = vmatprep.subr.mxu0 0.0
  %1902 = vmatpush1.msra.mxu0 %v1777
  %1903 = vmatprep.subr.mxu0 0.0
  %1904 = vmatpush1.msra.mxu0 %v1778
  %1905 = vmatprep.subr.mxu0 0.0
  %1906 = vmatpush1.msra.mxu0 %v1779
  %1907 = vmatprep.subr.mxu0 0.0
  %1908 = vmatpush1.msra.mxu0 %v1780
  %1909 = vmatprep.subr.mxu0 0.0
  %1910 = vmatpush1.msra.mxu0 %v1781
  %1911 = vmatprep.subr.mxu0 0.0
  %1912 = vmatpush1.msra.mxu0 0.0
  %1913 = vmatprep.subr.mxu0 0.0
  %1914 = vmatpush1.msra.mxu0 0.0
  %1915 = vmatprep.subr.mxu0 0.0
  %1916 = vmatpush1.msra.mxu0 0.0
  %1917 = vmatprep.subr.mxu0 0.0
  %1918 = vmatpush1.msra.mxu0 0.0
  %1919 = vmatprep.subr.mxu0 0.0
  %1920 = vmatpush1.msra.mxu0 0.0
  %1921 = vmatprep.subr.mxu0 0.0
  %1922 = vmatpush1.msra.mxu0 0.0
  %1923 = vmatprep.subr.mxu0 0.0
  %1924 = vmatpush1.msra.mxu0 0.0
  %1925 = vmatprep.subr.mxu0 0.0
  %1926 = vmatpush1.msra.mxu0 0.0
  %1927 = vmatprep.subr.mxu0 0.0
  %1928 = vmatpush1.msra.mxu0 0.0
  %1929 = vmatprep.subr.mxu0 0.0
  %1930 = vmatpush1.msra.mxu0 0.0
  %1931 = vmatprep.subr.mxu0 0.0
  %1932 = vmatpush1.msra.mxu0 0.0
  %1933 = vmatprep.subr.mxu0 0.0
  %1934 = vmatpush1.msra.mxu0 0.0
  %1935 = vmatprep.subr.mxu0 0.0
  %1936 = vmatpush1.msra.mxu0 0.0
  %1937 = vmatprep.subr.mxu0 0.0
  %1938 = vmatpush1.msra.mxu0 0.0
  %1939 = vmatprep.subr.mxu0 0.0
  %1940 = vmatpush1.msra.mxu0 0.0
  %1941 = vmatprep.subr.mxu0 0.0
  %1942 = vmatpush1.msra.mxu0 0.0
  %1943 = vmatprep.mubr.f32.mxu0 0.0
  %1944 = vmatmul.mubr.f32.gmra.mrb[0].mxu0 %v1871
  %v1945 = vpop.f32.mrb[0].mxu0
  %v1946 = vadd.f32 %v1877, %v1945
  %v1947 = vpop.f32.mrb[0].mxu0
  %1948 = vmatprep.mubr.f32.mxu0 0.0
  %1949 = vmatmul.mubr.f32.gmra.mrb[0].mxu0 %v1872
  %v1950 = vpop.f32.mrb[0].mxu0
  %v1951 = vadd.f32 %v1877, %v1950
  %v1952 = vpop.f32.mrb[0].mxu0
  %1953 = vdwg.mxu0
  %v1954 = vadd.f32 %v1756, %v1946
  %v1955 = vadd.f32 %v1757, %v1951
  %s1956 = scalar_lea.vmem %s31, 1
  %v1957 = vld [vmem:[%s1956] sm:$0x1]
  %s1958 = scalar_lea.vmem %s33, 1
  %v1959 = vld [vmem:[%s1958] sm:$0x1]
  %v1960 = vsel %vm183, %v1954, 0.0
  %1961 = vadd.xlane.f32.xlu0 %v1960
  %v1962 = vpop.xlane.xlu0 %1961
  %v1963 = vsel %vm183, %v1955, 0.0
  %1964 = vadd.xlane.f32.xlu0 %v1963
  %v1965 = vpop.xlane.xlu0 %1964
  %v1966 = vmul.f32 %v1962, %v809
  %v1967 = vmul.f32 %v1965, %v809
  %v1968 = vsub.f32 %v1954, %v1966
  %v1969 = vsub.f32 %v1955, %v1967
  %v1970 = vmul.f32 %v1968, %v1968
  %v1971 = vmul.f32 %v1969, %v1969
  %v1972 = vsel %vm183, %v1970, 0.0
  %1973 = vadd.xlane.f32.xlu0 %v1972
  %v1974 = vpop.xlane.xlu0 %1973
  %v1975 = vsel %vm183, %v1971, 0.0
  %1976 = vadd.xlane.f32.xlu0 %v1975
  %v1977 = vpop.xlane.xlu0 %1976
  %v1978 = vmul.f32 %v1974, %v809
  %v1979 = vmul.f32 %v1977, %v809
  %v1980 = vadd.f32 %v1978, 1e-05
  %v1981 = vadd.f32 %v1979, 1e-05
  %v1982 = vrsqrt.pop %v1980
  %v1983 = vrsqrt.pop %v1981
  %v1984 = vmul.f32 %v1968, %v1982
  %v1985 = vmul.f32 %v1969, %v1983
  %v1987 = vlaneseq
  %v1988 = vshrl.u32 %v1987, 7
  %v1989 = vsub.s32 0, %v1988
  %v1990 = vrot.slane %v1957, %v1989
  %v1992 = vmul.f32 %v1984, %v1990
  %v1993 = vmul.f32 %v1985, %v1990
  %v1995 = vlaneseq
  %v1996 = vshrl.u32 %v1995, 7
  %v1997 = vsub.s32 0, %v1996
  %v1998 = vrot.slane %v1959, %v1997
  %v2000 = vadd.f32 %v1992, %v1998
  %v2001 = vadd.f32 %v1993, %v1998
  %v2002 = vld [vmem:[%s3] sm:$0xff]
  %v2003 = vld [vmem:[%s3 + $0x8] sm:$0xff]
  %v2004 = vld [vmem:[%s7] sm:$0xff]
  %v2005 = vld [vmem:[%s7 + $0x8] sm:$0xff]
  %v2006 = vld [vmem:[%s7 + $0x10] sm:$0xff]
  %v2007 = vld [vmem:[%s7 + $0x18] sm:$0xff]
  %v2008 = vld [vmem:[%s7 + $0x20] sm:$0xff]
  %v2009 = vld [vmem:[%s7 + $0x28] sm:$0xff]
  %v2010 = vld [vmem:[%s7 + $0x30] sm:$0xff]
  %v2011 = vld [vmem:[%s7 + $0x38] sm:$0xff]
  %v2012 = vld [vmem:[%s9] sm:$0xff]
  %v2013 = vld [vmem:[%s9 + $0x8] sm:$0xff]
  %v2014 = vld [vmem:[%s9 + $0x10] sm:$0xff]
  %v2015 = vld [vmem:[%s9 + $0x18] sm:$0xff]
  %v2016 = vld [vmem:[%s9 + $0x20] sm:$0xff]
  %v2017 = vld [vmem:[%s9 + $0x28] sm:$0xff]
  %v2018 = vld [vmem:[%s9 + $0x30] sm:$0xff]
  %v2019 = vld [vmem:[%s9 + $0x38] sm:$0xff]
  %v2020 = vld [vmem:[%s35] sm:$0xff]
  %v2021 = vld [vmem:[%s35 + $0x8] sm:$0xff]
  %v2022 = vld [vmem:[%s35 + $0x10] sm:$0xff]
  %v2023 = vld [vmem:[%s35 + $0x18] sm:$0xff]
  %v2024 = vld [vmem:[%s37] sm:$0x1]
  %v2026 = vlaneseq
  %v2027 = vshrl.u32 %v2026, 7
  %v2028 = vsub.s32 0, %v2027
  %v2029 = vrot.slane %v2024, %v2028
  %v2032 = vsel %vm183, %v2002, 0
  %v2035 = vsel %vm183, %v2003, 0
  %2037 = vmatprep.subr.mxu0 0.0
  %2038 = vmatpush1.msra.mxu0 %v2020
  %2039 = vmatprep.subr.mxu0 0.0
  %2040 = vmatpush1.msra.mxu0 %v2021
  %2041 = vmatprep.subr.mxu0 0.0
  %2042 = vmatpush1.msra.mxu0 %v2022
  %2043 = vmatprep.subr.mxu0 0.0
  %2044 = vmatpush1.msra.mxu0 %v2023
  %2045 = vmatprep.subr.mxu0 0.0
  %2046 = vmatpush1.msra.mxu0 0.0
  %2047 = vmatprep.subr.mxu0 0.0
  %2048 = vmatpush1.msra.mxu0 0.0
  %2049 = vmatprep.subr.mxu0 0.0
  %2050 = vmatpush1.msra.mxu0 0.0
  %2051 = vmatprep.subr.mxu0 0.0
  %2052 = vmatpush1.msra.mxu0 0.0
  %2053 = vmatprep.subr.mxu0 0.0
  %2054 = vmatpush1.msra.mxu0 0.0
  %2055 = vmatprep.subr.mxu0 0.0
  %2056 = vmatpush1.msra.mxu0 0.0
  %2057 = vmatprep.subr.mxu0 0.0
  %2058 = vmatpush1.msra.mxu0 0.0
  %2059 = vmatprep.subr.mxu0 0.0
  %2060 = vmatpush1.msra.mxu0 0.0
  %2061 = vmatprep.subr.mxu0 0.0
  %2062 = vmatpush1.msra.mxu0 0.0
  %2063 = vmatprep.subr.mxu0 0.0
  %2064 = vmatpush1.msra.mxu0 0.0
  %2065 = vmatprep.subr.mxu0 0.0
  %2066 = vmatpush1.msra.mxu0 0.0
  %2067 = vmatprep.subr.mxu0 0.0
  %2068 = vmatpush1.msra.mxu0 0.0
  %2069 = vmatprep.subr.mxu0 0.0
  %2070 = vmatpush1.msra.mxu0 0.0
  %2071 = vmatprep.subr.mxu0 0.0
  %2072 = vmatpush1.msra.mxu0 0.0
  %2073 = vmatprep.subr.mxu0 0.0
  %2074 = vmatpush1.msra.mxu0 0.0
  %2075 = vmatprep.subr.mxu0 0.0
  %2076 = vmatpush1.msra.mxu0 0.0
  %2077 = vmatprep.subr.mxu0 0.0
  %2078 = vmatpush1.msra.mxu0 0.0
  %2079 = vmatprep.subr.mxu0 0.0
  %2080 = vmatpush1.msra.mxu0 0.0
  %2081 = vmatprep.subr.mxu0 0.0
  %2082 = vmatpush1.msra.mxu0 0.0
  %2083 = vmatprep.subr.mxu0 0.0
  %2084 = vmatpush1.msra.mxu0 0.0
  %2085 = vmatprep.subr.mxu0 0.0
  %2086 = vmatpush1.msra.mxu0 0.0
  %2087 = vmatprep.subr.mxu0 0.0
  %2088 = vmatpush1.msra.mxu0 0.0
  %2089 = vmatprep.subr.mxu0 0.0
  %2090 = vmatpush1.msra.mxu0 0.0
  %2091 = vmatprep.subr.mxu0 0.0
  %2092 = vmatpush1.msra.mxu0 0.0
  %2093 = vmatprep.subr.mxu0 0.0
  %2094 = vmatpush1.msra.mxu0 0.0
  %2095 = vmatprep.subr.mxu0 0.0
  %2096 = vmatpush1.msra.mxu0 0.0
  %2097 = vmatprep.subr.mxu0 0.0
  %2098 = vmatpush1.msra.mxu0 0.0
  %2099 = vmatprep.subr.mxu0 0.0
  %2100 = vmatpush1.msra.mxu0 0.0
  %2101 = vmatprep.mubr.f32.mxu0 0.0
  %2102 = vmatmul.mubr.f32.gmra.mrb[0].mxu0 %v2032
  %v2103 = vpop.f32.mrb[0].mxu0
  %v2104 = vadd.f32 %v2029, %v2103
  %v2105 = vpop.f32.mrb[0].mxu0
  %2106 = vmatprep.mubr.f32.mxu0 0.0
  %2107 = vmatmul.mubr.f32.gmra.mrb[0].mxu0 %v2035
  %v2108 = vpop.f32.mrb[0].mxu0
  %v2109 = vadd.f32 %v2029, %v2108
  %v2110 = vpop.f32.mrb[0].mxu0
  %2111 = vdwg.mxu0
  %2114 = vrot.lane.b32.xlu0 %v2104, 120
  %v2115 = vpop.permute.xlu0 %2114
  %2116 = vrot.lane.b32.xlu0 %v2109, 120
  %v2117 = vpop.permute.xlu0 %2116
  %2118 = vrot.lane.b32.xlu0 %v2104, 112
  %v2119 = vpop.permute.xlu0 %2118
  %2120 = vrot.lane.b32.xlu0 %v2109, 112
  %v2121 = vpop.permute.xlu0 %2120
  %2122 = vrot.lane.b32.xlu0 %v2104, 104
  %v2123 = vpop.permute.xlu0 %2122
  %2124 = vrot.lane.b32.xlu0 %v2109, 104
  %v2125 = vpop.permute.xlu0 %2124
  %2126 = vrot.lane.b32.xlu0 %v2104, 96
  %v2127 = vpop.permute.xlu0 %2126
  %2128 = vrot.lane.b32.xlu0 %v2109, 96
  %v2129 = vpop.permute.xlu0 %2128
  %2130 = vrot.lane.b32.xlu0 %v2115, 96
  %v2131 = vpop.permute.xlu0 %2130
  %2132 = vrot.lane.b32.xlu0 %v2117, 96
  %v2133 = vpop.permute.xlu0 %2132
  %2134 = vrot.lane.b32.xlu0 %v2119, 96
  %v2135 = vpop.permute.xlu0 %2134
  %2136 = vrot.lane.b32.xlu0 %v2121, 96
  %v2137 = vpop.permute.xlu0 %2136
  %2138 = vrot.lane.b32.xlu0 %v2123, 96
  %v2139 = vpop.permute.xlu0 %2138
  %2140 = vrot.lane.b32.xlu0 %v2125, 96
  %v2141 = vpop.permute.xlu0 %2140
  %v2142 = vsel %vm295, %v2104, 0
  %v2144 = vsel %vm295, %v2109, 0
  %v2146 = vsel %vm295, %v2115, 0
  %v2148 = vsel %vm295, %v2117, 0
  %v2150 = vsel %vm295, %v2119, 0
  %v2152 = vsel %vm295, %v2121, 0
  %v2154 = vsel %vm295, %v2123, 0
  %v2156 = vsel %vm295, %v2125, 0
  %v2158 = vsel %vm295, %v2127, 0
  %v2160 = vsel %vm295, %v2129, 0
  %v2162 = vsel %vm295, %v2131, 0
  %v2164 = vsel %vm295, %v2133, 0
  %v2166 = vsel %vm295, %v2135, 0
  %v2168 = vsel %vm295, %v2137, 0
  %v2170 = vsel %vm295, %v2139, 0
  %v2172 = vsel %vm295, %v2141, 0
  %2174 = vmatprep.subr.mxu0 0.0
  %2175 = vmatpush1.xpose.msra.mxu0 %v2158
  %2176 = vmatprep.subr.mxu0 0.0
  %2177 = vmatpush1.xpose.msra.mxu0 %v2160
  %2178 = vmatprep.subr.mxu0 0.0
  %2179 = vmatpush1.xpose.msra.mxu0 %v2162
  %2180 = vmatprep.subr.mxu0 0.0
  %2181 = vmatpush1.xpose.msra.mxu0 %v2164
  %2182 = vmatprep.subr.mxu0 0.0
  %2183 = vmatpush1.xpose.msra.mxu0 %v2166
  %2184 = vmatprep.subr.mxu0 0.0
  %2185 = vmatpush1.xpose.msra.mxu0 %v2168
  %2186 = vmatprep.subr.mxu0 0.0
  %2187 = vmatpush1.xpose.msra.mxu0 %v2170
  %2188 = vmatprep.subr.mxu0 0.0
  %2189 = vmatpush1.xpose.msra.mxu0 %v2172
  %2190 = vmatprep.subr.mxu0 0.0
  %2191 = vmatpush1.xpose.msra.mxu0 0.0
  %2192 = vmatprep.subr.mxu0 0.0
  %2193 = vmatpush1.xpose.msra.mxu0 0.0
  %2194 = vmatprep.subr.mxu0 0.0
  %2195 = vmatpush1.xpose.msra.mxu0 0.0
  %2196 = vmatprep.subr.mxu0 0.0
  %2197 = vmatpush1.xpose.msra.mxu0 0.0
  %2198 = vmatprep.subr.mxu0 0.0
  %2199 = vmatpush1.xpose.msra.mxu0 0.0
  %2200 = vmatprep.subr.mxu0 0.0
  %2201 = vmatpush1.xpose.msra.mxu0 0.0
  %2202 = vmatprep.subr.mxu0 0.0
  %2203 = vmatpush1.xpose.msra.mxu0 0.0
  %2204 = vmatprep.subr.mxu0 0.0
  %2205 = vmatpush1.xpose.msra.mxu0 0.0
  %2206 = vmatprep.subr.mxu0 0.0
  %2207 = vmatpush1.xpose.msra.mxu0 0.0
  %2208 = vmatprep.subr.mxu0 0.0
  %2209 = vmatpush1.xpose.msra.mxu0 0.0
  %2210 = vmatprep.subr.mxu0 0.0
  %2211 = vmatpush1.xpose.msra.mxu0 0.0
  %2212 = vmatprep.subr.mxu0 0.0
  %2213 = vmatpush1.xpose.msra.mxu0 0.0
  %2214 = vmatprep.subr.mxu0 0.0
  %2215 = vmatpush1.xpose.msra.mxu0 0.0
  %2216 = vmatprep.subr.mxu0 0.0
  %2217 = vmatpush1.xpose.msra.mxu0 0.0
  %2218 = vmatprep.subr.mxu0 0.0
  %2219 = vmatpush1.xpose.msra.mxu0 0.0
  %2220 = vmatprep.subr.mxu0 0.0
  %2221 = vmatpush1.xpose.msra.mxu0 0.0
  %2222 = vmatprep.subr.mxu0 0.0
  %2223 = vmatpush1.xpose.msra.mxu0 0.0
  %2224 = vmatprep.subr.mxu0 0.0
  %2225 = vmatpush1.xpose.msra.mxu0 0.0
  %2226 = vmatprep.subr.mxu0 0.0
  %2227 = vmatpush1.xpose.msra.mxu0 0.0
  %2228 = vmatprep.subr.mxu0 0.0
  %2229 = vmatpush1.xpose.msra.mxu0 0.0
  %2230 = vmatprep.subr.mxu0 0.0
  %2231 = vmatpush1.xpose.msra.mxu0 0.0
  %2232 = vmatprep.subr.mxu0 0.0
  %2233 = vmatpush1.xpose.msra.mxu0 0.0
  %2234 = vmatprep.subr.mxu0 0.0
  %2235 = vmatpush1.xpose.msra.mxu0 0.0
  %2236 = vmatprep.subr.mxu0 0.0
  %2237 = vmatpush1.xpose.msra.mxu0 0.0
  %2238 = vmatprep.mubr.f32.mxu0 0.0
  %2239 = vmatmul.mubr.f32.gmra.mrb[0].mxu0 %v2142
  %v2240 = vpop.f32.mrb[0].mxu0
  %v2241 = vadd.f32 %v2004, %v2240
  %v2242 = vpop.f32.mrb[0].mxu0
  %2243 = vmatprep.mubr.f32.mxu0 0.0
  %2244 = vmatmul.mubr.f32.gmra.mrb[0].mxu0 %v2144
  %v2245 = vpop.f32.mrb[0].mxu0
  %v2246 = vadd.f32 %v2005, %v2245
  %v2247 = vpop.f32.mrb[0].mxu0
  %2248 = vmatprep.mubr.f32.mxu0 0.0
  %2249 = vmatmul.mubr.f32.gmra.mrb[0].mxu0 %v2146
  %v2250 = vpop.f32.mrb[0].mxu0
  %v2251 = vadd.f32 %v2006, %v2250
  %v2252 = vpop.f32.mrb[0].mxu0
  %2253 = vmatprep.mubr.f32.mxu0 0.0
  %2254 = vmatmul.mubr.f32.gmra.mrb[0].mxu0 %v2148
  %v2255 = vpop.f32.mrb[0].mxu0
  %v2256 = vadd.f32 %v2007, %v2255
  %v2257 = vpop.f32.mrb[0].mxu0
  %2258 = vmatprep.mubr.f32.mxu0 0.0
  %2259 = vmatmul.mubr.f32.gmra.mrb[0].mxu0 %v2150
  %v2260 = vpop.f32.mrb[0].mxu0
  %v2261 = vadd.f32 %v2008, %v2260
  %v2262 = vpop.f32.mrb[0].mxu0
  %2263 = vmatprep.mubr.f32.mxu0 0.0
  %2264 = vmatmul.mubr.f32.gmra.mrb[0].mxu0 %v2152
  %v2265 = vpop.f32.mrb[0].mxu0
  %v2266 = vadd.f32 %v2009, %v2265
  %v2267 = vpop.f32.mrb[0].mxu0
  %2268 = vmatprep.mubr.f32.mxu0 0.0
  %2269 = vmatmul.mubr.f32.gmra.mrb[0].mxu0 %v2154
  %v2270 = vpop.f32.mrb[0].mxu0
  %v2271 = vadd.f32 %v2010, %v2270
  %v2272 = vpop.f32.mrb[0].mxu0
  %2273 = vmatprep.mubr.f32.mxu0 0.0
  %2274 = vmatmul.mubr.f32.gmra.mrb[0].mxu0 %v2156
  %v2275 = vpop.f32.mrb[0].mxu0
  %v2276 = vadd.f32 %v2011, %v2275
  %v2277 = vpop.f32.mrb[0].mxu0
  %2278 = vdwg.mxu0
  %v2279 = vsel %vm433, %v2241, -inf
  %2280 = vmax.xlane.f32.xlu0 %v2279
  %v2281 = vpop.xlane.xlu0 %2280
  %v2282 = vsel %vm433, %v2246, -inf
  %2283 = vmax.xlane.f32.xlu0 %v2282
  %v2284 = vpop.xlane.xlu0 %2283
  %v2285 = vsel %vm433, %v2251, -inf
  %2286 = vmax.xlane.f32.xlu0 %v2285
  %v2287 = vpop.xlane.xlu0 %2286
  %v2288 = vsel %vm433, %v2256, -inf
  %2289 = vmax.xlane.f32.xlu0 %v2288
  %v2290 = vpop.xlane.xlu0 %2289
  %v2291 = vsel %vm433, %v2261, -inf
  %2292 = vmax.xlane.f32.xlu0 %v2291
  %v2293 = vpop.xlane.xlu0 %2292
  %v2294 = vsel %vm433, %v2266, -inf
  %2295 = vmax.xlane.f32.xlu0 %v2294
  %v2296 = vpop.xlane.xlu0 %2295
  %v2297 = vsel %vm433, %v2271, -inf
  %2298 = vmax.xlane.f32.xlu0 %v2297
  %v2299 = vpop.xlane.xlu0 %2298
  %v2300 = vsel %vm433, %v2276, -inf
  %2301 = vmax.xlane.f32.xlu0 %v2300
  %v2302 = vpop.xlane.xlu0 %2301
  %v2303 = vsub.f32 %v2241, %v2281
  %v2304 = vsub.f32 %v2246, %v2284
  %v2305 = vsub.f32 %v2251, %v2287
  %v2306 = vsub.f32 %v2256, %v2290
  %v2307 = vsub.f32 %v2261, %v2293
  %v2308 = vsub.f32 %v2266, %v2296
  %v2309 = vsub.f32 %v2271, %v2299
  %v2310 = vsub.f32 %v2276, %v2302
  %v2311 = vmul.f32 %v2303, 1.442695
  %v2312 = vpow.pop %v2311
  %v2313 = vmul.f32 %v2304, 1.442695
  %v2314 = vpow.pop %v2313
  %v2315 = vmul.f32 %v2305, 1.442695
  %v2316 = vpow.pop %v2315
  %v2317 = vmul.f32 %v2306, 1.442695
  %v2318 = vpow.pop %v2317
  %v2319 = vmul.f32 %v2307, 1.442695
  %v2320 = vpow.pop %v2319
  %v2321 = vmul.f32 %v2308, 1.442695
  %v2322 = vpow.pop %v2321
  %v2323 = vmul.f32 %v2309, 1.442695
  %v2324 = vpow.pop %v2323
  %v2325 = vmul.f32 %v2310, 1.442695
  %v2326 = vpow.pop %v2325
  %v2327 = vsel %vm433, %v2312, 0.0
  %2328 = vadd.xlane.f32.xlu0 %v2327
  %v2329 = vpop.xlane.xlu0 %2328
  %v2330 = vsel %vm433, %v2314, 0.0
  %2331 = vadd.xlane.f32.xlu0 %v2330
  %v2332 = vpop.xlane.xlu0 %2331
  %v2333 = vsel %vm433, %v2316, 0.0
  %2334 = vadd.xlane.f32.xlu0 %v2333
  %v2335 = vpop.xlane.xlu0 %2334
  %v2336 = vsel %vm433, %v2318, 0.0
  %2337 = vadd.xlane.f32.xlu0 %v2336
  %v2338 = vpop.xlane.xlu0 %2337
  %v2339 = vsel %vm433, %v2320, 0.0
  %2340 = vadd.xlane.f32.xlu0 %v2339
  %v2341 = vpop.xlane.xlu0 %2340
  %v2342 = vsel %vm433, %v2322, 0.0
  %2343 = vadd.xlane.f32.xlu0 %v2342
  %v2344 = vpop.xlane.xlu0 %2343
  %v2345 = vsel %vm433, %v2324, 0.0
  %2346 = vadd.xlane.f32.xlu0 %v2345
  %v2347 = vpop.xlane.xlu0 %2346
  %v2348 = vsel %vm433, %v2326, 0.0
  %2349 = vadd.xlane.f32.xlu0 %v2348
  %v2350 = vpop.xlane.xlu0 %2349
  %v2351 = vrcp.pop %v2329
  %v2352 = vrcp.pop %v2332
  %v2353 = vrcp.pop %v2335
  %v2354 = vrcp.pop %v2338
  %v2355 = vrcp.pop %v2341
  %v2356 = vrcp.pop %v2344
  %v2357 = vrcp.pop %v2347
  %v2358 = vrcp.pop %v2350
  %v2359 = vmul.f32 %v2312, %v2351
  %v2360 = vmul.f32 %v2314, %v2352
  %v2361 = vmul.f32 %v2316, %v2353
  %v2362 = vmul.f32 %v2318, %v2354
  %v2363 = vmul.f32 %v2320, %v2355
  %v2364 = vmul.f32 %v2322, %v2356
  %v2365 = vmul.f32 %v2324, %v2357
  %v2366 = vmul.f32 %v2326, %v2358
  %2367 = vrot.lane.b32.xlu0 %v2104, 64
  %v2368 = vpop.permute.xlu0 %2367
  %2369 = vrot.lane.b32.xlu0 %v2109, 64
  %v2370 = vpop.permute.xlu0 %2369
  %2371 = vrot.lane.b32.xlu0 %v2115, 64
  %v2372 = vpop.permute.xlu0 %2371
  %2373 = vrot.lane.b32.xlu0 %v2117, 64
  %v2374 = vpop.permute.xlu0 %2373
  %2375 = vrot.lane.b32.xlu0 %v2119, 64
  %v2376 = vpop.permute.xlu0 %2375
  %2377 = vrot.lane.b32.xlu0 %v2121, 64
  %v2378 = vpop.permute.xlu0 %2377
  %2379 = vrot.lane.b32.xlu0 %v2123, 64
  %v2380 = vpop.permute.xlu0 %2379
  %2381 = vrot.lane.b32.xlu0 %v2125, 64
  %v2382 = vpop.permute.xlu0 %2381
  %v2392 = vsel %vm433, %v2359, 0
  %v2395 = vsel %vm433, %v2360, 0
  %v2398 = vsel %vm433, %v2361, 0
  %v2401 = vsel %vm433, %v2362, 0
  %v2404 = vsel %vm433, %v2363, 0
  %v2407 = vsel %vm433, %v2364, 0
  %v2410 = vsel %vm433, %v2365, 0
  %v2413 = vsel %vm433, %v2366, 0
  %2415 = vmatprep.subr.mxu0 0.0
  %2416 = vmatpush1.msra.mxu0 %v2368
  %2417 = vmatprep.subr.mxu0 0.0
  %2418 = vmatpush1.msra.mxu0 %v2370
  %2419 = vmatprep.subr.mxu0 0.0
  %2420 = vmatpush1.msra.mxu0 %v2372
  %2421 = vmatprep.subr.mxu0 0.0
  %2422 = vmatpush1.msra.mxu0 %v2374
  %2423 = vmatprep.subr.mxu0 0.0
  %2424 = vmatpush1.msra.mxu0 %v2376
  %2425 = vmatprep.subr.mxu0 0.0
  %2426 = vmatpush1.msra.mxu0 %v2378
  %2427 = vmatprep.subr.mxu0 0.0
  %2428 = vmatpush1.msra.mxu0 %v2380
  %2429 = vmatprep.subr.mxu0 0.0
  %2430 = vmatpush1.msra.mxu0 %v2382
  %2431 = vmatprep.subr.mxu0 0.0
  %2432 = vmatpush1.msra.mxu0 0.0
  %2433 = vmatprep.subr.mxu0 0.0
  %2434 = vmatpush1.msra.mxu0 0.0
  %2435 = vmatprep.subr.mxu0 0.0
  %2436 = vmatpush1.msra.mxu0 0.0
  %2437 = vmatprep.subr.mxu0 0.0
  %2438 = vmatpush1.msra.mxu0 0.0
  %2439 = vmatprep.subr.mxu0 0.0
  %2440 = vmatpush1.msra.mxu0 0.0
  %2441 = vmatprep.subr.mxu0 0.0
  %2442 = vmatpush1.msra.mxu0 0.0
  %2443 = vmatprep.subr.mxu0 0.0
  %2444 = vmatpush1.msra.mxu0 0.0
  %2445 = vmatprep.subr.mxu0 0.0
  %2446 = vmatpush1.msra.mxu0 0.0
  %2447 = vmatprep.subr.mxu0 0.0
  %2448 = vmatpush1.msra.mxu0 0.0
  %2449 = vmatprep.subr.mxu0 0.0
  %2450 = vmatpush1.msra.mxu0 0.0
  %2451 = vmatprep.subr.mxu0 0.0
  %2452 = vmatpush1.msra.mxu0 0.0
  %2453 = vmatprep.subr.mxu0 0.0
  %2454 = vmatpush1.msra.mxu0 0.0
  %2455 = vmatprep.subr.mxu0 0.0
  %2456 = vmatpush1.msra.mxu0 0.0
  %2457 = vmatprep.subr.mxu0 0.0
  %2458 = vmatpush1.msra.mxu0 0.0
  %2459 = vmatprep.subr.mxu0 0.0
  %2460 = vmatpush1.msra.mxu0 0.0
  %2461 = vmatprep.subr.mxu0 0.0
  %2462 = vmatpush1.msra.mxu0 0.0
  %2463 = vmatprep.subr.mxu0 0.0
  %2464 = vmatpush1.msra.mxu0 0.0
  %2465 = vmatprep.subr.mxu0 0.0
  %2466 = vmatpush1.msra.mxu0 0.0
  %2467 = vmatprep.subr.mxu0 0.0
  %2468 = vmatpush1.msra.mxu0 0.0
  %2469 = vmatprep.subr.mxu0 0.0
  %2470 = vmatpush1.msra.mxu0 0.0
  %2471 = vmatprep.subr.mxu0 0.0
  %2472 = vmatpush1.msra.mxu0 0.0
  %2473 = vmatprep.subr.mxu0 0.0
  %2474 = vmatpush1.msra.mxu0 0.0
  %2475 = vmatprep.subr.mxu0 0.0
  %2476 = vmatpush1.msra.mxu0 0.0
  %2477 = vmatprep.subr.mxu0 0.0
  %2478 = vmatpush1.msra.mxu0 0.0
  %2479 = vmatprep.mubr.f32.mxu0 0.0
  %2480 = vmatmul.mubr.f32.gmra.mrb[0].mxu0 %v2392
  %v2481 = vpop.f32.mrb[0].mxu0
  %v2482 = vadd.f32 0.0, %v2481
  %v2483 = vpop.f32.mrb[0].mxu0
  %2484 = vmatprep.mubr.f32.mxu0 0.0
  %2485 = vmatmul.mubr.f32.gmra.mrb[0].mxu0 %v2395
  %v2486 = vpop.f32.mrb[0].mxu0
  %v2487 = vadd.f32 0.0, %v2486
  %v2488 = vpop.f32.mrb[0].mxu0
  %2489 = vmatprep.mubr.f32.mxu0 0.0
  %2490 = vmatmul.mubr.f32.gmra.mrb[0].mxu0 %v2398
  %v2491 = vpop.f32.mrb[0].mxu0
  %v2492 = vadd.f32 0.0, %v2491
  %v2493 = vpop.f32.mrb[0].mxu0
  %2494 = vmatprep.mubr.f32.mxu0 0.0
  %2495 = vmatmul.mubr.f32.gmra.mrb[0].mxu0 %v2401
  %v2496 = vpop.f32.mrb[0].mxu0
  %v2497 = vadd.f32 0.0, %v2496
  %v2498 = vpop.f32.mrb[0].mxu0
  %2499 = vmatprep.mubr.f32.mxu0 0.0
  %2500 = vmatmul.mubr.f32.gmra.mrb[0].mxu0 %v2404
  %v2501 = vpop.f32.mrb[0].mxu0
  %v2502 = vadd.f32 0.0, %v2501
  %v2503 = vpop.f32.mrb[0].mxu0
  %2504 = vmatprep.mubr.f32.mxu0 0.0
  %2505 = vmatmul.mubr.f32.gmra.mrb[0].mxu0 %v2407
  %v2506 = vpop.f32.mrb[0].mxu0
  %v2507 = vadd.f32 0.0, %v2506
  %v2508 = vpop.f32.mrb[0].mxu0
  %2509 = vmatprep.mubr.f32.mxu0 0.0
  %2510 = vmatmul.mubr.f32.gmra.mrb[0].mxu0 %v2410
  %v2511 = vpop.f32.mrb[0].mxu0
  %v2512 = vadd.f32 0.0, %v2511
  %v2513 = vpop.f32.mrb[0].mxu0
  %2514 = vmatprep.mubr.f32.mxu0 0.0
  %2515 = vmatmul.mubr.f32.gmra.mrb[0].mxu0 %v2413
  %v2516 = vpop.f32.mrb[0].mxu0
  %v2517 = vadd.f32 0.0, %v2516
  %v2518 = vpop.f32.mrb[0].mxu0
  %2519 = vdwg.mxu0
  %2522 = vrot.lane.b32.xlu0 %v2492, 8
  %v2523 = vpop.permute.xlu0 %2522
  %2524 = vrot.lane.b32.xlu0 %v2497, 8
  %v2525 = vpop.permute.xlu0 %2524
  %2530 = vrot.lane.b32.xlu0 %v2502, 16
  %v2531 = vpop.permute.xlu0 %2530
  %2532 = vrot.lane.b32.xlu0 %v2507, 16
  %v2533 = vpop.permute.xlu0 %2532
  %2538 = vrot.lane.b32.xlu0 %v2512, 24
  %v2539 = vpop.permute.xlu0 %2538
  %2540 = vrot.lane.b32.xlu0 %v2517, 24
  %v2541 = vpop.permute.xlu0 %2540
  %v2544 = vsel %vm295, %v2482, %v2523
  %v2545 = vsel %vm295, %v2487, %v2525
  %v2546 = vsel %vm701, %v2544, %v2531
  %v2547 = vsel %vm701, %v2545, %v2533
  %v2548 = vsel %vm704, %v2546, %v2539
  %v2549 = vsel %vm704, %v2547, %v2541
  %v2550 = vld [vmem:[%s39] sm:$0xff]
  %v2551 = vld [vmem:[%s39 + $0x8] sm:$0xff]
  %v2552 = vld [vmem:[%s39 + $0x10] sm:$0xff]
  %v2553 = vld [vmem:[%s39 + $0x18] sm:$0xff]
  %v2554 = vld [vmem:[%s41] sm:$0x1]
  %v2556 = vlaneseq
  %v2557 = vshrl.u32 %v2556, 7
  %v2558 = vsub.s32 0, %v2557
  %v2559 = vrot.slane %v2554, %v2558
  %v2562 = vsel %vm183, %v2548, 0
  %v2565 = vsel %vm183, %v2549, 0
  %2567 = vmatprep.subr.mxu0 0.0
  %2568 = vmatpush1.msra.mxu0 %v2550
  %2569 = vmatprep.subr.mxu0 0.0
  %2570 = vmatpush1.msra.mxu0 %v2551
  %2571 = vmatprep.subr.mxu0 0.0
  %2572 = vmatpush1.msra.mxu0 %v2552
  %2573 = vmatprep.subr.mxu0 0.0
  %2574 = vmatpush1.msra.mxu0 %v2553
  %2575 = vmatprep.subr.mxu0 0.0
  %2576 = vmatpush1.msra.mxu0 0.0
  %2577 = vmatprep.subr.mxu0 0.0
  %2578 = vmatpush1.msra.mxu0 0.0
  %2579 = vmatprep.subr.mxu0 0.0
  %2580 = vmatpush1.msra.mxu0 0.0
  %2581 = vmatprep.subr.mxu0 0.0
  %2582 = vmatpush1.msra.mxu0 0.0
  %2583 = vmatprep.subr.mxu0 0.0
  %2584 = vmatpush1.msra.mxu0 0.0
  %2585 = vmatprep.subr.mxu0 0.0
  %2586 = vmatpush1.msra.mxu0 0.0
  %2587 = vmatprep.subr.mxu0 0.0
  %2588 = vmatpush1.msra.mxu0 0.0
  %2589 = vmatprep.subr.mxu0 0.0
  %2590 = vmatpush1.msra.mxu0 0.0
  %2591 = vmatprep.subr.mxu0 0.0
  %2592 = vmatpush1.msra.mxu0 0.0
  %2593 = vmatprep.subr.mxu0 0.0
  %2594 = vmatpush1.msra.mxu0 0.0
  %2595 = vmatprep.subr.mxu0 0.0
  %2596 = vmatpush1.msra.mxu0 0.0
  %2597 = vmatprep.subr.mxu0 0.0
  %2598 = vmatpush1.msra.mxu0 0.0
  %2599 = vmatprep.subr.mxu0 0.0
  %2600 = vmatpush1.msra.mxu0 0.0
  %2601 = vmatprep.subr.mxu0 0.0
  %2602 = vmatpush1.msra.mxu0 0.0
  %2603 = vmatprep.subr.mxu0 0.0
  %2604 = vmatpush1.msra.mxu0 0.0
  %2605 = vmatprep.subr.mxu0 0.0
  %2606 = vmatpush1.msra.mxu0 0.0
  %2607 = vmatprep.subr.mxu0 0.0
  %2608 = vmatpush1.msra.mxu0 0.0
  %2609 = vmatprep.subr.mxu0 0.0
  %2610 = vmatpush1.msra.mxu0 0.0
  %2611 = vmatprep.subr.mxu0 0.0
  %2612 = vmatpush1.msra.mxu0 0.0
  %2613 = vmatprep.subr.mxu0 0.0
  %2614 = vmatpush1.msra.mxu0 0.0
  %2615 = vmatprep.subr.mxu0 0.0
  %2616 = vmatpush1.msra.mxu0 0.0
  %2617 = vmatprep.subr.mxu0 0.0
  %2618 = vmatpush1.msra.mxu0 0.0
  %2619 = vmatprep.subr.mxu0 0.0
  %2620 = vmatpush1.msra.mxu0 0.0
  %2621 = vmatprep.subr.mxu0 0.0
  %2622 = vmatpush1.msra.mxu0 0.0
  %2623 = vmatprep.subr.mxu0 0.0
  %2624 = vmatpush1.msra.mxu0 0.0
  %2625 = vmatprep.subr.mxu0 0.0
  %2626 = vmatpush1.msra.mxu0 0.0
  %2627 = vmatprep.subr.mxu0 0.0
  %2628 = vmatpush1.msra.mxu0 0.0
  %2629 = vmatprep.subr.mxu0 0.0
  %2630 = vmatpush1.msra.mxu0 0.0
  %2631 = vmatprep.mubr.f32.mxu0 0.0
  %2632 = vmatmul.mubr.f32.gmra.mrb[0].mxu0 %v2562
  %v2633 = vpop.f32.mrb[0].mxu0
  %v2634 = vadd.f32 %v2559, %v2633
  %v2635 = vpop.f32.mrb[0].mxu0
  %2636 = vmatprep.mubr.f32.mxu0 0.0
  %2637 = vmatmul.mubr.f32.gmra.mrb[0].mxu0 %v2565
  %v2638 = vpop.f32.mrb[0].mxu0
  %v2639 = vadd.f32 %v2559, %v2638
  %v2640 = vpop.f32.mrb[0].mxu0
  %2641 = vdwg.mxu0
  %v2642 = vadd.f32 %v2002, %v2634
  %v2643 = vadd.f32 %v2003, %v2639
  %v2644 = vld [vmem:[%s43] sm:$0x1]
  %v2645 = vld [vmem:[%s45] sm:$0x1]
  %v2646 = vsel %vm183, %v2642, 0.0
  %2647 = vadd.xlane.f32.xlu0 %v2646
  %v2648 = vpop.xlane.xlu0 %2647
  %v2649 = vsel %vm183, %v2643, 0.0
  %2650 = vadd.xlane.f32.xlu0 %v2649
  %v2651 = vpop.xlane.xlu0 %2650
  %v2652 = vmul.f32 %v2648, %v809
  %v2653 = vmul.f32 %v2651, %v809
  %v2654 = vsub.f32 %v2642, %v2652
  %v2655 = vsub.f32 %v2643, %v2653
  %v2656 = vmul.f32 %v2654, %v2654
  %v2657 = vmul.f32 %v2655, %v2655
  %v2658 = vsel %vm183, %v2656, 0.0
  %2659 = vadd.xlane.f32.xlu0 %v2658
  %v2660 = vpop.xlane.xlu0 %2659
  %v2661 = vsel %vm183, %v2657, 0.0
  %2662 = vadd.xlane.f32.xlu0 %v2661
  %v2663 = vpop.xlane.xlu0 %2662
  %v2664 = vmul.f32 %v2660, %v809
  %v2665 = vmul.f32 %v2663, %v809
  %v2666 = vadd.f32 %v2664, 1e-05
  %v2667 = vadd.f32 %v2665, 1e-05
  %v2668 = vrsqrt.pop %v2666
  %v2669 = vrsqrt.pop %v2667
  %v2670 = vmul.f32 %v2654, %v2668
  %v2671 = vmul.f32 %v2655, %v2669
  %v2673 = vlaneseq
  %v2674 = vshrl.u32 %v2673, 7
  %v2675 = vsub.s32 0, %v2674
  %v2676 = vrot.slane %v2644, %v2675
  %v2678 = vmul.f32 %v2670, %v2676
  %v2679 = vmul.f32 %v2671, %v2676
  %v2681 = vlaneseq
  %v2682 = vshrl.u32 %v2681, 7
  %v2683 = vsub.s32 0, %v2682
  %v2684 = vrot.slane %v2645, %v2683
  %v2686 = vadd.f32 %v2678, %v2684
  %v2687 = vadd.f32 %v2679, %v2684
  %v2688 = vld [vmem:[%s47] sm:$0xff]
  %v2689 = vld [vmem:[%s47 + $0x8] sm:$0xff]
  %v2690 = vld [vmem:[%s47 + $0x10] sm:$0xff]
  %v2691 = vld [vmem:[%s47 + $0x18] sm:$0xff]
  %v2692 = vld [vmem:[%s49] sm:$0x1]
  %v2694 = vlaneseq
  %v2695 = vshrl.u32 %v2694, 7
  %v2696 = vsub.s32 0, %v2695
  %v2697 = vrot.slane %v2692, %v2696
  %v2700 = vsel %vm183, %v2686, 0
  %v2703 = vsel %vm183, %v2687, 0
  %2705 = vmatprep.subr.mxu0 0.0
  %2706 = vmatpush1.msra.mxu0 %v2688
  %2707 = vmatprep.subr.mxu0 0.0
  %2708 = vmatpush1.msra.mxu0 %v2689
  %2709 = vmatprep.subr.mxu0 0.0
  %2710 = vmatpush1.msra.mxu0 %v2690
  %2711 = vmatprep.subr.mxu0 0.0
  %2712 = vmatpush1.msra.mxu0 %v2691
  %2713 = vmatprep.subr.mxu0 0.0
  %2714 = vmatpush1.msra.mxu0 0.0
  %2715 = vmatprep.subr.mxu0 0.0
  %2716 = vmatpush1.msra.mxu0 0.0
  %2717 = vmatprep.subr.mxu0 0.0
  %2718 = vmatpush1.msra.mxu0 0.0
  %2719 = vmatprep.subr.mxu0 0.0
  %2720 = vmatpush1.msra.mxu0 0.0
  %2721 = vmatprep.subr.mxu0 0.0
  %2722 = vmatpush1.msra.mxu0 0.0
  %2723 = vmatprep.subr.mxu0 0.0
  %2724 = vmatpush1.msra.mxu0 0.0
  %2725 = vmatprep.subr.mxu0 0.0
  %2726 = vmatpush1.msra.mxu0 0.0
  %2727 = vmatprep.subr.mxu0 0.0
  %2728 = vmatpush1.msra.mxu0 0.0
  %2729 = vmatprep.subr.mxu0 0.0
  %2730 = vmatpush1.msra.mxu0 0.0
  %2731 = vmatprep.subr.mxu0 0.0
  %2732 = vmatpush1.msra.mxu0 0.0
  %2733 = vmatprep.subr.mxu0 0.0
  %2734 = vmatpush1.msra.mxu0 0.0
  %2735 = vmatprep.subr.mxu0 0.0
  %2736 = vmatpush1.msra.mxu0 0.0
  %2737 = vmatprep.subr.mxu0 0.0
  %2738 = vmatpush1.msra.mxu0 0.0
  %2739 = vmatprep.subr.mxu0 0.0
  %2740 = vmatpush1.msra.mxu0 0.0
  %2741 = vmatprep.subr.mxu0 0.0
  %2742 = vmatpush1.msra.mxu0 0.0
  %2743 = vmatprep.subr.mxu0 0.0
  %2744 = vmatpush1.msra.mxu0 0.0
  %2745 = vmatprep.subr.mxu0 0.0
  %2746 = vmatpush1.msra.mxu0 0.0
  %2747 = vmatprep.subr.mxu0 0.0
  %2748 = vmatpush1.msra.mxu0 0.0
  %2749 = vmatprep.subr.mxu0 0.0
  %2750 = vmatpush1.msra.mxu0 0.0
  %2751 = vmatprep.subr.mxu0 0.0
  %2752 = vmatpush1.msra.mxu0 0.0
  %2753 = vmatprep.subr.mxu0 0.0
  %2754 = vmatpush1.msra.mxu0 0.0
  %2755 = vmatprep.subr.mxu0 0.0
  %2756 = vmatpush1.msra.mxu0 0.0
  %2757 = vmatprep.subr.mxu0 0.0
  %2758 = vmatpush1.msra.mxu0 0.0
  %2759 = vmatprep.subr.mxu0 0.0
  %2760 = vmatpush1.msra.mxu0 0.0
  %2761 = vmatprep.subr.mxu0 0.0
  %2762 = vmatpush1.msra.mxu0 0.0
  %2763 = vmatprep.subr.mxu0 0.0
  %2764 = vmatpush1.msra.mxu0 0.0
  %2765 = vmatprep.subr.mxu0 0.0
  %2766 = vmatpush1.msra.mxu0 0.0
  %2767 = vmatprep.subr.mxu0 0.0
  %2768 = vmatpush1.msra.mxu0 0.0
  %2769 = vmatprep.mubr.f32.mxu0 0.0
  %2770 = vmatmul.mubr.f32.gmra.mrb[0].mxu0 %v2700
  %v2771 = vpop.f32.mrb[0].mxu0
  %v2772 = vadd.f32 %v2697, %v2771
  %v2773 = vpop.f32.mrb[0].mxu0
  %2774 = vmatprep.mubr.f32.mxu0 0.0
  %2775 = vmatmul.mubr.f32.gmra.mrb[0].mxu0 %v2703
  %v2776 = vpop.f32.mrb[0].mxu0
  %v2777 = vadd.f32 %v2697, %v2776
  %v2778 = vpop.f32.mrb[0].mxu0
  %2779 = vdwg.mxu0
  %v2780 = vld [vmem:[%s51] sm:$0xff]
  %v2781 = vld [vmem:[%s51 + $0x8] sm:$0xff]
  %v2782 = vld [vmem:[%s51 + $0x10] sm:$0xff]
  %v2783 = vld [vmem:[%s51 + $0x18] sm:$0xff]
  %v2784 = vld [vmem:[%s53] sm:$0x1]
  %v2786 = vlaneseq
  %v2787 = vshrl.u32 %v2786, 7
  %v2788 = vsub.s32 0, %v2787
  %v2789 = vrot.slane %v2784, %v2788
  %v2792 = vsel %vm183, %v2000, 0
  %v2795 = vsel %vm183, %v2001, 0
  %2797 = vmatprep.subr.mxu0 0.0
  %2798 = vmatpush1.msra.mxu0 %v2780
  %2799 = vmatprep.subr.mxu0 0.0
  %2800 = vmatpush1.msra.mxu0 %v2781
  %2801 = vmatprep.subr.mxu0 0.0
  %2802 = vmatpush1.msra.mxu0 %v2782
  %2803 = vmatprep.subr.mxu0 0.0
  %2804 = vmatpush1.msra.mxu0 %v2783
  %2805 = vmatprep.subr.mxu0 0.0
  %2806 = vmatpush1.msra.mxu0 0.0
  %2807 = vmatprep.subr.mxu0 0.0
  %2808 = vmatpush1.msra.mxu0 0.0
  %2809 = vmatprep.subr.mxu0 0.0
  %2810 = vmatpush1.msra.mxu0 0.0
  %2811 = vmatprep.subr.mxu0 0.0
  %2812 = vmatpush1.msra.mxu0 0.0
  %2813 = vmatprep.subr.mxu0 0.0
  %2814 = vmatpush1.msra.mxu0 0.0
  %2815 = vmatprep.subr.mxu0 0.0
  %2816 = vmatpush1.msra.mxu0 0.0
  %2817 = vmatprep.subr.mxu0 0.0
  %2818 = vmatpush1.msra.mxu0 0.0
  %2819 = vmatprep.subr.mxu0 0.0
  %2820 = vmatpush1.msra.mxu0 0.0
  %2821 = vmatprep.subr.mxu0 0.0
  %2822 = vmatpush1.msra.mxu0 0.0
  %2823 = vmatprep.subr.mxu0 0.0
  %2824 = vmatpush1.msra.mxu0 0.0
  %2825 = vmatprep.subr.mxu0 0.0
  %2826 = vmatpush1.msra.mxu0 0.0
  %2827 = vmatprep.subr.mxu0 0.0
  %2828 = vmatpush1.msra.mxu0 0.0
  %2829 = vmatprep.subr.mxu0 0.0
  %2830 = vmatpush1.msra.mxu0 0.0
  %2831 = vmatprep.subr.mxu0 0.0
  %2832 = vmatpush1.msra.mxu0 0.0
  %2833 = vmatprep.subr.mxu0 0.0
  %2834 = vmatpush1.msra.mxu0 0.0
  %2835 = vmatprep.subr.mxu0 0.0
  %2836 = vmatpush1.msra.mxu0 0.0
  %2837 = vmatprep.subr.mxu0 0.0
  %2838 = vmatpush1.msra.mxu0 0.0
  %2839 = vmatprep.subr.mxu0 0.0
  %2840 = vmatpush1.msra.mxu0 0.0
  %2841 = vmatprep.subr.mxu0 0.0
  %2842 = vmatpush1.msra.mxu0 0.0
  %2843 = vmatprep.subr.mxu0 0.0
  %2844 = vmatpush1.msra.mxu0 0.0
  %2845 = vmatprep.subr.mxu0 0.0
  %2846 = vmatpush1.msra.mxu0 0.0
  %2847 = vmatprep.subr.mxu0 0.0
  %2848 = vmatpush1.msra.mxu0 0.0
  %2849 = vmatprep.subr.mxu0 0.0
  %2850 = vmatpush1.msra.mxu0 0.0
  %2851 = vmatprep.subr.mxu0 0.0
  %2852 = vmatpush1.msra.mxu0 0.0
  %2853 = vmatprep.subr.mxu0 0.0
  %2854 = vmatpush1.msra.mxu0 0.0
  %2855 = vmatprep.subr.mxu0 0.0
  %2856 = vmatpush1.msra.mxu0 0.0
  %2857 = vmatprep.subr.mxu0 0.0
  %2858 = vmatpush1.msra.mxu0 0.0
  %2859 = vmatprep.subr.mxu0 0.0
  %2860 = vmatpush1.msra.mxu0 0.0
  %2861 = vmatprep.mubr.f32.mxu0 0.0
  %2862 = vmatmul.mubr.f32.gmra.mrb[0].mxu0 %v2792
  %v2863 = vpop.f32.mrb[0].mxu0
  %v2864 = vadd.f32 %v2789, %v2863
  %v2865 = vpop.f32.mrb[0].mxu0
  %2866 = vmatprep.mubr.f32.mxu0 0.0
  %2867 = vmatmul.mubr.f32.gmra.mrb[0].mxu0 %v2795
  %v2868 = vpop.f32.mrb[0].mxu0
  %v2869 = vadd.f32 %v2789, %v2868
  %v2870 = vpop.f32.mrb[0].mxu0
  %2871 = vdwg.mxu0
  %2874 = vrot.lane.b32.xlu0 %v2772, 120
  %v2875 = vpop.permute.xlu0 %2874
  %2876 = vrot.lane.b32.xlu0 %v2777, 120
  %v2877 = vpop.permute.xlu0 %2876
  %2878 = vrot.lane.b32.xlu0 %v2772, 112
  %v2879 = vpop.permute.xlu0 %2878
  %2880 = vrot.lane.b32.xlu0 %v2777, 112
  %v2881 = vpop.permute.xlu0 %2880
  %2882 = vrot.lane.b32.xlu0 %v2772, 104
  %v2883 = vpop.permute.xlu0 %2882
  %2884 = vrot.lane.b32.xlu0 %v2777, 104
  %v2885 = vpop.permute.xlu0 %2884
  %2888 = vrot.lane.b32.xlu0 %v2864, 120
  %v2889 = vpop.permute.xlu0 %2888
  %2890 = vrot.lane.b32.xlu0 %v2869, 120
  %v2891 = vpop.permute.xlu0 %2890
  %2892 = vrot.lane.b32.xlu0 %v2864, 112
  %v2893 = vpop.permute.xlu0 %2892
  %2894 = vrot.lane.b32.xlu0 %v2869, 112
  %v2895 = vpop.permute.xlu0 %2894
  %2896 = vrot.lane.b32.xlu0 %v2864, 104
  %v2897 = vpop.permute.xlu0 %2896
  %2898 = vrot.lane.b32.xlu0 %v2869, 104
  %v2899 = vpop.permute.xlu0 %2898
  %v2900 = vsel %vm295, %v2772, 0
  %v2902 = vsel %vm295, %v2777, 0
  %v2904 = vsel %vm295, %v2875, 0
  %v2906 = vsel %vm295, %v2877, 0
  %v2908 = vsel %vm295, %v2879, 0
  %v2910 = vsel %vm295, %v2881, 0
  %v2912 = vsel %vm295, %v2883, 0
  %v2914 = vsel %vm295, %v2885, 0
  %v2916 = vsel %vm295, %v2864, 0
  %v2918 = vsel %vm295, %v2869, 0
  %v2920 = vsel %vm295, %v2889, 0
  %v2922 = vsel %vm295, %v2891, 0
  %v2924 = vsel %vm295, %v2893, 0
  %v2926 = vsel %vm295, %v2895, 0
  %v2928 = vsel %vm295, %v2897, 0
  %v2930 = vsel %vm295, %v2899, 0
  %2932 = vmatprep.subr.mxu0 0.0
  %2933 = vmatpush1.xpose.msra.mxu0 %v2916
  %2934 = vmatprep.subr.mxu0 0.0
  %2935 = vmatpush1.xpose.msra.mxu0 %v2918
  %2936 = vmatprep.subr.mxu0 0.0
  %2937 = vmatpush1.xpose.msra.mxu0 %v2920
  %2938 = vmatprep.subr.mxu0 0.0
  %2939 = vmatpush1.xpose.msra.mxu0 %v2922
  %2940 = vmatprep.subr.mxu0 0.0
  %2941 = vmatpush1.xpose.msra.mxu0 %v2924
  %2942 = vmatprep.subr.mxu0 0.0
  %2943 = vmatpush1.xpose.msra.mxu0 %v2926
  %2944 = vmatprep.subr.mxu0 0.0
  %2945 = vmatpush1.xpose.msra.mxu0 %v2928
  %2946 = vmatprep.subr.mxu0 0.0
  %2947 = vmatpush1.xpose.msra.mxu0 %v2930
  %2948 = vmatprep.subr.mxu0 0.0
  %2949 = vmatpush1.xpose.msra.mxu0 0.0
  %2950 = vmatprep.subr.mxu0 0.0
  %2951 = vmatpush1.xpose.msra.mxu0 0.0
  %2952 = vmatprep.subr.mxu0 0.0
  %2953 = vmatpush1.xpose.msra.mxu0 0.0
  %2954 = vmatprep.subr.mxu0 0.0
  %2955 = vmatpush1.xpose.msra.mxu0 0.0
  %2956 = vmatprep.subr.mxu0 0.0
  %2957 = vmatpush1.xpose.msra.mxu0 0.0
  %2958 = vmatprep.subr.mxu0 0.0
  %2959 = vmatpush1.xpose.msra.mxu0 0.0
  %2960 = vmatprep.subr.mxu0 0.0
  %2961 = vmatpush1.xpose.msra.mxu0 0.0
  %2962 = vmatprep.subr.mxu0 0.0
  %2963 = vmatpush1.xpose.msra.mxu0 0.0
  %2964 = vmatprep.subr.mxu0 0.0
  %2965 = vmatpush1.xpose.msra.mxu0 0.0
  %2966 = vmatprep.subr.mxu0 0.0
  %2967 = vmatpush1.xpose.msra.mxu0 0.0
  %2968 = vmatprep.subr.mxu0 0.0
  %2969 = vmatpush1.xpose.msra.mxu0 0.0
  %2970 = vmatprep.subr.mxu0 0.0
  %2971 = vmatpush1.xpose.msra.mxu0 0.0
  %2972 = vmatprep.subr.mxu0 0.0
  %2973 = vmatpush1.xpose.msra.mxu0 0.0
  %2974 = vmatprep.subr.mxu0 0.0
  %2975 = vmatpush1.xpose.msra.mxu0 0.0
  %2976 = vmatprep.subr.mxu0 0.0
  %2977 = vmatpush1.xpose.msra.mxu0 0.0
  %2978 = vmatprep.subr.mxu0 0.0
  %2979 = vmatpush1.xpose.msra.mxu0 0.0
  %2980 = vmatprep.subr.mxu0 0.0
  %2981 = vmatpush1.xpose.msra.mxu0 0.0
  %2982 = vmatprep.subr.mxu0 0.0
  %2983 = vmatpush1.xpose.msra.mxu0 0.0
  %2984 = vmatprep.subr.mxu0 0.0
  %2985 = vmatpush1.xpose.msra.mxu0 0.0
  %2986 = vmatprep.subr.mxu0 0.0
  %2987 = vmatpush1.xpose.msra.mxu0 0.0
  %2988 = vmatprep.subr.mxu0 0.0
  %2989 = vmatpush1.xpose.msra.mxu0 0.0
  %2990 = vmatprep.subr.mxu0 0.0
  %2991 = vmatpush1.xpose.msra.mxu0 0.0
  %2992 = vmatprep.subr.mxu0 0.0
  %2993 = vmatpush1.xpose.msra.mxu0 0.0
  %2994 = vmatprep.subr.mxu0 0.0
  %2995 = vmatpush1.xpose.msra.mxu0 0.0
  %2996 = vmatprep.mubr.f32.mxu0 0.0
  %2997 = vmatmul.mubr.f32.gmra.mrb[0].mxu0 %v2900
  %v2998 = vpop.f32.mrb[0].mxu0
  %v2999 = vadd.f32 %v2012, %v2998
  %v3000 = vpop.f32.mrb[0].mxu0
  %3001 = vmatprep.mubr.f32.mxu0 0.0
  %3002 = vmatmul.mubr.f32.gmra.mrb[0].mxu0 %v2902
  %v3003 = vpop.f32.mrb[0].mxu0
  %v3004 = vadd.f32 %v2013, %v3003
  %v3005 = vpop.f32.mrb[0].mxu0
  %3006 = vmatprep.mubr.f32.mxu0 0.0
  %3007 = vmatmul.mubr.f32.gmra.mrb[0].mxu0 %v2904
  %v3008 = vpop.f32.mrb[0].mxu0
  %v3009 = vadd.f32 %v2014, %v3008
  %v3010 = vpop.f32.mrb[0].mxu0
  %3011 = vmatprep.mubr.f32.mxu0 0.0
  %3012 = vmatmul.mubr.f32.gmra.mrb[0].mxu0 %v2906
  %v3013 = vpop.f32.mrb[0].mxu0
  %v3014 = vadd.f32 %v2015, %v3013
  %v3015 = vpop.f32.mrb[0].mxu0
  %3016 = vmatprep.mubr.f32.mxu0 0.0
  %3017 = vmatmul.mubr.f32.gmra.mrb[0].mxu0 %v2908
  %v3018 = vpop.f32.mrb[0].mxu0
  %v3019 = vadd.f32 %v2016, %v3018
  %v3020 = vpop.f32.mrb[0].mxu0
  %3021 = vmatprep.mubr.f32.mxu0 0.0
  %3022 = vmatmul.mubr.f32.gmra.mrb[0].mxu0 %v2910
  %v3023 = vpop.f32.mrb[0].mxu0
  %v3024 = vadd.f32 %v2017, %v3023
  %v3025 = vpop.f32.mrb[0].mxu0
  %3026 = vmatprep.mubr.f32.mxu0 0.0
  %3027 = vmatmul.mubr.f32.gmra.mrb[0].mxu0 %v2912
  %v3028 = vpop.f32.mrb[0].mxu0
  %v3029 = vadd.f32 %v2018, %v3028
  %v3030 = vpop.f32.mrb[0].mxu0
  %3031 = vmatprep.mubr.f32.mxu0 0.0
  %3032 = vmatmul.mubr.f32.gmra.mrb[0].mxu0 %v2914
  %v3033 = vpop.f32.mrb[0].mxu0
  %v3034 = vadd.f32 %v2019, %v3033
  %v3035 = vpop.f32.mrb[0].mxu0
  %3036 = vdwg.mxu0
  %v3037 = vsel %vm433, %v2999, -inf
  %3038 = vmax.xlane.f32.xlu0 %v3037
  %v3039 = vpop.xlane.xlu0 %3038
  %v3040 = vsel %vm433, %v3004, -inf
  %3041 = vmax.xlane.f32.xlu0 %v3040
  %v3042 = vpop.xlane.xlu0 %3041
  %v3043 = vsel %vm433, %v3009, -inf
  %3044 = vmax.xlane.f32.xlu0 %v3043
  %v3045 = vpop.xlane.xlu0 %3044
  %v3046 = vsel %vm433, %v3014, -inf
  %3047 = vmax.xlane.f32.xlu0 %v3046
  %v3048 = vpop.xlane.xlu0 %3047
  %v3049 = vsel %vm433, %v3019, -inf
  %3050 = vmax.xlane.f32.xlu0 %v3049
  %v3051 = vpop.xlane.xlu0 %3050
  %v3052 = vsel %vm433, %v3024, -inf
  %3053 = vmax.xlane.f32.xlu0 %v3052
  %v3054 = vpop.xlane.xlu0 %3053
  %v3055 = vsel %vm433, %v3029, -inf
  %3056 = vmax.xlane.f32.xlu0 %v3055
  %v3057 = vpop.xlane.xlu0 %3056
  %v3058 = vsel %vm433, %v3034, -inf
  %3059 = vmax.xlane.f32.xlu0 %v3058
  %v3060 = vpop.xlane.xlu0 %3059
  %v3061 = vsub.f32 %v2999, %v3039
  %v3062 = vsub.f32 %v3004, %v3042
  %v3063 = vsub.f32 %v3009, %v3045
  %v3064 = vsub.f32 %v3014, %v3048
  %v3065 = vsub.f32 %v3019, %v3051
  %v3066 = vsub.f32 %v3024, %v3054
  %v3067 = vsub.f32 %v3029, %v3057
  %v3068 = vsub.f32 %v3034, %v3060
  %v3069 = vmul.f32 %v3061, 1.442695
  %v3070 = vpow.pop %v3069
  %v3071 = vmul.f32 %v3062, 1.442695
  %v3072 = vpow.pop %v3071
  %v3073 = vmul.f32 %v3063, 1.442695
  %v3074 = vpow.pop %v3073
  %v3075 = vmul.f32 %v3064, 1.442695
  %v3076 = vpow.pop %v3075
  %v3077 = vmul.f32 %v3065, 1.442695
  %v3078 = vpow.pop %v3077
  %v3079 = vmul.f32 %v3066, 1.442695
  %v3080 = vpow.pop %v3079
  %v3081 = vmul.f32 %v3067, 1.442695
  %v3082 = vpow.pop %v3081
  %v3083 = vmul.f32 %v3068, 1.442695
  %v3084 = vpow.pop %v3083
  %v3085 = vsel %vm433, %v3070, 0.0
  %3086 = vadd.xlane.f32.xlu0 %v3085
  %v3087 = vpop.xlane.xlu0 %3086
  %v3088 = vsel %vm433, %v3072, 0.0
  %3089 = vadd.xlane.f32.xlu0 %v3088
  %v3090 = vpop.xlane.xlu0 %3089
  %v3091 = vsel %vm433, %v3074, 0.0
  %3092 = vadd.xlane.f32.xlu0 %v3091
  %v3093 = vpop.xlane.xlu0 %3092
  %v3094 = vsel %vm433, %v3076, 0.0
  %3095 = vadd.xlane.f32.xlu0 %v3094
  %v3096 = vpop.xlane.xlu0 %3095
  %v3097 = vsel %vm433, %v3078, 0.0
  %3098 = vadd.xlane.f32.xlu0 %v3097
  %v3099 = vpop.xlane.xlu0 %3098
  %v3100 = vsel %vm433, %v3080, 0.0
  %3101 = vadd.xlane.f32.xlu0 %v3100
  %v3102 = vpop.xlane.xlu0 %3101
  %v3103 = vsel %vm433, %v3082, 0.0
  %3104 = vadd.xlane.f32.xlu0 %v3103
  %v3105 = vpop.xlane.xlu0 %3104
  %v3106 = vsel %vm433, %v3084, 0.0
  %3107 = vadd.xlane.f32.xlu0 %v3106
  %v3108 = vpop.xlane.xlu0 %3107
  %v3109 = vrcp.pop %v3087
  %v3110 = vrcp.pop %v3090
  %v3111 = vrcp.pop %v3093
  %v3112 = vrcp.pop %v3096
  %v3113 = vrcp.pop %v3099
  %v3114 = vrcp.pop %v3102
  %v3115 = vrcp.pop %v3105
  %v3116 = vrcp.pop %v3108
  %v3117 = vmul.f32 %v3070, %v3109
  %v3118 = vmul.f32 %v3072, %v3110
  %v3119 = vmul.f32 %v3074, %v3111
  %v3120 = vmul.f32 %v3076, %v3112
  %v3121 = vmul.f32 %v3078, %v3113
  %v3122 = vmul.f32 %v3080, %v3114
  %v3123 = vmul.f32 %v3082, %v3115
  %v3124 = vmul.f32 %v3084, %v3116
  %3125 = vrot.lane.b32.xlu0 %v2864, 96
  %v3126 = vpop.permute.xlu0 %3125
  %3127 = vrot.lane.b32.xlu0 %v2869, 96
  %v3128 = vpop.permute.xlu0 %3127
  %3129 = vrot.lane.b32.xlu0 %v2889, 96
  %v3130 = vpop.permute.xlu0 %3129
  %3131 = vrot.lane.b32.xlu0 %v2891, 96
  %v3132 = vpop.permute.xlu0 %3131
  %3133 = vrot.lane.b32.xlu0 %v2893, 96
  %v3134 = vpop.permute.xlu0 %3133
  %3135 = vrot.lane.b32.xlu0 %v2895, 96
  %v3136 = vpop.permute.xlu0 %3135
  %3137 = vrot.lane.b32.xlu0 %v2897, 96
  %v3138 = vpop.permute.xlu0 %3137
  %3139 = vrot.lane.b32.xlu0 %v2899, 96
  %v3140 = vpop.permute.xlu0 %3139
  %v3150 = vsel %vm433, %v3117, 0
  %v3153 = vsel %vm433, %v3118, 0
  %v3156 = vsel %vm433, %v3119, 0
  %v3159 = vsel %vm433, %v3120, 0
  %v3162 = vsel %vm433, %v3121, 0
  %v3165 = vsel %vm433, %v3122, 0
  %v3168 = vsel %vm433, %v3123, 0
  %v3171 = vsel %vm433, %v3124, 0
  %3173 = vmatprep.subr.mxu0 0.0
  %3174 = vmatpush1.msra.mxu0 %v3126
  %3175 = vmatprep.subr.mxu0 0.0
  %3176 = vmatpush1.msra.mxu0 %v3128
  %3177 = vmatprep.subr.mxu0 0.0
  %3178 = vmatpush1.msra.mxu0 %v3130
  %3179 = vmatprep.subr.mxu0 0.0
  %3180 = vmatpush1.msra.mxu0 %v3132
  %3181 = vmatprep.subr.mxu0 0.0
  %3182 = vmatpush1.msra.mxu0 %v3134
  %3183 = vmatprep.subr.mxu0 0.0
  %3184 = vmatpush1.msra.mxu0 %v3136
  %3185 = vmatprep.subr.mxu0 0.0
  %3186 = vmatpush1.msra.mxu0 %v3138
  %3187 = vmatprep.subr.mxu0 0.0
  %3188 = vmatpush1.msra.mxu0 %v3140
  %3189 = vmatprep.subr.mxu0 0.0
  %3190 = vmatpush1.msra.mxu0 0.0
  %3191 = vmatprep.subr.mxu0 0.0
  %3192 = vmatpush1.msra.mxu0 0.0
  %3193 = vmatprep.subr.mxu0 0.0
  %3194 = vmatpush1.msra.mxu0 0.0
  %3195 = vmatprep.subr.mxu0 0.0
  %3196 = vmatpush1.msra.mxu0 0.0
  %3197 = vmatprep.subr.mxu0 0.0
  %3198 = vmatpush1.msra.mxu0 0.0
  %3199 = vmatprep.subr.mxu0 0.0
  %3200 = vmatpush1.msra.mxu0 0.0
  %3201 = vmatprep.subr.mxu0 0.0
  %3202 = vmatpush1.msra.mxu0 0.0
  %3203 = vmatprep.subr.mxu0 0.0
  %3204 = vmatpush1.msra.mxu0 0.0
  %3205 = vmatprep.subr.mxu0 0.0
  %3206 = vmatpush1.msra.mxu0 0.0
  %3207 = vmatprep.subr.mxu0 0.0
  %3208 = vmatpush1.msra.mxu0 0.0
  %3209 = vmatprep.subr.mxu0 0.0
  %3210 = vmatpush1.msra.mxu0 0.0
  %3211 = vmatprep.subr.mxu0 0.0
  %3212 = vmatpush1.msra.mxu0 0.0
  %3213 = vmatprep.subr.mxu0 0.0
  %3214 = vmatpush1.msra.mxu0 0.0
  %3215 = vmatprep.subr.mxu0 0.0
  %3216 = vmatpush1.msra.mxu0 0.0
  %3217 = vmatprep.subr.mxu0 0.0
  %3218 = vmatpush1.msra.mxu0 0.0
  %3219 = vmatprep.subr.mxu0 0.0
  %3220 = vmatpush1.msra.mxu0 0.0
  %3221 = vmatprep.subr.mxu0 0.0
  %3222 = vmatpush1.msra.mxu0 0.0
  %3223 = vmatprep.subr.mxu0 0.0
  %3224 = vmatpush1.msra.mxu0 0.0
  %3225 = vmatprep.subr.mxu0 0.0
  %3226 = vmatpush1.msra.mxu0 0.0
  %3227 = vmatprep.subr.mxu0 0.0
  %3228 = vmatpush1.msra.mxu0 0.0
  %3229 = vmatprep.subr.mxu0 0.0
  %3230 = vmatpush1.msra.mxu0 0.0
  %3231 = vmatprep.subr.mxu0 0.0
  %3232 = vmatpush1.msra.mxu0 0.0
  %3233 = vmatprep.subr.mxu0 0.0
  %3234 = vmatpush1.msra.mxu0 0.0
  %3235 = vmatprep.subr.mxu0 0.0
  %3236 = vmatpush1.msra.mxu0 0.0
  %3237 = vmatprep.mubr.f32.mxu0 0.0
  %3238 = vmatmul.mubr.f32.gmra.mrb[0].mxu0 %v3150
  %v3239 = vpop.f32.mrb[0].mxu0
  %v3240 = vadd.f32 0.0, %v3239
  %v3241 = vpop.f32.mrb[0].mxu0
  %3242 = vmatprep.mubr.f32.mxu0 0.0
  %3243 = vmatmul.mubr.f32.gmra.mrb[0].mxu0 %v3153
  %v3244 = vpop.f32.mrb[0].mxu0
  %v3245 = vadd.f32 0.0, %v3244
  %v3246 = vpop.f32.mrb[0].mxu0
  %3247 = vmatprep.mubr.f32.mxu0 0.0
  %3248 = vmatmul.mubr.f32.gmra.mrb[0].mxu0 %v3156
  %v3249 = vpop.f32.mrb[0].mxu0
  %v3250 = vadd.f32 0.0, %v3249
  %v3251 = vpop.f32.mrb[0].mxu0
  %3252 = vmatprep.mubr.f32.mxu0 0.0
  %3253 = vmatmul.mubr.f32.gmra.mrb[0].mxu0 %v3159
  %v3254 = vpop.f32.mrb[0].mxu0
  %v3255 = vadd.f32 0.0, %v3254
  %v3256 = vpop.f32.mrb[0].mxu0
  %3257 = vmatprep.mubr.f32.mxu0 0.0
  %3258 = vmatmul.mubr.f32.gmra.mrb[0].mxu0 %v3162
  %v3259 = vpop.f32.mrb[0].mxu0
  %v3260 = vadd.f32 0.0, %v3259
  %v3261 = vpop.f32.mrb[0].mxu0
  %3262 = vmatprep.mubr.f32.mxu0 0.0
  %3263 = vmatmul.mubr.f32.gmra.mrb[0].mxu0 %v3165
  %v3264 = vpop.f32.mrb[0].mxu0
  %v3265 = vadd.f32 0.0, %v3264
  %v3266 = vpop.f32.mrb[0].mxu0
  %3267 = vmatprep.mubr.f32.mxu0 0.0
  %3268 = vmatmul.mubr.f32.gmra.mrb[0].mxu0 %v3168
  %v3269 = vpop.f32.mrb[0].mxu0
  %v3270 = vadd.f32 0.0, %v3269
  %v3271 = vpop.f32.mrb[0].mxu0
  %3272 = vmatprep.mubr.f32.mxu0 0.0
  %3273 = vmatmul.mubr.f32.gmra.mrb[0].mxu0 %v3171
  %v3274 = vpop.f32.mrb[0].mxu0
  %v3275 = vadd.f32 0.0, %v3274
  %v3276 = vpop.f32.mrb[0].mxu0
  %3277 = vdwg.mxu0
  %3280 = vrot.lane.b32.xlu0 %v3250, 8
  %v3281 = vpop.permute.xlu0 %3280
  %3282 = vrot.lane.b32.xlu0 %v3255, 8
  %v3283 = vpop.permute.xlu0 %3282
  %3288 = vrot.lane.b32.xlu0 %v3260, 16
  %v3289 = vpop.permute.xlu0 %3288
  %3290 = vrot.lane.b32.xlu0 %v3265, 16
  %v3291 = vpop.permute.xlu0 %3290
  %3296 = vrot.lane.b32.xlu0 %v3270, 24
  %v3297 = vpop.permute.xlu0 %3296
  %3298 = vrot.lane.b32.xlu0 %v3275, 24
  %v3299 = vpop.permute.xlu0 %3298
  %v3302 = vsel %vm295, %v3240, %v3281
  %v3303 = vsel %vm295, %v3245, %v3283
  %v3304 = vsel %vm701, %v3302, %v3289
  %v3305 = vsel %vm701, %v3303, %v3291
  %v3306 = vsel %vm704, %v3304, %v3297
  %v3307 = vsel %vm704, %v3305, %v3299
  %v3308 = vld [vmem:[%s55] sm:$0xff]
  %v3309 = vld [vmem:[%s55 + $0x8] sm:$0xff]
  %v3310 = vld [vmem:[%s55 + $0x10] sm:$0xff]
  %v3311 = vld [vmem:[%s55 + $0x18] sm:$0xff]
  %v3312 = vld [vmem:[%s57] sm:$0x1]
  %v3314 = vlaneseq
  %v3315 = vshrl.u32 %v3314, 7
  %v3316 = vsub.s32 0, %v3315
  %v3317 = vrot.slane %v3312, %v3316
  %v3320 = vsel %vm183, %v3306, 0
  %v3323 = vsel %vm183, %v3307, 0
  %3325 = vmatprep.subr.mxu0 0.0
  %3326 = vmatpush1.msra.mxu0 %v3308
  %3327 = vmatprep.subr.mxu0 0.0
  %3328 = vmatpush1.msra.mxu0 %v3309
  %3329 = vmatprep.subr.mxu0 0.0
  %3330 = vmatpush1.msra.mxu0 %v3310
  %3331 = vmatprep.subr.mxu0 0.0
  %3332 = vmatpush1.msra.mxu0 %v3311
  %3333 = vmatprep.subr.mxu0 0.0
  %3334 = vmatpush1.msra.mxu0 0.0
  %3335 = vmatprep.subr.mxu0 0.0
  %3336 = vmatpush1.msra.mxu0 0.0
  %3337 = vmatprep.subr.mxu0 0.0
  %3338 = vmatpush1.msra.mxu0 0.0
  %3339 = vmatprep.subr.mxu0 0.0
  %3340 = vmatpush1.msra.mxu0 0.0
  %3341 = vmatprep.subr.mxu0 0.0
  %3342 = vmatpush1.msra.mxu0 0.0
  %3343 = vmatprep.subr.mxu0 0.0
  %3344 = vmatpush1.msra.mxu0 0.0
  %3345 = vmatprep.subr.mxu0 0.0
  %3346 = vmatpush1.msra.mxu0 0.0
  %3347 = vmatprep.subr.mxu0 0.0
  %3348 = vmatpush1.msra.mxu0 0.0
  %3349 = vmatprep.subr.mxu0 0.0
  %3350 = vmatpush1.msra.mxu0 0.0
  %3351 = vmatprep.subr.mxu0 0.0
  %3352 = vmatpush1.msra.mxu0 0.0
  %3353 = vmatprep.subr.mxu0 0.0
  %3354 = vmatpush1.msra.mxu0 0.0
  %3355 = vmatprep.subr.mxu0 0.0
  %3356 = vmatpush1.msra.mxu0 0.0
  %3357 = vmatprep.subr.mxu0 0.0
  %3358 = vmatpush1.msra.mxu0 0.0
  %3359 = vmatprep.subr.mxu0 0.0
  %3360 = vmatpush1.msra.mxu0 0.0
  %3361 = vmatprep.subr.mxu0 0.0
  %3362 = vmatpush1.msra.mxu0 0.0
  %3363 = vmatprep.subr.mxu0 0.0
  %3364 = vmatpush1.msra.mxu0 0.0
  %3365 = vmatprep.subr.mxu0 0.0
  %3366 = vmatpush1.msra.mxu0 0.0
  %3367 = vmatprep.subr.mxu0 0.0
  %3368 = vmatpush1.msra.mxu0 0.0
  %3369 = vmatprep.subr.mxu0 0.0
  %3370 = vmatpush1.msra.mxu0 0.0
  %3371 = vmatprep.subr.mxu0 0.0
  %3372 = vmatpush1.msra.mxu0 0.0
  %3373 = vmatprep.subr.mxu0 0.0
  %3374 = vmatpush1.msra.mxu0 0.0
  %3375 = vmatprep.subr.mxu0 0.0
  %3376 = vmatpush1.msra.mxu0 0.0
  %3377 = vmatprep.subr.mxu0 0.0
  %3378 = vmatpush1.msra.mxu0 0.0
  %3379 = vmatprep.subr.mxu0 0.0
  %3380 = vmatpush1.msra.mxu0 0.0
  %3381 = vmatprep.subr.mxu0 0.0
  %3382 = vmatpush1.msra.mxu0 0.0
  %3383 = vmatprep.subr.mxu0 0.0
  %3384 = vmatpush1.msra.mxu0 0.0
  %3385 = vmatprep.subr.mxu0 0.0
  %3386 = vmatpush1.msra.mxu0 0.0
  %3387 = vmatprep.subr.mxu0 0.0
  %3388 = vmatpush1.msra.mxu0 0.0
  %3389 = vmatprep.mubr.f32.mxu0 0.0
  %3390 = vmatmul.mubr.f32.gmra.mrb[0].mxu0 %v3320
  %v3391 = vpop.f32.mrb[0].mxu0
  %v3392 = vadd.f32 %v3317, %v3391
  %v3393 = vpop.f32.mrb[0].mxu0
  %3394 = vmatprep.mubr.f32.mxu0 0.0
  %3395 = vmatmul.mubr.f32.gmra.mrb[0].mxu0 %v3323
  %v3396 = vpop.f32.mrb[0].mxu0
  %v3397 = vadd.f32 %v3317, %v3396
  %v3398 = vpop.f32.mrb[0].mxu0
  %3399 = vdwg.mxu0
  %v3400 = vadd.f32 %v2686, %v3392
  %v3401 = vadd.f32 %v2687, %v3397
  %v3402 = vld [vmem:[%s59] sm:$0x1]
  %v3403 = vld [vmem:[%s61] sm:$0x1]
  %v3404 = vsel %vm183, %v3400, 0.0
  %3405 = vadd.xlane.f32.xlu0 %v3404
  %v3406 = vpop.xlane.xlu0 %3405
  %v3407 = vsel %vm183, %v3401, 0.0
  %3408 = vadd.xlane.f32.xlu0 %v3407
  %v3409 = vpop.xlane.xlu0 %3408
  %v3410 = vmul.f32 %v3406, %v809
  %v3411 = vmul.f32 %v3409, %v809
  %v3412 = vsub.f32 %v3400, %v3410
  %v3413 = vsub.f32 %v3401, %v3411
  %v3414 = vmul.f32 %v3412, %v3412
  %v3415 = vmul.f32 %v3413, %v3413
  %v3416 = vsel %vm183, %v3414, 0.0
  %3417 = vadd.xlane.f32.xlu0 %v3416
  %v3418 = vpop.xlane.xlu0 %3417
  %v3419 = vsel %vm183, %v3415, 0.0
  %3420 = vadd.xlane.f32.xlu0 %v3419
  %v3421 = vpop.xlane.xlu0 %3420
  %v3422 = vmul.f32 %v3418, %v809
  %v3423 = vmul.f32 %v3421, %v809
  %v3424 = vadd.f32 %v3422, 1e-05
  %v3425 = vadd.f32 %v3423, 1e-05
  %v3426 = vrsqrt.pop %v3424
  %v3427 = vrsqrt.pop %v3425
  %v3428 = vmul.f32 %v3412, %v3426
  %v3429 = vmul.f32 %v3413, %v3427
  %v3431 = vlaneseq
  %v3432 = vshrl.u32 %v3431, 7
  %v3433 = vsub.s32 0, %v3432
  %v3434 = vrot.slane %v3402, %v3433
  %v3436 = vmul.f32 %v3428, %v3434
  %v3437 = vmul.f32 %v3429, %v3434
  %v3439 = vlaneseq
  %v3440 = vshrl.u32 %v3439, 7
  %v3441 = vsub.s32 0, %v3440
  %v3442 = vrot.slane %v3403, %v3441
  %v3444 = vadd.f32 %v3436, %v3442
  %v3445 = vadd.f32 %v3437, %v3442
  %v3446 = vld [vmem:[%s63] sm:$0xff]
  %v3447 = vld [vmem:[%s63 + $0x8] sm:$0xff]
  %v3448 = vld [vmem:[%s63 + $0x10] sm:$0xff]
  %v3449 = vld [vmem:[%s63 + $0x18] sm:$0xff]
  %v3450 = vld [vmem:[%s65] sm:$0x1]
  %v3451 = vld [vmem:[%s67] sm:$0xff]
  %v3452 = vld [vmem:[%s67 + $0x8] sm:$0xff]
  %v3453 = vld [vmem:[%s67 + $0x10] sm:$0xff]
  %v3454 = vld [vmem:[%s67 + $0x18] sm:$0xff]
  %v3455 = vld [vmem:[%s67 + $0x20] sm:$0xff]
  %v3456 = vld [vmem:[%s67 + $0x28] sm:$0xff]
  %v3457 = vld [vmem:[%s67 + $0x30] sm:$0xff]
  %v3458 = vld [vmem:[%s67 + $0x38] sm:$0xff]
  %v3459 = vld [vmem:[%s67 + $0x40] sm:$0xff]
  %v3460 = vld [vmem:[%s67 + $0x48] sm:$0xff]
  %v3461 = vld [vmem:[%s67 + $0x50] sm:$0xff]
  %v3462 = vld [vmem:[%s67 + $0x58] sm:$0xff]
  %v3463 = vld [vmem:[%s67 + $0x60] sm:$0xff]
  %v3464 = vld [vmem:[%s67 + $0x68] sm:$0xff]
  %v3465 = vld [vmem:[%s67 + $0x70] sm:$0xff]
  %v3466 = vld [vmem:[%s67 + $0x78] sm:$0xff]
  %v3467 = vld [vmem:[%s69] sm:$0x1]
  %v3469 = vlaneseq
  %v3470 = vshrl.u32 %v3469, 7
  %v3471 = vsub.s32 0, %v3470
  %v3472 = vrot.slane %v3450, %v3471
  %v3475 = vsel %vm183, %v3444, 0
  %v3478 = vsel %vm183, %v3445, 0
  %3480 = vmatprep.subr.mxu0 0.0
  %3481 = vmatpush1.msra.mxu0 %v3446
  %3482 = vmatprep.subr.mxu0 0.0
  %3483 = vmatpush1.msra.mxu0 %v3447
  %3484 = vmatprep.subr.mxu0 0.0
  %3485 = vmatpush1.msra.mxu0 %v3448
  %3486 = vmatprep.subr.mxu0 0.0
  %3487 = vmatpush1.msra.mxu0 %v3449
  %3488 = vmatprep.subr.mxu0 0.0
  %3489 = vmatpush1.msra.mxu0 0.0
  %3490 = vmatprep.subr.mxu0 0.0
  %3491 = vmatpush1.msra.mxu0 0.0
  %3492 = vmatprep.subr.mxu0 0.0
  %3493 = vmatpush1.msra.mxu0 0.0
  %3494 = vmatprep.subr.mxu0 0.0
  %3495 = vmatpush1.msra.mxu0 0.0
  %3496 = vmatprep.subr.mxu0 0.0
  %3497 = vmatpush1.msra.mxu0 0.0
  %3498 = vmatprep.subr.mxu0 0.0
  %3499 = vmatpush1.msra.mxu0 0.0
  %3500 = vmatprep.subr.mxu0 0.0
  %3501 = vmatpush1.msra.mxu0 0.0
  %3502 = vmatprep.subr.mxu0 0.0
  %3503 = vmatpush1.msra.mxu0 0.0
  %3504 = vmatprep.subr.mxu0 0.0
  %3505 = vmatpush1.msra.mxu0 0.0
  %3506 = vmatprep.subr.mxu0 0.0
  %3507 = vmatpush1.msra.mxu0 0.0
  %3508 = vmatprep.subr.mxu0 0.0
  %3509 = vmatpush1.msra.mxu0 0.0
  %3510 = vmatprep.subr.mxu0 0.0
  %3511 = vmatpush1.msra.mxu0 0.0
  %3512 = vmatprep.subr.mxu0 0.0
  %3513 = vmatpush1.msra.mxu0 0.0
  %3514 = vmatprep.subr.mxu0 0.0
  %3515 = vmatpush1.msra.mxu0 0.0
  %3516 = vmatprep.subr.mxu0 0.0
  %3517 = vmatpush1.msra.mxu0 0.0
  %3518 = vmatprep.subr.mxu0 0.0
  %3519 = vmatpush1.msra.mxu0 0.0
  %3520 = vmatprep.subr.mxu0 0.0
  %3521 = vmatpush1.msra.mxu0 0.0
  %3522 = vmatprep.subr.mxu0 0.0
  %3523 = vmatpush1.msra.mxu0 0.0
  %3524 = vmatprep.subr.mxu0 0.0
  %3525 = vmatpush1.msra.mxu0 0.0
  %3526 = vmatprep.subr.mxu0 0.0
  %3527 = vmatpush1.msra.mxu0 0.0
  %3528 = vmatprep.subr.mxu0 0.0
  %3529 = vmatpush1.msra.mxu0 0.0
  %3530 = vmatprep.subr.mxu0 0.0
  %3531 = vmatpush1.msra.mxu0 0.0
  %3532 = vmatprep.subr.mxu0 0.0
  %3533 = vmatpush1.msra.mxu0 0.0
  %3534 = vmatprep.subr.mxu0 0.0
  %3535 = vmatpush1.msra.mxu0 0.0
  %3536 = vmatprep.subr.mxu0 0.0
  %3537 = vmatpush1.msra.mxu0 0.0
  %3538 = vmatprep.subr.mxu0 0.0
  %3539 = vmatpush1.msra.mxu0 0.0
  %3540 = vmatprep.subr.mxu0 0.0
  %3541 = vmatpush1.msra.mxu0 0.0
  %3542 = vmatprep.subr.mxu0 0.0
  %3543 = vmatpush1.msra.mxu0 0.0
  %3544 = vmatprep.mubr.f32.mxu0 0.0
  %3545 = vmatmul.mubr.f32.gmra.mrb[0].mxu0 %v3475
  %v3546 = vpop.f32.mrb[0].mxu0
  %v3547 = vadd.f32 %v3472, %v3546
  %v3548 = vpop.f32.mrb[0].mxu0
  %3549 = vmatprep.mubr.f32.mxu0 0.0
  %3550 = vmatmul.mubr.f32.gmra.mrb[0].mxu0 %v3478
  %v3551 = vpop.f32.mrb[0].mxu0
  %v3552 = vadd.f32 %v3472, %v3551
  %v3553 = vpop.f32.mrb[0].mxu0
  %3554 = vdwg.mxu0
  %v3555 = vmax.f32 %v3547, 0.0
  %v3556 = vmax.f32 %v3552, 0.0
  %v3558 = vlaneseq
  %v3559 = vshrl.u32 %v3558, 7
  %v3560 = vsub.s32 0, %v3559
  %v3561 = vrot.slane %v3467, %v3560
  %3563 = vmatprep.subr.mxu0 0.0
  %3564 = vmatpush1.msra.mxu0 %v3451
  %3565 = vmatprep.subr.mxu0 0.0
  %3566 = vmatpush1.msra.mxu0 %v3452
  %3567 = vmatprep.subr.mxu0 0.0
  %3568 = vmatpush1.msra.mxu0 %v3453
  %3569 = vmatprep.subr.mxu0 0.0
  %3570 = vmatpush1.msra.mxu0 %v3454
  %3571 = vmatprep.subr.mxu0 0.0
  %3572 = vmatpush1.msra.mxu0 %v3455
  %3573 = vmatprep.subr.mxu0 0.0
  %3574 = vmatpush1.msra.mxu0 %v3456
  %3575 = vmatprep.subr.mxu0 0.0
  %3576 = vmatpush1.msra.mxu0 %v3457
  %3577 = vmatprep.subr.mxu0 0.0
  %3578 = vmatpush1.msra.mxu0 %v3458
  %3579 = vmatprep.subr.mxu0 0.0
  %3580 = vmatpush1.msra.mxu0 %v3459
  %3581 = vmatprep.subr.mxu0 0.0
  %3582 = vmatpush1.msra.mxu0 %v3460
  %3583 = vmatprep.subr.mxu0 0.0
  %3584 = vmatpush1.msra.mxu0 %v3461
  %3585 = vmatprep.subr.mxu0 0.0
  %3586 = vmatpush1.msra.mxu0 %v3462
  %3587 = vmatprep.subr.mxu0 0.0
  %3588 = vmatpush1.msra.mxu0 %v3463
  %3589 = vmatprep.subr.mxu0 0.0
  %3590 = vmatpush1.msra.mxu0 %v3464
  %3591 = vmatprep.subr.mxu0 0.0
  %3592 = vmatpush1.msra.mxu0 %v3465
  %3593 = vmatprep.subr.mxu0 0.0
  %3594 = vmatpush1.msra.mxu0 %v3466
  %3595 = vmatprep.subr.mxu0 0.0
  %3596 = vmatpush1.msra.mxu0 0.0
  %3597 = vmatprep.subr.mxu0 0.0
  %3598 = vmatpush1.msra.mxu0 0.0
  %3599 = vmatprep.subr.mxu0 0.0
  %3600 = vmatpush1.msra.mxu0 0.0
  %3601 = vmatprep.subr.mxu0 0.0
  %3602 = vmatpush1.msra.mxu0 0.0
  %3603 = vmatprep.subr.mxu0 0.0
  %3604 = vmatpush1.msra.mxu0 0.0
  %3605 = vmatprep.subr.mxu0 0.0
  %3606 = vmatpush1.msra.mxu0 0.0
  %3607 = vmatprep.subr.mxu0 0.0
  %3608 = vmatpush1.msra.mxu0 0.0
  %3609 = vmatprep.subr.mxu0 0.0
  %3610 = vmatpush1.msra.mxu0 0.0
  %3611 = vmatprep.subr.mxu0 0.0
  %3612 = vmatpush1.msra.mxu0 0.0
  %3613 = vmatprep.subr.mxu0 0.0
  %3614 = vmatpush1.msra.mxu0 0.0
  %3615 = vmatprep.subr.mxu0 0.0
  %3616 = vmatpush1.msra.mxu0 0.0
  %3617 = vmatprep.subr.mxu0 0.0
  %3618 = vmatpush1.msra.mxu0 0.0
  %3619 = vmatprep.subr.mxu0 0.0
  %3620 = vmatpush1.msra.mxu0 0.0
  %3621 = vmatprep.subr.mxu0 0.0
  %3622 = vmatpush1.msra.mxu0 0.0
  %3623 = vmatprep.subr.mxu0 0.0
  %3624 = vmatpush1.msra.mxu0 0.0
  %3625 = vmatprep.subr.mxu0 0.0
  %3626 = vmatpush1.msra.mxu0 0.0
  %3627 = vmatprep.mubr.f32.mxu0 0.0
  %3628 = vmatmul.mubr.f32.gmra.mrb[0].mxu0 %v3555
  %v3629 = vpop.f32.mrb[0].mxu0
  %v3630 = vadd.f32 %v3561, %v3629
  %v3631 = vpop.f32.mrb[0].mxu0
  %3632 = vmatprep.mubr.f32.mxu0 0.0
  %3633 = vmatmul.mubr.f32.gmra.mrb[0].mxu0 %v3556
  %v3634 = vpop.f32.mrb[0].mxu0
  %v3635 = vadd.f32 %v3561, %v3634
  %v3636 = vpop.f32.mrb[0].mxu0
  %3637 = vdwg.mxu0
  %v3638 = vadd.f32 %v3444, %v3630
  %v3639 = vadd.f32 %v3445, %v3635
  %v3640 = vld [vmem:[%s71] sm:$0x1]
  %v3641 = vld [vmem:[%s73] sm:$0x1]
  %v3642 = vsel %vm183, %v3638, 0.0
  %3643 = vadd.xlane.f32.xlu0 %v3642
  %v3644 = vpop.xlane.xlu0 %3643
  %v3645 = vsel %vm183, %v3639, 0.0
  %3646 = vadd.xlane.f32.xlu0 %v3645
  %v3647 = vpop.xlane.xlu0 %3646
  %v3648 = vmul.f32 %v3644, %v809
  %v3649 = vmul.f32 %v3647, %v809
  %v3650 = vsub.f32 %v3638, %v3648
  %v3651 = vsub.f32 %v3639, %v3649
  %v3652 = vmul.f32 %v3650, %v3650
  %v3653 = vmul.f32 %v3651, %v3651
  %v3654 = vsel %vm183, %v3652, 0.0
  %3655 = vadd.xlane.f32.xlu0 %v3654
  %v3656 = vpop.xlane.xlu0 %3655
  %v3657 = vsel %vm183, %v3653, 0.0
  %3658 = vadd.xlane.f32.xlu0 %v3657
  %v3659 = vpop.xlane.xlu0 %3658
  %v3660 = vmul.f32 %v3656, %v809
  %v3661 = vmul.f32 %v3659, %v809
  %v3662 = vadd.f32 %v3660, 1e-05
  %v3663 = vadd.f32 %v3661, 1e-05
  %v3664 = vrsqrt.pop %v3662
  %v3665 = vrsqrt.pop %v3663
  %v3666 = vmul.f32 %v3650, %v3664
  %v3667 = vmul.f32 %v3651, %v3665
  %v3669 = vlaneseq
  %v3670 = vshrl.u32 %v3669, 7
  %v3671 = vsub.s32 0, %v3670
  %v3672 = vrot.slane %v3640, %v3671
  %v3674 = vmul.f32 %v3666, %v3672
  %v3675 = vmul.f32 %v3667, %v3672
  %v3677 = vlaneseq
  %v3678 = vshrl.u32 %v3677, 7
  %v3679 = vsub.s32 0, %v3678
  %v3680 = vrot.slane %v3641, %v3679
  %v3682 = vadd.f32 %v3674, %v3680
  %v3683 = vadd.f32 %v3675, %v3680
  %s3684 = scalar_lea.vmem %s35, 32
  %v3685 = vld [vmem:[%s3684] sm:$0xff]
  %v3686 = vld [vmem:[%s3684 + $0x8] sm:$0xff]
  %v3687 = vld [vmem:[%s3684 + $0x10] sm:$0xff]
  %v3688 = vld [vmem:[%s3684 + $0x18] sm:$0xff]
  %s3689 = scalar_lea.vmem %s37, 1
  %v3690 = vld [vmem:[%s3689] sm:$0x1]
  %v3692 = vlaneseq
  %v3693 = vshrl.u32 %v3692, 7
  %v3694 = vsub.s32 0, %v3693
  %v3695 = vrot.slane %v3690, %v3694
  %v3698 = vsel %vm183, %v3682, 0
  %v3701 = vsel %vm183, %v3683, 0
  %3703 = vmatprep.subr.mxu0 0.0
  %3704 = vmatpush1.msra.mxu0 %v3685
  %3705 = vmatprep.subr.mxu0 0.0
  %3706 = vmatpush1.msra.mxu0 %v3686
  %3707 = vmatprep.subr.mxu0 0.0
  %3708 = vmatpush1.msra.mxu0 %v3687
  %3709 = vmatprep.subr.mxu0 0.0
  %3710 = vmatpush1.msra.mxu0 %v3688
  %3711 = vmatprep.subr.mxu0 0.0
  %3712 = vmatpush1.msra.mxu0 0.0
  %3713 = vmatprep.subr.mxu0 0.0
  %3714 = vmatpush1.msra.mxu0 0.0
  %3715 = vmatprep.subr.mxu0 0.0
  %3716 = vmatpush1.msra.mxu0 0.0
  %3717 = vmatprep.subr.mxu0 0.0
  %3718 = vmatpush1.msra.mxu0 0.0
  %3719 = vmatprep.subr.mxu0 0.0
  %3720 = vmatpush1.msra.mxu0 0.0
  %3721 = vmatprep.subr.mxu0 0.0
  %3722 = vmatpush1.msra.mxu0 0.0
  %3723 = vmatprep.subr.mxu0 0.0
  %3724 = vmatpush1.msra.mxu0 0.0
  %3725 = vmatprep.subr.mxu0 0.0
  %3726 = vmatpush1.msra.mxu0 0.0
  %3727 = vmatprep.subr.mxu0 0.0
  %3728 = vmatpush1.msra.mxu0 0.0
  %3729 = vmatprep.subr.mxu0 0.0
  %3730 = vmatpush1.msra.mxu0 0.0
  %3731 = vmatprep.subr.mxu0 0.0
  %3732 = vmatpush1.msra.mxu0 0.0
  %3733 = vmatprep.subr.mxu0 0.0
  %3734 = vmatpush1.msra.mxu0 0.0
  %3735 = vmatprep.subr.mxu0 0.0
  %3736 = vmatpush1.msra.mxu0 0.0
  %3737 = vmatprep.subr.mxu0 0.0
  %3738 = vmatpush1.msra.mxu0 0.0
  %3739 = vmatprep.subr.mxu0 0.0
  %3740 = vmatpush1.msra.mxu0 0.0
  %3741 = vmatprep.subr.mxu0 0.0
  %3742 = vmatpush1.msra.mxu0 0.0
  %3743 = vmatprep.subr.mxu0 0.0
  %3744 = vmatpush1.msra.mxu0 0.0
  %3745 = vmatprep.subr.mxu0 0.0
  %3746 = vmatpush1.msra.mxu0 0.0
  %3747 = vmatprep.subr.mxu0 0.0
  %3748 = vmatpush1.msra.mxu0 0.0
  %3749 = vmatprep.subr.mxu0 0.0
  %3750 = vmatpush1.msra.mxu0 0.0
  %3751 = vmatprep.subr.mxu0 0.0
  %3752 = vmatpush1.msra.mxu0 0.0
  %3753 = vmatprep.subr.mxu0 0.0
  %3754 = vmatpush1.msra.mxu0 0.0
  %3755 = vmatprep.subr.mxu0 0.0
  %3756 = vmatpush1.msra.mxu0 0.0
  %3757 = vmatprep.subr.mxu0 0.0
  %3758 = vmatpush1.msra.mxu0 0.0
  %3759 = vmatprep.subr.mxu0 0.0
  %3760 = vmatpush1.msra.mxu0 0.0
  %3761 = vmatprep.subr.mxu0 0.0
  %3762 = vmatpush1.msra.mxu0 0.0
  %3763 = vmatprep.subr.mxu0 0.0
  %3764 = vmatpush1.msra.mxu0 0.0
  %3765 = vmatprep.subr.mxu0 0.0
  %3766 = vmatpush1.msra.mxu0 0.0
  %3767 = vmatprep.mubr.f32.mxu0 0.0
  %3768 = vmatmul.mubr.f32.gmra.mrb[0].mxu0 %v3698
  %v3769 = vpop.f32.mrb[0].mxu0
  %v3770 = vadd.f32 %v3695, %v3769
  %v3771 = vpop.f32.mrb[0].mxu0
  %3772 = vmatprep.mubr.f32.mxu0 0.0
  %3773 = vmatmul.mubr.f32.gmra.mrb[0].mxu0 %v3701
  %v3774 = vpop.f32.mrb[0].mxu0
  %v3775 = vadd.f32 %v3695, %v3774
  %v3776 = vpop.f32.mrb[0].mxu0
  %3777 = vdwg.mxu0
  %3780 = vrot.lane.b32.xlu0 %v3770, 120
  %v3781 = vpop.permute.xlu0 %3780
  %3782 = vrot.lane.b32.xlu0 %v3775, 120
  %v3783 = vpop.permute.xlu0 %3782
  %3784 = vrot.lane.b32.xlu0 %v3770, 112
  %v3785 = vpop.permute.xlu0 %3784
  %3786 = vrot.lane.b32.xlu0 %v3775, 112
  %v3787 = vpop.permute.xlu0 %3786
  %3788 = vrot.lane.b32.xlu0 %v3770, 104
  %v3789 = vpop.permute.xlu0 %3788
  %3790 = vrot.lane.b32.xlu0 %v3775, 104
  %v3791 = vpop.permute.xlu0 %3790
  %3792 = vrot.lane.b32.xlu0 %v3770, 96
  %v3793 = vpop.permute.xlu0 %3792
  %3794 = vrot.lane.b32.xlu0 %v3775, 96
  %v3795 = vpop.permute.xlu0 %3794
  %3796 = vrot.lane.b32.xlu0 %v3781, 96
  %v3797 = vpop.permute.xlu0 %3796
  %3798 = vrot.lane.b32.xlu0 %v3783, 96
  %v3799 = vpop.permute.xlu0 %3798
  %3800 = vrot.lane.b32.xlu0 %v3785, 96
  %v3801 = vpop.permute.xlu0 %3800
  %3802 = vrot.lane.b32.xlu0 %v3787, 96
  %v3803 = vpop.permute.xlu0 %3802
  %3804 = vrot.lane.b32.xlu0 %v3789, 96
  %v3805 = vpop.permute.xlu0 %3804
  %3806 = vrot.lane.b32.xlu0 %v3791, 96
  %v3807 = vpop.permute.xlu0 %3806
  %v3808 = vsel %vm295, %v3770, 0
  %v3810 = vsel %vm295, %v3775, 0
  %v3812 = vsel %vm295, %v3781, 0
  %v3814 = vsel %vm295, %v3783, 0
  %v3816 = vsel %vm295, %v3785, 0
  %v3818 = vsel %vm295, %v3787, 0
  %v3820 = vsel %vm295, %v3789, 0
  %v3822 = vsel %vm295, %v3791, 0
  %v3824 = vsel %vm295, %v3793, 0
  %v3826 = vsel %vm295, %v3795, 0
  %v3828 = vsel %vm295, %v3797, 0
  %v3830 = vsel %vm295, %v3799, 0
  %v3832 = vsel %vm295, %v3801, 0
  %v3834 = vsel %vm295, %v3803, 0
  %v3836 = vsel %vm295, %v3805, 0
  %v3838 = vsel %vm295, %v3807, 0
  %3840 = vmatprep.subr.mxu0 0.0
  %3841 = vmatpush1.xpose.msra.mxu0 %v3824
  %3842 = vmatprep.subr.mxu0 0.0
  %3843 = vmatpush1.xpose.msra.mxu0 %v3826
  %3844 = vmatprep.subr.mxu0 0.0
  %3845 = vmatpush1.xpose.msra.mxu0 %v3828
  %3846 = vmatprep.subr.mxu0 0.0
  %3847 = vmatpush1.xpose.msra.mxu0 %v3830
  %3848 = vmatprep.subr.mxu0 0.0
  %3849 = vmatpush1.xpose.msra.mxu0 %v3832
  %3850 = vmatprep.subr.mxu0 0.0
  %3851 = vmatpush1.xpose.msra.mxu0 %v3834
  %3852 = vmatprep.subr.mxu0 0.0
  %3853 = vmatpush1.xpose.msra.mxu0 %v3836
  %3854 = vmatprep.subr.mxu0 0.0
  %3855 = vmatpush1.xpose.msra.mxu0 %v3838
  %3856 = vmatprep.subr.mxu0 0.0
  %3857 = vmatpush1.xpose.msra.mxu0 0.0
  %3858 = vmatprep.subr.mxu0 0.0
  %3859 = vmatpush1.xpose.msra.mxu0 0.0
  %3860 = vmatprep.subr.mxu0 0.0
  %3861 = vmatpush1.xpose.msra.mxu0 0.0
  %3862 = vmatprep.subr.mxu0 0.0
  %3863 = vmatpush1.xpose.msra.mxu0 0.0
  %3864 = vmatprep.subr.mxu0 0.0
  %3865 = vmatpush1.xpose.msra.mxu0 0.0
  %3866 = vmatprep.subr.mxu0 0.0
  %3867 = vmatpush1.xpose.msra.mxu0 0.0
  %3868 = vmatprep.subr.mxu0 0.0
  %3869 = vmatpush1.xpose.msra.mxu0 0.0
  %3870 = vmatprep.subr.mxu0 0.0
  %3871 = vmatpush1.xpose.msra.mxu0 0.0
  %3872 = vmatprep.subr.mxu0 0.0
  %3873 = vmatpush1.xpose.msra.mxu0 0.0
  %3874 = vmatprep.subr.mxu0 0.0
  %3875 = vmatpush1.xpose.msra.mxu0 0.0
  %3876 = vmatprep.subr.mxu0 0.0
  %3877 = vmatpush1.xpose.msra.mxu0 0.0
  %3878 = vmatprep.subr.mxu0 0.0
  %3879 = vmatpush1.xpose.msra.mxu0 0.0
  %3880 = vmatprep.subr.mxu0 0.0
  %3881 = vmatpush1.xpose.msra.mxu0 0.0
  %3882 = vmatprep.subr.mxu0 0.0
  %3883 = vmatpush1.xpose.msra.mxu0 0.0
  %3884 = vmatprep.subr.mxu0 0.0
  %3885 = vmatpush1.xpose.msra.mxu0 0.0
  %3886 = vmatprep.subr.mxu0 0.0
  %3887 = vmatpush1.xpose.msra.mxu0 0.0
  %3888 = vmatprep.subr.mxu0 0.0
  %3889 = vmatpush1.xpose.msra.mxu0 0.0
  %3890 = vmatprep.subr.mxu0 0.0
  %3891 = vmatpush1.xpose.msra.mxu0 0.0
  %3892 = vmatprep.subr.mxu0 0.0
  %3893 = vmatpush1.xpose.msra.mxu0 0.0
  %3894 = vmatprep.subr.mxu0 0.0
  %3895 = vmatpush1.xpose.msra.mxu0 0.0
  %3896 = vmatprep.subr.mxu0 0.0
  %3897 = vmatpush1.xpose.msra.mxu0 0.0
  %3898 = vmatprep.subr.mxu0 0.0
  %3899 = vmatpush1.xpose.msra.mxu0 0.0
  %3900 = vmatprep.subr.mxu0 0.0
  %3901 = vmatpush1.xpose.msra.mxu0 0.0
  %3902 = vmatprep.subr.mxu0 0.0
  %3903 = vmatpush1.xpose.msra.mxu0 0.0
  %3904 = vmatprep.mubr.f32.mxu0 0.0
  %3905 = vmatmul.mubr.f32.gmra.mrb[0].mxu0 %v3808
  %v3906 = vpop.f32.mrb[0].mxu0
  %v3907 = vadd.f32 %v2004, %v3906
  %v3908 = vpop.f32.mrb[0].mxu0
  %3909 = vmatprep.mubr.f32.mxu0 0.0
  %3910 = vmatmul.mubr.f32.gmra.mrb[0].mxu0 %v3810
  %v3911 = vpop.f32.mrb[0].mxu0
  %v3912 = vadd.f32 %v2005, %v3911
  %v3913 = vpop.f32.mrb[0].mxu0
  %3914 = vmatprep.mubr.f32.mxu0 0.0
  %3915 = vmatmul.mubr.f32.gmra.mrb[0].mxu0 %v3812
  %v3916 = vpop.f32.mrb[0].mxu0
  %v3917 = vadd.f32 %v2006, %v3916
  %v3918 = vpop.f32.mrb[0].mxu0
  %3919 = vmatprep.mubr.f32.mxu0 0.0
  %3920 = vmatmul.mubr.f32.gmra.mrb[0].mxu0 %v3814
  %v3921 = vpop.f32.mrb[0].mxu0
  %v3922 = vadd.f32 %v2007, %v3921
  %v3923 = vpop.f32.mrb[0].mxu0
  %3924 = vmatprep.mubr.f32.mxu0 0.0
  %3925 = vmatmul.mubr.f32.gmra.mrb[0].mxu0 %v3816
  %v3926 = vpop.f32.mrb[0].mxu0
  %v3927 = vadd.f32 %v2008, %v3926
  %v3928 = vpop.f32.mrb[0].mxu0
  %3929 = vmatprep.mubr.f32.mxu0 0.0
  %3930 = vmatmul.mubr.f32.gmra.mrb[0].mxu0 %v3818
  %v3931 = vpop.f32.mrb[0].mxu0
  %v3932 = vadd.f32 %v2009, %v3931
  %v3933 = vpop.f32.mrb[0].mxu0
  %3934 = vmatprep.mubr.f32.mxu0 0.0
  %3935 = vmatmul.mubr.f32.gmra.mrb[0].mxu0 %v3820
  %v3936 = vpop.f32.mrb[0].mxu0
  %v3937 = vadd.f32 %v2010, %v3936
  %v3938 = vpop.f32.mrb[0].mxu0
  %3939 = vmatprep.mubr.f32.mxu0 0.0
  %3940 = vmatmul.mubr.f32.gmra.mrb[0].mxu0 %v3822
  %v3941 = vpop.f32.mrb[0].mxu0
  %v3942 = vadd.f32 %v2011, %v3941
  %v3943 = vpop.f32.mrb[0].mxu0
  %3944 = vdwg.mxu0
  %v3945 = vsel %vm433, %v3907, -inf
  %3946 = vmax.xlane.f32.xlu0 %v3945
  %v3947 = vpop.xlane.xlu0 %3946
  %v3948 = vsel %vm433, %v3912, -inf
  %3949 = vmax.xlane.f32.xlu0 %v3948
  %v3950 = vpop.xlane.xlu0 %3949
  %v3951 = vsel %vm433, %v3917, -inf
  %3952 = vmax.xlane.f32.xlu0 %v3951
  %v3953 = vpop.xlane.xlu0 %3952
  %v3954 = vsel %vm433, %v3922, -inf
  %3955 = vmax.xlane.f32.xlu0 %v3954
  %v3956 = vpop.xlane.xlu0 %3955
  %v3957 = vsel %vm433, %v3927, -inf
  %3958 = vmax.xlane.f32.xlu0 %v3957
  %v3959 = vpop.xlane.xlu0 %3958
  %v3960 = vsel %vm433, %v3932, -inf
  %3961 = vmax.xlane.f32.xlu0 %v3960
  %v3962 = vpop.xlane.xlu0 %3961
  %v3963 = vsel %vm433, %v3937, -inf
  %3964 = vmax.xlane.f32.xlu0 %v3963
  %v3965 = vpop.xlane.xlu0 %3964
  %v3966 = vsel %vm433, %v3942, -inf
  %3967 = vmax.xlane.f32.xlu0 %v3966
  %v3968 = vpop.xlane.xlu0 %3967
  %v3969 = vsub.f32 %v3907, %v3947
  %v3970 = vsub.f32 %v3912, %v3950
  %v3971 = vsub.f32 %v3917, %v3953
  %v3972 = vsub.f32 %v3922, %v3956
  %v3973 = vsub.f32 %v3927, %v3959
  %v3974 = vsub.f32 %v3932, %v3962
  %v3975 = vsub.f32 %v3937, %v3965
  %v3976 = vsub.f32 %v3942, %v3968
  %v3977 = vmul.f32 %v3969, 1.442695
  %v3978 = vpow.pop %v3977
  %v3979 = vmul.f32 %v3970, 1.442695
  %v3980 = vpow.pop %v3979
  %v3981 = vmul.f32 %v3971, 1.442695
  %v3982 = vpow.pop %v3981
  %v3983 = vmul.f32 %v3972, 1.442695
  %v3984 = vpow.pop %v3983
  %v3985 = vmul.f32 %v3973, 1.442695
  %v3986 = vpow.pop %v3985
  %v3987 = vmul.f32 %v3974, 1.442695
  %v3988 = vpow.pop %v3987
  %v3989 = vmul.f32 %v3975, 1.442695
  %v3990 = vpow.pop %v3989
  %v3991 = vmul.f32 %v3976, 1.442695
  %v3992 = vpow.pop %v3991
  %v3993 = vsel %vm433, %v3978, 0.0
  %3994 = vadd.xlane.f32.xlu0 %v3993
  %v3995 = vpop.xlane.xlu0 %3994
  %v3996 = vsel %vm433, %v3980, 0.0
  %3997 = vadd.xlane.f32.xlu0 %v3996
  %v3998 = vpop.xlane.xlu0 %3997
  %v3999 = vsel %vm433, %v3982, 0.0
  %4000 = vadd.xlane.f32.xlu0 %v3999
  %v4001 = vpop.xlane.xlu0 %4000
  %v4002 = vsel %vm433, %v3984, 0.0
  %4003 = vadd.xlane.f32.xlu0 %v4002
  %v4004 = vpop.xlane.xlu0 %4003
  %v4005 = vsel %vm433, %v3986, 0.0
  %4006 = vadd.xlane.f32.xlu0 %v4005
  %v4007 = vpop.xlane.xlu0 %4006
  %v4008 = vsel %vm433, %v3988, 0.0
  %4009 = vadd.xlane.f32.xlu0 %v4008
  %v4010 = vpop.xlane.xlu0 %4009
  %v4011 = vsel %vm433, %v3990, 0.0
  %4012 = vadd.xlane.f32.xlu0 %v4011
  %v4013 = vpop.xlane.xlu0 %4012
  %v4014 = vsel %vm433, %v3992, 0.0
  %4015 = vadd.xlane.f32.xlu0 %v4014
  %v4016 = vpop.xlane.xlu0 %4015
  %v4017 = vrcp.pop %v3995
  %v4018 = vrcp.pop %v3998
  %v4019 = vrcp.pop %v4001
  %v4020 = vrcp.pop %v4004
  %v4021 = vrcp.pop %v4007
  %v4022 = vrcp.pop %v4010
  %v4023 = vrcp.pop %v4013
  %v4024 = vrcp.pop %v4016
  %v4025 = vmul.f32 %v3978, %v4017
  %v4026 = vmul.f32 %v3980, %v4018
  %v4027 = vmul.f32 %v3982, %v4019
  %v4028 = vmul.f32 %v3984, %v4020
  %v4029 = vmul.f32 %v3986, %v4021
  %v4030 = vmul.f32 %v3988, %v4022
  %v4031 = vmul.f32 %v3990, %v4023
  %v4032 = vmul.f32 %v3992, %v4024
  %4033 = vrot.lane.b32.xlu0 %v3770, 64
  %v4034 = vpop.permute.xlu0 %4033
  %4035 = vrot.lane.b32.xlu0 %v3775, 64
  %v4036 = vpop.permute.xlu0 %4035
  %4037 = vrot.lane.b32.xlu0 %v3781, 64
  %v4038 = vpop.permute.xlu0 %4037
  %4039 = vrot.lane.b32.xlu0 %v3783, 64
  %v4040 = vpop.permute.xlu0 %4039
  %4041 = vrot.lane.b32.xlu0 %v3785, 64
  %v4042 = vpop.permute.xlu0 %4041
  %4043 = vrot.lane.b32.xlu0 %v3787, 64
  %v4044 = vpop.permute.xlu0 %4043
  %4045 = vrot.lane.b32.xlu0 %v3789, 64
  %v4046 = vpop.permute.xlu0 %4045
  %4047 = vrot.lane.b32.xlu0 %v3791, 64
  %v4048 = vpop.permute.xlu0 %4047
  %v4058 = vsel %vm433, %v4025, 0
  %v4061 = vsel %vm433, %v4026, 0
  %v4064 = vsel %vm433, %v4027, 0
  %v4067 = vsel %vm433, %v4028, 0
  %v4070 = vsel %vm433, %v4029, 0
  %v4073 = vsel %vm433, %v4030, 0
  %v4076 = vsel %vm433, %v4031, 0
  %v4079 = vsel %vm433, %v4032, 0
  %4081 = vmatprep.subr.mxu0 0.0
  %4082 = vmatpush1.msra.mxu0 %v4034
  %4083 = vmatprep.subr.mxu0 0.0
  %4084 = vmatpush1.msra.mxu0 %v4036
  %4085 = vmatprep.subr.mxu0 0.0
  %4086 = vmatpush1.msra.mxu0 %v4038
  %4087 = vmatprep.subr.mxu0 0.0
  %4088 = vmatpush1.msra.mxu0 %v4040
  %4089 = vmatprep.subr.mxu0 0.0
  %4090 = vmatpush1.msra.mxu0 %v4042
  %4091 = vmatprep.subr.mxu0 0.0
  %4092 = vmatpush1.msra.mxu0 %v4044
  %4093 = vmatprep.subr.mxu0 0.0
  %4094 = vmatpush1.msra.mxu0 %v4046
  %4095 = vmatprep.subr.mxu0 0.0
  %4096 = vmatpush1.msra.mxu0 %v4048
  %4097 = vmatprep.subr.mxu0 0.0
  %4098 = vmatpush1.msra.mxu0 0.0
  %4099 = vmatprep.subr.mxu0 0.0
  %4100 = vmatpush1.msra.mxu0 0.0
  %4101 = vmatprep.subr.mxu0 0.0
  %4102 = vmatpush1.msra.mxu0 0.0
  %4103 = vmatprep.subr.mxu0 0.0
  %4104 = vmatpush1.msra.mxu0 0.0
  %4105 = vmatprep.subr.mxu0 0.0
  %4106 = vmatpush1.msra.mxu0 0.0
  %4107 = vmatprep.subr.mxu0 0.0
  %4108 = vmatpush1.msra.mxu0 0.0
  %4109 = vmatprep.subr.mxu0 0.0
  %4110 = vmatpush1.msra.mxu0 0.0
  %4111 = vmatprep.subr.mxu0 0.0
  %4112 = vmatpush1.msra.mxu0 0.0
  %4113 = vmatprep.subr.mxu0 0.0
  %4114 = vmatpush1.msra.mxu0 0.0
  %4115 = vmatprep.subr.mxu0 0.0
  %4116 = vmatpush1.msra.mxu0 0.0
  %4117 = vmatprep.subr.mxu0 0.0
  %4118 = vmatpush1.msra.mxu0 0.0
  %4119 = vmatprep.subr.mxu0 0.0
  %4120 = vmatpush1.msra.mxu0 0.0
  %4121 = vmatprep.subr.mxu0 0.0
  %4122 = vmatpush1.msra.mxu0 0.0
  %4123 = vmatprep.subr.mxu0 0.0
  %4124 = vmatpush1.msra.mxu0 0.0
  %4125 = vmatprep.subr.mxu0 0.0
  %4126 = vmatpush1.msra.mxu0 0.0
  %4127 = vmatprep.subr.mxu0 0.0
  %4128 = vmatpush1.msra.mxu0 0.0
  %4129 = vmatprep.subr.mxu0 0.0
  %4130 = vmatpush1.msra.mxu0 0.0
  %4131 = vmatprep.subr.mxu0 0.0
  %4132 = vmatpush1.msra.mxu0 0.0
  %4133 = vmatprep.subr.mxu0 0.0
  %4134 = vmatpush1.msra.mxu0 0.0
  %4135 = vmatprep.subr.mxu0 0.0
  %4136 = vmatpush1.msra.mxu0 0.0
  %4137 = vmatprep.subr.mxu0 0.0
  %4138 = vmatpush1.msra.mxu0 0.0
  %4139 = vmatprep.subr.mxu0 0.0
  %4140 = vmatpush1.msra.mxu0 0.0
  %4141 = vmatprep.subr.mxu0 0.0
  %4142 = vmatpush1.msra.mxu0 0.0
  %4143 = vmatprep.subr.mxu0 0.0
  %4144 = vmatpush1.msra.mxu0 0.0
  %4145 = vmatprep.mubr.f32.mxu0 0.0
  %4146 = vmatmul.mubr.f32.gmra.mrb[0].mxu0 %v4058
  %v4147 = vpop.f32.mrb[0].mxu0
  %v4148 = vadd.f32 0.0, %v4147
  %v4149 = vpop.f32.mrb[0].mxu0
  %4150 = vmatprep.mubr.f32.mxu0 0.0
  %4151 = vmatmul.mubr.f32.gmra.mrb[0].mxu0 %v4061
  %v4152 = vpop.f32.mrb[0].mxu0
  %v4153 = vadd.f32 0.0, %v4152
  %v4154 = vpop.f32.mrb[0].mxu0
  %4155 = vmatprep.mubr.f32.mxu0 0.0
  %4156 = vmatmul.mubr.f32.gmra.mrb[0].mxu0 %v4064
  %v4157 = vpop.f32.mrb[0].mxu0
  %v4158 = vadd.f32 0.0, %v4157
  %v4159 = vpop.f32.mrb[0].mxu0
  %4160 = vmatprep.mubr.f32.mxu0 0.0
  %4161 = vmatmul.mubr.f32.gmra.mrb[0].mxu0 %v4067
  %v4162 = vpop.f32.mrb[0].mxu0
  %v4163 = vadd.f32 0.0, %v4162
  %v4164 = vpop.f32.mrb[0].mxu0
  %4165 = vmatprep.mubr.f32.mxu0 0.0
  %4166 = vmatmul.mubr.f32.gmra.mrb[0].mxu0 %v4070
  %v4167 = vpop.f32.mrb[0].mxu0
  %v4168 = vadd.f32 0.0, %v4167
  %v4169 = vpop.f32.mrb[0].mxu0
  %4170 = vmatprep.mubr.f32.mxu0 0.0
  %4171 = vmatmul.mubr.f32.gmra.mrb[0].mxu0 %v4073
  %v4172 = vpop.f32.mrb[0].mxu0
  %v4173 = vadd.f32 0.0, %v4172
  %v4174 = vpop.f32.mrb[0].mxu0
  %4175 = vmatprep.mubr.f32.mxu0 0.0
  %4176 = vmatmul.mubr.f32.gmra.mrb[0].mxu0 %v4076
  %v4177 = vpop.f32.mrb[0].mxu0
  %v4178 = vadd.f32 0.0, %v4177
  %v4179 = vpop.f32.mrb[0].mxu0
  %4180 = vmatprep.mubr.f32.mxu0 0.0
  %4181 = vmatmul.mubr.f32.gmra.mrb[0].mxu0 %v4079
  %v4182 = vpop.f32.mrb[0].mxu0
  %v4183 = vadd.f32 0.0, %v4182
  %v4184 = vpop.f32.mrb[0].mxu0
  %4185 = vdwg.mxu0
  %4188 = vrot.lane.b32.xlu0 %v4158, 8
  %v4189 = vpop.permute.xlu0 %4188
  %4190 = vrot.lane.b32.xlu0 %v4163, 8
  %v4191 = vpop.permute.xlu0 %4190
  %4196 = vrot.lane.b32.xlu0 %v4168, 16
  %v4197 = vpop.permute.xlu0 %4196
  %4198 = vrot.lane.b32.xlu0 %v4173, 16
  %v4199 = vpop.permute.xlu0 %4198
  %4204 = vrot.lane.b32.xlu0 %v4178, 24
  %v4205 = vpop.permute.xlu0 %4204
  %4206 = vrot.lane.b32.xlu0 %v4183, 24
  %v4207 = vpop.permute.xlu0 %4206
  %v4210 = vsel %vm295, %v4148, %v4189
  %v4211 = vsel %vm295, %v4153, %v4191
  %v4212 = vsel %vm701, %v4210, %v4197
  %v4213 = vsel %vm701, %v4211, %v4199
  %v4214 = vsel %vm704, %v4212, %v4205
  %v4215 = vsel %vm704, %v4213, %v4207
  %s4216 = scalar_lea.vmem %s39, 32
  %v4217 = vld [vmem:[%s4216] sm:$0xff]
  %v4218 = vld [vmem:[%s4216 + $0x8] sm:$0xff]
  %v4219 = vld [vmem:[%s4216 + $0x10] sm:$0xff]
  %v4220 = vld [vmem:[%s4216 + $0x18] sm:$0xff]
  %s4221 = scalar_lea.vmem %s41, 1
  %v4222 = vld [vmem:[%s4221] sm:$0x1]
  %v4224 = vlaneseq
  %v4225 = vshrl.u32 %v4224, 7
  %v4226 = vsub.s32 0, %v4225
  %v4227 = vrot.slane %v4222, %v4226
  %v4230 = vsel %vm183, %v4214, 0
  %v4233 = vsel %vm183, %v4215, 0
  %4235 = vmatprep.subr.mxu0 0.0
  %4236 = vmatpush1.msra.mxu0 %v4217
  %4237 = vmatprep.subr.mxu0 0.0
  %4238 = vmatpush1.msra.mxu0 %v4218
  %4239 = vmatprep.subr.mxu0 0.0
  %4240 = vmatpush1.msra.mxu0 %v4219
  %4241 = vmatprep.subr.mxu0 0.0
  %4242 = vmatpush1.msra.mxu0 %v4220
  %4243 = vmatprep.subr.mxu0 0.0
  %4244 = vmatpush1.msra.mxu0 0.0
  %4245 = vmatprep.subr.mxu0 0.0
  %4246 = vmatpush1.msra.mxu0 0.0
  %4247 = vmatprep.subr.mxu0 0.0
  %4248 = vmatpush1.msra.mxu0 0.0
  %4249 = vmatprep.subr.mxu0 0.0
  %4250 = vmatpush1.msra.mxu0 0.0
  %4251 = vmatprep.subr.mxu0 0.0
  %4252 = vmatpush1.msra.mxu0 0.0
  %4253 = vmatprep.subr.mxu0 0.0
  %4254 = vmatpush1.msra.mxu0 0.0
  %4255 = vmatprep.subr.mxu0 0.0
  %4256 = vmatpush1.msra.mxu0 0.0
  %4257 = vmatprep.subr.mxu0 0.0
  %4258 = vmatpush1.msra.mxu0 0.0
  %4259 = vmatprep.subr.mxu0 0.0
  %4260 = vmatpush1.msra.mxu0 0.0
  %4261 = vmatprep.subr.mxu0 0.0
  %4262 = vmatpush1.msra.mxu0 0.0
  %4263 = vmatprep.subr.mxu0 0.0
  %4264 = vmatpush1.msra.mxu0 0.0
  %4265 = vmatprep.subr.mxu0 0.0
  %4266 = vmatpush1.msra.mxu0 0.0
  %4267 = vmatprep.subr.mxu0 0.0
  %4268 = vmatpush1.msra.mxu0 0.0
  %4269 = vmatprep.subr.mxu0 0.0
  %4270 = vmatpush1.msra.mxu0 0.0
  %4271 = vmatprep.subr.mxu0 0.0
  %4272 = vmatpush1.msra.mxu0 0.0
  %4273 = vmatprep.subr.mxu0 0.0
  %4274 = vmatpush1.msra.mxu0 0.0
  %4275 = vmatprep.subr.mxu0 0.0
  %4276 = vmatpush1.msra.mxu0 0.0
  %4277 = vmatprep.subr.mxu0 0.0
  %4278 = vmatpush1.msra.mxu0 0.0
  %4279 = vmatprep.subr.mxu0 0.0
  %4280 = vmatpush1.msra.mxu0 0.0
  %4281 = vmatprep.subr.mxu0 0.0
  %4282 = vmatpush1.msra.mxu0 0.0
  %4283 = vmatprep.subr.mxu0 0.0
  %4284 = vmatpush1.msra.mxu0 0.0
  %4285 = vmatprep.subr.mxu0 0.0
  %4286 = vmatpush1.msra.mxu0 0.0
  %4287 = vmatprep.subr.mxu0 0.0
  %4288 = vmatpush1.msra.mxu0 0.0
  %4289 = vmatprep.subr.mxu0 0.0
  %4290 = vmatpush1.msra.mxu0 0.0
  %4291 = vmatprep.subr.mxu0 0.0
  %4292 = vmatpush1.msra.mxu0 0.0
  %4293 = vmatprep.subr.mxu0 0.0
  %4294 = vmatpush1.msra.mxu0 0.0
  %4295 = vmatprep.subr.mxu0 0.0
  %4296 = vmatpush1.msra.mxu0 0.0
  %4297 = vmatprep.subr.mxu0 0.0
  %4298 = vmatpush1.msra.mxu0 0.0
  %4299 = vmatprep.mubr.f32.mxu0 0.0
  %4300 = vmatmul.mubr.f32.gmra.mrb[0].mxu0 %v4230
  %v4301 = vpop.f32.mrb[0].mxu0
  %v4302 = vadd.f32 %v4227, %v4301
  %v4303 = vpop.f32.mrb[0].mxu0
  %4304 = vmatprep.mubr.f32.mxu0 0.0
  %4305 = vmatmul.mubr.f32.gmra.mrb[0].mxu0 %v4233
  %v4306 = vpop.f32.mrb[0].mxu0
  %v4307 = vadd.f32 %v4227, %v4306
  %v4308 = vpop.f32.mrb[0].mxu0
  %4309 = vdwg.mxu0
  %v4310 = vadd.f32 %v3682, %v4302
  %v4311 = vadd.f32 %v3683, %v4307
  %s4312 = scalar_lea.vmem %s43, 1
  %v4313 = vld [vmem:[%s4312] sm:$0x1]
  %s4314 = scalar_lea.vmem %s45, 1
  %v4315 = vld [vmem:[%s4314] sm:$0x1]
  %v4316 = vsel %vm183, %v4310, 0.0
  %4317 = vadd.xlane.f32.xlu0 %v4316
  %v4318 = vpop.xlane.xlu0 %4317
  %v4319 = vsel %vm183, %v4311, 0.0
  %4320 = vadd.xlane.f32.xlu0 %v4319
  %v4321 = vpop.xlane.xlu0 %4320
  %v4322 = vmul.f32 %v4318, %v809
  %v4323 = vmul.f32 %v4321, %v809
  %v4324 = vsub.f32 %v4310, %v4322
  %v4325 = vsub.f32 %v4311, %v4323
  %v4326 = vmul.f32 %v4324, %v4324
  %v4327 = vmul.f32 %v4325, %v4325
  %v4328 = vsel %vm183, %v4326, 0.0
  %4329 = vadd.xlane.f32.xlu0 %v4328
  %v4330 = vpop.xlane.xlu0 %4329
  %v4331 = vsel %vm183, %v4327, 0.0
  %4332 = vadd.xlane.f32.xlu0 %v4331
  %v4333 = vpop.xlane.xlu0 %4332
  %v4334 = vmul.f32 %v4330, %v809
  %v4335 = vmul.f32 %v4333, %v809
  %v4336 = vadd.f32 %v4334, 1e-05
  %v4337 = vadd.f32 %v4335, 1e-05
  %v4338 = vrsqrt.pop %v4336
  %v4339 = vrsqrt.pop %v4337
  %v4340 = vmul.f32 %v4324, %v4338
  %v4341 = vmul.f32 %v4325, %v4339
  %v4343 = vlaneseq
  %v4344 = vshrl.u32 %v4343, 7
  %v4345 = vsub.s32 0, %v4344
  %v4346 = vrot.slane %v4313, %v4345
  %v4348 = vmul.f32 %v4340, %v4346
  %v4349 = vmul.f32 %v4341, %v4346
  %v4351 = vlaneseq
  %v4352 = vshrl.u32 %v4351, 7
  %v4353 = vsub.s32 0, %v4352
  %v4354 = vrot.slane %v4315, %v4353
  %v4356 = vadd.f32 %v4348, %v4354
  %v4357 = vadd.f32 %v4349, %v4354
  %s4358 = scalar_lea.vmem %s47, 32
  %v4359 = vld [vmem:[%s4358] sm:$0xff]
  %v4360 = vld [vmem:[%s4358 + $0x8] sm:$0xff]
  %v4361 = vld [vmem:[%s4358 + $0x10] sm:$0xff]
  %v4362 = vld [vmem:[%s4358 + $0x18] sm:$0xff]
  %s4363 = scalar_lea.vmem %s49, 1
  %v4364 = vld [vmem:[%s4363] sm:$0x1]
  %v4366 = vlaneseq
  %v4367 = vshrl.u32 %v4366, 7
  %v4368 = vsub.s32 0, %v4367
  %v4369 = vrot.slane %v4364, %v4368
  %v4372 = vsel %vm183, %v4356, 0
  %v4375 = vsel %vm183, %v4357, 0
  %4377 = vmatprep.subr.mxu0 0.0
  %4378 = vmatpush1.msra.mxu0 %v4359
  %4379 = vmatprep.subr.mxu0 0.0
  %4380 = vmatpush1.msra.mxu0 %v4360
  %4381 = vmatprep.subr.mxu0 0.0
  %4382 = vmatpush1.msra.mxu0 %v4361
  %4383 = vmatprep.subr.mxu0 0.0
  %4384 = vmatpush1.msra.mxu0 %v4362
  %4385 = vmatprep.subr.mxu0 0.0
  %4386 = vmatpush1.msra.mxu0 0.0
  %4387 = vmatprep.subr.mxu0 0.0
  %4388 = vmatpush1.msra.mxu0 0.0
  %4389 = vmatprep.subr.mxu0 0.0
  %4390 = vmatpush1.msra.mxu0 0.0
  %4391 = vmatprep.subr.mxu0 0.0
  %4392 = vmatpush1.msra.mxu0 0.0
  %4393 = vmatprep.subr.mxu0 0.0
  %4394 = vmatpush1.msra.mxu0 0.0
  %4395 = vmatprep.subr.mxu0 0.0
  %4396 = vmatpush1.msra.mxu0 0.0
  %4397 = vmatprep.subr.mxu0 0.0
  %4398 = vmatpush1.msra.mxu0 0.0
  %4399 = vmatprep.subr.mxu0 0.0
  %4400 = vmatpush1.msra.mxu0 0.0
  %4401 = vmatprep.subr.mxu0 0.0
  %4402 = vmatpush1.msra.mxu0 0.0
  %4403 = vmatprep.subr.mxu0 0.0
  %4404 = vmatpush1.msra.mxu0 0.0
  %4405 = vmatprep.subr.mxu0 0.0
  %4406 = vmatpush1.msra.mxu0 0.0
  %4407 = vmatprep.subr.mxu0 0.0
  %4408 = vmatpush1.msra.mxu0 0.0
  %4409 = vmatprep.subr.mxu0 0.0
  %4410 = vmatpush1.msra.mxu0 0.0
  %4411 = vmatprep.subr.mxu0 0.0
  %4412 = vmatpush1.msra.mxu0 0.0
  %4413 = vmatprep.subr.mxu0 0.0
  %4414 = vmatpush1.msra.mxu0 0.0
  %4415 = vmatprep.subr.mxu0 0.0
  %4416 = vmatpush1.msra.mxu0 0.0
  %4417 = vmatprep.subr.mxu0 0.0
  %4418 = vmatpush1.msra.mxu0 0.0
  %4419 = vmatprep.subr.mxu0 0.0
  %4420 = vmatpush1.msra.mxu0 0.0
  %4421 = vmatprep.subr.mxu0 0.0
  %4422 = vmatpush1.msra.mxu0 0.0
  %4423 = vmatprep.subr.mxu0 0.0
  %4424 = vmatpush1.msra.mxu0 0.0
  %4425 = vmatprep.subr.mxu0 0.0
  %4426 = vmatpush1.msra.mxu0 0.0
  %4427 = vmatprep.subr.mxu0 0.0
  %4428 = vmatpush1.msra.mxu0 0.0
  %4429 = vmatprep.subr.mxu0 0.0
  %4430 = vmatpush1.msra.mxu0 0.0
  %4431 = vmatprep.subr.mxu0 0.0
  %4432 = vmatpush1.msra.mxu0 0.0
  %4433 = vmatprep.subr.mxu0 0.0
  %4434 = vmatpush1.msra.mxu0 0.0
  %4435 = vmatprep.subr.mxu0 0.0
  %4436 = vmatpush1.msra.mxu0 0.0
  %4437 = vmatprep.subr.mxu0 0.0
  %4438 = vmatpush1.msra.mxu0 0.0
  %4439 = vmatprep.subr.mxu0 0.0
  %4440 = vmatpush1.msra.mxu0 0.0
  %4441 = vmatprep.mubr.f32.mxu0 0.0
  %4442 = vmatmul.mubr.f32.gmra.mrb[0].mxu0 %v4372
  %v4443 = vpop.f32.mrb[0].mxu0
  %v4444 = vadd.f32 %v4369, %v4443
  %v4445 = vpop.f32.mrb[0].mxu0
  %4446 = vmatprep.mubr.f32.mxu0 0.0
  %4447 = vmatmul.mubr.f32.gmra.mrb[0].mxu0 %v4375
  %v4448 = vpop.f32.mrb[0].mxu0
  %v4449 = vadd.f32 %v4369, %v4448
  %v4450 = vpop.f32.mrb[0].mxu0
  %4451 = vdwg.mxu0
  %s4452 = scalar_lea.vmem %s51, 32
  %v4453 = vld [vmem:[%s4452] sm:$0xff]
  %v4454 = vld [vmem:[%s4452 + $0x8] sm:$0xff]
  %v4455 = vld [vmem:[%s4452 + $0x10] sm:$0xff]
  %v4456 = vld [vmem:[%s4452 + $0x18] sm:$0xff]
  %s4457 = scalar_lea.vmem %s53, 1
  %v4458 = vld [vmem:[%s4457] sm:$0x1]
  %v4460 = vlaneseq
  %v4461 = vshrl.u32 %v4460, 7
  %v4462 = vsub.s32 0, %v4461
  %v4463 = vrot.slane %v4458, %v4462
  %4465 = vmatprep.subr.mxu0 0.0
  %4466 = vmatpush1.msra.mxu0 %v4453
  %4467 = vmatprep.subr.mxu0 0.0
  %4468 = vmatpush1.msra.mxu0 %v4454
  %4469 = vmatprep.subr.mxu0 0.0
  %4470 = vmatpush1.msra.mxu0 %v4455
  %4471 = vmatprep.subr.mxu0 0.0
  %4472 = vmatpush1.msra.mxu0 %v4456
  %4473 = vmatprep.subr.mxu0 0.0
  %4474 = vmatpush1.msra.mxu0 0.0
  %4475 = vmatprep.subr.mxu0 0.0
  %4476 = vmatpush1.msra.mxu0 0.0
  %4477 = vmatprep.subr.mxu0 0.0
  %4478 = vmatpush1.msra.mxu0 0.0
  %4479 = vmatprep.subr.mxu0 0.0
  %4480 = vmatpush1.msra.mxu0 0.0
  %4481 = vmatprep.subr.mxu0 0.0
  %4482 = vmatpush1.msra.mxu0 0.0
  %4483 = vmatprep.subr.mxu0 0.0
  %4484 = vmatpush1.msra.mxu0 0.0
  %4485 = vmatprep.subr.mxu0 0.0
  %4486 = vmatpush1.msra.mxu0 0.0
  %4487 = vmatprep.subr.mxu0 0.0
  %4488 = vmatpush1.msra.mxu0 0.0
  %4489 = vmatprep.subr.mxu0 0.0
  %4490 = vmatpush1.msra.mxu0 0.0
  %4491 = vmatprep.subr.mxu0 0.0
  %4492 = vmatpush1.msra.mxu0 0.0
  %4493 = vmatprep.subr.mxu0 0.0
  %4494 = vmatpush1.msra.mxu0 0.0
  %4495 = vmatprep.subr.mxu0 0.0
  %4496 = vmatpush1.msra.mxu0 0.0
  %4497 = vmatprep.subr.mxu0 0.0
  %4498 = vmatpush1.msra.mxu0 0.0
  %4499 = vmatprep.subr.mxu0 0.0
  %4500 = vmatpush1.msra.mxu0 0.0
  %4501 = vmatprep.subr.mxu0 0.0
  %4502 = vmatpush1.msra.mxu0 0.0
  %4503 = vmatprep.subr.mxu0 0.0
  %4504 = vmatpush1.msra.mxu0 0.0
  %4505 = vmatprep.subr.mxu0 0.0
  %4506 = vmatpush1.msra.mxu0 0.0
  %4507 = vmatprep.subr.mxu0 0.0
  %4508 = vmatpush1.msra.mxu0 0.0
  %4509 = vmatprep.subr.mxu0 0.0
  %4510 = vmatpush1.msra.mxu0 0.0
  %4511 = vmatprep.subr.mxu0 0.0
  %4512 = vmatpush1.msra.mxu0 0.0
  %4513 = vmatprep.subr.mxu0 0.0
  %4514 = vmatpush1.msra.mxu0 0.0
  %4515 = vmatprep.subr.mxu0 0.0
  %4516 = vmatpush1.msra.mxu0 0.0
  %4517 = vmatprep.subr.mxu0 0.0
  %4518 = vmatpush1.msra.mxu0 0.0
  %4519 = vmatprep.subr.mxu0 0.0
  %4520 = vmatpush1.msra.mxu0 0.0
  %4521 = vmatprep.subr.mxu0 0.0
  %4522 = vmatpush1.msra.mxu0 0.0
  %4523 = vmatprep.subr.mxu0 0.0
  %4524 = vmatpush1.msra.mxu0 0.0
  %4525 = vmatprep.subr.mxu0 0.0
  %4526 = vmatpush1.msra.mxu0 0.0
  %4527 = vmatprep.subr.mxu0 0.0
  %4528 = vmatpush1.msra.mxu0 0.0
  %4529 = vmatprep.mubr.f32.mxu0 0.0
  %4530 = vmatmul.mubr.f32.gmra.mrb[0].mxu0 %v2792
  %v4531 = vpop.f32.mrb[0].mxu0
  %v4532 = vadd.f32 %v4463, %v4531
  %v4533 = vpop.f32.mrb[0].mxu0
  %4534 = vmatprep.mubr.f32.mxu0 0.0
  %4535 = vmatmul.mubr.f32.gmra.mrb[0].mxu0 %v2795
  %v4536 = vpop.f32.mrb[0].mxu0
  %v4537 = vadd.f32 %v4463, %v4536
  %v4538 = vpop.f32.mrb[0].mxu0
  %4539 = vdwg.mxu0
  %4542 = vrot.lane.b32.xlu0 %v4444, 120
  %v4543 = vpop.permute.xlu0 %4542
  %4544 = vrot.lane.b32.xlu0 %v4449, 120
  %v4545 = vpop.permute.xlu0 %4544
  %4546 = vrot.lane.b32.xlu0 %v4444, 112
  %v4547 = vpop.permute.xlu0 %4546
  %4548 = vrot.lane.b32.xlu0 %v4449, 112
  %v4549 = vpop.permute.xlu0 %4548
  %4550 = vrot.lane.b32.xlu0 %v4444, 104
  %v4551 = vpop.permute.xlu0 %4550
  %4552 = vrot.lane.b32.xlu0 %v4449, 104
  %v4553 = vpop.permute.xlu0 %4552
  %4556 = vrot.lane.b32.xlu0 %v4532, 120
  %v4557 = vpop.permute.xlu0 %4556
  %4558 = vrot.lane.b32.xlu0 %v4537, 120
  %v4559 = vpop.permute.xlu0 %4558
  %4560 = vrot.lane.b32.xlu0 %v4532, 112
  %v4561 = vpop.permute.xlu0 %4560
  %4562 = vrot.lane.b32.xlu0 %v4537, 112
  %v4563 = vpop.permute.xlu0 %4562
  %4564 = vrot.lane.b32.xlu0 %v4532, 104
  %v4565 = vpop.permute.xlu0 %4564
  %4566 = vrot.lane.b32.xlu0 %v4537, 104
  %v4567 = vpop.permute.xlu0 %4566
  %v4568 = vsel %vm295, %v4444, 0
  %v4570 = vsel %vm295, %v4449, 0
  %v4572 = vsel %vm295, %v4543, 0
  %v4574 = vsel %vm295, %v4545, 0
  %v4576 = vsel %vm295, %v4547, 0
  %v4578 = vsel %vm295, %v4549, 0
  %v4580 = vsel %vm295, %v4551, 0
  %v4582 = vsel %vm295, %v4553, 0
  %v4584 = vsel %vm295, %v4532, 0
  %v4586 = vsel %vm295, %v4537, 0
  %v4588 = vsel %vm295, %v4557, 0
  %v4590 = vsel %vm295, %v4559, 0
  %v4592 = vsel %vm295, %v4561, 0
  %v4594 = vsel %vm295, %v4563, 0
  %v4596 = vsel %vm295, %v4565, 0
  %v4598 = vsel %vm295, %v4567, 0
  %4600 = vmatprep.subr.mxu0 0.0
  %4601 = vmatpush1.xpose.msra.mxu0 %v4584
  %4602 = vmatprep.subr.mxu0 0.0
  %4603 = vmatpush1.xpose.msra.mxu0 %v4586
  %4604 = vmatprep.subr.mxu0 0.0
  %4605 = vmatpush1.xpose.msra.mxu0 %v4588
  %4606 = vmatprep.subr.mxu0 0.0
  %4607 = vmatpush1.xpose.msra.mxu0 %v4590
  %4608 = vmatprep.subr.mxu0 0.0
  %4609 = vmatpush1.xpose.msra.mxu0 %v4592
  %4610 = vmatprep.subr.mxu0 0.0
  %4611 = vmatpush1.xpose.msra.mxu0 %v4594
  %4612 = vmatprep.subr.mxu0 0.0
  %4613 = vmatpush1.xpose.msra.mxu0 %v4596
  %4614 = vmatprep.subr.mxu0 0.0
  %4615 = vmatpush1.xpose.msra.mxu0 %v4598
  %4616 = vmatprep.subr.mxu0 0.0
  %4617 = vmatpush1.xpose.msra.mxu0 0.0
  %4618 = vmatprep.subr.mxu0 0.0
  %4619 = vmatpush1.xpose.msra.mxu0 0.0
  %4620 = vmatprep.subr.mxu0 0.0
  %4621 = vmatpush1.xpose.msra.mxu0 0.0
  %4622 = vmatprep.subr.mxu0 0.0
  %4623 = vmatpush1.xpose.msra.mxu0 0.0
  %4624 = vmatprep.subr.mxu0 0.0
  %4625 = vmatpush1.xpose.msra.mxu0 0.0
  %4626 = vmatprep.subr.mxu0 0.0
  %4627 = vmatpush1.xpose.msra.mxu0 0.0
  %4628 = vmatprep.subr.mxu0 0.0
  %4629 = vmatpush1.xpose.msra.mxu0 0.0
  %4630 = vmatprep.subr.mxu0 0.0
  %4631 = vmatpush1.xpose.msra.mxu0 0.0
  %4632 = vmatprep.subr.mxu0 0.0
  %4633 = vmatpush1.xpose.msra.mxu0 0.0
  %4634 = vmatprep.subr.mxu0 0.0
  %4635 = vmatpush1.xpose.msra.mxu0 0.0
  %4636 = vmatprep.subr.mxu0 0.0
  %4637 = vmatpush1.xpose.msra.mxu0 0.0
  %4638 = vmatprep.subr.mxu0 0.0
  %4639 = vmatpush1.xpose.msra.mxu0 0.0
  %4640 = vmatprep.subr.mxu0 0.0
  %4641 = vmatpush1.xpose.msra.mxu0 0.0
  %4642 = vmatprep.subr.mxu0 0.0
  %4643 = vmatpush1.xpose.msra.mxu0 0.0
  %4644 = vmatprep.subr.mxu0 0.0
  %4645 = vmatpush1.xpose.msra.mxu0 0.0
  %4646 = vmatprep.subr.mxu0 0.0
  %4647 = vmatpush1.xpose.msra.mxu0 0.0
  %4648 = vmatprep.subr.mxu0 0.0
  %4649 = vmatpush1.xpose.msra.mxu0 0.0
  %4650 = vmatprep.subr.mxu0 0.0
  %4651 = vmatpush1.xpose.msra.mxu0 0.0
  %4652 = vmatprep.subr.mxu0 0.0
  %4653 = vmatpush1.xpose.msra.mxu0 0.0
  %4654 = vmatprep.subr.mxu0 0.0
  %4655 = vmatpush1.xpose.msra.mxu0 0.0
  %4656 = vmatprep.subr.mxu0 0.0
  %4657 = vmatpush1.xpose.msra.mxu0 0.0
  %4658 = vmatprep.subr.mxu0 0.0
  %4659 = vmatpush1.xpose.msra.mxu0 0.0
  %4660 = vmatprep.subr.mxu0 0.0
  %4661 = vmatpush1.xpose.msra.mxu0 0.0
  %4662 = vmatprep.subr.mxu0 0.0
  %4663 = vmatpush1.xpose.msra.mxu0 0.0
  %4664 = vmatprep.mubr.f32.mxu0 0.0
  %4665 = vmatmul.mubr.f32.gmra.mrb[0].mxu0 %v4568
  %v4666 = vpop.f32.mrb[0].mxu0
  %v4667 = vadd.f32 %v2012, %v4666
  %v4668 = vpop.f32.mrb[0].mxu0
  %4669 = vmatprep.mubr.f32.mxu0 0.0
  %4670 = vmatmul.mubr.f32.gmra.mrb[0].mxu0 %v4570
  %v4671 = vpop.f32.mrb[0].mxu0
  %v4672 = vadd.f32 %v2013, %v4671
  %v4673 = vpop.f32.mrb[0].mxu0
  %4674 = vmatprep.mubr.f32.mxu0 0.0
  %4675 = vmatmul.mubr.f32.gmra.mrb[0].mxu0 %v4572
  %v4676 = vpop.f32.mrb[0].mxu0
  %v4677 = vadd.f32 %v2014, %v4676
  %v4678 = vpop.f32.mrb[0].mxu0
  %4679 = vmatprep.mubr.f32.mxu0 0.0
  %4680 = vmatmul.mubr.f32.gmra.mrb[0].mxu0 %v4574
  %v4681 = vpop.f32.mrb[0].mxu0
  %v4682 = vadd.f32 %v2015, %v4681
  %v4683 = vpop.f32.mrb[0].mxu0
  %4684 = vmatprep.mubr.f32.mxu0 0.0
  %4685 = vmatmul.mubr.f32.gmra.mrb[0].mxu0 %v4576
  %v4686 = vpop.f32.mrb[0].mxu0
  %v4687 = vadd.f32 %v2016, %v4686
  %v4688 = vpop.f32.mrb[0].mxu0
  %4689 = vmatprep.mubr.f32.mxu0 0.0
  %4690 = vmatmul.mubr.f32.gmra.mrb[0].mxu0 %v4578
  %v4691 = vpop.f32.mrb[0].mxu0
  %v4692 = vadd.f32 %v2017, %v4691
  %v4693 = vpop.f32.mrb[0].mxu0
  %4694 = vmatprep.mubr.f32.mxu0 0.0
  %4695 = vmatmul.mubr.f32.gmra.mrb[0].mxu0 %v4580
  %v4696 = vpop.f32.mrb[0].mxu0
  %v4697 = vadd.f32 %v2018, %v4696
  %v4698 = vpop.f32.mrb[0].mxu0
  %4699 = vmatprep.mubr.f32.mxu0 0.0
  %4700 = vmatmul.mubr.f32.gmra.mrb[0].mxu0 %v4582
  %v4701 = vpop.f32.mrb[0].mxu0
  %v4702 = vadd.f32 %v2019, %v4701
  %v4703 = vpop.f32.mrb[0].mxu0
  %4704 = vdwg.mxu0
  %v4705 = vsel %vm433, %v4667, -inf
  %4706 = vmax.xlane.f32.xlu0 %v4705
  %v4707 = vpop.xlane.xlu0 %4706
  %v4708 = vsel %vm433, %v4672, -inf
  %4709 = vmax.xlane.f32.xlu0 %v4708
  %v4710 = vpop.xlane.xlu0 %4709
  %v4711 = vsel %vm433, %v4677, -inf
  %4712 = vmax.xlane.f32.xlu0 %v4711
  %v4713 = vpop.xlane.xlu0 %4712
  %v4714 = vsel %vm433, %v4682, -inf
  %4715 = vmax.xlane.f32.xlu0 %v4714
  %v4716 = vpop.xlane.xlu0 %4715
  %v4717 = vsel %vm433, %v4687, -inf
  %4718 = vmax.xlane.f32.xlu0 %v4717
  %v4719 = vpop.xlane.xlu0 %4718
  %v4720 = vsel %vm433, %v4692, -inf
  %4721 = vmax.xlane.f32.xlu0 %v4720
  %v4722 = vpop.xlane.xlu0 %4721
  %v4723 = vsel %vm433, %v4697, -inf
  %4724 = vmax.xlane.f32.xlu0 %v4723
  %v4725 = vpop.xlane.xlu0 %4724
  %v4726 = vsel %vm433, %v4702, -inf
  %4727 = vmax.xlane.f32.xlu0 %v4726
  %v4728 = vpop.xlane.xlu0 %4727
  %v4729 = vsub.f32 %v4667, %v4707
  %v4730 = vsub.f32 %v4672, %v4710
  %v4731 = vsub.f32 %v4677, %v4713
  %v4732 = vsub.f32 %v4682, %v4716
  %v4733 = vsub.f32 %v4687, %v4719
  %v4734 = vsub.f32 %v4692, %v4722
  %v4735 = vsub.f32 %v4697, %v4725
  %v4736 = vsub.f32 %v4702, %v4728
  %v4737 = vmul.f32 %v4729, 1.442695
  %v4738 = vpow.pop %v4737
  %v4739 = vmul.f32 %v4730, 1.442695
  %v4740 = vpow.pop %v4739
  %v4741 = vmul.f32 %v4731, 1.442695
  %v4742 = vpow.pop %v4741
  %v4743 = vmul.f32 %v4732, 1.442695
  %v4744 = vpow.pop %v4743
  %v4745 = vmul.f32 %v4733, 1.442695
  %v4746 = vpow.pop %v4745
  %v4747 = vmul.f32 %v4734, 1.442695
  %v4748 = vpow.pop %v4747
  %v4749 = vmul.f32 %v4735, 1.442695
  %v4750 = vpow.pop %v4749
  %v4751 = vmul.f32 %v4736, 1.442695
  %v4752 = vpow.pop %v4751
  %v4753 = vsel %vm433, %v4738, 0.0
  %4754 = vadd.xlane.f32.xlu0 %v4753
  %v4755 = vpop.xlane.xlu0 %4754
  %v4756 = vsel %vm433, %v4740, 0.0
  %4757 = vadd.xlane.f32.xlu0 %v4756
  %v4758 = vpop.xlane.xlu0 %4757
  %v4759 = vsel %vm433, %v4742, 0.0
  %4760 = vadd.xlane.f32.xlu0 %v4759
  %v4761 = vpop.xlane.xlu0 %4760
  %v4762 = vsel %vm433, %v4744, 0.0
  %4763 = vadd.xlane.f32.xlu0 %v4762
  %v4764 = vpop.xlane.xlu0 %4763
  %v4765 = vsel %vm433, %v4746, 0.0
  %4766 = vadd.xlane.f32.xlu0 %v4765
  %v4767 = vpop.xlane.xlu0 %4766
  %v4768 = vsel %vm433, %v4748, 0.0
  %4769 = vadd.xlane.f32.xlu0 %v4768
  %v4770 = vpop.xlane.xlu0 %4769
  %v4771 = vsel %vm433, %v4750, 0.0
  %4772 = vadd.xlane.f32.xlu0 %v4771
  %v4773 = vpop.xlane.xlu0 %4772
  %v4774 = vsel %vm433, %v4752, 0.0
  %4775 = vadd.xlane.f32.xlu0 %v4774
  %v4776 = vpop.xlane.xlu0 %4775
  %v4777 = vrcp.pop %v4755
  %v4778 = vrcp.pop %v4758
  %v4779 = vrcp.pop %v4761
  %v4780 = vrcp.pop %v4764
  %v4781 = vrcp.pop %v4767
  %v4782 = vrcp.pop %v4770
  %v4783 = vrcp.pop %v4773
  %v4784 = vrcp.pop %v4776
  %v4785 = vmul.f32 %v4738, %v4777
  %v4786 = vmul.f32 %v4740, %v4778
  %v4787 = vmul.f32 %v4742, %v4779
  %v4788 = vmul.f32 %v4744, %v4780
  %v4789 = vmul.f32 %v4746, %v4781
  %v4790 = vmul.f32 %v4748, %v4782
  %v4791 = vmul.f32 %v4750, %v4783
  %v4792 = vmul.f32 %v4752, %v4784
  %4793 = vrot.lane.b32.xlu0 %v4532, 96
  %v4794 = vpop.permute.xlu0 %4793
  %4795 = vrot.lane.b32.xlu0 %v4537, 96
  %v4796 = vpop.permute.xlu0 %4795
  %4797 = vrot.lane.b32.xlu0 %v4557, 96
  %v4798 = vpop.permute.xlu0 %4797
  %4799 = vrot.lane.b32.xlu0 %v4559, 96
  %v4800 = vpop.permute.xlu0 %4799
  %4801 = vrot.lane.b32.xlu0 %v4561, 96
  %v4802 = vpop.permute.xlu0 %4801
  %4803 = vrot.lane.b32.xlu0 %v4563, 96
  %v4804 = vpop.permute.xlu0 %4803
  %4805 = vrot.lane.b32.xlu0 %v4565, 96
  %v4806 = vpop.permute.xlu0 %4805
  %4807 = vrot.lane.b32.xlu0 %v4567, 96
  %v4808 = vpop.permute.xlu0 %4807
  %v4818 = vsel %vm433, %v4785, 0
  %v4821 = vsel %vm433, %v4786, 0
  %v4824 = vsel %vm433, %v4787, 0
  %v4827 = vsel %vm433, %v4788, 0
  %v4830 = vsel %vm433, %v4789, 0
  %v4833 = vsel %vm433, %v4790, 0
  %v4836 = vsel %vm433, %v4791, 0
  %v4839 = vsel %vm433, %v4792, 0
  %4841 = vmatprep.subr.mxu0 0.0
  %4842 = vmatpush1.msra.mxu0 %v4794
  %4843 = vmatprep.subr.mxu0 0.0
  %4844 = vmatpush1.msra.mxu0 %v4796
  %4845 = vmatprep.subr.mxu0 0.0
  %4846 = vmatpush1.msra.mxu0 %v4798
  %4847 = vmatprep.subr.mxu0 0.0
  %4848 = vmatpush1.msra.mxu0 %v4800
  %4849 = vmatprep.subr.mxu0 0.0
  %4850 = vmatpush1.msra.mxu0 %v4802
  %4851 = vmatprep.subr.mxu0 0.0
  %4852 = vmatpush1.msra.mxu0 %v4804
  %4853 = vmatprep.subr.mxu0 0.0
  %4854 = vmatpush1.msra.mxu0 %v4806
  %4855 = vmatprep.subr.mxu0 0.0
  %4856 = vmatpush1.msra.mxu0 %v4808
  %4857 = vmatprep.subr.mxu0 0.0
  %4858 = vmatpush1.msra.mxu0 0.0
  %4859 = vmatprep.subr.mxu0 0.0
  %4860 = vmatpush1.msra.mxu0 0.0
  %4861 = vmatprep.subr.mxu0 0.0
  %4862 = vmatpush1.msra.mxu0 0.0
  %4863 = vmatprep.subr.mxu0 0.0
  %4864 = vmatpush1.msra.mxu0 0.0
  %4865 = vmatprep.subr.mxu0 0.0
  %4866 = vmatpush1.msra.mxu0 0.0
  %4867 = vmatprep.subr.mxu0 0.0
  %4868 = vmatpush1.msra.mxu0 0.0
  %4869 = vmatprep.subr.mxu0 0.0
  %4870 = vmatpush1.msra.mxu0 0.0
  %4871 = vmatprep.subr.mxu0 0.0
  %4872 = vmatpush1.msra.mxu0 0.0
  %4873 = vmatprep.subr.mxu0 0.0
  %4874 = vmatpush1.msra.mxu0 0.0
  %4875 = vmatprep.subr.mxu0 0.0
  %4876 = vmatpush1.msra.mxu0 0.0
  %4877 = vmatprep.subr.mxu0 0.0
  %4878 = vmatpush1.msra.mxu0 0.0
  %4879 = vmatprep.subr.mxu0 0.0
  %4880 = vmatpush1.msra.mxu0 0.0
  %4881 = vmatprep.subr.mxu0 0.0
  %4882 = vmatpush1.msra.mxu0 0.0
  %4883 = vmatprep.subr.mxu0 0.0
  %4884 = vmatpush1.msra.mxu0 0.0
  %4885 = vmatprep.subr.mxu0 0.0
  %4886 = vmatpush1.msra.mxu0 0.0
  %4887 = vmatprep.subr.mxu0 0.0
  %4888 = vmatpush1.msra.mxu0 0.0
  %4889 = vmatprep.subr.mxu0 0.0
  %4890 = vmatpush1.msra.mxu0 0.0
  %4891 = vmatprep.subr.mxu0 0.0
  %4892 = vmatpush1.msra.mxu0 0.0
  %4893 = vmatprep.subr.mxu0 0.0
  %4894 = vmatpush1.msra.mxu0 0.0
  %4895 = vmatprep.subr.mxu0 0.0
  %4896 = vmatpush1.msra.mxu0 0.0
  %4897 = vmatprep.subr.mxu0 0.0
  %4898 = vmatpush1.msra.mxu0 0.0
  %4899 = vmatprep.subr.mxu0 0.0
  %4900 = vmatpush1.msra.mxu0 0.0
  %4901 = vmatprep.subr.mxu0 0.0
  %4902 = vmatpush1.msra.mxu0 0.0
  %4903 = vmatprep.subr.mxu0 0.0
  %4904 = vmatpush1.msra.mxu0 0.0
  %4905 = vmatprep.mubr.f32.mxu0 0.0
  %4906 = vmatmul.mubr.f32.gmra.mrb[0].mxu0 %v4818
  %v4907 = vpop.f32.mrb[0].mxu0
  %v4908 = vadd.f32 0.0, %v4907
  %v4909 = vpop.f32.mrb[0].mxu0
  %4910 = vmatprep.mubr.f32.mxu0 0.0
  %4911 = vmatmul.mubr.f32.gmra.mrb[0].mxu0 %v4821
  %v4912 = vpop.f32.mrb[0].mxu0
  %v4913 = vadd.f32 0.0, %v4912
  %v4914 = vpop.f32.mrb[0].mxu0
  %4915 = vmatprep.mubr.f32.mxu0 0.0
  %4916 = vmatmul.mubr.f32.gmra.mrb[0].mxu0 %v4824
  %v4917 = vpop.f32.mrb[0].mxu0
  %v4918 = vadd.f32 0.0, %v4917
  %v4919 = vpop.f32.mrb[0].mxu0
  %4920 = vmatprep.mubr.f32.mxu0 0.0
  %4921 = vmatmul.mubr.f32.gmra.mrb[0].mxu0 %v4827
  %v4922 = vpop.f32.mrb[0].mxu0
  %v4923 = vadd.f32 0.0, %v4922
  %v4924 = vpop.f32.mrb[0].mxu0
  %4925 = vmatprep.mubr.f32.mxu0 0.0
  %4926 = vmatmul.mubr.f32.gmra.mrb[0].mxu0 %v4830
  %v4927 = vpop.f32.mrb[0].mxu0
  %v4928 = vadd.f32 0.0, %v4927
  %v4929 = vpop.f32.mrb[0].mxu0
  %4930 = vmatprep.mubr.f32.mxu0 0.0
  %4931 = vmatmul.mubr.f32.gmra.mrb[0].mxu0 %v4833
  %v4932 = vpop.f32.mrb[0].mxu0
  %v4933 = vadd.f32 0.0, %v4932
  %v4934 = vpop.f32.mrb[0].mxu0
  %4935 = vmatprep.mubr.f32.mxu0 0.0
  %4936 = vmatmul.mubr.f32.gmra.mrb[0].mxu0 %v4836
  %v4937 = vpop.f32.mrb[0].mxu0
  %v4938 = vadd.f32 0.0, %v4937
  %v4939 = vpop.f32.mrb[0].mxu0
  %4940 = vmatprep.mubr.f32.mxu0 0.0
  %4941 = vmatmul.mubr.f32.gmra.mrb[0].mxu0 %v4839
  %v4942 = vpop.f32.mrb[0].mxu0
  %v4943 = vadd.f32 0.0, %v4942
  %v4944 = vpop.f32.mrb[0].mxu0
  %4945 = vdwg.mxu0
  %4948 = vrot.lane.b32.xlu0 %v4918, 8
  %v4949 = vpop.permute.xlu0 %4948
  %4950 = vrot.lane.b32.xlu0 %v4923, 8
  %v4951 = vpop.permute.xlu0 %4950
  %4956 = vrot.lane.b32.xlu0 %v4928, 16
  %v4957 = vpop.permute.xlu0 %4956
  %4958 = vrot.lane.b32.xlu0 %v4933, 16
  %v4959 = vpop.permute.xlu0 %4958
  %4964 = vrot.lane.b32.xlu0 %v4938, 24
  %v4965 = vpop.permute.xlu0 %4964
  %4966 = vrot.lane.b32.xlu0 %v4943, 24
  %v4967 = vpop.permute.xlu0 %4966
  %v4970 = vsel %vm295, %v4908, %v4949
  %v4971 = vsel %vm295, %v4913, %v4951
  %v4972 = vsel %vm701, %v4970, %v4957
  %v4973 = vsel %vm701, %v4971, %v4959
  %v4974 = vsel %vm704, %v4972, %v4965
  %v4975 = vsel %vm704, %v4973, %v4967
  %s4976 = scalar_lea.vmem %s55, 32
  %v4977 = vld [vmem:[%s4976] sm:$0xff]
  %v4978 = vld [vmem:[%s4976 + $0x8] sm:$0xff]
  %v4979 = vld [vmem:[%s4976 + $0x10] sm:$0xff]
  %v4980 = vld [vmem:[%s4976 + $0x18] sm:$0xff]
  %s4981 = scalar_lea.vmem %s57, 1
  %v4982 = vld [vmem:[%s4981] sm:$0x1]
  %v4984 = vlaneseq
  %v4985 = vshrl.u32 %v4984, 7
  %v4986 = vsub.s32 0, %v4985
  %v4987 = vrot.slane %v4982, %v4986
  %v4990 = vsel %vm183, %v4974, 0
  %v4993 = vsel %vm183, %v4975, 0
  %4995 = vmatprep.subr.mxu0 0.0
  %4996 = vmatpush1.msra.mxu0 %v4977
  %4997 = vmatprep.subr.mxu0 0.0
  %4998 = vmatpush1.msra.mxu0 %v4978
  %4999 = vmatprep.subr.mxu0 0.0
  %5000 = vmatpush1.msra.mxu0 %v4979
  %5001 = vmatprep.subr.mxu0 0.0
  %5002 = vmatpush1.msra.mxu0 %v4980
  %5003 = vmatprep.subr.mxu0 0.0
  %5004 = vmatpush1.msra.mxu0 0.0
  %5005 = vmatprep.subr.mxu0 0.0
  %5006 = vmatpush1.msra.mxu0 0.0
  %5007 = vmatprep.subr.mxu0 0.0
  %5008 = vmatpush1.msra.mxu0 0.0
  %5009 = vmatprep.subr.mxu0 0.0
  %5010 = vmatpush1.msra.mxu0 0.0
  %5011 = vmatprep.subr.mxu0 0.0
  %5012 = vmatpush1.msra.mxu0 0.0
  %5013 = vmatprep.subr.mxu0 0.0
  %5014 = vmatpush1.msra.mxu0 0.0
  %5015 = vmatprep.subr.mxu0 0.0
  %5016 = vmatpush1.msra.mxu0 0.0
  %5017 = vmatprep.subr.mxu0 0.0
  %5018 = vmatpush1.msra.mxu0 0.0
  %5019 = vmatprep.subr.mxu0 0.0
  %5020 = vmatpush1.msra.mxu0 0.0
  %5021 = vmatprep.subr.mxu0 0.0
  %5022 = vmatpush1.msra.mxu0 0.0
  %5023 = vmatprep.subr.mxu0 0.0
  %5024 = vmatpush1.msra.mxu0 0.0
  %5025 = vmatprep.subr.mxu0 0.0
  %5026 = vmatpush1.msra.mxu0 0.0
  %5027 = vmatprep.subr.mxu0 0.0
  %5028 = vmatpush1.msra.mxu0 0.0
  %5029 = vmatprep.subr.mxu0 0.0
  %5030 = vmatpush1.msra.mxu0 0.0
  %5031 = vmatprep.subr.mxu0 0.0
  %5032 = vmatpush1.msra.mxu0 0.0
  %5033 = vmatprep.subr.mxu0 0.0
  %5034 = vmatpush1.msra.mxu0 0.0
  %5035 = vmatprep.subr.mxu0 0.0
  %5036 = vmatpush1.msra.mxu0 0.0
  %5037 = vmatprep.subr.mxu0 0.0
  %5038 = vmatpush1.msra.mxu0 0.0
  %5039 = vmatprep.subr.mxu0 0.0
  %5040 = vmatpush1.msra.mxu0 0.0
  %5041 = vmatprep.subr.mxu0 0.0
  %5042 = vmatpush1.msra.mxu0 0.0
  %5043 = vmatprep.subr.mxu0 0.0
  %5044 = vmatpush1.msra.mxu0 0.0
  %5045 = vmatprep.subr.mxu0 0.0
  %5046 = vmatpush1.msra.mxu0 0.0
  %5047 = vmatprep.subr.mxu0 0.0
  %5048 = vmatpush1.msra.mxu0 0.0
  %5049 = vmatprep.subr.mxu0 0.0
  %5050 = vmatpush1.msra.mxu0 0.0
  %5051 = vmatprep.subr.mxu0 0.0
  %5052 = vmatpush1.msra.mxu0 0.0
  %5053 = vmatprep.subr.mxu0 0.0
  %5054 = vmatpush1.msra.mxu0 0.0
  %5055 = vmatprep.subr.mxu0 0.0
  %5056 = vmatpush1.msra.mxu0 0.0
  %5057 = vmatprep.subr.mxu0 0.0
  %5058 = vmatpush1.msra.mxu0 0.0
  %5059 = vmatprep.mubr.f32.mxu0 0.0
  %5060 = vmatmul.mubr.f32.gmra.mrb[0].mxu0 %v4990
  %v5061 = vpop.f32.mrb[0].mxu0
  %v5062 = vadd.f32 %v4987, %v5061
  %v5063 = vpop.f32.mrb[0].mxu0
  %5064 = vmatprep.mubr.f32.mxu0 0.0
  %5065 = vmatmul.mubr.f32.gmra.mrb[0].mxu0 %v4993
  %v5066 = vpop.f32.mrb[0].mxu0
  %v5067 = vadd.f32 %v4987, %v5066
  %v5068 = vpop.f32.mrb[0].mxu0
  %5069 = vdwg.mxu0
  %v5070 = vadd.f32 %v4356, %v5062
  %v5071 = vadd.f32 %v4357, %v5067
  %s5072 = scalar_lea.vmem %s59, 1
  %v5073 = vld [vmem:[%s5072] sm:$0x1]
  %s5074 = scalar_lea.vmem %s61, 1
  %v5075 = vld [vmem:[%s5074] sm:$0x1]
  %v5076 = vsel %vm183, %v5070, 0.0
  %5077 = vadd.xlane.f32.xlu0 %v5076
  %v5078 = vpop.xlane.xlu0 %5077
  %v5079 = vsel %vm183, %v5071, 0.0
  %5080 = vadd.xlane.f32.xlu0 %v5079
  %v5081 = vpop.xlane.xlu0 %5080
  %v5082 = vmul.f32 %v5078, %v809
  %v5083 = vmul.f32 %v5081, %v809
  %v5084 = vsub.f32 %v5070, %v5082
  %v5085 = vsub.f32 %v5071, %v5083
  %v5086 = vmul.f32 %v5084, %v5084
  %v5087 = vmul.f32 %v5085, %v5085
  %v5088 = vsel %vm183, %v5086, 0.0
  %5089 = vadd.xlane.f32.xlu0 %v5088
  %v5090 = vpop.xlane.xlu0 %5089
  %v5091 = vsel %vm183, %v5087, 0.0
  %5092 = vadd.xlane.f32.xlu0 %v5091
  %v5093 = vpop.xlane.xlu0 %5092
  %v5094 = vmul.f32 %v5090, %v809
  %v5095 = vmul.f32 %v5093, %v809
  %v5096 = vadd.f32 %v5094, 1e-05
  %v5097 = vadd.f32 %v5095, 1e-05
  %v5098 = vrsqrt.pop %v5096
  %v5099 = vrsqrt.pop %v5097
  %v5100 = vmul.f32 %v5084, %v5098
  %v5101 = vmul.f32 %v5085, %v5099
  %v5103 = vlaneseq
  %v5104 = vshrl.u32 %v5103, 7
  %v5105 = vsub.s32 0, %v5104
  %v5106 = vrot.slane %v5073, %v5105
  %v5108 = vmul.f32 %v5100, %v5106
  %v5109 = vmul.f32 %v5101, %v5106
  %v5111 = vlaneseq
  %v5112 = vshrl.u32 %v5111, 7
  %v5113 = vsub.s32 0, %v5112
  %v5114 = vrot.slane %v5075, %v5113
  %v5116 = vadd.f32 %v5108, %v5114
  %v5117 = vadd.f32 %v5109, %v5114
  %s5118 = scalar_lea.vmem %s63, 32
  %v5119 = vld [vmem:[%s5118] sm:$0xff]
  %v5120 = vld [vmem:[%s5118 + $0x8] sm:$0xff]
  %v5121 = vld [vmem:[%s5118 + $0x10] sm:$0xff]
  %v5122 = vld [vmem:[%s5118 + $0x18] sm:$0xff]
  %s5123 = scalar_lea.vmem %s65, 1
  %v5124 = vld [vmem:[%s5123] sm:$0x1]
  %s5125 = scalar_lea.vmem %s67, 128
  %v5126 = vld [vmem:[%s5125] sm:$0xff]
  %v5127 = vld [vmem:[%s5125 + $0x8] sm:$0xff]
  %v5128 = vld [vmem:[%s5125 + $0x10] sm:$0xff]
  %v5129 = vld [vmem:[%s5125 + $0x18] sm:$0xff]
  %v5130 = vld [vmem:[%s5125 + $0x20] sm:$0xff]
  %v5131 = vld [vmem:[%s5125 + $0x28] sm:$0xff]
  %v5132 = vld [vmem:[%s5125 + $0x30] sm:$0xff]
  %v5133 = vld [vmem:[%s5125 + $0x38] sm:$0xff]
  %v5134 = vld [vmem:[%s5125 + $0x40] sm:$0xff]
  %v5135 = vld [vmem:[%s5125 + $0x48] sm:$0xff]
  %v5136 = vld [vmem:[%s5125 + $0x50] sm:$0xff]
  %v5137 = vld [vmem:[%s5125 + $0x58] sm:$0xff]
  %v5138 = vld [vmem:[%s5125 + $0x60] sm:$0xff]
  %v5139 = vld [vmem:[%s5125 + $0x68] sm:$0xff]
  %v5140 = vld [vmem:[%s5125 + $0x70] sm:$0xff]
  %v5141 = vld [vmem:[%s5125 + $0x78] sm:$0xff]
  %s5142 = scalar_lea.vmem %s69, 1
  %v5143 = vld [vmem:[%s5142] sm:$0x1]
  %v5145 = vlaneseq
  %v5146 = vshrl.u32 %v5145, 7
  %v5147 = vsub.s32 0, %v5146
  %v5148 = vrot.slane %v5124, %v5147
  %v5151 = vsel %vm183, %v5116, 0
  %v5154 = vsel %vm183, %v5117, 0
  %5156 = vmatprep.subr.mxu0 0.0
  %5157 = vmatpush1.msra.mxu0 %v5119
  %5158 = vmatprep.subr.mxu0 0.0
  %5159 = vmatpush1.msra.mxu0 %v5120
  %5160 = vmatprep.subr.mxu0 0.0
  %5161 = vmatpush1.msra.mxu0 %v5121
  %5162 = vmatprep.subr.mxu0 0.0
  %5163 = vmatpush1.msra.mxu0 %v5122
  %5164 = vmatprep.subr.mxu0 0.0
  %5165 = vmatpush1.msra.mxu0 0.0
  %5166 = vmatprep.subr.mxu0 0.0
  %5167 = vmatpush1.msra.mxu0 0.0
  %5168 = vmatprep.subr.mxu0 0.0
  %5169 = vmatpush1.msra.mxu0 0.0
  %5170 = vmatprep.subr.mxu0 0.0
  %5171 = vmatpush1.msra.mxu0 0.0
  %5172 = vmatprep.subr.mxu0 0.0
  %5173 = vmatpush1.msra.mxu0 0.0
  %5174 = vmatprep.subr.mxu0 0.0
  %5175 = vmatpush1.msra.mxu0 0.0
  %5176 = vmatprep.subr.mxu0 0.0
  %5177 = vmatpush1.msra.mxu0 0.0
  %5178 = vmatprep.subr.mxu0 0.0
  %5179 = vmatpush1.msra.mxu0 0.0
  %5180 = vmatprep.subr.mxu0 0.0
  %5181 = vmatpush1.msra.mxu0 0.0
  %5182 = vmatprep.subr.mxu0 0.0
  %5183 = vmatpush1.msra.mxu0 0.0
  %5184 = vmatprep.subr.mxu0 0.0
  %5185 = vmatpush1.msra.mxu0 0.0
  %5186 = vmatprep.subr.mxu0 0.0
  %5187 = vmatpush1.msra.mxu0 0.0
  %5188 = vmatprep.subr.mxu0 0.0
  %5189 = vmatpush1.msra.mxu0 0.0
  %5190 = vmatprep.subr.mxu0 0.0
  %5191 = vmatpush1.msra.mxu0 0.0
  %5192 = vmatprep.subr.mxu0 0.0
  %5193 = vmatpush1.msra.mxu0 0.0
  %5194 = vmatprep.subr.mxu0 0.0
  %5195 = vmatpush1.msra.mxu0 0.0
  %5196 = vmatprep.subr.mxu0 0.0
  %5197 = vmatpush1.msra.mxu0 0.0
  %5198 = vmatprep.subr.mxu0 0.0
  %5199 = vmatpush1.msra.mxu0 0.0
  %5200 = vmatprep.subr.mxu0 0.0
  %5201 = vmatpush1.msra.mxu0 0.0
  %5202 = vmatprep.subr.mxu0 0.0
  %5203 = vmatpush1.msra.mxu0 0.0
  %5204 = vmatprep.subr.mxu0 0.0
  %5205 = vmatpush1.msra.mxu0 0.0
  %5206 = vmatprep.subr.mxu0 0.0
  %5207 = vmatpush1.msra.mxu0 0.0
  %5208 = vmatprep.subr.mxu0 0.0
  %5209 = vmatpush1.msra.mxu0 0.0
  %5210 = vmatprep.subr.mxu0 0.0
  %5211 = vmatpush1.msra.mxu0 0.0
  %5212 = vmatprep.subr.mxu0 0.0
  %5213 = vmatpush1.msra.mxu0 0.0
  %5214 = vmatprep.subr.mxu0 0.0
  %5215 = vmatpush1.msra.mxu0 0.0
  %5216 = vmatprep.subr.mxu0 0.0
  %5217 = vmatpush1.msra.mxu0 0.0
  %5218 = vmatprep.subr.mxu0 0.0
  %5219 = vmatpush1.msra.mxu0 0.0
  %5220 = vmatprep.mubr.f32.mxu0 0.0
  %5221 = vmatmul.mubr.f32.gmra.mrb[0].mxu0 %v5151
  %v5222 = vpop.f32.mrb[0].mxu0
  %v5223 = vadd.f32 %v5148, %v5222
  %v5224 = vpop.f32.mrb[0].mxu0
  %5225 = vmatprep.mubr.f32.mxu0 0.0
  %5226 = vmatmul.mubr.f32.gmra.mrb[0].mxu0 %v5154
  %v5227 = vpop.f32.mrb[0].mxu0
  %v5228 = vadd.f32 %v5148, %v5227
  %v5229 = vpop.f32.mrb[0].mxu0
  %5230 = vdwg.mxu0
  %v5231 = vmax.f32 %v5223, 0.0
  %v5232 = vmax.f32 %v5228, 0.0
  %v5234 = vlaneseq
  %v5235 = vshrl.u32 %v5234, 7
  %v5236 = vsub.s32 0, %v5235
  %v5237 = vrot.slane %v5143, %v5236
  %5239 = vmatprep.subr.mxu0 0.0
  %5240 = vmatpush1.msra.mxu0 %v5126
  %5241 = vmatprep.subr.mxu0 0.0
  %5242 = vmatpush1.msra.mxu0 %v5127
  %5243 = vmatprep.subr.mxu0 0.0
  %5244 = vmatpush1.msra.mxu0 %v5128
  %5245 = vmatprep.subr.mxu0 0.0
  %5246 = vmatpush1.msra.mxu0 %v5129
  %5247 = vmatprep.subr.mxu0 0.0
  %5248 = vmatpush1.msra.mxu0 %v5130
  %5249 = vmatprep.subr.mxu0 0.0
  %5250 = vmatpush1.msra.mxu0 %v5131
  %5251 = vmatprep.subr.mxu0 0.0
  %5252 = vmatpush1.msra.mxu0 %v5132
  %5253 = vmatprep.subr.mxu0 0.0
  %5254 = vmatpush1.msra.mxu0 %v5133
  %5255 = vmatprep.subr.mxu0 0.0
  %5256 = vmatpush1.msra.mxu0 %v5134
  %5257 = vmatprep.subr.mxu0 0.0
  %5258 = vmatpush1.msra.mxu0 %v5135
  %5259 = vmatprep.subr.mxu0 0.0
  %5260 = vmatpush1.msra.mxu0 %v5136
  %5261 = vmatprep.subr.mxu0 0.0
  %5262 = vmatpush1.msra.mxu0 %v5137
  %5263 = vmatprep.subr.mxu0 0.0
  %5264 = vmatpush1.msra.mxu0 %v5138
  %5265 = vmatprep.subr.mxu0 0.0
  %5266 = vmatpush1.msra.mxu0 %v5139
  %5267 = vmatprep.subr.mxu0 0.0
  %5268 = vmatpush1.msra.mxu0 %v5140
  %5269 = vmatprep.subr.mxu0 0.0
  %5270 = vmatpush1.msra.mxu0 %v5141
  %5271 = vmatprep.subr.mxu0 0.0
  %5272 = vmatpush1.msra.mxu0 0.0
  %5273 = vmatprep.subr.mxu0 0.0
  %5274 = vmatpush1.msra.mxu0 0.0
  %5275 = vmatprep.subr.mxu0 0.0
  %5276 = vmatpush1.msra.mxu0 0.0
  %5277 = vmatprep.subr.mxu0 0.0
  %5278 = vmatpush1.msra.mxu0 0.0
  %5279 = vmatprep.subr.mxu0 0.0
  %5280 = vmatpush1.msra.mxu0 0.0
  %5281 = vmatprep.subr.mxu0 0.0
  %5282 = vmatpush1.msra.mxu0 0.0
  %5283 = vmatprep.subr.mxu0 0.0
  %5284 = vmatpush1.msra.mxu0 0.0
  %5285 = vmatprep.subr.mxu0 0.0
  %5286 = vmatpush1.msra.mxu0 0.0
  %5287 = vmatprep.subr.mxu0 0.0
  %5288 = vmatpush1.msra.mxu0 0.0
  %5289 = vmatprep.subr.mxu0 0.0
  %5290 = vmatpush1.msra.mxu0 0.0
  %5291 = vmatprep.subr.mxu0 0.0
  %5292 = vmatpush1.msra.mxu0 0.0
  %5293 = vmatprep.subr.mxu0 0.0
  %5294 = vmatpush1.msra.mxu0 0.0
  %5295 = vmatprep.subr.mxu0 0.0
  %5296 = vmatpush1.msra.mxu0 0.0
  %5297 = vmatprep.subr.mxu0 0.0
  %5298 = vmatpush1.msra.mxu0 0.0
  %5299 = vmatprep.subr.mxu0 0.0
  %5300 = vmatpush1.msra.mxu0 0.0
  %5301 = vmatprep.subr.mxu0 0.0
  %5302 = vmatpush1.msra.mxu0 0.0
  %5303 = vmatprep.mubr.f32.mxu0 0.0
  %5304 = vmatmul.mubr.f32.gmra.mrb[0].mxu0 %v5231
  %v5305 = vpop.f32.mrb[0].mxu0
  %v5306 = vadd.f32 %v5237, %v5305
  %v5307 = vpop.f32.mrb[0].mxu0
  %5308 = vmatprep.mubr.f32.mxu0 0.0
  %5309 = vmatmul.mubr.f32.gmra.mrb[0].mxu0 %v5232
  %v5310 = vpop.f32.mrb[0].mxu0
  %v5311 = vadd.f32 %v5237, %v5310
  %v5312 = vpop.f32.mrb[0].mxu0
  %5313 = vdwg.mxu0
  %v5314 = vadd.f32 %v5116, %v5306
  %v5315 = vadd.f32 %v5117, %v5311
  %s5316 = scalar_lea.vmem %s71, 1
  %v5317 = vld [vmem:[%s5316] sm:$0x1]
  %s5318 = scalar_lea.vmem %s73, 1
  %v5319 = vld [vmem:[%s5318] sm:$0x1]
  %v5320 = vsel %vm183, %v5314, 0.0
  %5321 = vadd.xlane.f32.xlu0 %v5320
  %v5322 = vpop.xlane.xlu0 %5321
  %v5323 = vsel %vm183, %v5315, 0.0
  %5324 = vadd.xlane.f32.xlu0 %v5323
  %v5325 = vpop.xlane.xlu0 %5324
  %v5326 = vmul.f32 %v5322, %v809
  %v5327 = vmul.f32 %v5325, %v809
  %v5328 = vsub.f32 %v5314, %v5326
  %v5329 = vsub.f32 %v5315, %v5327
  %v5330 = vmul.f32 %v5328, %v5328
  %v5331 = vmul.f32 %v5329, %v5329
  %v5332 = vsel %vm183, %v5330, 0.0
  %5333 = vadd.xlane.f32.xlu0 %v5332
  %v5334 = vpop.xlane.xlu0 %5333
  %v5335 = vsel %vm183, %v5331, 0.0
  %5336 = vadd.xlane.f32.xlu0 %v5335
  %v5337 = vpop.xlane.xlu0 %5336
  %v5338 = vmul.f32 %v5334, %v809
  %v5339 = vmul.f32 %v5337, %v809
  %v5340 = vadd.f32 %v5338, 1e-05
  %v5341 = vadd.f32 %v5339, 1e-05
  %v5342 = vrsqrt.pop %v5340
  %v5343 = vrsqrt.pop %v5341
  %v5344 = vmul.f32 %v5328, %v5342
  %v5345 = vmul.f32 %v5329, %v5343
  %v5347 = vlaneseq
  %v5348 = vshrl.u32 %v5347, 7
  %v5349 = vsub.s32 0, %v5348
  %v5350 = vrot.slane %v5317, %v5349
  %v5352 = vmul.f32 %v5344, %v5350
  %v5353 = vmul.f32 %v5345, %v5350
  %v5355 = vlaneseq
  %v5356 = vshrl.u32 %v5355, 7
  %v5357 = vsub.s32 0, %v5356
  %v5358 = vrot.slane %v5319, %v5357
  %v5360 = vadd.f32 %v5352, %v5358
  %v5361 = vadd.f32 %v5353, %v5358
  %v5362 = vld [vmem:[%s75] sm:$0xff]
  %v5363 = vld [vmem:[%s75 + $0x8] sm:$0xff]
  %v5364 = vld [vmem:[%s75 + $0x10] sm:$0xff]
  %v5365 = vld [vmem:[%s75 + $0x18] sm:$0xff]
  %v5366 = vld [vmem:[%s77] sm:$0x1]
  %v5368 = vlaneseq
  %v5369 = vshrl.u32 %v5368, 7
  %v5370 = vsub.s32 0, %v5369
  %v5371 = vrot.slane %v5366, %v5370
  %v5374 = vsel %vm183, %v5360, 0
  %v5377 = vsel %vm183, %v5361, 0
  %5379 = vmatprep.subr.mxu0 0.0
  %5380 = vmatpush1.msra.mxu0 %v5362
  %5381 = vmatprep.subr.mxu0 0.0
  %5382 = vmatpush1.msra.mxu0 %v5363
  %5383 = vmatprep.subr.mxu0 0.0
  %5384 = vmatpush1.msra.mxu0 %v5364
  %5385 = vmatprep.subr.mxu0 0.0
  %5386 = vmatpush1.msra.mxu0 %v5365
  %5387 = vmatprep.subr.mxu0 0.0
  %5388 = vmatpush1.msra.mxu0 0.0
  %5389 = vmatprep.subr.mxu0 0.0
  %5390 = vmatpush1.msra.mxu0 0.0
  %5391 = vmatprep.subr.mxu0 0.0
  %5392 = vmatpush1.msra.mxu0 0.0
  %5393 = vmatprep.subr.mxu0 0.0
  %5394 = vmatpush1.msra.mxu0 0.0
  %5395 = vmatprep.subr.mxu0 0.0
  %5396 = vmatpush1.msra.mxu0 0.0
  %5397 = vmatprep.subr.mxu0 0.0
  %5398 = vmatpush1.msra.mxu0 0.0
  %5399 = vmatprep.subr.mxu0 0.0
  %5400 = vmatpush1.msra.mxu0 0.0
  %5401 = vmatprep.subr.mxu0 0.0
  %5402 = vmatpush1.msra.mxu0 0.0
  %5403 = vmatprep.subr.mxu0 0.0
  %5404 = vmatpush1.msra.mxu0 0.0
  %5405 = vmatprep.subr.mxu0 0.0
  %5406 = vmatpush1.msra.mxu0 0.0
  %5407 = vmatprep.subr.mxu0 0.0
  %5408 = vmatpush1.msra.mxu0 0.0
  %5409 = vmatprep.subr.mxu0 0.0
  %5410 = vmatpush1.msra.mxu0 0.0
  %5411 = vmatprep.subr.mxu0 0.0
  %5412 = vmatpush1.msra.mxu0 0.0
  %5413 = vmatprep.subr.mxu0 0.0
  %5414 = vmatpush1.msra.mxu0 0.0
  %5415 = vmatprep.subr.mxu0 0.0
  %5416 = vmatpush1.msra.mxu0 0.0
  %5417 = vmatprep.subr.mxu0 0.0
  %5418 = vmatpush1.msra.mxu0 0.0
  %5419 = vmatprep.subr.mxu0 0.0
  %5420 = vmatpush1.msra.mxu0 0.0
  %5421 = vmatprep.subr.mxu0 0.0
  %5422 = vmatpush1.msra.mxu0 0.0
  %5423 = vmatprep.subr.mxu0 0.0
  %5424 = vmatpush1.msra.mxu0 0.0
  %5425 = vmatprep.subr.mxu0 0.0
  %5426 = vmatpush1.msra.mxu0 0.0
  %5427 = vmatprep.subr.mxu0 0.0
  %5428 = vmatpush1.msra.mxu0 0.0
  %5429 = vmatprep.subr.mxu0 0.0
  %5430 = vmatpush1.msra.mxu0 0.0
  %5431 = vmatprep.subr.mxu0 0.0
  %5432 = vmatpush1.msra.mxu0 0.0
  %5433 = vmatprep.subr.mxu0 0.0
  %5434 = vmatpush1.msra.mxu0 0.0
  %5435 = vmatprep.subr.mxu0 0.0
  %5436 = vmatpush1.msra.mxu0 0.0
  %5437 = vmatprep.subr.mxu0 0.0
  %5438 = vmatpush1.msra.mxu0 0.0
  %5439 = vmatprep.subr.mxu0 0.0
  %5440 = vmatpush1.msra.mxu0 0.0
  %5441 = vmatprep.subr.mxu0 0.0
  %5442 = vmatpush1.msra.mxu0 0.0
  %5443 = vmatprep.mubr.f32.mxu0 0.0
  %5444 = vmatmul.mubr.f32.gmra.mrb[0].mxu0 %v5374
  %v5445 = vpop.f32.mrb[0].mxu0
  %v5446 = vadd.f32 %v5371, %v5445
  %v5447 = vpop.f32.mrb[0].mxu0
  %5448 = vmatprep.mubr.f32.mxu0 0.0
  %5449 = vmatmul.mubr.f32.gmra.mrb[0].mxu0 %v5377
  %v5450 = vpop.f32.mrb[0].mxu0
  %v5451 = vadd.f32 %v5371, %v5450
  %v5452 = vpop.f32.mrb[0].mxu0
  %5453 = vdwg.mxu0
  %5454 = vst [vmem:[%s79] sm:$0xff] %v5446
  %5455 = vst [vmem:[%s79 + $0x8] sm:$0xff] %v5451
  // Predicated region
  $region158: #{transformer_forward.1} parent=0 // pred_check
    _
  $region159: #{transformer_forward.1} parent=0 // pred_check_branch
    %5457 = sbr.rel (0) target = $region161
  $region160: #{transformer_forward.1} parent=0 // pred_region
    _
  $region161: #{transformer_forward.1} parent=0 // pred_fallthru
    _
  // Predicated region
  $region162: #{transformer_forward.1} parent=0 // pred_check
    _
  $region163: #{transformer_forward.1} parent=0 // pred_check_branch
    %5459 = sbr.rel (0) target = $region165
  $region164: #{transformer_forward.1} parent=0 // pred_region
    _
  $region165: #{transformer_forward.1} parent=0 // pred_fallthru
    _

</llo_original>
